<compile_context>
chip_gen: v6e
topology: v6e:2x2x1
jax: 0.10.0
libtpu: 0.0.40
codegen_flags: <defaults>
</compile_context>

<pallas_src>
import functools

import jax
import jax.numpy as jnp
from jax.experimental import pallas as pl
from jax.experimental.pallas import tpu as pltpu

_EPS = 1e-5

_VMEM = pl.BlockSpec(memory_space=pltpu.MemorySpace.VMEM)
_SMEM = pl.BlockSpec(memory_space=pltpu.MemorySpace.SMEM)


# ----------------------------- Pallas kernels ------------------------------

def _bn_act_pad_kernel(y_ref, g_ref, b_ref, p_ref, o_ref, *, eps, with_prelu):
    """Batch-stat BN (+ optional PReLU), result written zero-padded by 1 pixel."""
    y = y_ref[...]                                        # (N, H, W, C) f32
    n, h, w, c = y.shape
    y2 = y.reshape(n * h * w, c)
    mean = jnp.mean(y2, axis=0, keepdims=True)
    d = y2 - mean
    var = jnp.mean(d * d, axis=0, keepdims=True)
    z = d * (g_ref[...] * jax.lax.rsqrt(var + eps)) + b_ref[...]
    if with_prelu:
        a = p_ref[...]
        z = jnp.where(z >= 0, z, a * z)
    o_ref[...] = jnp.zeros_like(o_ref)
    o_ref[:, 1:1 + h, 1:1 + w, :] = z.reshape(n, h, w, c)


def _conv3x3_kernel(x_ref, w_ref, o_ref, *, Ho, Wo, Cin, Cout, stride):
    """3x3 conv for one image. x_ref holds the s*s phase planes of the padded,
    already normalized/activated input; the 9 taps are contiguous slices,
    accumulated as bf16 MXU matmuls into an f32 value (no scratch)."""
    acc = jnp.zeros((Ho * Wo, Cout), jnp.float32)
    for kh in range(3):
        for kw in range(3):
            pi, pj = kh % stride, kw % stride
            oh, ow = kh // stride, kw // stride
            tap = x_ref[0, pi, pj, oh:oh + Ho, ow:ow + Wo, :]   # (Ho, Wo, Cin)
            t2 = tap.reshape(Ho * Wo, Cin).astype(jnp.bfloat16)
            t = kh * 3 + kw
            acc = acc + jnp.dot(t2, w_ref[t * Cin:(t + 1) * Cin, :],
                                preferred_element_type=jnp.float32)
    o_ref[0] = acc.reshape(Ho, Wo, Cout)


def _conv1x1_kernel(x_ref, w_ref, o_ref, *, Ho, Wo, Cin, Cout):
    v = x_ref[0].reshape(Ho * Wo, Cin).astype(jnp.bfloat16)
    o_ref[0] = jnp.dot(v, w_ref[...],
                       preferred_element_type=jnp.float32).reshape(Ho, Wo, Cout)


def _bn_sam_add_kernel(r_ref, g3_ref, b3_ref, wsam_ref, s_ref, gs_ref, bs_ref,
                       o_ref, mpad_ref, *, eps, dim_match):
    """Fused: BN3 -> SAModule (channel avg/max -> 3x3 conv(2->1) -> sigmoid ->
    scale) -> shortcut BN (if needed) -> residual add."""
    r = r_ref[...]                                        # (N, Ho, Wo, C)
    n, ho, wo, c = r.shape
    r2 = r.reshape(n * ho * wo, c)
    mean = jnp.mean(r2, axis=0, keepdims=True)
    d = r2 - mean
    var = jnp.mean(d * d, axis=0, keepdims=True)
    z = (d * (g3_ref[...] * jax.lax.rsqrt(var + eps))
         + b3_ref[...]).reshape(n, ho, wo, c)

    # Spatial attention: 2-channel (avg, max) map, zero-padded in VMEM scratch.
    avg_c = jnp.mean(z, axis=-1, keepdims=True)           # (N, Ho, Wo, 1)
    max_c = jnp.max(z, axis=-1, keepdims=True)
    mpad_ref[...] = jnp.zeros_like(mpad_ref)
    mpad_ref[:, 0, 1:1 + ho, 1:1 + wo, :] = avg_c
    mpad_ref[:, 1, 1:1 + ho, 1:1 + wo, :] = max_c

    att = jnp.zeros((n, ho, wo, 1), jnp.float32)
    for ci in range(2):
        for kh in range(3):
            for kw in range(3):
                wgt = wsam_ref[ci, kh * 3 + kw]            # SMEM scalar weight
                att = att + wgt * mpad_ref[:, ci, kh:kh + ho, kw:kw + wo, :]
    res = z * jax.nn.sigmoid(att)

    if dim_match:
        sc = s_ref[...]
    else:
        s2 = s_ref[...].reshape(n * ho * wo, c)
        ms = jnp.mean(s2, axis=0, keepdims=True)
        ds = s2 - ms
        vs = jnp.mean(ds * ds, axis=0, keepdims=True)
        sc = (ds * (gs_ref[...] * jax.lax.rsqrt(vs + eps))
              + bs_ref[...]).reshape(n, ho, wo, c)

    o_ref[...] = sc + res


# ------------------------------ op wrappers --------------------------------

def bn_act_pad(y, gamma, beta, prelu=None):
    n, h, w, c = y.shape
    with_prelu = prelu is not None
    p = prelu if with_prelu else jnp.ones((c,), jnp.float32)
    kern = functools.partial(_bn_act_pad_kernel, eps=_EPS, with_prelu=with_prelu)
    return pl.pallas_call(
        kern,
        out_shape=jax.ShapeDtypeStruct((n, h + 2, w + 2, c), jnp.float32),
        in_specs=[_VMEM, _VMEM, _VMEM, _VMEM],
        out_specs=_VMEM,
    )(y, gamma.reshape(1, c), beta.reshape(1, c), p.reshape(1, c))


def conv3x3(ypad, w, stride):
    """ypad: (N, H+2, W+2, Cin) normalized + zero-padded. w: torch (Cout, Cin, 3, 3)."""
    n, hp, wp, cin = ypad.shape
    cout = w.shape[0]
    h, wdt = hp - 2, wp - 2
    ho = (h + 2 - 3) // stride + 1
    wo = (wdt + 2 - 3) // stride + 1
    s = stride
    # 1x wrapper-side phase repack so in-kernel taps are contiguous slices.
    hr, wr = -(-hp // s) * s, -(-wp // s) * s
    if (hr, wr) != (hp, wp):
        ypad = jnp.pad(ypad, ((0, 0), (0, hr - hp), (0, wr - wp), (0, 0)))
    hh, wh = hr // s, wr // s
    assert 2 // s + ho <= hh and 2 // s + wo <= wh
    xph = ypad.reshape(n, hh, s, wh, s, cin).transpose(0, 2, 4, 1, 3, 5)
    wmat = jnp.transpose(w, (2, 3, 1, 0)).reshape(9 * cin, cout).astype(jnp.bfloat16)
    kern = functools.partial(_conv3x3_kernel, Ho=ho, Wo=wo, Cin=cin, Cout=cout,
                             stride=s)
    return pl.pallas_call(
        kern,
        out_shape=jax.ShapeDtypeStruct((n, ho, wo, cout), jnp.float32),
        grid=(n,),
        in_specs=[
            pl.BlockSpec((1, s, s, hh, wh, cin), lambda i: (i, 0, 0, 0, 0, 0)),
            pl.BlockSpec((9 * cin, cout), lambda i: (0, 0)),
        ],
        out_specs=pl.BlockSpec((1, ho, wo, cout), lambda i: (i, 0, 0, 0)),
        compiler_params=pltpu.CompilerParams(dimension_semantics=("parallel",)),
    )(xph, wmat)


def conv1x1_strided(x, w, stride):
    xs = x[:, ::stride, ::stride, :]
    n, ho, wo, cin = xs.shape
    cout = w.shape[0]
    wmat = w.reshape(cout, cin).T.astype(jnp.bfloat16)
    kern = functools.partial(_conv1x1_kernel, Ho=ho, Wo=wo, Cin=cin, Cout=cout)
    return pl.pallas_call(
        kern,
        out_shape=jax.ShapeDtypeStruct((n, ho, wo, cout), jnp.float32),
        grid=(n,),
        in_specs=[pl.BlockSpec((1, ho, wo, cin), lambda i: (i, 0, 0, 0)),
                  pl.BlockSpec((cin, cout), lambda i: (0, 0))],
        out_specs=pl.BlockSpec((1, ho, wo, cout), lambda i: (i, 0, 0, 0)),
        compiler_params=pltpu.CompilerParams(dimension_semantics=("parallel",)),
    )(xs, wmat)


def bn_sam_add(r, g3, b3, w_sam, shortcut, gs, bs, dim_match):
    n, ho, wo, c = r.shape
    wsam2 = w_sam.reshape(2, 9)                 # torch (1,2,3,3) -> (2, 9)
    kern = functools.partial(_bn_sam_add_kernel, eps=_EPS, dim_match=dim_match)
    return pl.pallas_call(
        kern,
        out_shape=jax.ShapeDtypeStruct((n, ho, wo, c), jnp.float32),
        in_specs=[_VMEM, _VMEM, _VMEM, _SMEM, _VMEM, _VMEM, _VMEM],
        out_specs=_VMEM,
        scratch_shapes=[pltpu.VMEM((n, 2, ho + 2, wo + 2, 1), jnp.float32)],
    )(r, g3.reshape(1, c), b3.reshape(1, c), wsam2, shortcut,
      gs.reshape(1, c), bs.reshape(1, c))


# --------------------------- parameters & model ----------------------------

def init_block_params(key, in_channel, out_channel, dim_match):
    ks = jax.random.split(key, 4)

    def conv_w(k, cout, cin, ksz):
        fan = cin * ksz * ksz
        return (2.0 / fan) ** 0.5 * jax.random.normal(
            k, (cout, cin, ksz, ksz), jnp.float32)

    p = {
        "bn1_g": jnp.ones((in_channel,), jnp.float32),
        "bn1_b": jnp.zeros((in_channel,), jnp.float32),
        "conv1_w": conv_w(ks[0], out_channel, in_channel, 3),
        "bn2_g": jnp.ones((out_channel,), jnp.float32),
        "bn2_b": jnp.zeros((out_channel,), jnp.float32),
        "prelu_w": jnp.full((out_channel,), 0.25, jnp.float32),
        "conv2_w": conv_w(ks[1], out_channel, out_channel, 3),
        "bn3_g": jnp.ones((out_channel,), jnp.float32),
        "bn3_b": jnp.zeros((out_channel,), jnp.float32),
        "sam_w": conv_w(ks[2], 1, 2, 3),
    }
    if not dim_match:
        p["sc_conv_w"] = conv_w(ks[3], out_channel, in_channel, 1)
        p["sc_bn_g"] = jnp.ones((out_channel,), jnp.float32)
        p["sc_bn_b"] = jnp.zeros((out_channel,), jnp.float32)
    return p


def bottleneck_ir_sam_forward(params, x, stride, dim_match):
    """x: NCHW (PyTorch layout); returns NCHW."""
    xh = jnp.transpose(x, (0, 2, 3, 1)).astype(jnp.float32)       # NHWC
    y = bn_act_pad(xh, params["bn1_g"], params["bn1_b"], prelu=None)
    y = conv3x3(y, params["conv1_w"], stride=1)
    y = bn_act_pad(y, params["bn2_g"], params["bn2_b"], prelu=params["prelu_w"])
    y = conv3x3(y, params["conv2_w"], stride=stride)
    if dim_match:
        sc = xh
        gs, bs = params["bn3_g"], params["bn3_b"]                 # unused placeholders
    else:
        sc = conv1x1_strided(xh, params["sc_conv_w"], stride)
        gs, bs = params["sc_bn_g"], params["sc_bn_b"]
    out = bn_sam_add(y, params["bn3_g"], params["bn3_b"], params["sam_w"],
                     sc, gs, bs, dim_match=dim_match)
    return jnp.transpose(out, (0, 3, 1, 2))


# ------------------------- pure-JAX reference check ------------------------

def _reference_forward(params, x, stride, dim_match, eps=_EPS):
    def bn(v, g, b):
        m = jnp.mean(v, axis=(0, 2, 3), keepdims=True)
        var = jnp.mean((v - m) ** 2, axis=(0, 2, 3), keepdims=True)
        return ((v - m) * jax.lax.rsqrt(var + eps) * g.reshape(1, -1, 1, 1)
                + b.reshape(1, -1, 1, 1))

    def conv(v, w, s, p):
        return jax.lax.conv_general_dilated(
            v, w, (s, s), [(p, p), (p, p)],
            dimension_numbers=('NCHW', 'OIHW', 'NCHW'))

    y = bn(x, params["bn1_g"], params["bn1_b"])
    y = conv(y, params["conv1_w"], 1, 1)
    y = bn(y, params["bn2_g"], params["bn2_b"])
    a = params["prelu_w"].reshape(1, -1, 1, 1)
    y = jnp.where(y >= 0, y, a * y)
    y = conv(y, params["conv2_w"], stride, 1)
    y = bn(y, params["bn3_g"], params["bn3_b"])
    avg_c = jnp.mean(y, axis=1, keepdims=True)
    max_c = jnp.max(y, axis=1, keepdims=True)
    att = conv(jnp.concatenate([avg_c, max_c], axis=1), params["sam_w"], 1, 1)
    res = y * jax.nn.sigmoid(att)
    if dim_match:
        sc = x
    else:
        sc = bn(conv(x, params["sc_conv_w"], stride, 0),
                params["sc_bn_g"], params["sc_bn_b"])
    return sc + res


if __name__ == "__main__":
    key = jax.random.PRNGKey(0)
    k1, k2, k3 = jax.random.split(key, 3)

    # Case A: dim_match=False, stride=2 (conv+BN shortcut), 32 -> 64 channels.
    pa = init_block_params(k1, 32, 64, dim_match=False)
    xa = jax.random.normal(k2, (2, 32, 16, 16), jnp.float32)
    fa = jax.jit(functools.partial(bottleneck_ir_sam_forward,
                                   stride=2, dim_match=False))
    oa = jax.block_until_ready(fa(pa, xa))
    assert oa.shape == (2, 64, 8, 8), oa.shape
    assert bool(jnp.all(jnp.isfinite(oa)))
    ra = _reference_forward(pa, xa, 2, False)
    erra = float(jnp.max(jnp.abs(oa - ra)))
    assert erra <= 0.05 * (float(jnp.max(jnp.abs(ra))) + 1.0), erra

    # Case B: dim_match=True, stride=1 (identity shortcut), 32 -> 32 channels.
    pb = init_block_params(k1, 32, 32, dim_match=True)
    xb = jax.random.normal(k3, (2, 32, 16, 16), jnp.float32)
    fb = jax.jit(functools.partial(bottleneck_ir_sam_forward,
                                   stride=1, dim_match=True))
    ob = jax.block_until_ready(fb(pb, xb))
    assert ob.shape == (2, 32, 16, 16), ob.shape
    assert bool(jnp.all(jnp.isfinite(ob)))
    rb = _reference_forward(pb, xb, 1, True)
    errb = float(jnp.max(jnp.abs(ob - rb)))
    assert errb <= 0.05 * (float(jnp.max(jnp.abs(rb))) + 1.0), errb

    print("KERNEL_OK")
</pallas_src>

<mosaic_0001>
module attributes {stable_mosaic.version = 11 : i64} {
  func.func @_bn_act_pad_kernel(%arg0: memref<2x16x16x32xf32, #tpu.memory_space<vmem>>, %arg1: memref<1x32xf32, #tpu.memory_space<vmem>>, %arg2: memref<1x32xf32, #tpu.memory_space<vmem>>, %arg3: memref<1x32xf32, #tpu.memory_space<vmem>>, %arg4: memref<2x18x18x32xf32, #tpu.memory_space<vmem>>) attributes {dimension_semantics = [], scalar_prefetch = 0 : i64, scratch_operands = 0 : i64, tpu.core_type = #tpu.core_type<tc>} {
    %c0 = arith.constant 0 : index
    %c0_0 = arith.constant 0 : index
    %c0_1 = arith.constant 0 : index
    %c0_2 = arith.constant 0 : index
    %0 = vector.load %arg0[%c0, %c0_0, %c0_1, %c0_2] : memref<2x16x16x32xf32, #tpu.memory_space<vmem>>, vector<2x16x16x32xf32>
    %1 = vector.shape_cast %0 : vector<2x16x16x32xf32> to vector<512x32xf32>
    %cst = arith.constant dense<0.000000e+00> : vector<32xf32>
    %2 = vector.multi_reduction <add>, %1, %cst [0] : vector<512x32xf32> to vector<32xf32>
    %3 = vector.shape_cast %2 : vector<32xf32> to vector<1x32xf32>
    %cst_3 = arith.constant 5.120000e+02 : f32
    %4 = vector.broadcast %cst_3 : f32 to vector<1x32xf32>
    %5 = arith.divf %3, %4 : vector<1x32xf32>
    %6 = vector.broadcast %5 : vector<1x32xf32> to vector<512x32xf32>
    %7 = arith.subf %1, %6 : vector<512x32xf32>
    %8 = arith.mulf %7, %7 : vector<512x32xf32>
    %cst_4 = arith.constant dense<0.000000e+00> : vector<32xf32>
    %9 = vector.multi_reduction <add>, %8, %cst_4 [0] : vector<512x32xf32> to vector<32xf32>
    %10 = vector.shape_cast %9 : vector<32xf32> to vector<1x32xf32>
    %cst_5 = arith.constant 5.120000e+02 : f32
    %11 = vector.broadcast %cst_5 : f32 to vector<1x32xf32>
    %12 = arith.divf %10, %11 : vector<1x32xf32>
    %c0_6 = arith.constant 0 : index
    %c0_7 = arith.constant 0 : index
    %13 = vector.load %arg1[%c0_6, %c0_7] : memref<1x32xf32, #tpu.memory_space<vmem>>, vector<1x32xf32>
    %cst_8 = arith.constant 9.99999974E-6 : f32
    %14 = vector.broadcast %cst_8 : f32 to vector<1x32xf32>
    %15 = arith.addf %12, %14 : vector<1x32xf32>
    %16 = math.rsqrt %15 : vector<1x32xf32>
    %17 = arith.mulf %13, %16 : vector<1x32xf32>
    %18 = vector.broadcast %17 : vector<1x32xf32> to vector<512x32xf32>
    %19 = arith.mulf %7, %18 : vector<512x32xf32>
    %c0_9 = arith.constant 0 : index
    %c0_10 = arith.constant 0 : index
    %20 = vector.load %arg2[%c0_9, %c0_10] : memref<1x32xf32, #tpu.memory_space<vmem>>, vector<1x32xf32>
    %21 = vector.broadcast %20 : vector<1x32xf32> to vector<512x32xf32>
    %22 = arith.addf %19, %21 : vector<512x32xf32>
    %cst_11 = arith.constant 0.000000e+00 : f32
    %23 = vector.broadcast %cst_11 : f32 to vector<2x18x18x32xf32>
    %c0_12 = arith.constant 0 : index
    %c0_13 = arith.constant 0 : index
    %c0_14 = arith.constant 0 : index
    %c0_15 = arith.constant 0 : index
    %24 = vector.load %arg4[%c0_12, %c0_13, %c0_14, %c0_15] : memref<2x18x18x32xf32, #tpu.memory_space<vmem>>, vector<2x18x18x32xf32>
    tpu.vector_store %arg4[%c0_12, %c0_13, %c0_14, %c0_15], %23 {strides = array<i32>} : memref<2x18x18x32xf32, #tpu.memory_space<vmem>>, vector<2x18x18x32xf32>,
    %25 = vector.shape_cast %22 : vector<512x32xf32> to vector<2x16x16x32xf32>
    %c0_16 = arith.constant 0 : index
    %c1 = arith.constant 1 : index
    %c1_17 = arith.constant 1 : index
    %c0_18 = arith.constant 0 : index
    %26 = vector.load %arg4[%c0_16, %c1, %c1_17, %c0_18] : memref<2x18x18x32xf32, #tpu.memory_space<vmem>>, vector<2x16x16x32xf32>
    tpu.vector_store %arg4[%c0_16, %c1, %c1_17, %c0_18], %25 {strides = array<i32>} : memref<2x18x18x32xf32, #tpu.memory_space<vmem>>, vector<2x16x16x32xf32>,
    return
  }
}

module attributes {stable_mosaic.version = 11 : i64} {
  func.func @_conv3x3_kernel(%arg0: i32, %arg1: memref<1x1x1x18x18x32xf32, #tpu.memory_space<vmem>>, %arg2: memref<288x64xbf16, #tpu.memory_space<vmem>>, %arg3: memref<1x16x16x64xf32, #tpu.memory_space<vmem>>) attributes {dimension_semantics = [#tpu.dimension_semantics<parallel>], iteration_bounds = array<i64: 2>, scalar_prefetch = 0 : i64, scratch_operands = 0 : i64, tpu.core_type = #tpu.core_type<tc>, window_params = [{transform_indices = @transform_0, window_bounds = array<i64: 1, 1, 1, 18, 18, 32>}, {pipeline_mode = #tpu.pipeline_mode<synchronous>, transform_indices = @transform_1, window_bounds = array<i64: 288, 64>}, {transform_indices = @transform_2, window_bounds = array<i64: 1, 16, 16, 64>}]} {
    %cst = arith.constant 0.000000e+00 : f32
    %0 = vector.broadcast %cst : f32 to vector<256x64xf32>
    %c0 = arith.constant 0 : index
    %c0_0 = arith.constant 0 : index
    %c0_1 = arith.constant 0 : index
    %c0_2 = arith.constant 0 : index
    %c0_3 = arith.constant 0 : index
    %c0_4 = arith.constant 0 : index
    %1 = vector.load %arg1[%c0, %c0_0, %c0_1, %c0_2, %c0_3, %c0_4] : memref<1x1x1x18x18x32xf32, #tpu.memory_space<vmem>>, vector<1x1x1x16x16x32xf32>
    %2 = vector.shape_cast %1 : vector<1x1x1x16x16x32xf32> to vector<16x16x32xf32>
    %3 = vector.shape_cast %2 : vector<16x16x32xf32> to vector<256x32xf32>
    %4 = arith.truncf %3 : vector<256x32xf32> to vector<256x32xbf16>
    %c0_5 = arith.constant 0 : index
    %c0_6 = arith.constant 0 : index
    %5 = vector.load %arg2[%c0_5, %c0_6] : memref<288x64xbf16, #tpu.memory_space<vmem>>, vector<32x64xbf16>
    %cst_7 = arith.constant dense<0.000000e+00> : vector<256x64xf32>
    %6 = tpu.matmul %4, %5, %cst_7 {dimension_numbers = #tpu.dot_dimension_numbers<[1], [0], [0], [1], [0, 0, 1, 1], [], []>} : vector<256x32xbf16>, vector<32x64xbf16>, vector<256x64xf32> -> vector<256x64xf32>
    %7 = arith.addf %0, %6 : vector<256x64xf32>
    %c0_8 = arith.constant 0 : index
    %c0_9 = arith.constant 0 : index
    %c0_10 = arith.constant 0 : index
    %c0_11 = arith.constant 0 : index
    %c1 = arith.constant 1 : index
    %c0_12 = arith.constant 0 : index
    %8 = vector.load %arg1[%c0_8, %c0_9, %c0_10, %c0_11, %c1, %c0_12] : memref<1x1x1x18x18x32xf32, #tpu.memory_space<vmem>>, vector<1x1x1x16x16x32xf32>
    %9 = vector.shape_cast %8 : vector<1x1x1x16x16x32xf32> to vector<16x16x32xf32>
    %10 = vector.shape_cast %9 : vector<16x16x32xf32> to vector<256x32xf32>
    %11 = arith.truncf %10 : vector<256x32xf32> to vector<256x32xbf16>
    %c32 = arith.constant 32 : index
    %c0_13 = arith.constant 0 : index
    %12 = vector.load %arg2[%c32, %c0_13] : memref<288x64xbf16, #tpu.memory_space<vmem>>, vector<32x64xbf16>
    %cst_14 = arith.constant dense<0.000000e+00> : vector<256x64xf32>
    %13 = tpu.matmul %11, %12, %cst_14 {dimension_numbers = #tpu.dot_dimension_numbers<[1], [0], [0], [1], [0, 0, 1, 1], [], []>} : vector<256x32xbf16>, vector<32x64xbf16>, vector<256x64xf32> -> vector<256x64xf32>
    %14 = arith.addf %7, %13 : vector<256x64xf32>
    %c0_15 = arith.constant 0 : index
    %c0_16 = arith.constant 0 : index
    %c0_17 = arith.constant 0 : index
    %c0_18 = arith.constant 0 : index
    %c2 = arith.constant 2 : index
    %c0_19 = arith.constant 0 : index
    %15 = vector.load %arg1[%c0_15, %c0_16, %c0_17, %c0_18, %c2, %c0_19] : memref<1x1x1x18x18x32xf32, #tpu.memory_space<vmem>>, vector<1x1x1x16x16x32xf32>
    %16 = vector.shape_cast %15 : vector<1x1x1x16x16x32xf32> to vector<16x16x32xf32>
    %17 = vector.shape_cast %16 : vector<16x16x32xf32> to vector<256x32xf32>
    %18 = arith.truncf %17 : vector<256x32xf32> to vector<256x32xbf16>
    %c64 = arith.constant 64 : index
    %c0_20 = arith.constant 0 : index
    %19 = vector.load %arg2[%c64, %c0_20] : memref<288x64xbf16, #tpu.memory_space<vmem>>, vector<32x64xbf16>
    %cst_21 = arith.constant dense<0.000000e+00> : vector<256x64xf32>
    %20 = tpu.matmul %18, %19, %cst_21 {dimension_numbers = #tpu.dot_dimension_numbers<[1], [0], [0], [1], [0, 0, 1, 1], [], []>} : vector<256x32xbf16>, vector<32x64xbf16>, vector<256x64xf32> -> vector<256x64xf32>
    %21 = arith.addf %14, %20 : vector<256x64xf32>
    %c0_22 = arith.constant 0 : index
    %c0_23 = arith.constant 0 : index
    %c0_24 = arith.constant 0 : index
    %c1_25 = arith.constant 1 : index
    %c0_26 = arith.constant 0 : index
    %c0_27 = arith.constant 0 : index
    %22 = vector.load %arg1[%c0_22, %c0_23, %c0_24, %c1_25, %c0_26, %c0_27] : memref<1x1x1x18x18x32xf32, #tpu.memory_space<vmem>>, vector<1x1x1x16x16x32xf32>
    %23 = vector.shape_cast %22 : vector<1x1x1x16x16x32xf32> to vector<16x16x32xf32>
    %24 = vector.shape_cast %23 : vector<16x16x32xf32> to vector<256x32xf32>
    %25 = arith.truncf %24 : vector<256x32xf32> to vector<256x32xbf16>
    %c96 = arith.constant 96 : index
    %c0_28 = arith.constant 0 : index
    %26 = vector.load %arg2[%c96, %c0_28] : memref<288x64xbf16, #tpu.memory_space<vmem>>, vector<32x64xbf16>
    %cst_29 = arith.constant dense<0.000000e+00> : vector<256x64xf32>
    %27 = tpu.matmul %25, %26, %cst_29 {dimension_numbers = #tpu.dot_dimension_numbers<[1], [0], [0], [1], [0, 0, 1, 1], [], []>} : vector<256x32xbf16>, vector<32x64xbf16>, vector<256x64xf32> -> vector<256x64xf32>
    %28 = arith.addf %21, %27 : vector<256x64xf32>
    %c0_30 = arith.constant 0 : index
    %c0_31 = arith.constant 0 : index
    %c0_32 = arith.constant 0 : index
    %c1_33 = arith.constant 1 : index
    %c1_34 = arith.constant 1 : index
    %c0_35 = arith.constant 0 : index
    %29 = vector.load %arg1[%c0_30, %c0_31, %c0_32, %c1_33, %c1_34, %c0_35] : memref<1x1x1x18x18x32xf32, #tpu.memory_space<vmem>>, vector<1x1x1x16x16x32xf32>
    %30 = vector.shape_cast %29 : vector<1x1x1x16x16x32xf32> to vector<16x16x32xf32>
    %31 = vector.shape_cast %30 : vector<16x16x32xf32> to vector<256x32xf32>
    %32 = arith.truncf %31 : vector<256x32xf32> to vector<256x32xbf16>
    %c128 = arith.constant 128 : index
    %c0_36 = arith.constant 0 : index
    %33 = vector.load %arg2[%c128, %c0_36] : memref<288x64xbf16, #tpu.memory_space<vmem>>, vector<32x64xbf16>
    %cst_37 = arith.constant dense<0.000000e+00> : vector<256x64xf32>
    %34 = tpu.matmul %32, %33, %cst_37 {dimension_numbers = #tpu.dot_dimension_numbers<[1], [0], [0], [1], [0, 0, 1, 1], [], []>} : vector<256x32xbf16>, vector<32x64xbf16>, vector<256x64xf32> -> vector<256x64xf32>
    %35 = arith.addf %28, %34 : vector<256x64xf32>
    %c0_38 = arith.constant 0 : index
    %c0_39 = arith.constant 0 : index
    %c0_40 = arith.constant 0 : index
    %c1_41 = arith.constant 1 : index
    %c2_42 = arith.constant 2 : index
    %c0_43 = arith.constant 0 : index
    %36 = vector.load %arg1[%c0_38, %c0_39, %c0_40, %c1_41, %c2_42, %c0_43] : memref<1x1x1x18x18x32xf32, #tpu.memory_space<vmem>>, vector<1x1x1x16x16x32xf32>
    %37 = vector.shape_cast %36 : vector<1x1x1x16x16x32xf32> to vector<16x16x32xf32>
    %38 = vector.shape_cast %37 : vector<16x16x32xf32> to vector<256x32xf32>
    %39 = arith.truncf %38 : vector<256x32xf32> to vector<256x32xbf16>
    %c160 = arith.constant 160 : index
    %c0_44 = arith.constant 0 : index
    %40 = vector.load %arg2[%c160, %c0_44] : memref<288x64xbf16, #tpu.memory_space<vmem>>, vector<32x64xbf16>
    %cst_45 = arith.constant dense<0.000000e+00> : vector<256x64xf32>
    %41 = tpu.matmul %39, %40, %cst_45 {dimension_numbers = #tpu.dot_dimension_numbers<[1], [0], [0], [1], [0, 0, 1, 1], [], []>} : vector<256x32xbf16>, vector<32x64xbf16>, vector<256x64xf32> -> vector<256x64xf32>
    %42 = arith.addf %35, %41 : vector<256x64xf32>
    %c0_46 = arith.constant 0 : index
    %c0_47 = arith.constant 0 : index
    %c0_48 = arith.constant 0 : index
    %c2_49 = arith.constant 2 : index
    %c0_50 = arith.constant 0 : index
    %c0_51 = arith.constant 0 : index
    %43 = vector.load %arg1[%c0_46, %c0_47, %c0_48, %c2_49, %c0_50, %c0_51] : memref<1x1x1x18x18x32xf32, #tpu.memory_space<vmem>>, vector<1x1x1x16x16x32xf32>
    %44 = vector.shape_cast %43 : vector<1x1x1x16x16x32xf32> to vector<16x16x32xf32>
    %45 = vector.shape_cast %44 : vector<16x16x32xf32> to vector<256x32xf32>
    %46 = arith.truncf %45 : vector<256x32xf32> to vector<256x32xbf16>
    %c192 = arith.constant 192 : index
    %c0_52 = arith.constant 0 : index
    %47 = vector.load %arg2[%c192, %c0_52] : memref<288x64xbf16, #tpu.memory_space<vmem>>, vector<32x64xbf16>
    %cst_53 = arith.constant dense<0.000000e+00> : vector<256x64xf32>
    %48 = tpu.matmul %46, %47, %cst_53 {dimension_numbers = #tpu.dot_dimension_numbers<[1], [0], [0], [1], [0, 0, 1, 1], [], []>} : vector<256x32xbf16>, vector<32x64xbf16>, vector<256x64xf32> -> vector<256x64xf32>
    %49 = arith.addf %42, %48 : vector<256x64xf32>
    %c0_54 = arith.constant 0 : index
    %c0_55 = arith.constant 0 : index
    %c0_56 = arith.constant 0 : index
    %c2_57 = arith.constant 2 : index
    %c1_58 = arith.constant 1 : index
    %c0_59 = arith.constant 0 : index
    %50 = vector.load %arg1[%c0_54, %c0_55, %c0_56, %c2_57, %c1_58, %c0_59] : memref<1x1x1x18x18x32xf32, #tpu.memory_space<vmem>>, vector<1x1x1x16x16x32xf32>
    %51 = vector.shape_cast %50 : vector<1x1x1x16x16x32xf32> to vector<16x16x32xf32>
    %52 = vector.shape_cast %51 : vector<16x16x32xf32> to vector<256x32xf32>
    %53 = arith.truncf %52 : vector<256x32xf32> to vector<256x32xbf16>
    %c224 = arith.constant 224 : index
    %c0_60 = arith.constant 0 : index
    %54 = vector.load %arg2[%c224, %c0_60] : memref<288x64xbf16, #tpu.memory_space<vmem>>, vector<32x64xbf16>
    %cst_61 = arith.constant dense<0.000000e+00> : vector<256x64xf32>
    %55 = tpu.matmul %53, %54, %cst_61 {dimension_numbers = #tpu.dot_dimension_numbers<[1], [0], [0], [1], [0, 0, 1, 1], [], []>} : vector<256x32xbf16>, vector<32x64xbf16>, vector<256x64xf32> -> vector<256x64xf32>
    %56 = arith.addf %49, %55 : vector<256x64xf32>
    %c0_62 = arith.constant 0 : index
    %c0_63 = arith.constant 0 : index
    %c0_64 = arith.constant 0 : index
    %c2_65 = arith.constant 2 : index
    %c2_66 = arith.constant 2 : index
    %c0_67 = arith.constant 0 : index
    %57 = vector.load %arg1[%c0_62, %c0_63, %c0_64, %c2_65, %c2_66, %c0_67] : memref<1x1x1x18x18x32xf32, #tpu.memory_space<vmem>>, vector<1x1x1x16x16x32xf32>
    %58 = vector.shape_cast %57 : vector<1x1x1x16x16x32xf32> to vector<16x16x32xf32>
    %59 = vector.shape_cast %58 : vector<16x16x32xf32> to vector<256x32xf32>
    %60 = arith.truncf %59 : vector<256x32xf32> to vector<256x32xbf16>
    %c256 = arith.constant 256 : index
    %c0_68 = arith.constant 0 : index
    %61 = vector.load %arg2[%c256, %c0_68] : memref<288x64xbf16, #tpu.memory_space<vmem>>, vector<32x64xbf16>
    %cst_69 = arith.constant dense<0.000000e+00> : vector<256x64xf32>
    %62 = tpu.matmul %60, %61, %cst_69 {dimension_numbers = #tpu.dot_dimension_numbers<[1], [0], [0], [1], [0, 0, 1, 1], [], []>} : vector<256x32xbf16>, vector<32x64xbf16>, vector<256x64xf32> -> vector<256x64xf32>
    %63 = arith.addf %56, %62 : vector<256x64xf32>
    %64 = vector.shape_cast %63 : vector<256x64xf32> to vector<16x16x64xf32>
    %c0_70 = arith.constant 0 : index
    %c0_71 = arith.constant 0 : index
    %c0_72 = arith.constant 0 : index
    %c0_73 = arith.constant 0 : index
    %65 = vector.load %arg3[%c0_70, %c0_71, %c0_72, %c0_73] : memref<1x16x16x64xf32, #tpu.memory_space<vmem>>, vector<1x16x16x64xf32>
    %66 = vector.shape_cast %65 : vector<1x16x16x64xf32> to vector<16x16x64xf32>
    %67 = vector.shape_cast %64 : vector<16x16x64xf32> to vector<1x16x16x64xf32>
    tpu.vector_store %arg3[%c0_70, %c0_71, %c0_72, %c0_73], %67 {strides = array<i32>} : memref<1x16x16x64xf32, #tpu.memory_space<vmem>>, vector<1x16x16x64xf32>,
    return
  }
  func.func @transform_0(%arg0: i32) -> (i32, i32, i32, i32, i32, i32) {
    %c0_i32 = arith.constant 0 : i32
    %c0_i32_0 = arith.constant 0 : i32
    %c0_i32_1 = arith.constant 0 : i32
    %c0_i32_2 = arith.constant 0 : i32
    %c0_i32_3 = arith.constant 0 : i32
    %c0_i32_4 = arith.constant 0 : i32
    return %arg0, %c0_i32, %c0_i32_0, %c0_i32_1, %c0_i32_2, %c0_i32_3 : i32, i32, i32, i32, i32, i32
  }
  func.func @transform_1(%arg0: i32) -> (i32, i32) {
    %c0_i32 = arith.constant 0 : i32
    %c0_i32_0 = arith.constant 0 : i32
    %c0_i32_1 = arith.constant 0 : i32
    return %c0_i32, %c0_i32_0 : i32, i32
  }
  func.func @transform_2(%arg0: i32) -> (i32, i32, i32, i32) {
    %c0_i32 = arith.constant 0 : i32
    %c0_i32_0 = arith.constant 0 : i32
    %c0_i32_1 = arith.constant 0 : i32
    %c0_i32_2 = arith.constant 0 : i32
    return %arg0, %c0_i32, %c0_i32_0, %c0_i32_1 : i32, i32, i32, i32
  }
}

module attributes {stable_mosaic.version = 11 : i64} {
  func.func @_bn_act_pad_kernel(%arg0: memref<2x16x16x64xf32, #tpu.memory_space<vmem>>, %arg1: memref<1x64xf32, #tpu.memory_space<vmem>>, %arg2: memref<1x64xf32, #tpu.memory_space<vmem>>, %arg3: memref<1x64xf32, #tpu.memory_space<vmem>>, %arg4: memref<2x18x18x64xf32, #tpu.memory_space<vmem>>) attributes {dimension_semantics = [], scalar_prefetch = 0 : i64, scratch_operands = 0 : i64, tpu.core_type = #tpu.core_type<tc>} {
    %c0 = arith.constant 0 : index
    %c0_0 = arith.constant 0 : index
    %c0_1 = arith.constant 0 : index
    %c0_2 = arith.constant 0 : index
    %0 = vector.load %arg0[%c0, %c0_0, %c0_1, %c0_2] : memref<2x16x16x64xf32, #tpu.memory_space<vmem>>, vector<2x16x16x64xf32>
    %1 = vector.shape_cast %0 : vector<2x16x16x64xf32> to vector<512x64xf32>
    %cst = arith.constant dense<0.000000e+00> : vector<64xf32>
    %2 = vector.multi_reduction <add>, %1, %cst [0] : vector<512x64xf32> to vector<64xf32>
    %3 = vector.shape_cast %2 : vector<64xf32> to vector<1x64xf32>
    %cst_3 = arith.constant 5.120000e+02 : f32
    %4 = vector.broadcast %cst_3 : f32 to vector<1x64xf32>
    %5 = arith.divf %3, %4 : vector<1x64xf32>
    %6 = vector.broadcast %5 : vector<1x64xf32> to vector<512x64xf32>
    %7 = arith.subf %1, %6 : vector<512x64xf32>
    %8 = arith.mulf %7, %7 : vector<512x64xf32>
    %cst_4 = arith.constant dense<0.000000e+00> : vector<64xf32>
    %9 = vector.multi_reduction <add>, %8, %cst_4 [0] : vector<512x64xf32> to vector<64xf32>
    %10 = vector.shape_cast %9 : vector<64xf32> to vector<1x64xf32>
    %cst_5 = arith.constant 5.120000e+02 : f32
    %11 = vector.broadcast %cst_5 : f32 to vector<1x64xf32>
    %12 = arith.divf %10, %11 : vector<1x64xf32>
    %c0_6 = arith.constant 0 : index
    %c0_7 = arith.constant 0 : index
    %13 = vector.load %arg1[%c0_6, %c0_7] : memref<1x64xf32, #tpu.memory_space<vmem>>, vector<1x64xf32>
    %cst_8 = arith.constant 9.99999974E-6 : f32
    %14 = vector.broadcast %cst_8 : f32 to vector<1x64xf32>
    %15 = arith.addf %12, %14 : vector<1x64xf32>
    %16 = math.rsqrt %15 : vector<1x64xf32>
    %17 = arith.mulf %13, %16 : vector<1x64xf32>
    %18 = vector.broadcast %17 : vector<1x64xf32> to vector<512x64xf32>
    %19 = arith.mulf %7, %18 : vector<512x64xf32>
    %c0_9 = arith.constant 0 : index
    %c0_10 = arith.constant 0 : index
    %20 = vector.load %arg2[%c0_9, %c0_10] : memref<1x64xf32, #tpu.memory_space<vmem>>, vector<1x64xf32>
    %21 = vector.broadcast %20 : vector<1x64xf32> to vector<512x64xf32>
    %22 = arith.addf %19, %21 : vector<512x64xf32>
    %c0_11 = arith.constant 0 : index
    %c0_12 = arith.constant 0 : index
    %23 = vector.load %arg3[%c0_11, %c0_12] : memref<1x64xf32, #tpu.memory_space<vmem>>, vector<1x64xf32>
    %cst_13 = arith.constant 0.000000e+00 : f32
    %24 = vector.broadcast %cst_13 : f32 to vector<512x64xf32>
    %25 = arith.cmpf oge, %22, %24 : vector<512x64xf32>
    %26 = vector.broadcast %23 : vector<1x64xf32> to vector<512x64xf32>
    %27 = arith.mulf %26, %22 : vector<512x64xf32>
    %28 = arith.select %25, %22, %27 : vector<512x64xi1>, vector<512x64xf32>
    %cst_14 = arith.constant 0.000000e+00 : f32
    %29 = vector.broadcast %cst_14 : f32 to vector<2x18x18x64xf32>
    %c0_15 = arith.constant 0 : index
    %c0_16 = arith.constant 0 : index
    %c0_17 = arith.constant 0 : index
    %c0_18 = arith.constant 0 : index
    %30 = vector.load %arg4[%c0_15, %c0_16, %c0_17, %c0_18] : memref<2x18x18x64xf32, #tpu.memory_space<vmem>>, vector<2x18x18x64xf32>
    tpu.vector_store %arg4[%c0_15, %c0_16, %c0_17, %c0_18], %29 {strides = array<i32>} : memref<2x18x18x64xf32, #tpu.memory_space<vmem>>, vector<2x18x18x64xf32>,
    %31 = vector.shape_cast %28 : vector<512x64xf32> to vector<2x16x16x64xf32>
    %c0_19 = arith.constant 0 : index
    %c1 = arith.constant 1 : index
    %c1_20 = arith.constant 1 : index
    %c0_21 = arith.constant 0 : index
    %32 = vector.load %arg4[%c0_19, %c1, %c1_20, %c0_21] : memref<2x18x18x64xf32, #tpu.memory_space<vmem>>, vector<2x16x16x64xf32>
    tpu.vector_store %arg4[%c0_19, %c1, %c1_20, %c0_21], %31 {strides = array<i32>} : memref<2x18x18x64xf32, #tpu.memory_space<vmem>>, vector<2x16x16x64xf32>,
    return
  }
}

module attributes {stable_mosaic.version = 11 : i64} {
  func.func @_conv1x1_kernel(%arg0: i32, %arg1: memref<1x8x8x32xf32, #tpu.memory_space<vmem>>, %arg2: memref<32x64xbf16, #tpu.memory_space<vmem>>, %arg3: memref<1x8x8x64xf32, #tpu.memory_space<vmem>>) attributes {dimension_semantics = [#tpu.dimension_semantics<parallel>], iteration_bounds = array<i64: 2>, scalar_prefetch = 0 : i64, scratch_operands = 0 : i64, tpu.core_type = #tpu.core_type<tc>, window_params = [{transform_indices = @transform_0, window_bounds = array<i64: 1, 8, 8, 32>}, {pipeline_mode = #tpu.pipeline_mode<synchronous>, transform_indices = @transform_1, window_bounds = array<i64: 32, 64>}, {transform_indices = @transform_2, window_bounds = array<i64: 1, 8, 8, 64>}]} {
    %c0 = arith.constant 0 : index
    %c0_0 = arith.constant 0 : index
    %c0_1 = arith.constant 0 : index
    %c0_2 = arith.constant 0 : index
    %0 = vector.load %arg1[%c0, %c0_0, %c0_1, %c0_2] : memref<1x8x8x32xf32, #tpu.memory_space<vmem>>, vector<1x8x8x32xf32>
    %1 = vector.shape_cast %0 : vector<1x8x8x32xf32> to vector<8x8x32xf32>
    %2 = vector.shape_cast %1 : vector<8x8x32xf32> to vector<64x32xf32>
    %3 = arith.truncf %2 : vector<64x32xf32> to vector<64x32xbf16>
    %c0_3 = arith.constant 0 : index
    %c0_4 = arith.constant 0 : index
    %4 = vector.load %arg2[%c0_3, %c0_4] : memref<32x64xbf16, #tpu.memory_space<vmem>>, vector<32x64xbf16>
    %cst = arith.constant dense<0.000000e+00> : vector<64x64xf32>
    %5 = tpu.matmul %3, %4, %cst {dimension_numbers = #tpu.dot_dimension_numbers<[1], [0], [0], [1], [0, 0, 1, 1], [], []>} : vector<64x32xbf16>, vector<32x64xbf16>, vector<64x64xf32> -> vector<64x64xf32>
    %6 = vector.shape_cast %5 : vector<64x64xf32> to vector<8x8x64xf32>
    %c0_5 = arith.constant 0 : index
    %c0_6 = arith.constant 0 : index
    %c0_7 = arith.constant 0 : index
    %c0_8 = arith.constant 0 : index
    %7 = vector.load %arg3[%c0_5, %c0_6, %c0_7, %c0_8] : memref<1x8x8x64xf32, #tpu.memory_space<vmem>>, vector<1x8x8x64xf32>
    %8 = vector.shape_cast %7 : vector<1x8x8x64xf32> to vector<8x8x64xf32>
    %9 = vector.shape_cast %6 : vector<8x8x64xf32> to vector<1x8x8x64xf32>
    tpu.vector_store %arg3[%c0_5, %c0_6, %c0_7, %c0_8], %9 {strides = array<i32>} : memref<1x8x8x64xf32, #tpu.memory_space<vmem>>, vector<1x8x8x64xf32>,
    return
  }
  func.func @transform_0(%arg0: i32) -> (i32, i32, i32, i32) {
    %c0_i32 = arith.constant 0 : i32
    %c0_i32_0 = arith.constant 0 : i32
    %c0_i32_1 = arith.constant 0 : i32
    %c0_i32_2 = arith.constant 0 : i32
    return %arg0, %c0_i32, %c0_i32_0, %c0_i32_1 : i32, i32, i32, i32
  }
  func.func @transform_1(%arg0: i32) -> (i32, i32) {
    %c0_i32 = arith.constant 0 : i32
    %c0_i32_0 = arith.constant 0 : i32
    %c0_i32_1 = arith.constant 0 : i32
    return %c0_i32, %c0_i32_0 : i32, i32
  }
  func.func @transform_2(%arg0: i32) -> (i32, i32, i32, i32) {
    %c0_i32 = arith.constant 0 : i32
    %c0_i32_0 = arith.constant 0 : i32
    %c0_i32_1 = arith.constant 0 : i32
    %c0_i32_2 = arith.constant 0 : i32
    return %arg0, %c0_i32, %c0_i32_0, %c0_i32_1 : i32, i32, i32, i32
  }
}

module attributes {stable_mosaic.version = 11 : i64} {
  func.func @_conv3x3_kernel(%arg0: i32, %arg1: memref<1x2x2x9x9x64xf32, #tpu.memory_space<vmem>>, %arg2: memref<576x64xbf16, #tpu.memory_space<vmem>>, %arg3: memref<1x8x8x64xf32, #tpu.memory_space<vmem>>) attributes {dimension_semantics = [#tpu.dimension_semantics<parallel>], iteration_bounds = array<i64: 2>, scalar_prefetch = 0 : i64, scratch_operands = 0 : i64, tpu.core_type = #tpu.core_type<tc>, window_params = [{transform_indices = @transform_0, window_bounds = array<i64: 1, 2, 2, 9, 9, 64>}, {pipeline_mode = #tpu.pipeline_mode<synchronous>, transform_indices = @transform_1, window_bounds = array<i64: 576, 64>}, {transform_indices = @transform_2, window_bounds = array<i64: 1, 8, 8, 64>}]} {
    %cst = arith.constant 0.000000e+00 : f32
    %0 = vector.broadcast %cst : f32 to vector<64x64xf32>
    %c0 = arith.constant 0 : index
    %c0_0 = arith.constant 0 : index
    %c0_1 = arith.constant 0 : index
    %c0_2 = arith.constant 0 : index
    %c0_3 = arith.constant 0 : index
    %c0_4 = arith.constant 0 : index
    %1 = vector.load %arg1[%c0, %c0_0, %c0_1, %c0_2, %c0_3, %c0_4] : memref<1x2x2x9x9x64xf32, #tpu.memory_space<vmem>>, vector<1x1x1x8x8x64xf32>
    %2 = vector.shape_cast %1 : vector<1x1x1x8x8x64xf32> to vector<8x8x64xf32>
    %3 = vector.shape_cast %2 : vector<8x8x64xf32> to vector<64x64xf32>
    %4 = arith.truncf %3 : vector<64x64xf32> to vector<64x64xbf16>
    %c0_5 = arith.constant 0 : index
    %c0_6 = arith.constant 0 : index
    %5 = vector.load %arg2[%c0_5, %c0_6] : memref<576x64xbf16, #tpu.memory_space<vmem>>, vector<64x64xbf16>
    %cst_7 = arith.constant dense<0.000000e+00> : vector<64x64xf32>
    %6 = tpu.matmul %4, %5, %cst_7 {dimension_numbers = #tpu.dot_dimension_numbers<[1], [0], [0], [1], [0, 0, 1, 1], [], []>} : vector<64x64xbf16>, vector<64x64xbf16>, vector<64x64xf32> -> vector<64x64xf32>
    %7 = arith.addf %0, %6 : vector<64x64xf32>
    %c0_8 = arith.constant 0 : index
    %c0_9 = arith.constant 0 : index
    %c1 = arith.constant 1 : index
    %c0_10 = arith.constant 0 : index
    %c0_11 = arith.constant 0 : index
    %c0_12 = arith.constant 0 : index
    %8 = vector.load %arg1[%c0_8, %c0_9, %c1, %c0_10, %c0_11, %c0_12] : memref<1x2x2x9x9x64xf32, #tpu.memory_space<vmem>>, vector<1x1x1x8x8x64xf32>
    %9 = vector.shape_cast %8 : vector<1x1x1x8x8x64xf32> to vector<8x8x64xf32>
    %10 = vector.shape_cast %9 : vector<8x8x64xf32> to vector<64x64xf32>
    %11 = arith.truncf %10 : vector<64x64xf32> to vector<64x64xbf16>
    %c64 = arith.constant 64 : index
    %c0_13 = arith.constant 0 : index
    %12 = vector.load %arg2[%c64, %c0_13] : memref<576x64xbf16, #tpu.memory_space<vmem>>, vector<64x64xbf16>
    %cst_14 = arith.constant dense<0.000000e+00> : vector<64x64xf32>
    %13 = tpu.matmul %11, %12, %cst_14 {dimension_numbers = #tpu.dot_dimension_numbers<[1], [0], [0], [1], [0, 0, 1, 1], [], []>} : vector<64x64xbf16>, vector<64x64xbf16>, vector<64x64xf32> -> vector<64x64xf32>
    %14 = arith.addf %7, %13 : vector<64x64xf32>
    %c0_15 = arith.constant 0 : index
    %c0_16 = arith.constant 0 : index
    %c0_17 = arith.constant 0 : index
    %c0_18 = arith.constant 0 : index
    %c1_19 = arith.constant 1 : index
    %c0_20 = arith.constant 0 : index
    %15 = vector.load %arg1[%c0_15, %c0_16, %c0_17, %c0_18, %c1_19, %c0_20] : memref<1x2x2x9x9x64xf32, #tpu.memory_space<vmem>>, vector<1x1x1x8x8x64xf32>
    %16 = vector.shape_cast %15 : vector<1x1x1x8x8x64xf32> to vector<8x8x64xf32>
    %17 = vector.shape_cast %16 : vector<8x8x64xf32> to vector<64x64xf32>
    %18 = arith.truncf %17 : vector<64x64xf32> to vector<64x64xbf16>
    %c128 = arith.constant 128 : index
    %c0_21 = arith.constant 0 : index
    %19 = vector.load %arg2[%c128, %c0_21] : memref<576x64xbf16, #tpu.memory_space<vmem>>, vector<64x64xbf16>
    %cst_22 = arith.constant dense<0.000000e+00> : vector<64x64xf32>
    %20 = tpu.matmul %18, %19, %cst_22 {dimension_numbers = #tpu.dot_dimension_numbers<[1], [0], [0], [1], [0, 0, 1, 1], [], []>} : vector<64x64xbf16>, vector<64x64xbf16>, vector<64x64xf32> -> vector<64x64xf32>
    %21 = arith.addf %14, %20 : vector<64x64xf32>
    %c0_23 = arith.constant 0 : index
    %c1_24 = arith.constant 1 : index
    %c0_25 = arith.constant 0 : index
    %c0_26 = arith.constant 0 : index
    %c0_27 = arith.constant 0 : index
    %c0_28 = arith.constant 0 : index
    %22 = vector.load %arg1[%c0_23, %c1_24, %c0_25, %c0_26, %c0_27, %c0_28] : memref<1x2x2x9x9x64xf32, #tpu.memory_space<vmem>>, vector<1x1x1x8x8x64xf32>
    %23 = vector.shape_cast %22 : vector<1x1x1x8x8x64xf32> to vector<8x8x64xf32>
    %24 = vector.shape_cast %23 : vector<8x8x64xf32> to vector<64x64xf32>
    %25 = arith.truncf %24 : vector<64x64xf32> to vector<64x64xbf16>
    %c192 = arith.constant 192 : index
    %c0_29 = arith.constant 0 : index
    %26 = vector.load %arg2[%c192, %c0_29] : memref<576x64xbf16, #tpu.memory_space<vmem>>, vector<64x64xbf16>
    %cst_30 = arith.constant dense<0.000000e+00> : vector<64x64xf32>
    %27 = tpu.matmul %25, %26, %cst_30 {dimension_numbers = #tpu.dot_dimension_numbers<[1], [0], [0], [1], [0, 0, 1, 1], [], []>} : vector<64x64xbf16>, vector<64x64xbf16>, vector<64x64xf32> -> vector<64x64xf32>
    %28 = arith.addf %21, %27 : vector<64x64xf32>
    %c0_31 = arith.constant 0 : index
    %c1_32 = arith.constant 1 : index
    %c1_33 = arith.constant 1 : index
    %c0_34 = arith.constant 0 : index
    %c0_35 = arith.constant 0 : index
    %c0_36 = arith.constant 0 : index
    %29 = vector.load %arg1[%c0_31, %c1_32, %c1_33, %c0_34, %c0_35, %c0_36] : memref<1x2x2x9x9x64xf32, #tpu.memory_space<vmem>>, vector<1x1x1x8x8x64xf32>
    %30 = vector.shape_cast %29 : vector<1x1x1x8x8x64xf32> to vector<8x8x64xf32>
    %31 = vector.shape_cast %30 : vector<8x8x64xf32> to vector<64x64xf32>
    %32 = arith.truncf %31 : vector<64x64xf32> to vector<64x64xbf16>
    %c256 = arith.constant 256 : index
    %c0_37 = arith.constant 0 : index
    %33 = vector.load %arg2[%c256, %c0_37] : memref<576x64xbf16, #tpu.memory_space<vmem>>, vector<64x64xbf16>
    %cst_38 = arith.constant dense<0.000000e+00> : vector<64x64xf32>
    %34 = tpu.matmul %32, %33, %cst_38 {dimension_numbers = #tpu.dot_dimension_numbers<[1], [0], [0], [1], [0, 0, 1, 1], [], []>} : vector<64x64xbf16>, vector<64x64xbf16>, vector<64x64xf32> -> vector<64x64xf32>
    %35 = arith.addf %28, %34 : vector<64x64xf32>
    %c0_39 = arith.constant 0 : index
    %c1_40 = arith.constant 1 : index
    %c0_41 = arith.constant 0 : index
    %c0_42 = arith.constant 0 : index
    %c1_43 = arith.constant 1 : index
    %c0_44 = arith.constant 0 : index
    %36 = vector.load %arg1[%c0_39, %c1_40, %c0_41, %c0_42, %c1_43, %c0_44] : memref<1x2x2x9x9x64xf32, #tpu.memory_space<vmem>>, vector<1x1x1x8x8x64xf32>
    %37 = vector.shape_cast %36 : vector<1x1x1x8x8x64xf32> to vector<8x8x64xf32>
    %38 = vector.shape_cast %37 : vector<8x8x64xf32> to vector<64x64xf32>
    %39 = arith.truncf %38 : vector<64x64xf32> to vector<64x64xbf16>
    %c320 = arith.constant 320 : index
    %c0_45 = arith.constant 0 : index
    %40 = vector.load %arg2[%c320, %c0_45] : memref<576x64xbf16, #tpu.memory_space<vmem>>, vector<64x64xbf16>
    %cst_46 = arith.constant dense<0.000000e+00> : vector<64x64xf32>
    %41 = tpu.matmul %39, %40, %cst_46 {dimension_numbers = #tpu.dot_dimension_numbers<[1], [0], [0], [1], [0, 0, 1, 1], [], []>} : vector<64x64xbf16>, vector<64x64xbf16>, vector<64x64xf32> -> vector<64x64xf32>
    %42 = arith.addf %35, %41 : vector<64x64xf32>
    %c0_47 = arith.constant 0 : index
    %c0_48 = arith.constant 0 : index
    %c0_49 = arith.constant 0 : index
    %c1_50 = arith.constant 1 : index
    %c0_51 = arith.constant 0 : index
    %c0_52 = arith.constant 0 : index
    %43 = vector.load %arg1[%c0_47, %c0_48, %c0_49, %c1_50, %c0_51, %c0_52] : memref<1x2x2x9x9x64xf32, #tpu.memory_space<vmem>>, vector<1x1x1x8x8x64xf32>
    %44 = vector.shape_cast %43 : vector<1x1x1x8x8x64xf32> to vector<8x8x64xf32>
    %45 = vector.shape_cast %44 : vector<8x8x64xf32> to vector<64x64xf32>
    %46 = arith.truncf %45 : vector<64x64xf32> to vector<64x64xbf16>
    %c384 = arith.constant 384 : index
    %c0_53 = arith.constant 0 : index
    %47 = vector.load %arg2[%c384, %c0_53] : memref<576x64xbf16, #tpu.memory_space<vmem>>, vector<64x64xbf16>
    %cst_54 = arith.constant dense<0.000000e+00> : vector<64x64xf32>
    %48 = tpu.matmul %46, %47, %cst_54 {dimension_numbers = #tpu.dot_dimension_numbers<[1], [0], [0], [1], [0, 0, 1, 1], [], []>} : vector<64x64xbf16>, vector<64x64xbf16>, vector<64x64xf32> -> vector<64x64xf32>
    %49 = arith.addf %42, %48 : vector<64x64xf32>
    %c0_55 = arith.constant 0 : index
    %c0_56 = arith.constant 0 : index
    %c1_57 = arith.constant 1 : index
    %c1_58 = arith.constant 1 : index
    %c0_59 = arith.constant 0 : index
    %c0_60 = arith.constant 0 : index
    %50 = vector.load %arg1[%c0_55, %c0_56, %c1_57, %c1_58, %c0_59, %c0_60] : memref<1x2x2x9x9x64xf32, #tpu.memory_space<vmem>>, vector<1x1x1x8x8x64xf32>
    %51 = vector.shape_cast %50 : vector<1x1x1x8x8x64xf32> to vector<8x8x64xf32>
    %52 = vector.shape_cast %51 : vector<8x8x64xf32> to vector<64x64xf32>
    %53 = arith.truncf %52 : vector<64x64xf32> to vector<64x64xbf16>
    %c448 = arith.constant 448 : index
    %c0_61 = arith.constant 0 : index
    %54 = vector.load %arg2[%c448, %c0_61] : memref<576x64xbf16, #tpu.memory_space<vmem>>, vector<64x64xbf16>
    %cst_62 = arith.constant dense<0.000000e+00> : vector<64x64xf32>
    %55 = tpu.matmul %53, %54, %cst_62 {dimension_numbers = #tpu.dot_dimension_numbers<[1], [0], [0], [1], [0, 0, 1, 1], [], []>} : vector<64x64xbf16>, vector<64x64xbf16>, vector<64x64xf32> -> vector<64x64xf32>
    %56 = arith.addf %49, %55 : vector<64x64xf32>
    %c0_63 = arith.constant 0 : index
    %c0_64 = arith.constant 0 : index
    %c0_65 = arith.constant 0 : index
    %c1_66 = arith.constant 1 : index
    %c1_67 = arith.constant 1 : index
    %c0_68 = arith.constant 0 : index
    %57 = vector.load %arg1[%c0_63, %c0_64, %c0_65, %c1_66, %c1_67, %c0_68] : memref<1x2x2x9x9x64xf32, #tpu.memory_space<vmem>>, vector<1x1x1x8x8x64xf32>
    %58 = vector.shape_cast %57 : vector<1x1x1x8x8x64xf32> to vector<8x8x64xf32>
    %59 = vector.shape_cast %58 : vector<8x8x64xf32> to vector<64x64xf32>
    %60 = arith.truncf %59 : vector<64x64xf32> to vector<64x64xbf16>
    %c512 = arith.constant 512 : index
    %c0_69 = arith.constant 0 : index
    %61 = vector.load %arg2[%c512, %c0_69] : memref<576x64xbf16, #tpu.memory_space<vmem>>, vector<64x64xbf16>
    %cst_70 = arith.constant dense<0.000000e+00> : vector<64x64xf32>
    %62 = tpu.matmul %60, %61, %cst_70 {dimension_numbers = #tpu.dot_dimension_numbers<[1], [0], [0], [1], [0, 0, 1, 1], [], []>} : vector<64x64xbf16>, vector<64x64xbf16>, vector<64x64xf32> -> vector<64x64xf32>
    %63 = arith.addf %56, %62 : vector<64x64xf32>
    %64 = vector.shape_cast %63 : vector<64x64xf32> to vector<8x8x64xf32>
    %c0_71 = arith.constant 0 : index
    %c0_72 = arith.constant 0 : index
    %c0_73 = arith.constant 0 : index
    %c0_74 = arith.constant 0 : index
    %65 = vector.load %arg3[%c0_71, %c0_72, %c0_73, %c0_74] : memref<1x8x8x64xf32, #tpu.memory_space<vmem>>, vector<1x8x8x64xf32>
    %66 = vector.shape_cast %65 : vector<1x8x8x64xf32> to vector<8x8x64xf32>
    %67 = vector.shape_cast %64 : vector<8x8x64xf32> to vector<1x8x8x64xf32>
    tpu.vector_store %arg3[%c0_71, %c0_72, %c0_73, %c0_74], %67 {strides = array<i32>} : memref<1x8x8x64xf32, #tpu.memory_space<vmem>>, vector<1x8x8x64xf32>,
    return
  }
  func.func @transform_0(%arg0: i32) -> (i32, i32, i32, i32, i32, i32) {
    %c0_i32 = arith.constant 0 : i32
    %c0_i32_0 = arith.constant 0 : i32
    %c0_i32_1 = arith.constant 0 : i32
    %c0_i32_2 = arith.constant 0 : i32
    %c0_i32_3 = arith.constant 0 : i32
    %c0_i32_4 = arith.constant 0 : i32
    return %arg0, %c0_i32, %c0_i32_0, %c0_i32_1, %c0_i32_2, %c0_i32_3 : i32, i32, i32, i32, i32, i32
  }
  func.func @transform_1(%arg0: i32) -> (i32, i32) {
    %c0_i32 = arith.constant 0 : i32
    %c0_i32_0 = arith.constant 0 : i32
    %c0_i32_1 = arith.constant 0 : i32
    return %c0_i32, %c0_i32_0 : i32, i32
  }
  func.func @transform_2(%arg0: i32) -> (i32, i32, i32, i32) {
    %c0_i32 = arith.constant 0 : i32
    %c0_i32_0 = arith.constant 0 : i32
    %c0_i32_1 = arith.constant 0 : i32
    %c0_i32_2 = arith.constant 0 : i32
    return %arg0, %c0_i32, %c0_i32_0, %c0_i32_1 : i32, i32, i32, i32
  }
}

module attributes {stable_mosaic.version = 11 : i64} {
  func.func @_bn_sam_add_kernel(%arg0: memref<2x8x8x64xf32, #tpu.memory_space<vmem>>, %arg1: memref<1x64xf32, #tpu.memory_space<vmem>>, %arg2: memref<1x64xf32, #tpu.memory_space<vmem>>, %arg3: memref<2x9xf32, #tpu.memory_space<smem>>, %arg4: memref<2x8x8x64xf32, #tpu.memory_space<vmem>>, %arg5: memref<1x64xf32, #tpu.memory_space<vmem>>, %arg6: memref<1x64xf32, #tpu.memory_space<vmem>>, %arg7: memref<2x8x8x64xf32, #tpu.memory_space<vmem>>, %arg8: memref<2x2x10x10x1xf32, #tpu.memory_space<vmem>>) attributes {dimension_semantics = [], scalar_prefetch = 0 : i64, scratch_operands = 1 : i64, tpu.core_type = #tpu.core_type<tc>} {
    %c0 = arith.constant 0 : index
    %c0_0 = arith.constant 0 : index
    %c0_1 = arith.constant 0 : index
    %c0_2 = arith.constant 0 : index
    %0 = vector.load %arg0[%c0, %c0_0, %c0_1, %c0_2] : memref<2x8x8x64xf32, #tpu.memory_space<vmem>>, vector<2x8x8x64xf32>
    %1 = vector.shape_cast %0 : vector<2x8x8x64xf32> to vector<128x64xf32>
    %cst = arith.constant dense<0.000000e+00> : vector<64xf32>
    %2 = vector.multi_reduction <add>, %1, %cst [0] : vector<128x64xf32> to vector<64xf32>
    %3 = vector.shape_cast %2 : vector<64xf32> to vector<1x64xf32>
    %cst_3 = arith.constant 1.280000e+02 : f32
    %4 = vector.broadcast %cst_3 : f32 to vector<1x64xf32>
    %5 = arith.divf %3, %4 : vector<1x64xf32>
    %6 = vector.broadcast %5 : vector<1x64xf32> to vector<128x64xf32>
    %7 = arith.subf %1, %6 : vector<128x64xf32>
    %8 = arith.mulf %7, %7 : vector<128x64xf32>
    %cst_4 = arith.constant dense<0.000000e+00> : vector<64xf32>
    %9 = vector.multi_reduction <add>, %8, %cst_4 [0] : vector<128x64xf32> to vector<64xf32>
    %10 = vector.shape_cast %9 : vector<64xf32> to vector<1x64xf32>
    %cst_5 = arith.constant 1.280000e+02 : f32
    %11 = vector.broadcast %cst_5 : f32 to vector<1x64xf32>
    %12 = arith.divf %10, %11 : vector<1x64xf32>
    %c0_6 = arith.constant 0 : index
    %c0_7 = arith.constant 0 : index
    %13 = vector.load %arg1[%c0_6, %c0_7] : memref<1x64xf32, #tpu.memory_space<vmem>>, vector<1x64xf32>
    %cst_8 = arith.constant 9.99999974E-6 : f32
    %14 = vector.broadcast %cst_8 : f32 to vector<1x64xf32>
    %15 = arith.addf %12, %14 : vector<1x64xf32>
    %16 = math.rsqrt %15 : vector<1x64xf32>
    %17 = arith.mulf %13, %16 : vector<1x64xf32>
    %18 = vector.broadcast %17 : vector<1x64xf32> to vector<128x64xf32>
    %19 = arith.mulf %7, %18 : vector<128x64xf32>
    %c0_9 = arith.constant 0 : index
    %c0_10 = arith.constant 0 : index
    %20 = vector.load %arg2[%c0_9, %c0_10] : memref<1x64xf32, #tpu.memory_space<vmem>>, vector<1x64xf32>
    %21 = vector.broadcast %20 : vector<1x64xf32> to vector<128x64xf32>
    %22 = arith.addf %19, %21 : vector<128x64xf32>
    %23 = vector.shape_cast %22 : vector<128x64xf32> to vector<2x8x8x64xf32>
    %cst_11 = arith.constant dense<0.000000e+00> : vector<2x8x8xf32>
    %24 = vector.multi_reduction <add>, %23, %cst_11 [3] : vector<2x8x8x64xf32> to vector<2x8x8xf32>
    %25 = vector.shape_cast %24 : vector<2x8x8xf32> to vector<2x8x8x1xf32>
    %cst_12 = arith.constant 6.400000e+01 : f32
    %26 = vector.broadcast %cst_12 : f32 to vector<2x8x8x1xf32>
    %27 = arith.divf %25, %26 : vector<2x8x8x1xf32>
    %cst_13 = arith.constant dense<0xFF800000> : vector<2x8x8xf32>
    %28 = vector.multi_reduction <maximumf>, %23, %cst_13 [3] : vector<2x8x8x64xf32> to vector<2x8x8xf32>
    %29 = vector.shape_cast %28 : vector<2x8x8xf32> to vector<2x8x8x1xf32>
    %cst_14 = arith.constant 0.000000e+00 : f32
    %30 = vector.broadcast %cst_14 : f32 to vector<2x2x10x10x1xf32>
    %c0_15 = arith.constant 0 : index
    %c0_16 = arith.constant 0 : index
    %c0_17 = arith.constant 0 : index
    %c0_18 = arith.constant 0 : index
    %c0_19 = arith.constant 0 : index
    %31 = vector.load %arg8[%c0_15, %c0_16, %c0_17, %c0_18, %c0_19] : memref<2x2x10x10x1xf32, #tpu.memory_space<vmem>>, vector<2x2x10x10x1xf32>
    tpu.vector_store %arg8[%c0_15, %c0_16, %c0_17, %c0_18, %c0_19], %30 {strides = array<i32>} : memref<2x2x10x10x1xf32, #tpu.memory_space<vmem>>, vector<2x2x10x10x1xf32>,
    %c0_20 = arith.constant 0 : index
    %c0_21 = arith.constant 0 : index
    %c1 = arith.constant 1 : index
    %c1_22 = arith.constant 1 : index
    %c0_23 = arith.constant 0 : index
    %32 = vector.load %arg8[%c0_20, %c0_21, %c1, %c1_22, %c0_23] : memref<2x2x10x10x1xf32, #tpu.memory_space<vmem>>, vector<2x1x8x8x1xf32>
    %33 = vector.shape_cast %32 : vector<2x1x8x8x1xf32> to vector<2x8x8x1xf32>
    %34 = vector.shape_cast %27 : vector<2x8x8x1xf32> to vector<2x1x8x8x1xf32>
    tpu.vector_store %arg8[%c0_20, %c0_21, %c1, %c1_22, %c0_23], %34 {strides = array<i32>} : memref<2x2x10x10x1xf32, #tpu.memory_space<vmem>>, vector<2x1x8x8x1xf32>,
    %c0_24 = arith.constant 0 : index
    %c1_25 = arith.constant 1 : index
    %c1_26 = arith.constant 1 : index
    %c1_27 = arith.constant 1 : index
    %c0_28 = arith.constant 0 : index
    %35 = vector.load %arg8[%c0_24, %c1_25, %c1_26, %c1_27, %c0_28] : memref<2x2x10x10x1xf32, #tpu.memory_space<vmem>>, vector<2x1x8x8x1xf32>
    %36 = vector.shape_cast %35 : vector<2x1x8x8x1xf32> to vector<2x8x8x1xf32>
    %37 = vector.shape_cast %29 : vector<2x8x8x1xf32> to vector<2x1x8x8x1xf32>
    tpu.vector_store %arg8[%c0_24, %c1_25, %c1_26, %c1_27, %c0_28], %37 {strides = array<i32>} : memref<2x2x10x10x1xf32, #tpu.memory_space<vmem>>, vector<2x1x8x8x1xf32>,
    %cst_29 = arith.constant 0.000000e+00 : f32
    %38 = vector.broadcast %cst_29 : f32 to vector<2x8x8x1xf32>
    %c0_30 = arith.constant 0 : index
    %c0_31 = arith.constant 0 : index
    %39 = memref.load %arg3[%c0_30, %c0_31] : memref<2x9xf32, #tpu.memory_space<smem>>
    %c0_32 = arith.constant 0 : index
    %c0_33 = arith.constant 0 : index
    %c0_34 = arith.constant 0 : index
    %c0_35 = arith.constant 0 : index
    %c0_36 = arith.constant 0 : index
    %40 = vector.load %arg8[%c0_32, %c0_33, %c0_34, %c0_35, %c0_36] : memref<2x2x10x10x1xf32, #tpu.memory_space<vmem>>, vector<2x1x8x8x1xf32>
    %41 = vector.shape_cast %40 : vector<2x1x8x8x1xf32> to vector<2x8x8x1xf32>
    %42 = vector.broadcast %39 : f32 to vector<2x8x8x1xf32>
    %43 = arith.mulf %42, %41 : vector<2x8x8x1xf32>
    %44 = arith.addf %38, %43 : vector<2x8x8x1xf32>
    %c0_37 = arith.constant 0 : index
    %c1_38 = arith.constant 1 : index
    %45 = memref.load %arg3[%c0_37, %c1_38] : memref<2x9xf32, #tpu.memory_space<smem>>
    %c0_39 = arith.constant 0 : index
    %c0_40 = arith.constant 0 : index
    %c0_41 = arith.constant 0 : index
    %c1_42 = arith.constant 1 : index
    %c0_43 = arith.constant 0 : index
    %46 = vector.load %arg8[%c0_39, %c0_40, %c0_41, %c1_42, %c0_43] : memref<2x2x10x10x1xf32, #tpu.memory_space<vmem>>, vector<2x1x8x8x1xf32>
    %47 = vector.shape_cast %46 : vector<2x1x8x8x1xf32> to vector<2x8x8x1xf32>
    %48 = vector.broadcast %45 : f32 to vector<2x8x8x1xf32>
    %49 = arith.mulf %48, %47 : vector<2x8x8x1xf32>
    %50 = arith.addf %44, %49 : vector<2x8x8x1xf32>
    %c0_44 = arith.constant 0 : index
    %c2 = arith.constant 2 : index
    %51 = memref.load %arg3[%c0_44, %c2] : memref<2x9xf32, #tpu.memory_space<smem>>
    %c0_45 = arith.constant 0 : index
    %c0_46 = arith.constant 0 : index
    %c0_47 = arith.constant 0 : index
    %c2_48 = arith.constant 2 : index
    %c0_49 = arith.constant 0 : index
    %52 = vector.load %arg8[%c0_45, %c0_46, %c0_47, %c2_48, %c0_49] : memref<2x2x10x10x1xf32, #tpu.memory_space<vmem>>, vector<2x1x8x8x1xf32>
    %53 = vector.shape_cast %52 : vector<2x1x8x8x1xf32> to vector<2x8x8x1xf32>
    %54 = vector.broadcast %51 : f32 to vector<2x8x8x1xf32>
    %55 = arith.mulf %54, %53 : vector<2x8x8x1xf32>
    %56 = arith.addf %50, %55 : vector<2x8x8x1xf32>
    %c0_50 = arith.constant 0 : index
    %c3 = arith.constant 3 : index
    %57 = memref.load %arg3[%c0_50, %c3] : memref<2x9xf32, #tpu.memory_space<smem>>
    %c0_51 = arith.constant 0 : index
    %c0_52 = arith.constant 0 : index
    %c1_53 = arith.constant 1 : index
    %c0_54 = arith.constant 0 : index
    %c0_55 = arith.constant 0 : index
    %58 = vector.load %arg8[%c0_51, %c0_52, %c1_53, %c0_54, %c0_55] : memref<2x2x10x10x1xf32, #tpu.memory_space<vmem>>, vector<2x1x8x8x1xf32>
    %59 = vector.shape_cast %58 : vector<2x1x8x8x1xf32> to vector<2x8x8x1xf32>
    %60 = vector.broadcast %57 : f32 to vector<2x8x8x1xf32>
    %61 = arith.mulf %60, %59 : vector<2x8x8x1xf32>
    %62 = arith.addf %56, %61 : vector<2x8x8x1xf32>
    %c0_56 = arith.constant 0 : index
    %c4 = arith.constant 4 : index
    %63 = memref.load %arg3[%c0_56, %c4] : memref<2x9xf32, #tpu.memory_space<smem>>
    %c0_57 = arith.constant 0 : index
    %c0_58 = arith.constant 0 : index
    %c1_59 = arith.constant 1 : index
    %c1_60 = arith.constant 1 : index
    %c0_61 = arith.constant 0 : index
    %64 = vector.load %arg8[%c0_57, %c0_58, %c1_59, %c1_60, %c0_61] : memref<2x2x10x10x1xf32, #tpu.memory_space<vmem>>, vector<2x1x8x8x1xf32>
    %65 = vector.shape_cast %64 : vector<2x1x8x8x1xf32> to vector<2x8x8x1xf32>
    %66 = vector.broadcast %63 : f32 to vector<2x8x8x1xf32>
    %67 = arith.mulf %66, %65 : vector<2x8x8x1xf32>
    %68 = arith.addf %62, %67 : vector<2x8x8x1xf32>
    %c0_62 = arith.constant 0 : index
    %c5 = arith.constant 5 : index
    %69 = memref.load %arg3[%c0_62, %c5] : memref<2x9xf32, #tpu.memory_space<smem>>
    %c0_63 = arith.constant 0 : index
    %c0_64 = arith.constant 0 : index
    %c1_65 = arith.constant 1 : index
    %c2_66 = arith.constant 2 : index
    %c0_67 = arith.constant 0 : index
    %70 = vector.load %arg8[%c0_63, %c0_64, %c1_65, %c2_66, %c0_67] : memref<2x2x10x10x1xf32, #tpu.memory_space<vmem>>, vector<2x1x8x8x1xf32>
    %71 = vector.shape_cast %70 : vector<2x1x8x8x1xf32> to vector<2x8x8x1xf32>
    %72 = vector.broadcast %69 : f32 to vector<2x8x8x1xf32>
    %73 = arith.mulf %72, %71 : vector<2x8x8x1xf32>
    %74 = arith.addf %68, %73 : vector<2x8x8x1xf32>
    %c0_68 = arith.constant 0 : index
    %c6 = arith.constant 6 : index
    %75 = memref.load %arg3[%c0_68, %c6] : memref<2x9xf32, #tpu.memory_space<smem>>
    %c0_69 = arith.constant 0 : index
    %c0_70 = arith.constant 0 : index
    %c2_71 = arith.constant 2 : index
    %c0_72 = arith.constant 0 : index
    %c0_73 = arith.constant 0 : index
    %76 = vector.load %arg8[%c0_69, %c0_70, %c2_71, %c0_72, %c0_73] : memref<2x2x10x10x1xf32, #tpu.memory_space<vmem>>, vector<2x1x8x8x1xf32>
    %77 = vector.shape_cast %76 : vector<2x1x8x8x1xf32> to vector<2x8x8x1xf32>
    %78 = vector.broadcast %75 : f32 to vector<2x8x8x1xf32>
    %79 = arith.mulf %78, %77 : vector<2x8x8x1xf32>
    %80 = arith.addf %74, %79 : vector<2x8x8x1xf32>
    %c0_74 = arith.constant 0 : index
    %c7 = arith.constant 7 : index
    %81 = memref.load %arg3[%c0_74, %c7] : memref<2x9xf32, #tpu.memory_space<smem>>
    %c0_75 = arith.constant 0 : index
    %c0_76 = arith.constant 0 : index
    %c2_77 = arith.constant 2 : index
    %c1_78 = arith.constant 1 : index
    %c0_79 = arith.constant 0 : index
    %82 = vector.load %arg8[%c0_75, %c0_76, %c2_77, %c1_78, %c0_79] : memref<2x2x10x10x1xf32, #tpu.memory_space<vmem>>, vector<2x1x8x8x1xf32>
    %83 = vector.shape_cast %82 : vector<2x1x8x8x1xf32> to vector<2x8x8x1xf32>
    %84 = vector.broadcast %81 : f32 to vector<2x8x8x1xf32>
    %85 = arith.mulf %84, %83 : vector<2x8x8x1xf32>
    %86 = arith.addf %80, %85 : vector<2x8x8x1xf32>
    %c0_80 = arith.constant 0 : index
    %c8 = arith.constant 8 : index
    %87 = memref.load %arg3[%c0_80, %c8] : memref<2x9xf32, #tpu.memory_space<smem>>
    %c0_81 = arith.constant 0 : index
    %c0_82 = arith.constant 0 : index
    %c2_83 = arith.constant 2 : index
    %c2_84 = arith.constant 2 : index
    %c0_85 = arith.constant 0 : index
    %88 = vector.load %arg8[%c0_81, %c0_82, %c2_83, %c2_84, %c0_85] : memref<2x2x10x10x1xf32, #tpu.memory_space<vmem>>, vector<2x1x8x8x1xf32>
    %89 = vector.shape_cast %88 : vector<2x1x8x8x1xf32> to vector<2x8x8x1xf32>
    %90 = vector.broadcast %87 : f32 to vector<2x8x8x1xf32>
    %91 = arith.mulf %90, %89 : vector<2x8x8x1xf32>
    %92 = arith.addf %86, %91 : vector<2x8x8x1xf32>
    %c1_86 = arith.constant 1 : index
    %c0_87 = arith.constant 0 : index
    %93 = memref.load %arg3[%c1_86, %c0_87] : memref<2x9xf32, #tpu.memory_space<smem>>
    %c0_88 = arith.constant 0 : index
    %c1_89 = arith.constant 1 : index
    %c0_90 = arith.constant 0 : index
    %c0_91 = arith.constant 0 : index
    %c0_92 = arith.constant 0 : index
    %94 = vector.load %arg8[%c0_88, %c1_89, %c0_90, %c0_91, %c0_92] : memref<2x2x10x10x1xf32, #tpu.memory_space<vmem>>, vector<2x1x8x8x1xf32>
    %95 = vector.shape_cast %94 : vector<2x1x8x8x1xf32> to vector<2x8x8x1xf32>
    %96 = vector.broadcast %93 : f32 to vector<2x8x8x1xf32>
    %97 = arith.mulf %96, %95 : vector<2x8x8x1xf32>
    %98 = arith.addf %92, %97 : vector<2x8x8x1xf32>
    %c1_93 = arith.constant 1 : index
    %c1_94 = arith.constant 1 : index
    %99 = memref.load %arg3[%c1_93, %c1_94] : memref<2x9xf32, #tpu.memory_space<smem>>
    %c0_95 = arith.constant 0 : index
    %c1_96 = arith.constant 1 : index
    %c0_97 = arith.constant 0 : index
    %c1_98 = arith.constant 1 : index
    %c0_99 = arith.constant 0 : index
    %100 = vector.load %arg8[%c0_95, %c1_96, %c0_97, %c1_98, %c0_99] : memref<2x2x10x10x1xf32, #tpu.memory_space<vmem>>, vector<2x1x8x8x1xf32>
    %101 = vector.shape_cast %100 : vector<2x1x8x8x1xf32> to vector<2x8x8x1xf32>
    %102 = vector.broadcast %99 : f32 to vector<2x8x8x1xf32>
    %103 = arith.mulf %102, %101 : vector<2x8x8x1xf32>
    %104 = arith.addf %98, %103 : vector<2x8x8x1xf32>
    %c1_100 = arith.constant 1 : index
    %c2_101 = arith.constant 2 : index
    %105 = memref.load %arg3[%c1_100, %c2_101] : memref<2x9xf32, #tpu.memory_space<smem>>
    %c0_102 = arith.constant 0 : index
    %c1_103 = arith.constant 1 : index
    %c0_104 = arith.constant 0 : index
    %c2_105 = arith.constant 2 : index
    %c0_106 = arith.constant 0 : index
    %106 = vector.load %arg8[%c0_102, %c1_103, %c0_104, %c2_105, %c0_106] : memref<2x2x10x10x1xf32, #tpu.memory_space<vmem>>, vector<2x1x8x8x1xf32>
    %107 = vector.shape_cast %106 : vector<2x1x8x8x1xf32> to vector<2x8x8x1xf32>
    %108 = vector.broadcast %105 : f32 to vector<2x8x8x1xf32>
    %109 = arith.mulf %108, %107 : vector<2x8x8x1xf32>
    %110 = arith.addf %104, %109 : vector<2x8x8x1xf32>
    %c1_107 = arith.constant 1 : index
    %c3_108 = arith.constant 3 : index
    %111 = memref.load %arg3[%c1_107, %c3_108] : memref<2x9xf32, #tpu.memory_space<smem>>
    %c0_109 = arith.constant 0 : index
    %c1_110 = arith.constant 1 : index
    %c1_111 = arith.constant 1 : index
    %c0_112 = arith.constant 0 : index
    %c0_113 = arith.constant 0 : index
    %112 = vector.load %arg8[%c0_109, %c1_110, %c1_111, %c0_112, %c0_113] : memref<2x2x10x10x1xf32, #tpu.memory_space<vmem>>, vector<2x1x8x8x1xf32>
    %113 = vector.shape_cast %112 : vector<2x1x8x8x1xf32> to vector<2x8x8x1xf32>
    %114 = vector.broadcast %111 : f32 to vector<2x8x8x1xf32>
    %115 = arith.mulf %114, %113 : vector<2x8x8x1xf32>
    %116 = arith.addf %110, %115 : vector<2x8x8x1xf32>
    %c1_114 = arith.constant 1 : index
    %c4_115 = arith.constant 4 : index
    %117 = memref.load %arg3[%c1_114, %c4_115] : memref<2x9xf32, #tpu.memory_space<smem>>
    %c0_116 = arith.constant 0 : index
    %c1_117 = arith.constant 1 : index
    %c1_118 = arith.constant 1 : index
    %c1_119 = arith.constant 1 : index
    %c0_120 = arith.constant 0 : index
    %118 = vector.load %arg8[%c0_116, %c1_117, %c1_118, %c1_119, %c0_120] : memref<2x2x10x10x1xf32, #tpu.memory_space<vmem>>, vector<2x1x8x8x1xf32>
    %119 = vector.shape_cast %118 : vector<2x1x8x8x1xf32> to vector<2x8x8x1xf32>
    %120 = vector.broadcast %117 : f32 to vector<2x8x8x1xf32>
    %121 = arith.mulf %120, %119 : vector<2x8x8x1xf32>
    %122 = arith.addf %116, %121 : vector<2x8x8x1xf32>
    %c1_121 = arith.constant 1 : index
    %c5_122 = arith.constant 5 : index
    %123 = memref.load %arg3[%c1_121, %c5_122] : memref<2x9xf32, #tpu.memory_space<smem>>
    %c0_123 = arith.constant 0 : index
    %c1_124 = arith.constant 1 : index
    %c1_125 = arith.constant 1 : index
    %c2_126 = arith.constant 2 : index
    %c0_127 = arith.constant 0 : index
    %124 = vector.load %arg8[%c0_123, %c1_124, %c1_125, %c2_126, %c0_127] : memref<2x2x10x10x1xf32, #tpu.memory_space<vmem>>, vector<2x1x8x8x1xf32>
    %125 = vector.shape_cast %124 : vector<2x1x8x8x1xf32> to vector<2x8x8x1xf32>
    %126 = vector.broadcast %123 : f32 to vector<2x8x8x1xf32>
    %127 = arith.mulf %126, %125 : vector<2x8x8x1xf32>
    %128 = arith.addf %122, %127 : vector<2x8x8x1xf32>
    %c1_128 = arith.constant 1 : index
    %c6_129 = arith.constant 6 : index
    %129 = memref.load %arg3[%c1_128, %c6_129] : memref<2x9xf32, #tpu.memory_space<smem>>
    %c0_130 = arith.constant 0 : index
    %c1_131 = arith.constant 1 : index
    %c2_132 = arith.constant 2 : index
    %c0_133 = arith.constant 0 : index
    %c0_134 = arith.constant 0 : index
    %130 = vector.load %arg8[%c0_130, %c1_131, %c2_132, %c0_133, %c0_134] : memref<2x2x10x10x1xf32, #tpu.memory_space<vmem>>, vector<2x1x8x8x1xf32>
    %131 = vector.shape_cast %130 : vector<2x1x8x8x1xf32> to vector<2x8x8x1xf32>
    %132 = vector.broadcast %129 : f32 to vector<2x8x8x1xf32>
    %133 = arith.mulf %132, %131 : vector<2x8x8x1xf32>
    %134 = arith.addf %128, %133 : vector<2x8x8x1xf32>
    %c1_135 = arith.constant 1 : index
    %c7_136 = arith.constant 7 : index
    %135 = memref.load %arg3[%c1_135, %c7_136] : memref<2x9xf32, #tpu.memory_space<smem>>
    %c0_137 = arith.constant 0 : index
    %c1_138 = arith.constant 1 : index
    %c2_139 = arith.constant 2 : index
    %c1_140 = arith.constant 1 : index
    %c0_141 = arith.constant 0 : index
    %136 = vector.load %arg8[%c0_137, %c1_138, %c2_139, %c1_140, %c0_141] : memref<2x2x10x10x1xf32, #tpu.memory_space<vmem>>, vector<2x1x8x8x1xf32>
    %137 = vector.shape_cast %136 : vector<2x1x8x8x1xf32> to vector<2x8x8x1xf32>
    %138 = vector.broadcast %135 : f32 to vector<2x8x8x1xf32>
    %139 = arith.mulf %138, %137 : vector<2x8x8x1xf32>
    %140 = arith.addf %134, %139 : vector<2x8x8x1xf32>
    %c1_142 = arith.constant 1 : index
    %c8_143 = arith.constant 8 : index
    %141 = memref.load %arg3[%c1_142, %c8_143] : memref<2x9xf32, #tpu.memory_space<smem>>
    %c0_144 = arith.constant 0 : index
    %c1_145 = arith.constant 1 : index
    %c2_146 = arith.constant 2 : index
    %c2_147 = arith.constant 2 : index
    %c0_148 = arith.constant 0 : index
    %142 = vector.load %arg8[%c0_144, %c1_145, %c2_146, %c2_147, %c0_148] : memref<2x2x10x10x1xf32, #tpu.memory_space<vmem>>, vector<2x1x8x8x1xf32>
    %143 = vector.shape_cast %142 : vector<2x1x8x8x1xf32> to vector<2x8x8x1xf32>
    %144 = vector.broadcast %141 : f32 to vector<2x8x8x1xf32>
    %145 = arith.mulf %144, %143 : vector<2x8x8x1xf32>
    %146 = arith.addf %140, %145 : vector<2x8x8x1xf32>
    %147 = arith.negf %146 : vector<2x8x8x1xf32>
    %148 = math.exp %147 : vector<2x8x8x1xf32>
    %cst_149 = arith.constant 1.000000e+00 : f32
    %149 = vector.broadcast %cst_149 : f32 to vector<2x8x8x1xf32>
    %150 = arith.addf %149, %148 : vector<2x8x8x1xf32>
    %151 = arith.divf %149, %150 : vector<2x8x8x1xf32>
    %152 = vector.broadcast %151 : vector<2x8x8x1xf32> to vector<2x8x8x64xf32>
    %153 = arith.mulf %23, %152 : vector<2x8x8x64xf32>
    %c0_150 = arith.constant 0 : index
    %c0_151 = arith.constant 0 : index
    %c0_152 = arith.constant 0 : index
    %c0_153 = arith.constant 0 : index
    %154 = vector.load %arg4[%c0_150, %c0_151, %c0_152, %c0_153] : memref<2x8x8x64xf32, #tpu.memory_space<vmem>>, vector<2x8x8x64xf32>
    %155 = vector.shape_cast %154 : vector<2x8x8x64xf32> to vector<128x64xf32>
    %cst_154 = arith.constant dense<0.000000e+00> : vector<64xf32>
    %156 = vector.multi_reduction <add>, %155, %cst_154 [0] : vector<128x64xf32> to vector<64xf32>
    %157 = vector.shape_cast %156 : vector<64xf32> to vector<1x64xf32>
    %cst_155 = arith.constant 1.280000e+02 : f32
    %158 = vector.broadcast %cst_155 : f32 to vector<1x64xf32>
    %159 = arith.divf %157, %158 : vector<1x64xf32>
    %160 = vector.broadcast %159 : vector<1x64xf32> to vector<128x64xf32>
    %161 = arith.subf %155, %160 : vector<128x64xf32>
    %162 = arith.mulf %161, %161 : vector<128x64xf32>
    %cst_156 = arith.constant dense<0.000000e+00> : vector<64xf32>
    %163 = vector.multi_reduction <add>, %162, %cst_156 [0] : vector<128x64xf32> to vector<64xf32>
    %164 = vector.shape_cast %163 : vector<64xf32> to vector<1x64xf32>
    %cst_157 = arith.constant 1.280000e+02 : f32
    %165 = vector.broadcast %cst_157 : f32 to vector<1x64xf32>
    %166 = arith.divf %164, %165 : vector<1x64xf32>
    %c0_158 = arith.constant 0 : index
    %c0_159 = arith.constant 0 : index
    %167 = vector.load %arg5[%c0_158, %c0_159] : memref<1x64xf32, #tpu.memory_space<vmem>>, vector<1x64xf32>
    %cst_160 = arith.constant 9.99999974E-6 : f32
    %168 = vector.broadcast %cst_160 : f32 to vector<1x64xf32>
    %169 = arith.addf %166, %168 : vector<1x64xf32>
    %170 = math.rsqrt %169 : vector<1x64xf32>
    %171 = arith.mulf %167, %170 : vector<1x64xf32>
    %172 = vector.broadcast %171 : vector<1x64xf32> to vector<128x64xf32>
    %173 = arith.mulf %161, %172 : vector<128x64xf32>
    %c0_161 = arith.constant 0 : index
    %c0_162 = arith.constant 0 : index
    %174 = vector.load %arg6[%c0_161, %c0_162] : memref<1x64xf32, #tpu.memory_space<vmem>>, vector<1x64xf32>
    %175 = vector.broadcast %174 : vector<1x64xf32> to vector<128x64xf32>
    %176 = arith.addf %173, %175 : vector<128x64xf32>
    %177 = vector.shape_cast %176 : vector<128x64xf32> to vector<2x8x8x64xf32>
    %178 = arith.addf %177, %153 : vector<2x8x8x64xf32>
    %c0_163 = arith.constant 0 : index
    %c0_164 = arith.constant 0 : index
    %c0_165 = arith.constant 0 : index
    %c0_166 = arith.constant 0 : index
    %179 = vector.load %arg7[%c0_163, %c0_164, %c0_165, %c0_166] : memref<2x8x8x64xf32, #tpu.memory_space<vmem>>, vector<2x8x8x64xf32>
    tpu.vector_store %arg7[%c0_163, %c0_164, %c0_165, %c0_166], %178 {strides = array<i32>} : memref<2x8x8x64xf32, #tpu.memory_space<vmem>>, vector<2x8x8x64xf32>,
    return
  }
}

</mosaic_0001>

<llo_original>
// kernel: bottleneck_ir_sam_forward.8
$region0: #{bottleneck_ir_sam_forward.8}
  #allocation0 [shape = 'u32[]', space=smem, size = 0x4, offset = 0x4, fixed_abs, tag = 'smem constant byte address 0x4 - core index']
  #allocation1 [shape = 'u32[144,128]{1,0:T(1,128)}', space=vmem, size = 0x12000, scoped, tag = 'internal scratch']
  %s0 = inlined_call_operand.vmem [shape: f32[2,16,16,64], index: 0, kind: input, shape index: {}]
  %s1 = inlined_call_operand.vmem [shape: f32[1,64], index: 1, kind: input, shape index: {}]
  %s2 = inlined_call_operand.vmem [shape: f32[1,64], index: 2, kind: input, shape index: {}]
  %s3 = inlined_call_operand.vmem [shape: f32[1,64], index: 3, kind: input, shape index: {}]
  %s4 = inlined_call_operand.vmem [shape: f32[2,18,18,64], index: 4, kind: output, shape index: {}]
  %s5 = sld [smem:[#allocation0]]
  $region26: #{bottleneck_ir_sam_forward.8} parent=0
    _
  %s7 = ssub.s32 1, %s5
  %s8 = scalar_select 0, %s7, %s5
  // Predicated region
  $region2: #{bottleneck_ir_sam_forward.8} parent=0 // pred_check
    _
  $region3: #{bottleneck_ir_sam_forward.8} parent=0 // pred_check_branch
    %10 = sbr.rel (0) target = $region5
  $region4: #{bottleneck_ir_sam_forward.8} parent=0 // pred_region
    _
  $region5: #{bottleneck_ir_sam_forward.8} parent=0 // pred_fallthru
    _
  // Predicated region
  $region6: #{bottleneck_ir_sam_forward.8} parent=0 // pred_check
    _
  $region7: #{bottleneck_ir_sam_forward.8} parent=0 // pred_check_branch
    %12 = sbr.rel (0) target = $region9
  $region8: #{bottleneck_ir_sam_forward.8} parent=0 // pred_region
    _
  $region9: #{bottleneck_ir_sam_forward.8} parent=0 // pred_fallthru
    _
  // Predicated region
  $region10: #{bottleneck_ir_sam_forward.8} parent=0 // pred_check
    _
  $region11: #{bottleneck_ir_sam_forward.8} parent=0 // pred_check_branch
    %14 = sbr.rel (0) target = $region13
  $region12: #{bottleneck_ir_sam_forward.8} parent=0 // pred_region
    _
  $region13: #{bottleneck_ir_sam_forward.8} parent=0 // pred_fallthru
    _
  // Predicated region
  $region14: #{bottleneck_ir_sam_forward.8} parent=0 // pred_check
    _
  $region15: #{bottleneck_ir_sam_forward.8} parent=0 // pred_check_branch
    %16 = sbr.rel (0) target = $region17
  $region16: #{bottleneck_ir_sam_forward.8} parent=0 // pred_region
    _
  $region17: #{bottleneck_ir_sam_forward.8} parent=0 // pred_fallthru
    _
  %v17 = vld [vmem:[%s0] sm:$0xff]
  %v18 = vld [vmem:[%s0 + $0x8] sm:$0xff]
  %v19 = vld [vmem:[%s0 + $0x10] sm:$0xff]
  %v20 = vld [vmem:[%s0 + $0x18] sm:$0xff]
  %v21 = vld [vmem:[%s0 + $0x20] sm:$0xff]
  %v22 = vld [vmem:[%s0 + $0x28] sm:$0xff]
  %v23 = vld [vmem:[%s0 + $0x30] sm:$0xff]
  %v24 = vld [vmem:[%s0 + $0x38] sm:$0xff]
  %v25 = vld [vmem:[%s0 + $0x40] sm:$0xff]
  %v26 = vld [vmem:[%s0 + $0x48] sm:$0xff]
  %v27 = vld [vmem:[%s0 + $0x50] sm:$0xff]
  %v28 = vld [vmem:[%s0 + $0x58] sm:$0xff]
  %v29 = vld [vmem:[%s0 + $0x60] sm:$0xff]
  %v30 = vld [vmem:[%s0 + $0x68] sm:$0xff]
  %v31 = vld [vmem:[%s0 + $0x70] sm:$0xff]
  %v32 = vld [vmem:[%s0 + $0x78] sm:$0xff]
  %v33 = vld [vmem:[%s0 + $0x80] sm:$0xff]
  %v34 = vld [vmem:[%s0 + $0x88] sm:$0xff]
  %v35 = vld [vmem:[%s0 + $0x90] sm:$0xff]
  %v36 = vld [vmem:[%s0 + $0x98] sm:$0xff]
  %v37 = vld [vmem:[%s0 + $0xa0] sm:$0xff]
  %v38 = vld [vmem:[%s0 + $0xa8] sm:$0xff]
  %v39 = vld [vmem:[%s0 + $0xb0] sm:$0xff]
  %v40 = vld [vmem:[%s0 + $0xb8] sm:$0xff]
  %v41 = vld [vmem:[%s0 + $0xc0] sm:$0xff]
  %v42 = vld [vmem:[%s0 + $0xc8] sm:$0xff]
  %v43 = vld [vmem:[%s0 + $0xd0] sm:$0xff]
  %v44 = vld [vmem:[%s0 + $0xd8] sm:$0xff]
  %v45 = vld [vmem:[%s0 + $0xe0] sm:$0xff]
  %v46 = vld [vmem:[%s0 + $0xe8] sm:$0xff]
  %v47 = vld [vmem:[%s0 + $0xf0] sm:$0xff]
  %v48 = vld [vmem:[%s0 + $0xf8] sm:$0xff]
  %v49 = vld [vmem:[%s0 + $0x100] sm:$0xff]
  %v50 = vld [vmem:[%s0 + $0x108] sm:$0xff]
  %v51 = vld [vmem:[%s0 + $0x110] sm:$0xff]
  %v52 = vld [vmem:[%s0 + $0x118] sm:$0xff]
  %v53 = vld [vmem:[%s0 + $0x120] sm:$0xff]
  %v54 = vld [vmem:[%s0 + $0x128] sm:$0xff]
  %v55 = vld [vmem:[%s0 + $0x130] sm:$0xff]
  %v56 = vld [vmem:[%s0 + $0x138] sm:$0xff]
  %v57 = vld [vmem:[%s0 + $0x140] sm:$0xff]
  %v58 = vld [vmem:[%s0 + $0x148] sm:$0xff]
  %v59 = vld [vmem:[%s0 + $0x150] sm:$0xff]
  %v60 = vld [vmem:[%s0 + $0x158] sm:$0xff]
  %v61 = vld [vmem:[%s0 + $0x160] sm:$0xff]
  %v62 = vld [vmem:[%s0 + $0x168] sm:$0xff]
  %v63 = vld [vmem:[%s0 + $0x170] sm:$0xff]
  %v64 = vld [vmem:[%s0 + $0x178] sm:$0xff]
  %v65 = vld [vmem:[%s0 + $0x180] sm:$0xff]
  %v66 = vld [vmem:[%s0 + $0x188] sm:$0xff]
  %v67 = vld [vmem:[%s0 + $0x190] sm:$0xff]
  %v68 = vld [vmem:[%s0 + $0x198] sm:$0xff]
  %v69 = vld [vmem:[%s0 + $0x1a0] sm:$0xff]
  %v70 = vld [vmem:[%s0 + $0x1a8] sm:$0xff]
  %v71 = vld [vmem:[%s0 + $0x1b0] sm:$0xff]
  %v72 = vld [vmem:[%s0 + $0x1b8] sm:$0xff]
  %v73 = vld [vmem:[%s0 + $0x1c0] sm:$0xff]
  %v74 = vld [vmem:[%s0 + $0x1c8] sm:$0xff]
  %v75 = vld [vmem:[%s0 + $0x1d0] sm:$0xff]
  %v76 = vld [vmem:[%s0 + $0x1d8] sm:$0xff]
  %v77 = vld [vmem:[%s0 + $0x1e0] sm:$0xff]
  %v78 = vld [vmem:[%s0 + $0x1e8] sm:$0xff]
  %v79 = vld [vmem:[%s0 + $0x1f0] sm:$0xff]
  %v80 = vld [vmem:[%s0 + $0x1f8] sm:$0xff]
  %vm81 = vcmask 523264
  %v82 = vsel %vm81, %v17, 0.0
  %v83 = vsel %vm81, %v18, 0.0
  %v84 = vadd.f32 %v82, %v83
  %v85 = vsel %vm81, %v19, 0.0
  %v86 = vadd.f32 %v84, %v85
  %v87 = vsel %vm81, %v20, 0.0
  %v88 = vadd.f32 %v86, %v87
  %v89 = vsel %vm81, %v21, 0.0
  %v90 = vadd.f32 %v88, %v89
  %v91 = vsel %vm81, %v22, 0.0
  %v92 = vadd.f32 %v90, %v91
  %v93 = vsel %vm81, %v23, 0.0
  %v94 = vadd.f32 %v92, %v93
  %v95 = vsel %vm81, %v24, 0.0
  %v96 = vadd.f32 %v94, %v95
  %v97 = vsel %vm81, %v25, 0.0
  %v98 = vadd.f32 %v96, %v97
  %v99 = vsel %vm81, %v26, 0.0
  %v100 = vadd.f32 %v98, %v99
  %v101 = vsel %vm81, %v27, 0.0
  %v102 = vadd.f32 %v100, %v101
  %v103 = vsel %vm81, %v28, 0.0
  %v104 = vadd.f32 %v102, %v103
  %v105 = vsel %vm81, %v29, 0.0
  %v106 = vadd.f32 %v104, %v105
  %v107 = vsel %vm81, %v30, 0.0
  %v108 = vadd.f32 %v106, %v107
  %v109 = vsel %vm81, %v31, 0.0
  %v110 = vadd.f32 %v108, %v109
  %v111 = vsel %vm81, %v32, 0.0
  %v112 = vadd.f32 %v110, %v111
  %v113 = vsel %vm81, %v33, 0.0
  %v114 = vadd.f32 %v112, %v113
  %v115 = vsel %vm81, %v34, 0.0
  %v116 = vadd.f32 %v114, %v115
  %v117 = vsel %vm81, %v35, 0.0
  %v118 = vadd.f32 %v116, %v117
  %v119 = vsel %vm81, %v36, 0.0
  %v120 = vadd.f32 %v118, %v119
  %v121 = vsel %vm81, %v37, 0.0
  %v122 = vadd.f32 %v120, %v121
  %v123 = vsel %vm81, %v38, 0.0
  %v124 = vadd.f32 %v122, %v123
  %v125 = vsel %vm81, %v39, 0.0
  %v126 = vadd.f32 %v124, %v125
  %v127 = vsel %vm81, %v40, 0.0
  %v128 = vadd.f32 %v126, %v127
  %v129 = vsel %vm81, %v41, 0.0
  %v130 = vadd.f32 %v128, %v129
  %v131 = vsel %vm81, %v42, 0.0
  %v132 = vadd.f32 %v130, %v131
  %v133 = vsel %vm81, %v43, 0.0
  %v134 = vadd.f32 %v132, %v133
  %v135 = vsel %vm81, %v44, 0.0
  %v136 = vadd.f32 %v134, %v135
  %v137 = vsel %vm81, %v45, 0.0
  %v138 = vadd.f32 %v136, %v137
  %v139 = vsel %vm81, %v46, 0.0
  %v140 = vadd.f32 %v138, %v139
  %v141 = vsel %vm81, %v47, 0.0
  %v142 = vadd.f32 %v140, %v141
  %v143 = vsel %vm81, %v48, 0.0
  %v144 = vadd.f32 %v142, %v143
  %v145 = vsel %vm81, %v49, 0.0
  %v146 = vadd.f32 %v144, %v145
  %v147 = vsel %vm81, %v50, 0.0
  %v148 = vadd.f32 %v146, %v147
  %v149 = vsel %vm81, %v51, 0.0
  %v150 = vadd.f32 %v148, %v149
  %v151 = vsel %vm81, %v52, 0.0
  %v152 = vadd.f32 %v150, %v151
  %v153 = vsel %vm81, %v53, 0.0
  %v154 = vadd.f32 %v152, %v153
  %v155 = vsel %vm81, %v54, 0.0
  %v156 = vadd.f32 %v154, %v155
  %v157 = vsel %vm81, %v55, 0.0
  %v158 = vadd.f32 %v156, %v157
  %v159 = vsel %vm81, %v56, 0.0
  %v160 = vadd.f32 %v158, %v159
  %v161 = vsel %vm81, %v57, 0.0
  %v162 = vadd.f32 %v160, %v161
  %v163 = vsel %vm81, %v58, 0.0
  %v164 = vadd.f32 %v162, %v163
  %v165 = vsel %vm81, %v59, 0.0
  %v166 = vadd.f32 %v164, %v165
  %v167 = vsel %vm81, %v60, 0.0
  %v168 = vadd.f32 %v166, %v167
  %v169 = vsel %vm81, %v61, 0.0
  %v170 = vadd.f32 %v168, %v169
  %v171 = vsel %vm81, %v62, 0.0
  %v172 = vadd.f32 %v170, %v171
  %v173 = vsel %vm81, %v63, 0.0
  %v174 = vadd.f32 %v172, %v173
  %v175 = vsel %vm81, %v64, 0.0
  %v176 = vadd.f32 %v174, %v175
  %v177 = vsel %vm81, %v65, 0.0
  %v178 = vadd.f32 %v176, %v177
  %v179 = vsel %vm81, %v66, 0.0
  %v180 = vadd.f32 %v178, %v179
  %v181 = vsel %vm81, %v67, 0.0
  %v182 = vadd.f32 %v180, %v181
  %v183 = vsel %vm81, %v68, 0.0
  %v184 = vadd.f32 %v182, %v183
  %v185 = vsel %vm81, %v69, 0.0
  %v186 = vadd.f32 %v184, %v185
  %v187 = vsel %vm81, %v70, 0.0
  %v188 = vadd.f32 %v186, %v187
  %v189 = vsel %vm81, %v71, 0.0
  %v190 = vadd.f32 %v188, %v189
  %v191 = vsel %vm81, %v72, 0.0
  %v192 = vadd.f32 %v190, %v191
  %v193 = vsel %vm81, %v73, 0.0
  %v194 = vadd.f32 %v192, %v193
  %v195 = vsel %vm81, %v74, 0.0
  %v196 = vadd.f32 %v194, %v195
  %v197 = vsel %vm81, %v75, 0.0
  %v198 = vadd.f32 %v196, %v197
  %v199 = vsel %vm81, %v76, 0.0
  %v200 = vadd.f32 %v198, %v199
  %v201 = vsel %vm81, %v77, 0.0
  %v202 = vadd.f32 %v200, %v201
  %v203 = vsel %vm81, %v78, 0.0
  %v204 = vadd.f32 %v202, %v203
  %v205 = vsel %vm81, %v79, 0.0
  %v206 = vadd.f32 %v204, %v205
  %v207 = vsel %vm81, %v80, 0.0
  %v208 = vadd.f32 %v206, %v207
  %v209 = vrot.slane %v208, 4
  %v210 = vadd.f32 %v208, %v209
  %v211 = vrot.slane %v210, 2
  %v212 = vadd.f32 %v210, %v211
  %v213 = vrot.slane %v212, 1
  %v214 = vadd.f32 %v212, %v213
  %v215 = vrcp.pop 512.0
  %v216 = vmul.f32 %v214, %v215
  %v217 = vsub.f32 %v17, %v216
  %v218 = vsub.f32 %v18, %v216
  %v219 = vsub.f32 %v19, %v216
  %v220 = vsub.f32 %v20, %v216
  %v221 = vsub.f32 %v21, %v216
  %v222 = vsub.f32 %v22, %v216
  %v223 = vsub.f32 %v23, %v216
  %v224 = vsub.f32 %v24, %v216
  %v225 = vsub.f32 %v25, %v216
  %v226 = vsub.f32 %v26, %v216
  %v227 = vsub.f32 %v27, %v216
  %v228 = vsub.f32 %v28, %v216
  %v229 = vsub.f32 %v29, %v216
  %v230 = vsub.f32 %v30, %v216
  %v231 = vsub.f32 %v31, %v216
  %v232 = vsub.f32 %v32, %v216
  %v233 = vsub.f32 %v33, %v216
  %v234 = vsub.f32 %v34, %v216
  %v235 = vsub.f32 %v35, %v216
  %v236 = vsub.f32 %v36, %v216
  %v237 = vsub.f32 %v37, %v216
  %v238 = vsub.f32 %v38, %v216
  %v239 = vsub.f32 %v39, %v216
  %v240 = vsub.f32 %v40, %v216
  %v241 = vsub.f32 %v41, %v216
  %v242 = vsub.f32 %v42, %v216
  %v243 = vsub.f32 %v43, %v216
  %v244 = vsub.f32 %v44, %v216
  %v245 = vsub.f32 %v45, %v216
  %v246 = vsub.f32 %v46, %v216
  %v247 = vsub.f32 %v47, %v216
  %v248 = vsub.f32 %v48, %v216
  %v249 = vsub.f32 %v49, %v216
  %v250 = vsub.f32 %v50, %v216
  %v251 = vsub.f32 %v51, %v216
  %v252 = vsub.f32 %v52, %v216
  %v253 = vsub.f32 %v53, %v216
  %v254 = vsub.f32 %v54, %v216
  %v255 = vsub.f32 %v55, %v216
  %v256 = vsub.f32 %v56, %v216
  %v257 = vsub.f32 %v57, %v216
  %v258 = vsub.f32 %v58, %v216
  %v259 = vsub.f32 %v59, %v216
  %v260 = vsub.f32 %v60, %v216
  %v261 = vsub.f32 %v61, %v216
  %v262 = vsub.f32 %v62, %v216
  %v263 = vsub.f32 %v63, %v216
  %v264 = vsub.f32 %v64, %v216
  %v265 = vsub.f32 %v65, %v216
  %v266 = vsub.f32 %v66, %v216
  %v267 = vsub.f32 %v67, %v216
  %v268 = vsub.f32 %v68, %v216
  %v269 = vsub.f32 %v69, %v216
  %v270 = vsub.f32 %v70, %v216
  %v271 = vsub.f32 %v71, %v216
  %v272 = vsub.f32 %v72, %v216
  %v273 = vsub.f32 %v73, %v216
  %v274 = vsub.f32 %v74, %v216
  %v275 = vsub.f32 %v75, %v216
  %v276 = vsub.f32 %v76, %v216
  %v277 = vsub.f32 %v77, %v216
  %v278 = vsub.f32 %v78, %v216
  %v279 = vsub.f32 %v79, %v216
  %v280 = vsub.f32 %v80, %v216
  %v281 = vmul.f32 %v217, %v217
  %v282 = vmul.f32 %v218, %v218
  %v283 = vmul.f32 %v219, %v219
  %v284 = vmul.f32 %v220, %v220
  %v285 = vmul.f32 %v221, %v221
  %v286 = vmul.f32 %v222, %v222
  %v287 = vmul.f32 %v223, %v223
  %v288 = vmul.f32 %v224, %v224
  %v289 = vmul.f32 %v225, %v225
  %v290 = vmul.f32 %v226, %v226
  %v291 = vmul.f32 %v227, %v227
  %v292 = vmul.f32 %v228, %v228
  %v293 = vmul.f32 %v229, %v229
  %v294 = vmul.f32 %v230, %v230
  %v295 = vmul.f32 %v231, %v231
  %v296 = vmul.f32 %v232, %v232
  %v297 = vmul.f32 %v233, %v233
  %v298 = vmul.f32 %v234, %v234
  %v299 = vmul.f32 %v235, %v235
  %v300 = vmul.f32 %v236, %v236
  %v301 = vmul.f32 %v237, %v237
  %v302 = vmul.f32 %v238, %v238
  %v303 = vmul.f32 %v239, %v239
  %v304 = vmul.f32 %v240, %v240
  %v305 = vmul.f32 %v241, %v241
  %v306 = vmul.f32 %v242, %v242
  %v307 = vmul.f32 %v243, %v243
  %v308 = vmul.f32 %v244, %v244
  %v309 = vmul.f32 %v245, %v245
  %v310 = vmul.f32 %v246, %v246
  %v311 = vmul.f32 %v247, %v247
  %v312 = vmul.f32 %v248, %v248
  %v313 = vmul.f32 %v249, %v249
  %v314 = vmul.f32 %v250, %v250
  %v315 = vmul.f32 %v251, %v251
  %v316 = vmul.f32 %v252, %v252
  %v317 = vmul.f32 %v253, %v253
  %v318 = vmul.f32 %v254, %v254
  %v319 = vmul.f32 %v255, %v255
  %v320 = vmul.f32 %v256, %v256
  %v321 = vmul.f32 %v257, %v257
  %v322 = vmul.f32 %v258, %v258
  %v323 = vmul.f32 %v259, %v259
  %v324 = vmul.f32 %v260, %v260
  %v325 = vmul.f32 %v261, %v261
  %v326 = vmul.f32 %v262, %v262
  %v327 = vmul.f32 %v263, %v263
  %v328 = vmul.f32 %v264, %v264
  %v329 = vmul.f32 %v265, %v265
  %v330 = vmul.f32 %v266, %v266
  %v331 = vmul.f32 %v267, %v267
  %v332 = vmul.f32 %v268, %v268
  %v333 = vmul.f32 %v269, %v269
  %v334 = vmul.f32 %v270, %v270
  %v335 = vmul.f32 %v271, %v271
  %v336 = vmul.f32 %v272, %v272
  %v337 = vmul.f32 %v273, %v273
  %v338 = vmul.f32 %v274, %v274
  %v339 = vmul.f32 %v275, %v275
  %v340 = vmul.f32 %v276, %v276
  %v341 = vmul.f32 %v277, %v277
  %v342 = vmul.f32 %v278, %v278
  %v343 = vmul.f32 %v279, %v279
  %v344 = vmul.f32 %v280, %v280
  %v345 = vsel %vm81, %v281, 0.0
  %v346 = vsel %vm81, %v282, 0.0
  %v347 = vadd.f32 %v345, %v346
  %v348 = vsel %vm81, %v283, 0.0
  %v349 = vadd.f32 %v347, %v348
  %v350 = vsel %vm81, %v284, 0.0
  %v351 = vadd.f32 %v349, %v350
  %v352 = vsel %vm81, %v285, 0.0
  %v353 = vadd.f32 %v351, %v352
  %v354 = vsel %vm81, %v286, 0.0
  %v355 = vadd.f32 %v353, %v354
  %v356 = vsel %vm81, %v287, 0.0
  %v357 = vadd.f32 %v355, %v356
  %v358 = vsel %vm81, %v288, 0.0
  %v359 = vadd.f32 %v357, %v358
  %v360 = vsel %vm81, %v289, 0.0
  %v361 = vadd.f32 %v359, %v360
  %v362 = vsel %vm81, %v290, 0.0
  %v363 = vadd.f32 %v361, %v362
  %v364 = vsel %vm81, %v291, 0.0
  %v365 = vadd.f32 %v363, %v364
  %v366 = vsel %vm81, %v292, 0.0
  %v367 = vadd.f32 %v365, %v366
  %v368 = vsel %vm81, %v293, 0.0
  %v369 = vadd.f32 %v367, %v368
  %v370 = vsel %vm81, %v294, 0.0
  %v371 = vadd.f32 %v369, %v370
  %v372 = vsel %vm81, %v295, 0.0
  %v373 = vadd.f32 %v371, %v372
  %v374 = vsel %vm81, %v296, 0.0
  %v375 = vadd.f32 %v373, %v374
  %v376 = vsel %vm81, %v297, 0.0
  %v377 = vadd.f32 %v375, %v376
  %v378 = vsel %vm81, %v298, 0.0
  %v379 = vadd.f32 %v377, %v378
  %v380 = vsel %vm81, %v299, 0.0
  %v381 = vadd.f32 %v379, %v380
  %v382 = vsel %vm81, %v300, 0.0
  %v383 = vadd.f32 %v381, %v382
  %v384 = vsel %vm81, %v301, 0.0
  %v385 = vadd.f32 %v383, %v384
  %v386 = vsel %vm81, %v302, 0.0
  %v387 = vadd.f32 %v385, %v386
  %v388 = vsel %vm81, %v303, 0.0
  %v389 = vadd.f32 %v387, %v388
  %v390 = vsel %vm81, %v304, 0.0
  %v391 = vadd.f32 %v389, %v390
  %v392 = vsel %vm81, %v305, 0.0
  %v393 = vadd.f32 %v391, %v392
  %v394 = vsel %vm81, %v306, 0.0
  %v395 = vadd.f32 %v393, %v394
  %v396 = vsel %vm81, %v307, 0.0
  %v397 = vadd.f32 %v395, %v396
  %v398 = vsel %vm81, %v308, 0.0
  %v399 = vadd.f32 %v397, %v398
  %v400 = vsel %vm81, %v309, 0.0
  %v401 = vadd.f32 %v399, %v400
  %v402 = vsel %vm81, %v310, 0.0
  %v403 = vadd.f32 %v401, %v402
  %v404 = vsel %vm81, %v311, 0.0
  %v405 = vadd.f32 %v403, %v404
  %v406 = vsel %vm81, %v312, 0.0
  %v407 = vadd.f32 %v405, %v406
  %v408 = vsel %vm81, %v313, 0.0
  %v409 = vadd.f32 %v407, %v408
  %v410 = vsel %vm81, %v314, 0.0
  %v411 = vadd.f32 %v409, %v410
  %v412 = vsel %vm81, %v315, 0.0
  %v413 = vadd.f32 %v411, %v412
  %v414 = vsel %vm81, %v316, 0.0
  %v415 = vadd.f32 %v413, %v414
  %v416 = vsel %vm81, %v317, 0.0
  %v417 = vadd.f32 %v415, %v416
  %v418 = vsel %vm81, %v318, 0.0
  %v419 = vadd.f32 %v417, %v418
  %v420 = vsel %vm81, %v319, 0.0
  %v421 = vadd.f32 %v419, %v420
  %v422 = vsel %vm81, %v320, 0.0
  %v423 = vadd.f32 %v421, %v422
  %v424 = vsel %vm81, %v321, 0.0
  %v425 = vadd.f32 %v423, %v424
  %v426 = vsel %vm81, %v322, 0.0
  %v427 = vadd.f32 %v425, %v426
  %v428 = vsel %vm81, %v323, 0.0
  %v429 = vadd.f32 %v427, %v428
  %v430 = vsel %vm81, %v324, 0.0
  %v431 = vadd.f32 %v429, %v430
  %v432 = vsel %vm81, %v325, 0.0
  %v433 = vadd.f32 %v431, %v432
  %v434 = vsel %vm81, %v326, 0.0
  %v435 = vadd.f32 %v433, %v434
  %v436 = vsel %vm81, %v327, 0.0
  %v437 = vadd.f32 %v435, %v436
  %v438 = vsel %vm81, %v328, 0.0
  %v439 = vadd.f32 %v437, %v438
  %v440 = vsel %vm81, %v329, 0.0
  %v441 = vadd.f32 %v439, %v440
  %v442 = vsel %vm81, %v330, 0.0
  %v443 = vadd.f32 %v441, %v442
  %v444 = vsel %vm81, %v331, 0.0
  %v445 = vadd.f32 %v443, %v444
  %v446 = vsel %vm81, %v332, 0.0
  %v447 = vadd.f32 %v445, %v446
  %v448 = vsel %vm81, %v333, 0.0
  %v449 = vadd.f32 %v447, %v448
  %v450 = vsel %vm81, %v334, 0.0
  %v451 = vadd.f32 %v449, %v450
  %v452 = vsel %vm81, %v335, 0.0
  %v453 = vadd.f32 %v451, %v452
  %v454 = vsel %vm81, %v336, 0.0
  %v455 = vadd.f32 %v453, %v454
  %v456 = vsel %vm81, %v337, 0.0
  %v457 = vadd.f32 %v455, %v456
  %v458 = vsel %vm81, %v338, 0.0
  %v459 = vadd.f32 %v457, %v458
  %v460 = vsel %vm81, %v339, 0.0
  %v461 = vadd.f32 %v459, %v460
  %v462 = vsel %vm81, %v340, 0.0
  %v463 = vadd.f32 %v461, %v462
  %v464 = vsel %vm81, %v341, 0.0
  %v465 = vadd.f32 %v463, %v464
  %v466 = vsel %vm81, %v342, 0.0
  %v467 = vadd.f32 %v465, %v466
  %v468 = vsel %vm81, %v343, 0.0
  %v469 = vadd.f32 %v467, %v468
  %v470 = vsel %vm81, %v344, 0.0
  %v471 = vadd.f32 %v469, %v470
  %v472 = vrot.slane %v471, 4
  %v473 = vadd.f32 %v471, %v472
  %v474 = vrot.slane %v473, 2
  %v475 = vadd.f32 %v473, %v474
  %v476 = vrot.slane %v475, 1
  %v477 = vadd.f32 %v475, %v476
  %v478 = vmul.f32 %v477, %v215
  %v479 = vld [vmem:[%s1] sm:$0x1]
  %v480 = vadd.f32 %v478, 1e-05
  %v481 = vrsqrt.pop %v480
  %v482 = vmul.f32 %v479, %v481
  %v484 = vlaneseq
  %v485 = vshrl.u32 %v484, 7
  %v486 = vsub.s32 0, %v485
  %v487 = vrot.slane %v482, %v486
  %v489 = vmul.f32 %v217, %v487
  %v490 = vmul.f32 %v218, %v487
  %v491 = vmul.f32 %v219, %v487
  %v492 = vmul.f32 %v220, %v487
  %v493 = vmul.f32 %v221, %v487
  %v494 = vmul.f32 %v222, %v487
  %v495 = vmul.f32 %v223, %v487
  %v496 = vmul.f32 %v224, %v487
  %v497 = vmul.f32 %v225, %v487
  %v498 = vmul.f32 %v226, %v487
  %v499 = vmul.f32 %v227, %v487
  %v500 = vmul.f32 %v228, %v487
  %v501 = vmul.f32 %v229, %v487
  %v502 = vmul.f32 %v230, %v487
  %v503 = vmul.f32 %v231, %v487
  %v504 = vmul.f32 %v232, %v487
  %v505 = vmul.f32 %v233, %v487
  %v506 = vmul.f32 %v234, %v487
  %v507 = vmul.f32 %v235, %v487
  %v508 = vmul.f32 %v236, %v487
  %v509 = vmul.f32 %v237, %v487
  %v510 = vmul.f32 %v238, %v487
  %v511 = vmul.f32 %v239, %v487
  %v512 = vmul.f32 %v240, %v487
  %v513 = vmul.f32 %v241, %v487
  %v514 = vmul.f32 %v242, %v487
  %v515 = vmul.f32 %v243, %v487
  %v516 = vmul.f32 %v244, %v487
  %v517 = vmul.f32 %v245, %v487
  %v518 = vmul.f32 %v246, %v487
  %v519 = vmul.f32 %v247, %v487
  %v520 = vmul.f32 %v248, %v487
  %v521 = vmul.f32 %v249, %v487
  %v522 = vmul.f32 %v250, %v487
  %v523 = vmul.f32 %v251, %v487
  %v524 = vmul.f32 %v252, %v487
  %v525 = vmul.f32 %v253, %v487
  %v526 = vmul.f32 %v254, %v487
  %v527 = vmul.f32 %v255, %v487
  %v528 = vmul.f32 %v256, %v487
  %v529 = vmul.f32 %v257, %v487
  %v530 = vmul.f32 %v258, %v487
  %v531 = vmul.f32 %v259, %v487
  %v532 = vmul.f32 %v260, %v487
  %v533 = vmul.f32 %v261, %v487
  %v534 = vmul.f32 %v262, %v487
  %v535 = vmul.f32 %v263, %v487
  %v536 = vmul.f32 %v264, %v487
  %v537 = vmul.f32 %v265, %v487
  %v538 = vmul.f32 %v266, %v487
  %v539 = vmul.f32 %v267, %v487
  %v540 = vmul.f32 %v268, %v487
  %v541 = vmul.f32 %v269, %v487
  %v542 = vmul.f32 %v270, %v487
  %v543 = vmul.f32 %v271, %v487
  %v544 = vmul.f32 %v272, %v487
  %v545 = vmul.f32 %v273, %v487
  %v546 = vmul.f32 %v274, %v487
  %v547 = vmul.f32 %v275, %v487
  %v548 = vmul.f32 %v276, %v487
  %v549 = vmul.f32 %v277, %v487
  %v550 = vmul.f32 %v278, %v487
  %v551 = vmul.f32 %v279, %v487
  %v552 = vmul.f32 %v280, %v487
  %v553 = vld [vmem:[%s2] sm:$0x1]
  %v555 = vlaneseq
  %v556 = vshrl.u32 %v555, 7
  %v557 = vsub.s32 0, %v556
  %v558 = vrot.slane %v553, %v557
  %v560 = vadd.f32 %v489, %v558
  %v561 = vadd.f32 %v490, %v558
  %v562 = vadd.f32 %v491, %v558
  %v563 = vadd.f32 %v492, %v558
  %v564 = vadd.f32 %v493, %v558
  %v565 = vadd.f32 %v494, %v558
  %v566 = vadd.f32 %v495, %v558
  %v567 = vadd.f32 %v496, %v558
  %v568 = vadd.f32 %v497, %v558
  %v569 = vadd.f32 %v498, %v558
  %v570 = vadd.f32 %v499, %v558
  %v571 = vadd.f32 %v500, %v558
  %v572 = vadd.f32 %v501, %v558
  %v573 = vadd.f32 %v502, %v558
  %v574 = vadd.f32 %v503, %v558
  %v575 = vadd.f32 %v504, %v558
  %v576 = vadd.f32 %v505, %v558
  %v577 = vadd.f32 %v506, %v558
  %v578 = vadd.f32 %v507, %v558
  %v579 = vadd.f32 %v508, %v558
  %v580 = vadd.f32 %v509, %v558
  %v581 = vadd.f32 %v510, %v558
  %v582 = vadd.f32 %v511, %v558
  %v583 = vadd.f32 %v512, %v558
  %v584 = vadd.f32 %v513, %v558
  %v585 = vadd.f32 %v514, %v558
  %v586 = vadd.f32 %v515, %v558
  %v587 = vadd.f32 %v516, %v558
  %v588 = vadd.f32 %v517, %v558
  %v589 = vadd.f32 %v518, %v558
  %v590 = vadd.f32 %v519, %v558
  %v591 = vadd.f32 %v520, %v558
  %v592 = vadd.f32 %v521, %v558
  %v593 = vadd.f32 %v522, %v558
  %v594 = vadd.f32 %v523, %v558
  %v595 = vadd.f32 %v524, %v558
  %v596 = vadd.f32 %v525, %v558
  %v597 = vadd.f32 %v526, %v558
  %v598 = vadd.f32 %v527, %v558
  %v599 = vadd.f32 %v528, %v558
  %v600 = vadd.f32 %v529, %v558
  %v601 = vadd.f32 %v530, %v558
  %v602 = vadd.f32 %v531, %v558
  %v603 = vadd.f32 %v532, %v558
  %v604 = vadd.f32 %v533, %v558
  %v605 = vadd.f32 %v534, %v558
  %v606 = vadd.f32 %v535, %v558
  %v607 = vadd.f32 %v536, %v558
  %v608 = vadd.f32 %v537, %v558
  %v609 = vadd.f32 %v538, %v558
  %v610 = vadd.f32 %v539, %v558
  %v611 = vadd.f32 %v540, %v558
  %v612 = vadd.f32 %v541, %v558
  %v613 = vadd.f32 %v542, %v558
  %v614 = vadd.f32 %v543, %v558
  %v615 = vadd.f32 %v544, %v558
  %v616 = vadd.f32 %v545, %v558
  %v617 = vadd.f32 %v546, %v558
  %v618 = vadd.f32 %v547, %v558
  %v619 = vadd.f32 %v548, %v558
  %v620 = vadd.f32 %v549, %v558
  %v621 = vadd.f32 %v550, %v558
  %v622 = vadd.f32 %v551, %v558
  %v623 = vadd.f32 %v552, %v558
  %v624 = vld [vmem:[%s3] sm:$0x1]
  %vm625 = vcmp.ge.f32.partialorder %v560, 0.0
  %vm626 = vcmp.ge.f32.partialorder %v561, 0.0
  %vm627 = vcmp.ge.f32.partialorder %v562, 0.0
  %vm628 = vcmp.ge.f32.partialorder %v563, 0.0
  %vm629 = vcmp.ge.f32.partialorder %v564, 0.0
  %vm630 = vcmp.ge.f32.partialorder %v565, 0.0
  %vm631 = vcmp.ge.f32.partialorder %v566, 0.0
  %vm632 = vcmp.ge.f32.partialorder %v567, 0.0
  %vm633 = vcmp.ge.f32.partialorder %v568, 0.0
  %vm634 = vcmp.ge.f32.partialorder %v569, 0.0
  %vm635 = vcmp.ge.f32.partialorder %v570, 0.0
  %vm636 = vcmp.ge.f32.partialorder %v571, 0.0
  %vm637 = vcmp.ge.f32.partialorder %v572, 0.0
  %vm638 = vcmp.ge.f32.partialorder %v573, 0.0
  %vm639 = vcmp.ge.f32.partialorder %v574, 0.0
  %vm640 = vcmp.ge.f32.partialorder %v575, 0.0
  %vm641 = vcmp.ge.f32.partialorder %v576, 0.0
  %vm642 = vcmp.ge.f32.partialorder %v577, 0.0
  %vm643 = vcmp.ge.f32.partialorder %v578, 0.0
  %vm644 = vcmp.ge.f32.partialorder %v579, 0.0
  %vm645 = vcmp.ge.f32.partialorder %v580, 0.0
  %vm646 = vcmp.ge.f32.partialorder %v581, 0.0
  %vm647 = vcmp.ge.f32.partialorder %v582, 0.0
  %vm648 = vcmp.ge.f32.partialorder %v583, 0.0
  %vm649 = vcmp.ge.f32.partialorder %v584, 0.0
  %vm650 = vcmp.ge.f32.partialorder %v585, 0.0
  %vm651 = vcmp.ge.f32.partialorder %v586, 0.0
  %vm652 = vcmp.ge.f32.partialorder %v587, 0.0
  %vm653 = vcmp.ge.f32.partialorder %v588, 0.0
  %vm654 = vcmp.ge.f32.partialorder %v589, 0.0
  %vm655 = vcmp.ge.f32.partialorder %v590, 0.0
  %vm656 = vcmp.ge.f32.partialorder %v591, 0.0
  %vm657 = vcmp.ge.f32.partialorder %v592, 0.0
  %vm658 = vcmp.ge.f32.partialorder %v593, 0.0
  %vm659 = vcmp.ge.f32.partialorder %v594, 0.0
  %vm660 = vcmp.ge.f32.partialorder %v595, 0.0
  %vm661 = vcmp.ge.f32.partialorder %v596, 0.0
  %vm662 = vcmp.ge.f32.partialorder %v597, 0.0
  %vm663 = vcmp.ge.f32.partialorder %v598, 0.0
  %vm664 = vcmp.ge.f32.partialorder %v599, 0.0
  %vm665 = vcmp.ge.f32.partialorder %v600, 0.0
  %vm666 = vcmp.ge.f32.partialorder %v601, 0.0
  %vm667 = vcmp.ge.f32.partialorder %v602, 0.0
  %vm668 = vcmp.ge.f32.partialorder %v603, 0.0
  %vm669 = vcmp.ge.f32.partialorder %v604, 0.0
  %vm670 = vcmp.ge.f32.partialorder %v605, 0.0
  %vm671 = vcmp.ge.f32.partialorder %v606, 0.0
  %vm672 = vcmp.ge.f32.partialorder %v607, 0.0
  %vm673 = vcmp.ge.f32.partialorder %v608, 0.0
  %vm674 = vcmp.ge.f32.partialorder %v609, 0.0
  %vm675 = vcmp.ge.f32.partialorder %v610, 0.0
  %vm676 = vcmp.ge.f32.partialorder %v611, 0.0
  %vm677 = vcmp.ge.f32.partialorder %v612, 0.0
  %vm678 = vcmp.ge.f32.partialorder %v613, 0.0
  %vm679 = vcmp.ge.f32.partialorder %v614, 0.0
  %vm680 = vcmp.ge.f32.partialorder %v615, 0.0
  %vm681 = vcmp.ge.f32.partialorder %v616, 0.0
  %vm682 = vcmp.ge.f32.partialorder %v617, 0.0
  %vm683 = vcmp.ge.f32.partialorder %v618, 0.0
  %vm684 = vcmp.ge.f32.partialorder %v619, 0.0
  %vm685 = vcmp.ge.f32.partialorder %v620, 0.0
  %vm686 = vcmp.ge.f32.partialorder %v621, 0.0
  %vm687 = vcmp.ge.f32.partialorder %v622, 0.0
  %vm688 = vcmp.ge.f32.partialorder %v623, 0.0
  %v690 = vlaneseq
  %v691 = vshrl.u32 %v690, 7
  %v692 = vsub.s32 0, %v691
  %v693 = vrot.slane %v624, %v692
  %v695 = vmul.f32 %v693, %v560
  %v696 = vmul.f32 %v693, %v561
  %v697 = vmul.f32 %v693, %v562
  %v698 = vmul.f32 %v693, %v563
  %v699 = vmul.f32 %v693, %v564
  %v700 = vmul.f32 %v693, %v565
  %v701 = vmul.f32 %v693, %v566
  %v702 = vmul.f32 %v693, %v567
  %v703 = vmul.f32 %v693, %v568
  %v704 = vmul.f32 %v693, %v569
  %v705 = vmul.f32 %v693, %v570
  %v706 = vmul.f32 %v693, %v571
  %v707 = vmul.f32 %v693, %v572
  %v708 = vmul.f32 %v693, %v573
  %v709 = vmul.f32 %v693, %v574
  %v710 = vmul.f32 %v693, %v575
  %v711 = vmul.f32 %v693, %v576
  %v712 = vmul.f32 %v693, %v577
  %v713 = vmul.f32 %v693, %v578
  %v714 = vmul.f32 %v693, %v579
  %v715 = vmul.f32 %v693, %v580
  %v716 = vmul.f32 %v693, %v581
  %v717 = vmul.f32 %v693, %v582
  %v718 = vmul.f32 %v693, %v583
  %v719 = vmul.f32 %v693, %v584
  %v720 = vmul.f32 %v693, %v585
  %v721 = vmul.f32 %v693, %v586
  %v722 = vmul.f32 %v693, %v587
  %v723 = vmul.f32 %v693, %v588
  %v724 = vmul.f32 %v693, %v589
  %v725 = vmul.f32 %v693, %v590
  %v726 = vmul.f32 %v693, %v591
  %v727 = vmul.f32 %v693, %v592
  %v728 = vmul.f32 %v693, %v593
  %v729 = vmul.f32 %v693, %v594
  %v730 = vmul.f32 %v693, %v595
  %v731 = vmul.f32 %v693, %v596
  %v732 = vmul.f32 %v693, %v597
  %v733 = vmul.f32 %v693, %v598
  %v734 = vmul.f32 %v693, %v599
  %v735 = vmul.f32 %v693, %v600
  %v736 = vmul.f32 %v693, %v601
  %v737 = vmul.f32 %v693, %v602
  %v738 = vmul.f32 %v693, %v603
  %v739 = vmul.f32 %v693, %v604
  %v740 = vmul.f32 %v693, %v605
  %v741 = vmul.f32 %v693, %v606
  %v742 = vmul.f32 %v693, %v607
  %v743 = vmul.f32 %v693, %v608
  %v744 = vmul.f32 %v693, %v609
  %v745 = vmul.f32 %v693, %v610
  %v746 = vmul.f32 %v693, %v611
  %v747 = vmul.f32 %v693, %v612
  %v748 = vmul.f32 %v693, %v613
  %v749 = vmul.f32 %v693, %v614
  %v750 = vmul.f32 %v693, %v615
  %v751 = vmul.f32 %v693, %v616
  %v752 = vmul.f32 %v693, %v617
  %v753 = vmul.f32 %v693, %v618
  %v754 = vmul.f32 %v693, %v619
  %v755 = vmul.f32 %v693, %v620
  %v756 = vmul.f32 %v693, %v621
  %v757 = vmul.f32 %v693, %v622
  %v758 = vmul.f32 %v693, %v623
  %v759 = vsel %vm625, %v560, %v695
  %v760 = vsel %vm626, %v561, %v696
  %v761 = vsel %vm627, %v562, %v697
  %v762 = vsel %vm628, %v563, %v698
  %v763 = vsel %vm629, %v564, %v699
  %v764 = vsel %vm630, %v565, %v700
  %v765 = vsel %vm631, %v566, %v701
  %v766 = vsel %vm632, %v567, %v702
  %v767 = vsel %vm633, %v568, %v703
  %v768 = vsel %vm634, %v569, %v704
  %v769 = vsel %vm635, %v570, %v705
  %v770 = vsel %vm636, %v571, %v706
  %v771 = vsel %vm637, %v572, %v707
  %v772 = vsel %vm638, %v573, %v708
  %v773 = vsel %vm639, %v574, %v709
  %v774 = vsel %vm640, %v575, %v710
  %v775 = vsel %vm641, %v576, %v711
  %v776 = vsel %vm642, %v577, %v712
  %v777 = vsel %vm643, %v578, %v713
  %v778 = vsel %vm644, %v579, %v714
  %v779 = vsel %vm645, %v580, %v715
  %v780 = vsel %vm646, %v581, %v716
  %v781 = vsel %vm647, %v582, %v717
  %v782 = vsel %vm648, %v583, %v718
  %v783 = vsel %vm649, %v584, %v719
  %v784 = vsel %vm650, %v585, %v720
  %v785 = vsel %vm651, %v586, %v721
  %v786 = vsel %vm652, %v587, %v722
  %v787 = vsel %vm653, %v588, %v723
  %v788 = vsel %vm654, %v589, %v724
  %v789 = vsel %vm655, %v590, %v725
  %v790 = vsel %vm656, %v591, %v726
  %v791 = vsel %vm657, %v592, %v727
  %v792 = vsel %vm658, %v593, %v728
  %v793 = vsel %vm659, %v594, %v729
  %v794 = vsel %vm660, %v595, %v730
  %v795 = vsel %vm661, %v596, %v731
  %v796 = vsel %vm662, %v597, %v732
  %v797 = vsel %vm663, %v598, %v733
  %v798 = vsel %vm664, %v599, %v734
  %v799 = vsel %vm665, %v600, %v735
  %v800 = vsel %vm666, %v601, %v736
  %v801 = vsel %vm667, %v602, %v737
  %v802 = vsel %vm668, %v603, %v738
  %v803 = vsel %vm669, %v604, %v739
  %v804 = vsel %vm670, %v605, %v740
  %v805 = vsel %vm671, %v606, %v741
  %v806 = vsel %vm672, %v607, %v742
  %v807 = vsel %vm673, %v608, %v743
  %v808 = vsel %vm674, %v609, %v744
  %v809 = vsel %vm675, %v610, %v745
  %v810 = vsel %vm676, %v611, %v746
  %v811 = vsel %vm677, %v612, %v747
  %v812 = vsel %vm678, %v613, %v748
  %v813 = vsel %vm679, %v614, %v749
  %v814 = vsel %vm680, %v615, %v750
  %v815 = vsel %vm681, %v616, %v751
  %v816 = vsel %vm682, %v617, %v752
  %v817 = vsel %vm683, %v618, %v753
  %v818 = vsel %vm684, %v619, %v754
  %v819 = vsel %vm685, %v620, %v755
  %v820 = vsel %vm686, %v621, %v756
  %v821 = vsel %vm687, %v622, %v757
  %v822 = vsel %vm688, %v623, %v758
  %823 = vst.msk [vmem:[%s4] sm:$0xff] %vm81, 0.0
  %824 = vst.msk [vmem:[%s4 + $0x8] sm:$0xff] %vm81, 0.0
  %vm825 = vcmask 517120
  %826 = vst.msk [vmem:[%s4 + $0x10] sm:$0x3] %vm825, 0.0
  %827 = vst.msk [vmem:[%s4 + $0x18] sm:$0xff] %vm81, 0.0
  %828 = vst.msk [vmem:[%s4 + $0x20] sm:$0xff] %vm81, 0.0
  %829 = vst.msk [vmem:[%s4 + $0x28] sm:$0x3] %vm825, 0.0
  %830 = vst.msk [vmem:[%s4 + $0x30] sm:$0xff] %vm81, 0.0
  %831 = vst.msk [vmem:[%s4 + $0x38] sm:$0xff] %vm81, 0.0
  %832 = vst.msk [vmem:[%s4 + $0x40] sm:$0x3] %vm825, 0.0
  %833 = vst.msk [vmem:[%s4 + $0x48] sm:$0xff] %vm81, 0.0
  %834 = vst.msk [vmem:[%s4 + $0x50] sm:$0xff] %vm81, 0.0
  %835 = vst.msk [vmem:[%s4 + $0x58] sm:$0x3] %vm825, 0.0
  %836 = vst.msk [vmem:[%s4 + $0x60] sm:$0xff] %vm81, 0.0
  %837 = vst.msk [vmem:[%s4 + $0x68] sm:$0xff] %vm81, 0.0
  %838 = vst.msk [vmem:[%s4 + $0x70] sm:$0x3] %vm825, 0.0
  %839 = vst.msk [vmem:[%s4 + $0x78] sm:$0xff] %vm81, 0.0
  %840 = vst.msk [vmem:[%s4 + $0x80] sm:$0xff] %vm81, 0.0
  %841 = vst.msk [vmem:[%s4 + $0x88] sm:$0x3] %vm825, 0.0
  %842 = vst.msk [vmem:[%s4 + $0x90] sm:$0xff] %vm81, 0.0
  %843 = vst.msk [vmem:[%s4 + $0x98] sm:$0xff] %vm81, 0.0
  %844 = vst.msk [vmem:[%s4 + $0xa0] sm:$0x3] %vm825, 0.0
  %845 = vst.msk [vmem:[%s4 + $0xa8] sm:$0xff] %vm81, 0.0
  %846 = vst.msk [vmem:[%s4 + $0xb0] sm:$0xff] %vm81, 0.0
  %847 = vst.msk [vmem:[%s4 + $0xb8] sm:$0x3] %vm825, 0.0
  %848 = vst.msk [vmem:[%s4 + $0xc0] sm:$0xff] %vm81, 0.0
  %849 = vst.msk [vmem:[%s4 + $0xc8] sm:$0xff] %vm81, 0.0
  %850 = vst.msk [vmem:[%s4 + $0xd0] sm:$0x3] %vm825, 0.0
  %851 = vst.msk [vmem:[%s4 + $0xd8] sm:$0xff] %vm81, 0.0
  %852 = vst.msk [vmem:[%s4 + $0xe0] sm:$0xff] %vm81, 0.0
  %853 = vst.msk [vmem:[%s4 + $0xe8] sm:$0x3] %vm825, 0.0
  %854 = vst.msk [vmem:[%s4 + $0xf0] sm:$0xff] %vm81, 0.0
  %855 = vst.msk [vmem:[%s4 + $0xf8] sm:$0xff] %vm81, 0.0
  %856 = vst.msk [vmem:[%s4 + $0x100] sm:$0x3] %vm825, 0.0
  %857 = vst.msk [vmem:[%s4 + $0x108] sm:$0xff] %vm81, 0.0
  %858 = vst.msk [vmem:[%s4 + $0x110] sm:$0xff] %vm81, 0.0
  %859 = vst.msk [vmem:[%s4 + $0x118] sm:$0x3] %vm825, 0.0
  %860 = vst.msk [vmem:[%s4 + $0x120] sm:$0xff] %vm81, 0.0
  %861 = vst.msk [vmem:[%s4 + $0x128] sm:$0xff] %vm81, 0.0
  %862 = vst.msk [vmem:[%s4 + $0x130] sm:$0x3] %vm825, 0.0
  %863 = vst.msk [vmem:[%s4 + $0x138] sm:$0xff] %vm81, 0.0
  %864 = vst.msk [vmem:[%s4 + $0x140] sm:$0xff] %vm81, 0.0
  %865 = vst.msk [vmem:[%s4 + $0x148] sm:$0x3] %vm825, 0.0
  %866 = vst.msk [vmem:[%s4 + $0x150] sm:$0xff] %vm81, 0.0
  %867 = vst.msk [vmem:[%s4 + $0x158] sm:$0xff] %vm81, 0.0
  %868 = vst.msk [vmem:[%s4 + $0x160] sm:$0x3] %vm825, 0.0
  %869 = vst.msk [vmem:[%s4 + $0x168] sm:$0xff] %vm81, 0.0
  %870 = vst.msk [vmem:[%s4 + $0x170] sm:$0xff] %vm81, 0.0
  %871 = vst.msk [vmem:[%s4 + $0x178] sm:$0x3] %vm825, 0.0
  %872 = vst.msk [vmem:[%s4 + $0x180] sm:$0xff] %vm81, 0.0
  %873 = vst.msk [vmem:[%s4 + $0x188] sm:$0xff] %vm81, 0.0
  %874 = vst.msk [vmem:[%s4 + $0x190] sm:$0x3] %vm825, 0.0
  %875 = vst.msk [vmem:[%s4 + $0x198] sm:$0xff] %vm81, 0.0
  %876 = vst.msk [vmem:[%s4 + $0x1a0] sm:$0xff] %vm81, 0.0
  %877 = vst.msk [vmem:[%s4 + $0x1a8] sm:$0x3] %vm825, 0.0
  %878 = vst.msk [vmem:[%s4 + $0x1b0] sm:$0xff] %vm81, 0.0
  %879 = vst.msk [vmem:[%s4 + $0x1b8] sm:$0xff] %vm81, 0.0
  %880 = vst.msk [vmem:[%s4 + $0x1c0] sm:$0x3] %vm825, 0.0
  %881 = vst.msk [vmem:[%s4 + $0x1c8] sm:$0xff] %vm81, 0.0
  %882 = vst.msk [vmem:[%s4 + $0x1d0] sm:$0xff] %vm81, 0.0
  %883 = vst.msk [vmem:[%s4 + $0x1d8] sm:$0x3] %vm825, 0.0
  %884 = vst.msk [vmem:[%s4 + $0x1e0] sm:$0xff] %vm81, 0.0
  %885 = vst.msk [vmem:[%s4 + $0x1e8] sm:$0xff] %vm81, 0.0
  %886 = vst.msk [vmem:[%s4 + $0x1f0] sm:$0x3] %vm825, 0.0
  %887 = vst.msk [vmem:[%s4 + $0x1f8] sm:$0xff] %vm81, 0.0
  %888 = vst.msk [vmem:[%s4 + $0x200] sm:$0xff] %vm81, 0.0
  %889 = vst.msk [vmem:[%s4 + $0x208] sm:$0x3] %vm825, 0.0
  %890 = vst.msk [vmem:[%s4 + $0x210] sm:$0xff] %vm81, 0.0
  %891 = vst.msk [vmem:[%s4 + $0x218] sm:$0xff] %vm81, 0.0
  %892 = vst.msk [vmem:[%s4 + $0x220] sm:$0x3] %vm825, 0.0
  %893 = vst.msk [vmem:[%s4 + $0x228] sm:$0xff] %vm81, 0.0
  %894 = vst.msk [vmem:[%s4 + $0x230] sm:$0xff] %vm81, 0.0
  %895 = vst.msk [vmem:[%s4 + $0x238] sm:$0x3] %vm825, 0.0
  %896 = vst.msk [vmem:[%s4 + $0x240] sm:$0xff] %vm81, 0.0
  %897 = vst.msk [vmem:[%s4 + $0x248] sm:$0xff] %vm81, 0.0
  %898 = vst.msk [vmem:[%s4 + $0x250] sm:$0x3] %vm825, 0.0
  %899 = vst.msk [vmem:[%s4 + $0x258] sm:$0xff] %vm81, 0.0
  %900 = vst.msk [vmem:[%s4 + $0x260] sm:$0xff] %vm81, 0.0
  %901 = vst.msk [vmem:[%s4 + $0x268] sm:$0x3] %vm825, 0.0
  %902 = vst.msk [vmem:[%s4 + $0x270] sm:$0xff] %vm81, 0.0
  %903 = vst.msk [vmem:[%s4 + $0x278] sm:$0xff] %vm81, 0.0
  %904 = vst.msk [vmem:[%s4 + $0x280] sm:$0x3] %vm825, 0.0
  %905 = vst.msk [vmem:[%s4 + $0x288] sm:$0xff] %vm81, 0.0
  %906 = vst.msk [vmem:[%s4 + $0x290] sm:$0xff] %vm81, 0.0
  %907 = vst.msk [vmem:[%s4 + $0x298] sm:$0x3] %vm825, 0.0
  %908 = vst.msk [vmem:[%s4 + $0x2a0] sm:$0xff] %vm81, 0.0
  %909 = vst.msk [vmem:[%s4 + $0x2a8] sm:$0xff] %vm81, 0.0
  %910 = vst.msk [vmem:[%s4 + $0x2b0] sm:$0x3] %vm825, 0.0
  %911 = vst.msk [vmem:[%s4 + $0x2b8] sm:$0xff] %vm81, 0.0
  %912 = vst.msk [vmem:[%s4 + $0x2c0] sm:$0xff] %vm81, 0.0
  %913 = vst.msk [vmem:[%s4 + $0x2c8] sm:$0x3] %vm825, 0.0
  %914 = vst.msk [vmem:[%s4 + $0x2d0] sm:$0xff] %vm81, 0.0
  %915 = vst.msk [vmem:[%s4 + $0x2d8] sm:$0xff] %vm81, 0.0
  %916 = vst.msk [vmem:[%s4 + $0x2e0] sm:$0x3] %vm825, 0.0
  %917 = vst.msk [vmem:[%s4 + $0x2e8] sm:$0xff] %vm81, 0.0
  %918 = vst.msk [vmem:[%s4 + $0x2f0] sm:$0xff] %vm81, 0.0
  %919 = vst.msk [vmem:[%s4 + $0x2f8] sm:$0x3] %vm825, 0.0
  %920 = vst.msk [vmem:[%s4 + $0x300] sm:$0xff] %vm81, 0.0
  %921 = vst.msk [vmem:[%s4 + $0x308] sm:$0xff] %vm81, 0.0
  %922 = vst.msk [vmem:[%s4 + $0x310] sm:$0x3] %vm825, 0.0
  %923 = vst.msk [vmem:[%s4 + $0x318] sm:$0xff] %vm81, 0.0
  %924 = vst.msk [vmem:[%s4 + $0x320] sm:$0xff] %vm81, 0.0
  %925 = vst.msk [vmem:[%s4 + $0x328] sm:$0x3] %vm825, 0.0
  %926 = vst.msk [vmem:[%s4 + $0x330] sm:$0xff] %vm81, 0.0
  %927 = vst.msk [vmem:[%s4 + $0x338] sm:$0xff] %vm81, 0.0
  %928 = vst.msk [vmem:[%s4 + $0x340] sm:$0x3] %vm825, 0.0
  %929 = vst.msk [vmem:[%s4 + $0x348] sm:$0xff] %vm81, 0.0
  %930 = vst.msk [vmem:[%s4 + $0x350] sm:$0xff] %vm81, 0.0
  %931 = vst.msk [vmem:[%s4 + $0x358] sm:$0x3] %vm825, 0.0
  %s932 = scalar_lea.vmem %s4, 24
  %933 = vst.msk [vmem:[%s932 + $0x1] sm:$0xff] %vm81, %v759
  %934 = vst.msk [vmem:[%s932 + $0x9] sm:$0xff] %vm81, %v760
  %935 = vst.msk [vmem:[%s932 + $0x19] sm:$0xff] %vm81, %v761
  %936 = vst.msk [vmem:[%s932 + $0x21] sm:$0xff] %vm81, %v762
  %937 = vst.msk [vmem:[%s932 + $0x31] sm:$0xff] %vm81, %v763
  %938 = vst.msk [vmem:[%s932 + $0x39] sm:$0xff] %vm81, %v764
  %939 = vst.msk [vmem:[%s932 + $0x49] sm:$0xff] %vm81, %v765
  %940 = vst.msk [vmem:[%s932 + $0x51] sm:$0xff] %vm81, %v766
  %941 = vst.msk [vmem:[%s932 + $0x61] sm:$0xff] %vm81, %v767
  %942 = vst.msk [vmem:[%s932 + $0x69] sm:$0xff] %vm81, %v768
  %943 = vst.msk [vmem:[%s932 + $0x79] sm:$0xff] %vm81, %v769
  %944 = vst.msk [vmem:[%s932 + $0x81] sm:$0xff] %vm81, %v770
  %945 = vst.msk [vmem:[%s932 + $0x91] sm:$0xff] %vm81, %v771
  %946 = vst.msk [vmem:[%s932 + $0x99] sm:$0xff] %vm81, %v772
  %947 = vst.msk [vmem:[%s932 + $0xa9] sm:$0xff] %vm81, %v773
  %948 = vst.msk [vmem:[%s932 + $0xb1] sm:$0xff] %vm81, %v774
  %949 = vst.msk [vmem:[%s932 + $0xc1] sm:$0xff] %vm81, %v775
  %950 = vst.msk [vmem:[%s932 + $0xc9] sm:$0xff] %vm81, %v776
  %951 = vst.msk [vmem:[%s932 + $0xd9] sm:$0xff] %vm81, %v777
  %952 = vst.msk [vmem:[%s932 + $0xe1] sm:$0xff] %vm81, %v778
  %953 = vst.msk [vmem:[%s932 + $0xf1] sm:$0xff] %vm81, %v779
  %954 = vst.msk [vmem:[%s932 + $0xf9] sm:$0xff] %vm81, %v780
  %955 = vst.msk [vmem:[%s932 + $0x109] sm:$0xff] %vm81, %v781
  %956 = vst.msk [vmem:[%s932 + $0x111] sm:$0xff] %vm81, %v782
  %957 = vst.msk [vmem:[%s932 + $0x121] sm:$0xff] %vm81, %v783
  %958 = vst.msk [vmem:[%s932 + $0x129] sm:$0xff] %vm81, %v784
  %959 = vst.msk [vmem:[%s932 + $0x139] sm:$0xff] %vm81, %v785
  %960 = vst.msk [vmem:[%s932 + $0x141] sm:$0xff] %vm81, %v786
  %961 = vst.msk [vmem:[%s932 + $0x151] sm:$0xff] %vm81, %v787
  %962 = vst.msk [vmem:[%s932 + $0x159] sm:$0xff] %vm81, %v788
  %963 = vst.msk [vmem:[%s932 + $0x169] sm:$0xff] %vm81, %v789
  %964 = vst.msk [vmem:[%s932 + $0x171] sm:$0xff] %vm81, %v790
  %965 = vst.msk [vmem:[%s932 + $0x1b1] sm:$0xff] %vm81, %v791
  %966 = vst.msk [vmem:[%s932 + $0x1b9] sm:$0xff] %vm81, %v792
  %967 = vst.msk [vmem:[%s932 + $0x1c9] sm:$0xff] %vm81, %v793
  %968 = vst.msk [vmem:[%s932 + $0x1d1] sm:$0xff] %vm81, %v794
  %969 = vst.msk [vmem:[%s932 + $0x1e1] sm:$0xff] %vm81, %v795
  %970 = vst.msk [vmem:[%s932 + $0x1e9] sm:$0xff] %vm81, %v796
  %971 = vst.msk [vmem:[%s932 + $0x1f9] sm:$0xff] %vm81, %v797
  %972 = vst.msk [vmem:[%s932 + $0x201] sm:$0xff] %vm81, %v798
  %973 = vst.msk [vmem:[%s932 + $0x211] sm:$0xff] %vm81, %v799
  %974 = vst.msk [vmem:[%s932 + $0x219] sm:$0xff] %vm81, %v800
  %975 = vst.msk [vmem:[%s932 + $0x229] sm:$0xff] %vm81, %v801
  %976 = vst.msk [vmem:[%s932 + $0x231] sm:$0xff] %vm81, %v802
  %977 = vst.msk [vmem:[%s932 + $0x241] sm:$0xff] %vm81, %v803
  %978 = vst.msk [vmem:[%s932 + $0x249] sm:$0xff] %vm81, %v804
  %979 = vst.msk [vmem:[%s932 + $0x259] sm:$0xff] %vm81, %v805
  %980 = vst.msk [vmem:[%s932 + $0x261] sm:$0xff] %vm81, %v806
  %981 = vst.msk [vmem:[%s932 + $0x271] sm:$0xff] %vm81, %v807
  %982 = vst.msk [vmem:[%s932 + $0x279] sm:$0xff] %vm81, %v808
  %983 = vst.msk [vmem:[%s932 + $0x289] sm:$0xff] %vm81, %v809
  %984 = vst.msk [vmem:[%s932 + $0x291] sm:$0xff] %vm81, %v810
  %985 = vst.msk [vmem:[%s932 + $0x2a1] sm:$0xff] %vm81, %v811
  %986 = vst.msk [vmem:[%s932 + $0x2a9] sm:$0xff] %vm81, %v812
  %987 = vst.msk [vmem:[%s932 + $0x2b9] sm:$0xff] %vm81, %v813
  %988 = vst.msk [vmem:[%s932 + $0x2c1] sm:$0xff] %vm81, %v814
  %989 = vst.msk [vmem:[%s932 + $0x2d1] sm:$0xff] %vm81, %v815
  %990 = vst.msk [vmem:[%s932 + $0x2d9] sm:$0xff] %vm81, %v816
  %991 = vst.msk [vmem:[%s932 + $0x2e9] sm:$0xff] %vm81, %v817
  %992 = vst.msk [vmem:[%s932 + $0x2f1] sm:$0xff] %vm81, %v818
  %993 = vst.msk [vmem:[%s932 + $0x301] sm:$0xff] %vm81, %v819
  %994 = vst.msk [vmem:[%s932 + $0x309] sm:$0xff] %vm81, %v820
  %995 = vst.msk [vmem:[%s932 + $0x319] sm:$0xff] %vm81, %v821
  %996 = vst.msk [vmem:[%s932 + $0x321] sm:$0xff] %vm81, %v822
  // Predicated region
  $region18: #{bottleneck_ir_sam_forward.8} parent=0 // pred_check
    _
  $region19: #{bottleneck_ir_sam_forward.8} parent=0 // pred_check_branch
    %998 = sbr.rel (0) target = $region21
  $region20: #{bottleneck_ir_sam_forward.8} parent=0 // pred_region
    _
  $region21: #{bottleneck_ir_sam_forward.8} parent=0 // pred_fallthru
    _
  // Predicated region
  $region22: #{bottleneck_ir_sam_forward.8} parent=0 // pred_check
    _
  $region23: #{bottleneck_ir_sam_forward.8} parent=0 // pred_check_branch
    %1000 = sbr.rel (0) target = $region25
  $region24: #{bottleneck_ir_sam_forward.8} parent=0 // pred_region
    _
  $region25: #{bottleneck_ir_sam_forward.8} parent=0 // pred_fallthru
    _

// kernel: bottleneck_ir_sam_forward.6
$region0: #{bottleneck_ir_sam_forward.6}
  #allocation0 [shape = 'u32[]', space=smem, size = 0x4, offset = 0x4, fixed_abs, tag = 'smem constant byte address 0x4 - core index']
  #allocation1 [shape = 'u32[144,128]{1,0:T(1,128)}', space=vmem, size = 0x12000, scoped, tag = 'internal scratch']
  %s0 = inlined_call_operand.hbm [shape: f32[2,16,16,32], index: 0, kind: input, shape index: {}]
  %s1 = inlined_call_operand.vmem [shape: f32[1,32], index: 1, kind: input, shape index: {}]
  %s2 = inlined_call_operand.vmem [shape: f32[1,32], index: 2, kind: input, shape index: {}]
  %s3 = inlined_call_operand.vmem [shape: f32[1,32], index: 3, kind: input, shape index: {}]
  %s4 = inlined_call_operand.vmem [shape: f32[2,18,18,32], index: 4, kind: output, shape index: {}]
  %s5 = sld [smem:[#allocation0]]
  $region30: #{bottleneck_ir_sam_forward.6} parent=0
    _
  %s7 = ssub.s32 1, %s5
  %s8 = scalar_select 0, %s7, %s5
  $region1: #{bottleneck_ir_sam_forward.6} parent=0
    #allocation2 [shape = 'u8[262144]{0}', space=vmem, size = 0x40000, scoped, tag = 'input window, operand 0, single buffered']
    #allocation3 [shape = 's32[1]{0}', space=sflag, size = 0x4, scoped, tag = 'scoped memory for bottleneck_ir_sam_forward.6']
    %9 = vsyncpa [#allocation3], 0
    // Predicated region
    $region2: #{bottleneck_ir_sam_forward.6} parent=1 // pred_check
      _
    $region3: #{bottleneck_ir_sam_forward.6} parent=1 // pred_check_branch
      %11 = sbr.rel (0) target = $region5
    $region4: #{bottleneck_ir_sam_forward.6} parent=1 // pred_region
      %s13 = ssub.s32 8192, 8192
      %14 = vsyncadd [#allocation3], %s13
      %s15 = sshll.u32 [#allocation2], 4
      %s16 = int_to_ptr.vmem [resolvable:$true] %s15
      %21 = dma.hbm_to_vmem [thread:$0]  %s0, 8192, %s16, [#allocation3], 128, 128, 8
    $region5: #{bottleneck_ir_sam_forward.6} parent=1 // pred_fallthru
      _
    // Predicated region
    $region6: #{bottleneck_ir_sam_forward.6} parent=1 // pred_check
      _
    $region7: #{bottleneck_ir_sam_forward.6} parent=1 // pred_check_branch
      %23 = sbr.rel (0) target = $region9
    $region8: #{bottleneck_ir_sam_forward.6} parent=1 // pred_region
      _
    $region9: #{bottleneck_ir_sam_forward.6} parent=1 // pred_fallthru
      _
    // Predicated region
    $region10: #{bottleneck_ir_sam_forward.6} parent=1 // pred_check
      _
    $region11: #{bottleneck_ir_sam_forward.6} parent=1 // pred_check_branch
      %25 = sbr.rel (0) target = $region13
    $region12: #{bottleneck_ir_sam_forward.6} parent=1 // pred_region
      _
    $region13: #{bottleneck_ir_sam_forward.6} parent=1 // pred_fallthru
      _
    // Predicated region
    $region14: #{bottleneck_ir_sam_forward.6} parent=1 // pred_check
      _
    $region15: #{bottleneck_ir_sam_forward.6} parent=1 // pred_check_branch
      %27 = sbr.rel (0) target = $region17
    $region16: #{bottleneck_ir_sam_forward.6} parent=1 // pred_region
      _
    $region17: #{bottleneck_ir_sam_forward.6} parent=1 // pred_fallthru
      _
    // Predicated region
    $region18: #{bottleneck_ir_sam_forward.6} parent=1 // pred_check
      _
    $region19: #{bottleneck_ir_sam_forward.6} parent=1 // pred_check_branch
      %29 = sbr.rel (0) target = $region21
    $region20: #{bottleneck_ir_sam_forward.6} parent=1 // pred_region
      %30 = dma.done [#allocation3], 8192
    $region21: #{bottleneck_ir_sam_forward.6} parent=1 // pred_fallthru
      _
    %v31 = vld [vmem:[#allocation2] sm:$0xff]
    %v32 = vld [vmem:[#allocation2 + $0x8] sm:$0xff]
    %v33 = vld [vmem:[#allocation2 + $0x10] sm:$0xff]
    %v34 = vld [vmem:[#allocation2 + $0x18] sm:$0xff]
    %v35 = vld [vmem:[#allocation2 + $0x20] sm:$0xff]
    %v36 = vld [vmem:[#allocation2 + $0x28] sm:$0xff]
    %v37 = vld [vmem:[#allocation2 + $0x30] sm:$0xff]
    %v38 = vld [vmem:[#allocation2 + $0x38] sm:$0xff]
    %v39 = vld [vmem:[#allocation2 + $0x40] sm:$0xff]
    %v40 = vld [vmem:[#allocation2 + $0x48] sm:$0xff]
    %v41 = vld [vmem:[#allocation2 + $0x50] sm:$0xff]
    %v42 = vld [vmem:[#allocation2 + $0x58] sm:$0xff]
    %v43 = vld [vmem:[#allocation2 + $0x60] sm:$0xff]
    %v44 = vld [vmem:[#allocation2 + $0x68] sm:$0xff]
    %v45 = vld [vmem:[#allocation2 + $0x70] sm:$0xff]
    %v46 = vld [vmem:[#allocation2 + $0x78] sm:$0xff]
    %v47 = vld [vmem:[#allocation2 + $0x80] sm:$0xff]
    %v48 = vld [vmem:[#allocation2 + $0x88] sm:$0xff]
    %v49 = vld [vmem:[#allocation2 + $0x90] sm:$0xff]
    %v50 = vld [vmem:[#allocation2 + $0x98] sm:$0xff]
    %v51 = vld [vmem:[#allocation2 + $0xa0] sm:$0xff]
    %v52 = vld [vmem:[#allocation2 + $0xa8] sm:$0xff]
    %v53 = vld [vmem:[#allocation2 + $0xb0] sm:$0xff]
    %v54 = vld [vmem:[#allocation2 + $0xb8] sm:$0xff]
    %v55 = vld [vmem:[#allocation2 + $0xc0] sm:$0xff]
    %v56 = vld [vmem:[#allocation2 + $0xc8] sm:$0xff]
    %v57 = vld [vmem:[#allocation2 + $0xd0] sm:$0xff]
    %v58 = vld [vmem:[#allocation2 + $0xd8] sm:$0xff]
    %v59 = vld [vmem:[#allocation2 + $0xe0] sm:$0xff]
    %v60 = vld [vmem:[#allocation2 + $0xe8] sm:$0xff]
    %v61 = vld [vmem:[#allocation2 + $0xf0] sm:$0xff]
    %v62 = vld [vmem:[#allocation2 + $0xf8] sm:$0xff]
    %v63 = vld [vmem:[#allocation2 + $0x100] sm:$0xff]
    %v64 = vld [vmem:[#allocation2 + $0x108] sm:$0xff]
    %v65 = vld [vmem:[#allocation2 + $0x110] sm:$0xff]
    %v66 = vld [vmem:[#allocation2 + $0x118] sm:$0xff]
    %v67 = vld [vmem:[#allocation2 + $0x120] sm:$0xff]
    %v68 = vld [vmem:[#allocation2 + $0x128] sm:$0xff]
    %v69 = vld [vmem:[#allocation2 + $0x130] sm:$0xff]
    %v70 = vld [vmem:[#allocation2 + $0x138] sm:$0xff]
    %v71 = vld [vmem:[#allocation2 + $0x140] sm:$0xff]
    %v72 = vld [vmem:[#allocation2 + $0x148] sm:$0xff]
    %v73 = vld [vmem:[#allocation2 + $0x150] sm:$0xff]
    %v74 = vld [vmem:[#allocation2 + $0x158] sm:$0xff]
    %v75 = vld [vmem:[#allocation2 + $0x160] sm:$0xff]
    %v76 = vld [vmem:[#allocation2 + $0x168] sm:$0xff]
    %v77 = vld [vmem:[#allocation2 + $0x170] sm:$0xff]
    %v78 = vld [vmem:[#allocation2 + $0x178] sm:$0xff]
    %v79 = vld [vmem:[#allocation2 + $0x180] sm:$0xff]
    %v80 = vld [vmem:[#allocation2 + $0x188] sm:$0xff]
    %v81 = vld [vmem:[#allocation2 + $0x190] sm:$0xff]
    %v82 = vld [vmem:[#allocation2 + $0x198] sm:$0xff]
    %v83 = vld [vmem:[#allocation2 + $0x1a0] sm:$0xff]
    %v84 = vld [vmem:[#allocation2 + $0x1a8] sm:$0xff]
    %v85 = vld [vmem:[#allocation2 + $0x1b0] sm:$0xff]
    %v86 = vld [vmem:[#allocation2 + $0x1b8] sm:$0xff]
    %v87 = vld [vmem:[#allocation2 + $0x1c0] sm:$0xff]
    %v88 = vld [vmem:[#allocation2 + $0x1c8] sm:$0xff]
    %v89 = vld [vmem:[#allocation2 + $0x1d0] sm:$0xff]
    %v90 = vld [vmem:[#allocation2 + $0x1d8] sm:$0xff]
    %v91 = vld [vmem:[#allocation2 + $0x1e0] sm:$0xff]
    %v92 = vld [vmem:[#allocation2 + $0x1e8] sm:$0xff]
    %v93 = vld [vmem:[#allocation2 + $0x1f0] sm:$0xff]
    %v94 = vld [vmem:[#allocation2 + $0x1f8] sm:$0xff]
    %vm95 = vcmask 261120
    %v96 = vsel %vm95, %v31, 0.0
    %v97 = vsel %vm95, %v32, 0.0
    %v98 = vadd.f32 %v96, %v97
    %v99 = vsel %vm95, %v33, 0.0
    %v100 = vadd.f32 %v98, %v99
    %v101 = vsel %vm95, %v34, 0.0
    %v102 = vadd.f32 %v100, %v101
    %v103 = vsel %vm95, %v35, 0.0
    %v104 = vadd.f32 %v102, %v103
    %v105 = vsel %vm95, %v36, 0.0
    %v106 = vadd.f32 %v104, %v105
    %v107 = vsel %vm95, %v37, 0.0
    %v108 = vadd.f32 %v106, %v107
    %v109 = vsel %vm95, %v38, 0.0
    %v110 = vadd.f32 %v108, %v109
    %v111 = vsel %vm95, %v39, 0.0
    %v112 = vadd.f32 %v110, %v111
    %v113 = vsel %vm95, %v40, 0.0
    %v114 = vadd.f32 %v112, %v113
    %v115 = vsel %vm95, %v41, 0.0
    %v116 = vadd.f32 %v114, %v115
    %v117 = vsel %vm95, %v42, 0.0
    %v118 = vadd.f32 %v116, %v117
    %v119 = vsel %vm95, %v43, 0.0
    %v120 = vadd.f32 %v118, %v119
    %v121 = vsel %vm95, %v44, 0.0
    %v122 = vadd.f32 %v120, %v121
    %v123 = vsel %vm95, %v45, 0.0
    %v124 = vadd.f32 %v122, %v123
    %v125 = vsel %vm95, %v46, 0.0
    %v126 = vadd.f32 %v124, %v125
    %v127 = vsel %vm95, %v47, 0.0
    %v128 = vadd.f32 %v126, %v127
    %v129 = vsel %vm95, %v48, 0.0
    %v130 = vadd.f32 %v128, %v129
    %v131 = vsel %vm95, %v49, 0.0
    %v132 = vadd.f32 %v130, %v131
    %v133 = vsel %vm95, %v50, 0.0
    %v134 = vadd.f32 %v132, %v133
    %v135 = vsel %vm95, %v51, 0.0
    %v136 = vadd.f32 %v134, %v135
    %v137 = vsel %vm95, %v52, 0.0
    %v138 = vadd.f32 %v136, %v137
    %v139 = vsel %vm95, %v53, 0.0
    %v140 = vadd.f32 %v138, %v139
    %v141 = vsel %vm95, %v54, 0.0
    %v142 = vadd.f32 %v140, %v141
    %v143 = vsel %vm95, %v55, 0.0
    %v144 = vadd.f32 %v142, %v143
    %v145 = vsel %vm95, %v56, 0.0
    %v146 = vadd.f32 %v144, %v145
    %v147 = vsel %vm95, %v57, 0.0
    %v148 = vadd.f32 %v146, %v147
    %v149 = vsel %vm95, %v58, 0.0
    %v150 = vadd.f32 %v148, %v149
    %v151 = vsel %vm95, %v59, 0.0
    %v152 = vadd.f32 %v150, %v151
    %v153 = vsel %vm95, %v60, 0.0
    %v154 = vadd.f32 %v152, %v153
    %v155 = vsel %vm95, %v61, 0.0
    %v156 = vadd.f32 %v154, %v155
    %v157 = vsel %vm95, %v62, 0.0
    %v158 = vadd.f32 %v156, %v157
    %v159 = vsel %vm95, %v63, 0.0
    %v160 = vadd.f32 %v158, %v159
    %v161 = vsel %vm95, %v64, 0.0
    %v162 = vadd.f32 %v160, %v161
    %v163 = vsel %vm95, %v65, 0.0
    %v164 = vadd.f32 %v162, %v163
    %v165 = vsel %vm95, %v66, 0.0
    %v166 = vadd.f32 %v164, %v165
    %v167 = vsel %vm95, %v67, 0.0
    %v168 = vadd.f32 %v166, %v167
    %v169 = vsel %vm95, %v68, 0.0
    %v170 = vadd.f32 %v168, %v169
    %v171 = vsel %vm95, %v69, 0.0
    %v172 = vadd.f32 %v170, %v171
    %v173 = vsel %vm95, %v70, 0.0
    %v174 = vadd.f32 %v172, %v173
    %v175 = vsel %vm95, %v71, 0.0
    %v176 = vadd.f32 %v174, %v175
    %v177 = vsel %vm95, %v72, 0.0
    %v178 = vadd.f32 %v176, %v177
    %v179 = vsel %vm95, %v73, 0.0
    %v180 = vadd.f32 %v178, %v179
    %v181 = vsel %vm95, %v74, 0.0
    %v182 = vadd.f32 %v180, %v181
    %v183 = vsel %vm95, %v75, 0.0
    %v184 = vadd.f32 %v182, %v183
    %v185 = vsel %vm95, %v76, 0.0
    %v186 = vadd.f32 %v184, %v185
    %v187 = vsel %vm95, %v77, 0.0
    %v188 = vadd.f32 %v186, %v187
    %v189 = vsel %vm95, %v78, 0.0
    %v190 = vadd.f32 %v188, %v189
    %v191 = vsel %vm95, %v79, 0.0
    %v192 = vadd.f32 %v190, %v191
    %v193 = vsel %vm95, %v80, 0.0
    %v194 = vadd.f32 %v192, %v193
    %v195 = vsel %vm95, %v81, 0.0
    %v196 = vadd.f32 %v194, %v195
    %v197 = vsel %vm95, %v82, 0.0
    %v198 = vadd.f32 %v196, %v197
    %v199 = vsel %vm95, %v83, 0.0
    %v200 = vadd.f32 %v198, %v199
    %v201 = vsel %vm95, %v84, 0.0
    %v202 = vadd.f32 %v200, %v201
    %v203 = vsel %vm95, %v85, 0.0
    %v204 = vadd.f32 %v202, %v203
    %v205 = vsel %vm95, %v86, 0.0
    %v206 = vadd.f32 %v204, %v205
    %v207 = vsel %vm95, %v87, 0.0
    %v208 = vadd.f32 %v206, %v207
    %v209 = vsel %vm95, %v88, 0.0
    %v210 = vadd.f32 %v208, %v209
    %v211 = vsel %vm95, %v89, 0.0
    %v212 = vadd.f32 %v210, %v211
    %v213 = vsel %vm95, %v90, 0.0
    %v214 = vadd.f32 %v212, %v213
    %v215 = vsel %vm95, %v91, 0.0
    %v216 = vadd.f32 %v214, %v215
    %v217 = vsel %vm95, %v92, 0.0
    %v218 = vadd.f32 %v216, %v217
    %v219 = vsel %vm95, %v93, 0.0
    %v220 = vadd.f32 %v218, %v219
    %v221 = vsel %vm95, %v94, 0.0
    %v222 = vadd.f32 %v220, %v221
    %v223 = vrot.slane %v222, 4
    %v224 = vadd.f32 %v222, %v223
    %v225 = vrot.slane %v224, 2
    %v226 = vadd.f32 %v224, %v225
    %v227 = vrot.slane %v226, 1
    %v228 = vadd.f32 %v226, %v227
    %v229 = vrcp.pop 512.0
    %v230 = vmul.f32 %v228, %v229
    %v231 = vsub.f32 %v31, %v230
    %v232 = vsub.f32 %v32, %v230
    %v233 = vsub.f32 %v33, %v230
    %v234 = vsub.f32 %v34, %v230
    %v235 = vsub.f32 %v35, %v230
    %v236 = vsub.f32 %v36, %v230
    %v237 = vsub.f32 %v37, %v230
    %v238 = vsub.f32 %v38, %v230
    %v239 = vsub.f32 %v39, %v230
    %v240 = vsub.f32 %v40, %v230
    %v241 = vsub.f32 %v41, %v230
    %v242 = vsub.f32 %v42, %v230
    %v243 = vsub.f32 %v43, %v230
    %v244 = vsub.f32 %v44, %v230
    %v245 = vsub.f32 %v45, %v230
    %v246 = vsub.f32 %v46, %v230
    %v247 = vsub.f32 %v47, %v230
    %v248 = vsub.f32 %v48, %v230
    %v249 = vsub.f32 %v49, %v230
    %v250 = vsub.f32 %v50, %v230
    %v251 = vsub.f32 %v51, %v230
    %v252 = vsub.f32 %v52, %v230
    %v253 = vsub.f32 %v53, %v230
    %v254 = vsub.f32 %v54, %v230
    %v255 = vsub.f32 %v55, %v230
    %v256 = vsub.f32 %v56, %v230
    %v257 = vsub.f32 %v57, %v230
    %v258 = vsub.f32 %v58, %v230
    %v259 = vsub.f32 %v59, %v230
    %v260 = vsub.f32 %v60, %v230
    %v261 = vsub.f32 %v61, %v230
    %v262 = vsub.f32 %v62, %v230
    %v263 = vsub.f32 %v63, %v230
    %v264 = vsub.f32 %v64, %v230
    %v265 = vsub.f32 %v65, %v230
    %v266 = vsub.f32 %v66, %v230
    %v267 = vsub.f32 %v67, %v230
    %v268 = vsub.f32 %v68, %v230
    %v269 = vsub.f32 %v69, %v230
    %v270 = vsub.f32 %v70, %v230
    %v271 = vsub.f32 %v71, %v230
    %v272 = vsub.f32 %v72, %v230
    %v273 = vsub.f32 %v73, %v230
    %v274 = vsub.f32 %v74, %v230
    %v275 = vsub.f32 %v75, %v230
    %v276 = vsub.f32 %v76, %v230
    %v277 = vsub.f32 %v77, %v230
    %v278 = vsub.f32 %v78, %v230
    %v279 = vsub.f32 %v79, %v230
    %v280 = vsub.f32 %v80, %v230
    %v281 = vsub.f32 %v81, %v230
    %v282 = vsub.f32 %v82, %v230
    %v283 = vsub.f32 %v83, %v230
    %v284 = vsub.f32 %v84, %v230
    %v285 = vsub.f32 %v85, %v230
    %v286 = vsub.f32 %v86, %v230
    %v287 = vsub.f32 %v87, %v230
    %v288 = vsub.f32 %v88, %v230
    %v289 = vsub.f32 %v89, %v230
    %v290 = vsub.f32 %v90, %v230
    %v291 = vsub.f32 %v91, %v230
    %v292 = vsub.f32 %v92, %v230
    %v293 = vsub.f32 %v93, %v230
    %v294 = vsub.f32 %v94, %v230
    %v295 = vmul.f32 %v231, %v231
    %v296 = vmul.f32 %v232, %v232
    %v297 = vmul.f32 %v233, %v233
    %v298 = vmul.f32 %v234, %v234
    %v299 = vmul.f32 %v235, %v235
    %v300 = vmul.f32 %v236, %v236
    %v301 = vmul.f32 %v237, %v237
    %v302 = vmul.f32 %v238, %v238
    %v303 = vmul.f32 %v239, %v239
    %v304 = vmul.f32 %v240, %v240
    %v305 = vmul.f32 %v241, %v241
    %v306 = vmul.f32 %v242, %v242
    %v307 = vmul.f32 %v243, %v243
    %v308 = vmul.f32 %v244, %v244
    %v309 = vmul.f32 %v245, %v245
    %v310 = vmul.f32 %v246, %v246
    %v311 = vmul.f32 %v247, %v247
    %v312 = vmul.f32 %v248, %v248
    %v313 = vmul.f32 %v249, %v249
    %v314 = vmul.f32 %v250, %v250
    %v315 = vmul.f32 %v251, %v251
    %v316 = vmul.f32 %v252, %v252
    %v317 = vmul.f32 %v253, %v253
    %v318 = vmul.f32 %v254, %v254
    %v319 = vmul.f32 %v255, %v255
    %v320 = vmul.f32 %v256, %v256
    %v321 = vmul.f32 %v257, %v257
    %v322 = vmul.f32 %v258, %v258
    %v323 = vmul.f32 %v259, %v259
    %v324 = vmul.f32 %v260, %v260
    %v325 = vmul.f32 %v261, %v261
    %v326 = vmul.f32 %v262, %v262
    %v327 = vmul.f32 %v263, %v263
    %v328 = vmul.f32 %v264, %v264
    %v329 = vmul.f32 %v265, %v265
    %v330 = vmul.f32 %v266, %v266
    %v331 = vmul.f32 %v267, %v267
    %v332 = vmul.f32 %v268, %v268
    %v333 = vmul.f32 %v269, %v269
    %v334 = vmul.f32 %v270, %v270
    %v335 = vmul.f32 %v271, %v271
    %v336 = vmul.f32 %v272, %v272
    %v337 = vmul.f32 %v273, %v273
    %v338 = vmul.f32 %v274, %v274
    %v339 = vmul.f32 %v275, %v275
    %v340 = vmul.f32 %v276, %v276
    %v341 = vmul.f32 %v277, %v277
    %v342 = vmul.f32 %v278, %v278
    %v343 = vmul.f32 %v279, %v279
    %v344 = vmul.f32 %v280, %v280
    %v345 = vmul.f32 %v281, %v281
    %v346 = vmul.f32 %v282, %v282
    %v347 = vmul.f32 %v283, %v283
    %v348 = vmul.f32 %v284, %v284
    %v349 = vmul.f32 %v285, %v285
    %v350 = vmul.f32 %v286, %v286
    %v351 = vmul.f32 %v287, %v287
    %v352 = vmul.f32 %v288, %v288
    %v353 = vmul.f32 %v289, %v289
    %v354 = vmul.f32 %v290, %v290
    %v355 = vmul.f32 %v291, %v291
    %v356 = vmul.f32 %v292, %v292
    %v357 = vmul.f32 %v293, %v293
    %v358 = vmul.f32 %v294, %v294
    %v359 = vsel %vm95, %v295, 0.0
    %v360 = vsel %vm95, %v296, 0.0
    %v361 = vadd.f32 %v359, %v360
    %v362 = vsel %vm95, %v297, 0.0
    %v363 = vadd.f32 %v361, %v362
    %v364 = vsel %vm95, %v298, 0.0
    %v365 = vadd.f32 %v363, %v364
    %v366 = vsel %vm95, %v299, 0.0
    %v367 = vadd.f32 %v365, %v366
    %v368 = vsel %vm95, %v300, 0.0
    %v369 = vadd.f32 %v367, %v368
    %v370 = vsel %vm95, %v301, 0.0
    %v371 = vadd.f32 %v369, %v370
    %v372 = vsel %vm95, %v302, 0.0
    %v373 = vadd.f32 %v371, %v372
    %v374 = vsel %vm95, %v303, 0.0
    %v375 = vadd.f32 %v373, %v374
    %v376 = vsel %vm95, %v304, 0.0
    %v377 = vadd.f32 %v375, %v376
    %v378 = vsel %vm95, %v305, 0.0
    %v379 = vadd.f32 %v377, %v378
    %v380 = vsel %vm95, %v306, 0.0
    %v381 = vadd.f32 %v379, %v380
    %v382 = vsel %vm95, %v307, 0.0
    %v383 = vadd.f32 %v381, %v382
    %v384 = vsel %vm95, %v308, 0.0
    %v385 = vadd.f32 %v383, %v384
    %v386 = vsel %vm95, %v309, 0.0
    %v387 = vadd.f32 %v385, %v386
    %v388 = vsel %vm95, %v310, 0.0
    %v389 = vadd.f32 %v387, %v388
    %v390 = vsel %vm95, %v311, 0.0
    %v391 = vadd.f32 %v389, %v390
    %v392 = vsel %vm95, %v312, 0.0
    %v393 = vadd.f32 %v391, %v392
    %v394 = vsel %vm95, %v313, 0.0
    %v395 = vadd.f32 %v393, %v394
    %v396 = vsel %vm95, %v314, 0.0
    %v397 = vadd.f32 %v395, %v396
    %v398 = vsel %vm95, %v315, 0.0
    %v399 = vadd.f32 %v397, %v398
    %v400 = vsel %vm95, %v316, 0.0
    %v401 = vadd.f32 %v399, %v400
    %v402 = vsel %vm95, %v317, 0.0
    %v403 = vadd.f32 %v401, %v402
    %v404 = vsel %vm95, %v318, 0.0
    %v405 = vadd.f32 %v403, %v404
    %v406 = vsel %vm95, %v319, 0.0
    %v407 = vadd.f32 %v405, %v406
    %v408 = vsel %vm95, %v320, 0.0
    %v409 = vadd.f32 %v407, %v408
    %v410 = vsel %vm95, %v321, 0.0
    %v411 = vadd.f32 %v409, %v410
    %v412 = vsel %vm95, %v322, 0.0
    %v413 = vadd.f32 %v411, %v412
    %v414 = vsel %vm95, %v323, 0.0
    %v415 = vadd.f32 %v413, %v414
    %v416 = vsel %vm95, %v324, 0.0
    %v417 = vadd.f32 %v415, %v416
    %v418 = vsel %vm95, %v325, 0.0
    %v419 = vadd.f32 %v417, %v418
    %v420 = vsel %vm95, %v326, 0.0
    %v421 = vadd.f32 %v419, %v420
    %v422 = vsel %vm95, %v327, 0.0
    %v423 = vadd.f32 %v421, %v422
    %v424 = vsel %vm95, %v328, 0.0
    %v425 = vadd.f32 %v423, %v424
    %v426 = vsel %vm95, %v329, 0.0
    %v427 = vadd.f32 %v425, %v426
    %v428 = vsel %vm95, %v330, 0.0
    %v429 = vadd.f32 %v427, %v428
    %v430 = vsel %vm95, %v331, 0.0
    %v431 = vadd.f32 %v429, %v430
    %v432 = vsel %vm95, %v332, 0.0
    %v433 = vadd.f32 %v431, %v432
    %v434 = vsel %vm95, %v333, 0.0
    %v435 = vadd.f32 %v433, %v434
    %v436 = vsel %vm95, %v334, 0.0
    %v437 = vadd.f32 %v435, %v436
    %v438 = vsel %vm95, %v335, 0.0
    %v439 = vadd.f32 %v437, %v438
    %v440 = vsel %vm95, %v336, 0.0
    %v441 = vadd.f32 %v439, %v440
    %v442 = vsel %vm95, %v337, 0.0
    %v443 = vadd.f32 %v441, %v442
    %v444 = vsel %vm95, %v338, 0.0
    %v445 = vadd.f32 %v443, %v444
    %v446 = vsel %vm95, %v339, 0.0
    %v447 = vadd.f32 %v445, %v446
    %v448 = vsel %vm95, %v340, 0.0
    %v449 = vadd.f32 %v447, %v448
    %v450 = vsel %vm95, %v341, 0.0
    %v451 = vadd.f32 %v449, %v450
    %v452 = vsel %vm95, %v342, 0.0
    %v453 = vadd.f32 %v451, %v452
    %v454 = vsel %vm95, %v343, 0.0
    %v455 = vadd.f32 %v453, %v454
    %v456 = vsel %vm95, %v344, 0.0
    %v457 = vadd.f32 %v455, %v456
    %v458 = vsel %vm95, %v345, 0.0
    %v459 = vadd.f32 %v457, %v458
    %v460 = vsel %vm95, %v346, 0.0
    %v461 = vadd.f32 %v459, %v460
    %v462 = vsel %vm95, %v347, 0.0
    %v463 = vadd.f32 %v461, %v462
    %v464 = vsel %vm95, %v348, 0.0
    %v465 = vadd.f32 %v463, %v464
    %v466 = vsel %vm95, %v349, 0.0
    %v467 = vadd.f32 %v465, %v466
    %v468 = vsel %vm95, %v350, 0.0
    %v469 = vadd.f32 %v467, %v468
    %v470 = vsel %vm95, %v351, 0.0
    %v471 = vadd.f32 %v469, %v470
    %v472 = vsel %vm95, %v352, 0.0
    %v473 = vadd.f32 %v471, %v472
    %v474 = vsel %vm95, %v353, 0.0
    %v475 = vadd.f32 %v473, %v474
    %v476 = vsel %vm95, %v354, 0.0
    %v477 = vadd.f32 %v475, %v476
    %v478 = vsel %vm95, %v355, 0.0
    %v479 = vadd.f32 %v477, %v478
    %v480 = vsel %vm95, %v356, 0.0
    %v481 = vadd.f32 %v479, %v480
    %v482 = vsel %vm95, %v357, 0.0
    %v483 = vadd.f32 %v481, %v482
    %v484 = vsel %vm95, %v358, 0.0
    %v485 = vadd.f32 %v483, %v484
    %v486 = vrot.slane %v485, 4
    %v487 = vadd.f32 %v485, %v486
    %v488 = vrot.slane %v487, 2
    %v489 = vadd.f32 %v487, %v488
    %v490 = vrot.slane %v489, 1
    %v491 = vadd.f32 %v489, %v490
    %v492 = vmul.f32 %v491, %v229
    %v493 = vld [vmem:[%s1] sm:$0x1]
    %v494 = vadd.f32 %v492, 1e-05
    %v495 = vrsqrt.pop %v494
    %v496 = vmul.f32 %v493, %v495
    %v498 = vlaneseq
    %v499 = vshrl.u32 %v498, 7
    %v500 = vsub.s32 0, %v499
    %v501 = vrot.slane %v496, %v500
    %v503 = vmul.f32 %v231, %v501
    %v504 = vmul.f32 %v232, %v501
    %v505 = vmul.f32 %v233, %v501
    %v506 = vmul.f32 %v234, %v501
    %v507 = vmul.f32 %v235, %v501
    %v508 = vmul.f32 %v236, %v501
    %v509 = vmul.f32 %v237, %v501
    %v510 = vmul.f32 %v238, %v501
    %v511 = vmul.f32 %v239, %v501
    %v512 = vmul.f32 %v240, %v501
    %v513 = vmul.f32 %v241, %v501
    %v514 = vmul.f32 %v242, %v501
    %v515 = vmul.f32 %v243, %v501
    %v516 = vmul.f32 %v244, %v501
    %v517 = vmul.f32 %v245, %v501
    %v518 = vmul.f32 %v246, %v501
    %v519 = vmul.f32 %v247, %v501
    %v520 = vmul.f32 %v248, %v501
    %v521 = vmul.f32 %v249, %v501
    %v522 = vmul.f32 %v250, %v501
    %v523 = vmul.f32 %v251, %v501
    %v524 = vmul.f32 %v252, %v501
    %v525 = vmul.f32 %v253, %v501
    %v526 = vmul.f32 %v254, %v501
    %v527 = vmul.f32 %v255, %v501
    %v528 = vmul.f32 %v256, %v501
    %v529 = vmul.f32 %v257, %v501
    %v530 = vmul.f32 %v258, %v501
    %v531 = vmul.f32 %v259, %v501
    %v532 = vmul.f32 %v260, %v501
    %v533 = vmul.f32 %v261, %v501
    %v534 = vmul.f32 %v262, %v501
    %v535 = vmul.f32 %v263, %v501
    %v536 = vmul.f32 %v264, %v501
    %v537 = vmul.f32 %v265, %v501
    %v538 = vmul.f32 %v266, %v501
    %v539 = vmul.f32 %v267, %v501
    %v540 = vmul.f32 %v268, %v501
    %v541 = vmul.f32 %v269, %v501
    %v542 = vmul.f32 %v270, %v501
    %v543 = vmul.f32 %v271, %v501
    %v544 = vmul.f32 %v272, %v501
    %v545 = vmul.f32 %v273, %v501
    %v546 = vmul.f32 %v274, %v501
    %v547 = vmul.f32 %v275, %v501
    %v548 = vmul.f32 %v276, %v501
    %v549 = vmul.f32 %v277, %v501
    %v550 = vmul.f32 %v278, %v501
    %v551 = vmul.f32 %v279, %v501
    %v552 = vmul.f32 %v280, %v501
    %v553 = vmul.f32 %v281, %v501
    %v554 = vmul.f32 %v282, %v501
    %v555 = vmul.f32 %v283, %v501
    %v556 = vmul.f32 %v284, %v501
    %v557 = vmul.f32 %v285, %v501
    %v558 = vmul.f32 %v286, %v501
    %v559 = vmul.f32 %v287, %v501
    %v560 = vmul.f32 %v288, %v501
    %v561 = vmul.f32 %v289, %v501
    %v562 = vmul.f32 %v290, %v501
    %v563 = vmul.f32 %v291, %v501
    %v564 = vmul.f32 %v292, %v501
    %v565 = vmul.f32 %v293, %v501
    %v566 = vmul.f32 %v294, %v501
    %v567 = vld [vmem:[%s2] sm:$0x1]
    %v569 = vlaneseq
    %v570 = vshrl.u32 %v569, 7
    %v571 = vsub.s32 0, %v570
    %v572 = vrot.slane %v567, %v571
    %v574 = vadd.f32 %v503, %v572
    %v575 = vadd.f32 %v504, %v572
    %v576 = vadd.f32 %v505, %v572
    %v577 = vadd.f32 %v506, %v572
    %v578 = vadd.f32 %v507, %v572
    %v579 = vadd.f32 %v508, %v572
    %v580 = vadd.f32 %v509, %v572
    %v581 = vadd.f32 %v510, %v572
    %v582 = vadd.f32 %v511, %v572
    %v583 = vadd.f32 %v512, %v572
    %v584 = vadd.f32 %v513, %v572
    %v585 = vadd.f32 %v514, %v572
    %v586 = vadd.f32 %v515, %v572
    %v587 = vadd.f32 %v516, %v572
    %v588 = vadd.f32 %v517, %v572
    %v589 = vadd.f32 %v518, %v572
    %v590 = vadd.f32 %v519, %v572
    %v591 = vadd.f32 %v520, %v572
    %v592 = vadd.f32 %v521, %v572
    %v593 = vadd.f32 %v522, %v572
    %v594 = vadd.f32 %v523, %v572
    %v595 = vadd.f32 %v524, %v572
    %v596 = vadd.f32 %v525, %v572
    %v597 = vadd.f32 %v526, %v572
    %v598 = vadd.f32 %v527, %v572
    %v599 = vadd.f32 %v528, %v572
    %v600 = vadd.f32 %v529, %v572
    %v601 = vadd.f32 %v530, %v572
    %v602 = vadd.f32 %v531, %v572
    %v603 = vadd.f32 %v532, %v572
    %v604 = vadd.f32 %v533, %v572
    %v605 = vadd.f32 %v534, %v572
    %v606 = vadd.f32 %v535, %v572
    %v607 = vadd.f32 %v536, %v572
    %v608 = vadd.f32 %v537, %v572
    %v609 = vadd.f32 %v538, %v572
    %v610 = vadd.f32 %v539, %v572
    %v611 = vadd.f32 %v540, %v572
    %v612 = vadd.f32 %v541, %v572
    %v613 = vadd.f32 %v542, %v572
    %v614 = vadd.f32 %v543, %v572
    %v615 = vadd.f32 %v544, %v572
    %v616 = vadd.f32 %v545, %v572
    %v617 = vadd.f32 %v546, %v572
    %v618 = vadd.f32 %v547, %v572
    %v619 = vadd.f32 %v548, %v572
    %v620 = vadd.f32 %v549, %v572
    %v621 = vadd.f32 %v550, %v572
    %v622 = vadd.f32 %v551, %v572
    %v623 = vadd.f32 %v552, %v572
    %v624 = vadd.f32 %v553, %v572
    %v625 = vadd.f32 %v554, %v572
    %v626 = vadd.f32 %v555, %v572
    %v627 = vadd.f32 %v556, %v572
    %v628 = vadd.f32 %v557, %v572
    %v629 = vadd.f32 %v558, %v572
    %v630 = vadd.f32 %v559, %v572
    %v631 = vadd.f32 %v560, %v572
    %v632 = vadd.f32 %v561, %v572
    %v633 = vadd.f32 %v562, %v572
    %v634 = vadd.f32 %v563, %v572
    %v635 = vadd.f32 %v564, %v572
    %v636 = vadd.f32 %v565, %v572
    %v637 = vadd.f32 %v566, %v572
    %638 = vst.msk [vmem:[%s4] sm:$0xff] %vm95, 0.0
    %639 = vst.msk [vmem:[%s4 + $0x8] sm:$0xff] %vm95, 0.0
    %vm640 = vcmask 254976
    %641 = vst.msk [vmem:[%s4 + $0x10] sm:$0x3] %vm640, 0.0
    %642 = vst.msk [vmem:[%s4 + $0x18] sm:$0xff] %vm95, 0.0
    %643 = vst.msk [vmem:[%s4 + $0x20] sm:$0xff] %vm95, 0.0
    %644 = vst.msk [vmem:[%s4 + $0x28] sm:$0x3] %vm640, 0.0
    %645 = vst.msk [vmem:[%s4 + $0x30] sm:$0xff] %vm95, 0.0
    %646 = vst.msk [vmem:[%s4 + $0x38] sm:$0xff] %vm95, 0.0
    %647 = vst.msk [vmem:[%s4 + $0x40] sm:$0x3] %vm640, 0.0
    %648 = vst.msk [vmem:[%s4 + $0x48] sm:$0xff] %vm95, 0.0
    %649 = vst.msk [vmem:[%s4 + $0x50] sm:$0xff] %vm95, 0.0
    %650 = vst.msk [vmem:[%s4 + $0x58] sm:$0x3] %vm640, 0.0
    %651 = vst.msk [vmem:[%s4 + $0x60] sm:$0xff] %vm95, 0.0
    %652 = vst.msk [vmem:[%s4 + $0x68] sm:$0xff] %vm95, 0.0
    %653 = vst.msk [vmem:[%s4 + $0x70] sm:$0x3] %vm640, 0.0
    %654 = vst.msk [vmem:[%s4 + $0x78] sm:$0xff] %vm95, 0.0
    %655 = vst.msk [vmem:[%s4 + $0x80] sm:$0xff] %vm95, 0.0
    %656 = vst.msk [vmem:[%s4 + $0x88] sm:$0x3] %vm640, 0.0
    %657 = vst.msk [vmem:[%s4 + $0x90] sm:$0xff] %vm95, 0.0
    %658 = vst.msk [vmem:[%s4 + $0x98] sm:$0xff] %vm95, 0.0
    %659 = vst.msk [vmem:[%s4 + $0xa0] sm:$0x3] %vm640, 0.0
    %660 = vst.msk [vmem:[%s4 + $0xa8] sm:$0xff] %vm95, 0.0
    %661 = vst.msk [vmem:[%s4 + $0xb0] sm:$0xff] %vm95, 0.0
    %662 = vst.msk [vmem:[%s4 + $0xb8] sm:$0x3] %vm640, 0.0
    %663 = vst.msk [vmem:[%s4 + $0xc0] sm:$0xff] %vm95, 0.0
    %664 = vst.msk [vmem:[%s4 + $0xc8] sm:$0xff] %vm95, 0.0
    %665 = vst.msk [vmem:[%s4 + $0xd0] sm:$0x3] %vm640, 0.0
    %666 = vst.msk [vmem:[%s4 + $0xd8] sm:$0xff] %vm95, 0.0
    %667 = vst.msk [vmem:[%s4 + $0xe0] sm:$0xff] %vm95, 0.0
    %668 = vst.msk [vmem:[%s4 + $0xe8] sm:$0x3] %vm640, 0.0
    %669 = vst.msk [vmem:[%s4 + $0xf0] sm:$0xff] %vm95, 0.0
    %670 = vst.msk [vmem:[%s4 + $0xf8] sm:$0xff] %vm95, 0.0
    %671 = vst.msk [vmem:[%s4 + $0x100] sm:$0x3] %vm640, 0.0
    %672 = vst.msk [vmem:[%s4 + $0x108] sm:$0xff] %vm95, 0.0
    %673 = vst.msk [vmem:[%s4 + $0x110] sm:$0xff] %vm95, 0.0
    %674 = vst.msk [vmem:[%s4 + $0x118] sm:$0x3] %vm640, 0.0
    %675 = vst.msk [vmem:[%s4 + $0x120] sm:$0xff] %vm95, 0.0
    %676 = vst.msk [vmem:[%s4 + $0x128] sm:$0xff] %vm95, 0.0
    %677 = vst.msk [vmem:[%s4 + $0x130] sm:$0x3] %vm640, 0.0
    %678 = vst.msk [vmem:[%s4 + $0x138] sm:$0xff] %vm95, 0.0
    %679 = vst.msk [vmem:[%s4 + $0x140] sm:$0xff] %vm95, 0.0
    %680 = vst.msk [vmem:[%s4 + $0x148] sm:$0x3] %vm640, 0.0
    %681 = vst.msk [vmem:[%s4 + $0x150] sm:$0xff] %vm95, 0.0
    %682 = vst.msk [vmem:[%s4 + $0x158] sm:$0xff] %vm95, 0.0
    %683 = vst.msk [vmem:[%s4 + $0x160] sm:$0x3] %vm640, 0.0
    %684 = vst.msk [vmem:[%s4 + $0x168] sm:$0xff] %vm95, 0.0
    %685 = vst.msk [vmem:[%s4 + $0x170] sm:$0xff] %vm95, 0.0
    %686 = vst.msk [vmem:[%s4 + $0x178] sm:$0x3] %vm640, 0.0
    %687 = vst.msk [vmem:[%s4 + $0x180] sm:$0xff] %vm95, 0.0
    %688 = vst.msk [vmem:[%s4 + $0x188] sm:$0xff] %vm95, 0.0
    %689 = vst.msk [vmem:[%s4 + $0x190] sm:$0x3] %vm640, 0.0
    %690 = vst.msk [vmem:[%s4 + $0x198] sm:$0xff] %vm95, 0.0
    %691 = vst.msk [vmem:[%s4 + $0x1a0] sm:$0xff] %vm95, 0.0
    %692 = vst.msk [vmem:[%s4 + $0x1a8] sm:$0x3] %vm640, 0.0
    %693 = vst.msk [vmem:[%s4 + $0x1b0] sm:$0xff] %vm95, 0.0
    %694 = vst.msk [vmem:[%s4 + $0x1b8] sm:$0xff] %vm95, 0.0
    %695 = vst.msk [vmem:[%s4 + $0x1c0] sm:$0x3] %vm640, 0.0
    %696 = vst.msk [vmem:[%s4 + $0x1c8] sm:$0xff] %vm95, 0.0
    %697 = vst.msk [vmem:[%s4 + $0x1d0] sm:$0xff] %vm95, 0.0
    %698 = vst.msk [vmem:[%s4 + $0x1d8] sm:$0x3] %vm640, 0.0
    %699 = vst.msk [vmem:[%s4 + $0x1e0] sm:$0xff] %vm95, 0.0
    %700 = vst.msk [vmem:[%s4 + $0x1e8] sm:$0xff] %vm95, 0.0
    %701 = vst.msk [vmem:[%s4 + $0x1f0] sm:$0x3] %vm640, 0.0
    %702 = vst.msk [vmem:[%s4 + $0x1f8] sm:$0xff] %vm95, 0.0
    %703 = vst.msk [vmem:[%s4 + $0x200] sm:$0xff] %vm95, 0.0
    %704 = vst.msk [vmem:[%s4 + $0x208] sm:$0x3] %vm640, 0.0
    %705 = vst.msk [vmem:[%s4 + $0x210] sm:$0xff] %vm95, 0.0
    %706 = vst.msk [vmem:[%s4 + $0x218] sm:$0xff] %vm95, 0.0
    %707 = vst.msk [vmem:[%s4 + $0x220] sm:$0x3] %vm640, 0.0
    %708 = vst.msk [vmem:[%s4 + $0x228] sm:$0xff] %vm95, 0.0
    %709 = vst.msk [vmem:[%s4 + $0x230] sm:$0xff] %vm95, 0.0
    %710 = vst.msk [vmem:[%s4 + $0x238] sm:$0x3] %vm640, 0.0
    %711 = vst.msk [vmem:[%s4 + $0x240] sm:$0xff] %vm95, 0.0
    %712 = vst.msk [vmem:[%s4 + $0x248] sm:$0xff] %vm95, 0.0
    %713 = vst.msk [vmem:[%s4 + $0x250] sm:$0x3] %vm640, 0.0
    %714 = vst.msk [vmem:[%s4 + $0x258] sm:$0xff] %vm95, 0.0
    %715 = vst.msk [vmem:[%s4 + $0x260] sm:$0xff] %vm95, 0.0
    %716 = vst.msk [vmem:[%s4 + $0x268] sm:$0x3] %vm640, 0.0
    %717 = vst.msk [vmem:[%s4 + $0x270] sm:$0xff] %vm95, 0.0
    %718 = vst.msk [vmem:[%s4 + $0x278] sm:$0xff] %vm95, 0.0
    %719 = vst.msk [vmem:[%s4 + $0x280] sm:$0x3] %vm640, 0.0
    %720 = vst.msk [vmem:[%s4 + $0x288] sm:$0xff] %vm95, 0.0
    %721 = vst.msk [vmem:[%s4 + $0x290] sm:$0xff] %vm95, 0.0
    %722 = vst.msk [vmem:[%s4 + $0x298] sm:$0x3] %vm640, 0.0
    %723 = vst.msk [vmem:[%s4 + $0x2a0] sm:$0xff] %vm95, 0.0
    %724 = vst.msk [vmem:[%s4 + $0x2a8] sm:$0xff] %vm95, 0.0
    %725 = vst.msk [vmem:[%s4 + $0x2b0] sm:$0x3] %vm640, 0.0
    %726 = vst.msk [vmem:[%s4 + $0x2b8] sm:$0xff] %vm95, 0.0
    %727 = vst.msk [vmem:[%s4 + $0x2c0] sm:$0xff] %vm95, 0.0
    %728 = vst.msk [vmem:[%s4 + $0x2c8] sm:$0x3] %vm640, 0.0
    %729 = vst.msk [vmem:[%s4 + $0x2d0] sm:$0xff] %vm95, 0.0
    %730 = vst.msk [vmem:[%s4 + $0x2d8] sm:$0xff] %vm95, 0.0
    %731 = vst.msk [vmem:[%s4 + $0x2e0] sm:$0x3] %vm640, 0.0
    %732 = vst.msk [vmem:[%s4 + $0x2e8] sm:$0xff] %vm95, 0.0
    %733 = vst.msk [vmem:[%s4 + $0x2f0] sm:$0xff] %vm95, 0.0
    %734 = vst.msk [vmem:[%s4 + $0x2f8] sm:$0x3] %vm640, 0.0
    %735 = vst.msk [vmem:[%s4 + $0x300] sm:$0xff] %vm95, 0.0
    %736 = vst.msk [vmem:[%s4 + $0x308] sm:$0xff] %vm95, 0.0
    %737 = vst.msk [vmem:[%s4 + $0x310] sm:$0x3] %vm640, 0.0
    %738 = vst.msk [vmem:[%s4 + $0x318] sm:$0xff] %vm95, 0.0
    %739 = vst.msk [vmem:[%s4 + $0x320] sm:$0xff] %vm95, 0.0
    %740 = vst.msk [vmem:[%s4 + $0x328] sm:$0x3] %vm640, 0.0
    %741 = vst.msk [vmem:[%s4 + $0x330] sm:$0xff] %vm95, 0.0
    %742 = vst.msk [vmem:[%s4 + $0x338] sm:$0xff] %vm95, 0.0
    %743 = vst.msk [vmem:[%s4 + $0x340] sm:$0x3] %vm640, 0.0
    %744 = vst.msk [vmem:[%s4 + $0x348] sm:$0xff] %vm95, 0.0
    %745 = vst.msk [vmem:[%s4 + $0x350] sm:$0xff] %vm95, 0.0
    %746 = vst.msk [vmem:[%s4 + $0x358] sm:$0x3] %vm640, 0.0
    %s747 = scalar_lea.vmem %s4, 24
    %748 = vst.msk [vmem:[%s747 + $0x1] sm:$0xff] %vm95, %v574
    %749 = vst.msk [vmem:[%s747 + $0x9] sm:$0xff] %vm95, %v575
    %750 = vst.msk [vmem:[%s747 + $0x19] sm:$0xff] %vm95, %v576
    %751 = vst.msk [vmem:[%s747 + $0x21] sm:$0xff] %vm95, %v577
    %752 = vst.msk [vmem:[%s747 + $0x31] sm:$0xff] %vm95, %v578
    %753 = vst.msk [vmem:[%s747 + $0x39] sm:$0xff] %vm95, %v579
    %754 = vst.msk [vmem:[%s747 + $0x49] sm:$0xff] %vm95, %v580
    %755 = vst.msk [vmem:[%s747 + $0x51] sm:$0xff] %vm95, %v581
    %756 = vst.msk [vmem:[%s747 + $0x61] sm:$0xff] %vm95, %v582
    %757 = vst.msk [vmem:[%s747 + $0x69] sm:$0xff] %vm95, %v583
    %758 = vst.msk [vmem:[%s747 + $0x79] sm:$0xff] %vm95, %v584
    %759 = vst.msk [vmem:[%s747 + $0x81] sm:$0xff] %vm95, %v585
    %760 = vst.msk [vmem:[%s747 + $0x91] sm:$0xff] %vm95, %v586
    %761 = vst.msk [vmem:[%s747 + $0x99] sm:$0xff] %vm95, %v587
    %762 = vst.msk [vmem:[%s747 + $0xa9] sm:$0xff] %vm95, %v588
    %763 = vst.msk [vmem:[%s747 + $0xb1] sm:$0xff] %vm95, %v589
    %764 = vst.msk [vmem:[%s747 + $0xc1] sm:$0xff] %vm95, %v590
    %765 = vst.msk [vmem:[%s747 + $0xc9] sm:$0xff] %vm95, %v591
    %766 = vst.msk [vmem:[%s747 + $0xd9] sm:$0xff] %vm95, %v592
    %767 = vst.msk [vmem:[%s747 + $0xe1] sm:$0xff] %vm95, %v593
    %768 = vst.msk [vmem:[%s747 + $0xf1] sm:$0xff] %vm95, %v594
    %769 = vst.msk [vmem:[%s747 + $0xf9] sm:$0xff] %vm95, %v595
    %770 = vst.msk [vmem:[%s747 + $0x109] sm:$0xff] %vm95, %v596
    %771 = vst.msk [vmem:[%s747 + $0x111] sm:$0xff] %vm95, %v597
    %772 = vst.msk [vmem:[%s747 + $0x121] sm:$0xff] %vm95, %v598
    %773 = vst.msk [vmem:[%s747 + $0x129] sm:$0xff] %vm95, %v599
    %774 = vst.msk [vmem:[%s747 + $0x139] sm:$0xff] %vm95, %v600
    %775 = vst.msk [vmem:[%s747 + $0x141] sm:$0xff] %vm95, %v601
    %776 = vst.msk [vmem:[%s747 + $0x151] sm:$0xff] %vm95, %v602
    %777 = vst.msk [vmem:[%s747 + $0x159] sm:$0xff] %vm95, %v603
    %778 = vst.msk [vmem:[%s747 + $0x169] sm:$0xff] %vm95, %v604
    %779 = vst.msk [vmem:[%s747 + $0x171] sm:$0xff] %vm95, %v605
    %780 = vst.msk [vmem:[%s747 + $0x1b1] sm:$0xff] %vm95, %v606
    %781 = vst.msk [vmem:[%s747 + $0x1b9] sm:$0xff] %vm95, %v607
    %782 = vst.msk [vmem:[%s747 + $0x1c9] sm:$0xff] %vm95, %v608
    %783 = vst.msk [vmem:[%s747 + $0x1d1] sm:$0xff] %vm95, %v609
    %784 = vst.msk [vmem:[%s747 + $0x1e1] sm:$0xff] %vm95, %v610
    %785 = vst.msk [vmem:[%s747 + $0x1e9] sm:$0xff] %vm95, %v611
    %786 = vst.msk [vmem:[%s747 + $0x1f9] sm:$0xff] %vm95, %v612
    %787 = vst.msk [vmem:[%s747 + $0x201] sm:$0xff] %vm95, %v613
    %788 = vst.msk [vmem:[%s747 + $0x211] sm:$0xff] %vm95, %v614
    %789 = vst.msk [vmem:[%s747 + $0x219] sm:$0xff] %vm95, %v615
    %790 = vst.msk [vmem:[%s747 + $0x229] sm:$0xff] %vm95, %v616
    %791 = vst.msk [vmem:[%s747 + $0x231] sm:$0xff] %vm95, %v617
    %792 = vst.msk [vmem:[%s747 + $0x241] sm:$0xff] %vm95, %v618
    %793 = vst.msk [vmem:[%s747 + $0x249] sm:$0xff] %vm95, %v619
    %794 = vst.msk [vmem:[%s747 + $0x259] sm:$0xff] %vm95, %v620
    %795 = vst.msk [vmem:[%s747 + $0x261] sm:$0xff] %vm95, %v621
    %796 = vst.msk [vmem:[%s747 + $0x271] sm:$0xff] %vm95, %v622
    %797 = vst.msk [vmem:[%s747 + $0x279] sm:$0xff] %vm95, %v623
    %798 = vst.msk [vmem:[%s747 + $0x289] sm:$0xff] %vm95, %v624
    %799 = vst.msk [vmem:[%s747 + $0x291] sm:$0xff] %vm95, %v625
    %800 = vst.msk [vmem:[%s747 + $0x2a1] sm:$0xff] %vm95, %v626
    %801 = vst.msk [vmem:[%s747 + $0x2a9] sm:$0xff] %vm95, %v627
    %802 = vst.msk [vmem:[%s747 + $0x2b9] sm:$0xff] %vm95, %v628
    %803 = vst.msk [vmem:[%s747 + $0x2c1] sm:$0xff] %vm95, %v629
    %804 = vst.msk [vmem:[%s747 + $0x2d1] sm:$0xff] %vm95, %v630
    %805 = vst.msk [vmem:[%s747 + $0x2d9] sm:$0xff] %vm95, %v631
    %806 = vst.msk [vmem:[%s747 + $0x2e9] sm:$0xff] %vm95, %v632
    %807 = vst.msk [vmem:[%s747 + $0x2f1] sm:$0xff] %vm95, %v633
    %808 = vst.msk [vmem:[%s747 + $0x301] sm:$0xff] %vm95, %v634
    %809 = vst.msk [vmem:[%s747 + $0x309] sm:$0xff] %vm95, %v635
    %810 = vst.msk [vmem:[%s747 + $0x319] sm:$0xff] %vm95, %v636
    %811 = vst.msk [vmem:[%s747 + $0x321] sm:$0xff] %vm95, %v637
    // Predicated region
    $region22: #{bottleneck_ir_sam_forward.6} parent=1 // pred_check
      _
    $region23: #{bottleneck_ir_sam_forward.6} parent=1 // pred_check_branch
      %813 = sbr.rel (0) target = $region25
    $region24: #{bottleneck_ir_sam_forward.6} parent=1 // pred_region
      _
    $region25: #{bottleneck_ir_sam_forward.6} parent=1 // pred_fallthru
      _
    // Predicated region
    $region26: #{bottleneck_ir_sam_forward.6} parent=1 // pred_check
      _
    $region27: #{bottleneck_ir_sam_forward.6} parent=1 // pred_check_branch
      %815 = sbr.rel (0) target = $region29
    $region28: #{bottleneck_ir_sam_forward.6} parent=1 // pred_region
      _
    $region29: #{bottleneck_ir_sam_forward.6} parent=1 // pred_fallthru
      _
    %816 = vsyncpa [#allocation3], 1

// kernel: bottleneck_ir_sam_forward.7
$region0: #{bottleneck_ir_sam_forward.7}
  #allocation0 [shape = 'u32[]', space=smem, size = 0x4, offset = 0x4, fixed_abs, tag = 'smem constant byte address 0x4 - core index']
  #allocation1 [shape = 'u32[144,128]{1,0:T(1,128)}', space=vmem, size = 0x12000, scoped, tag = 'internal scratch']
  %s0 = inlined_call_operand.vmem [shape: f32[2,1,1,18,18,32], index: 0, kind: input, shape index: {}]
  %s1 = inlined_call_operand.vmem [shape: bf16[288,64], index: 1, kind: input, shape index: {}]
  %s2 = inlined_call_operand.vmem [shape: f32[2,16,16,64], index: 2, kind: output, shape index: {}]
  %s3 = sld [smem:[#allocation0]]
  $region41: #{bottleneck_ir_sam_forward.7} parent=0
    _
  %s5 = ssub.s32 1, %s3
  %s6 = scalar_select 0, %s5, %s3
  loop: start=0, step=1, limit=4
  $region2: #{bottleneck_ir_sam_forward.7} parent=0 // loop_pre_header
    _
  $region3: #{bottleneck_ir_sam_forward.7} parent=0 // loop_header
    %s8 = sphi 0, %s12
    %p9 = scmp.ge.s32.totalorder %s8, 4
    %s18 = sphi 0, %s20
    %s21 = sphi 0, %s18
    %s22 = sphi 0, %s21
    %s38 = sphi 0, %s22
    %s42 = sphi 0, %s42
    %s44 = sphi 0, %s42
    %s45 = sphi 0, %s44
    %s59 = sphi 0, %s45
    %s65 = sphi 0, %s67
    %s68 = sphi 0, %s65
    %s69 = sphi 0, %s68
    %s85 = sphi 0, %s69
  $region4: #{bottleneck_ir_sam_forward.7} parent=0 // loop_header_branch
    %11 = sbr.rel (%p9) target = $region8
  $region5: #{bottleneck_ir_sam_forward.7} parent=0 // loop_body
    %s13 = ssub.s32 %s8, 1
    %s14 = ssub.s32 %s8, 2
    %s15 = sadd.s32 %s8, 1
    %s16 = ssub.s32 %s8, %s15
    %p17 = scmp.eq.s32.totalorder %s16, 0
    %s19 = sadd.s32 %s18, 1
    %s20 = scalar_select %p17, %s18, %s19
    %p23 = pneg %p17
    %p24 = scmp.eq.s32.totalorder %s8, 1
    %p25 = por %p23, %p24
    %p26 = scmp.ne.s32.totalorder %s18, %s21
    %p27 = scmp.eq.s32.totalorder %s8, 0
    %p28 = por %p26, %p27
    %p29 = scmp.ne.s32.totalorder %s18, %s21
    %p30 = scmp.eq.s32.totalorder %s13, 1
    %p31 = por %p29, %p30
    %p32 = scmp.ne.s32.totalorder %s21, %s22
    %p33 = scmp.eq.s32.totalorder %s13, 0
    %p34 = por %p32, %p33
    %p35 = scmp.ne.s32.totalorder %s21, %s22
    %p36 = scmp.eq.s32.totalorder %s14, 1
    %p37 = por %p35, %p36
    %p39 = scmp.ne.s32.totalorder %s22, %s38
    %p40 = scmp.eq.s32.totalorder %s14, 0
    %p41 = por %p39, %p40
    %s43 = sadd.s32 %s42, 1
    %p46 = scmp.eq.s32.totalorder %s8, 1
    %p47 = scmp.ne.s32.totalorder %s42, %s44
    %p48 = scmp.eq.s32.totalorder %s8, 0
    %p49 = por %p47, %p48
    %p50 = scmp.ne.s32.totalorder %s42, %s44
    %p51 = scmp.eq.s32.totalorder %s13, 1
    %p52 = por %p50, %p51
    %p53 = scmp.ne.s32.totalorder %s44, %s45
    %p54 = scmp.eq.s32.totalorder %s13, 0
    %p55 = por %p53, %p54
    %p56 = scmp.ne.s32.totalorder %s44, %s45
    %p57 = scmp.eq.s32.totalorder %s14, 1
    %p58 = por %p56, %p57
    %p60 = scmp.ne.s32.totalorder %s45, %s59
    %p61 = scmp.eq.s32.totalorder %s14, 0
    %p62 = por %p60, %p61
    %s63 = ssub.s32 %s8, %s15
    %p64 = scmp.eq.s32.totalorder %s63, 0
    %s66 = sadd.s32 %s65, 1
    %s67 = scalar_select %p64, %s65, %s66
    %p70 = pneg %p64
    %p71 = scmp.eq.s32.totalorder %s8, 1
    %p72 = por %p70, %p71
    %p73 = scmp.ne.s32.totalorder %s65, %s68
    %p74 = scmp.eq.s32.totalorder %s8, 0
    %p75 = por %p73, %p74
    %p76 = scmp.ne.s32.totalorder %s65, %s68
    %p77 = scmp.eq.s32.totalorder %s13, 1
    %p78 = por %p76, %p77
    %p79 = scmp.ne.s32.totalorder %s68, %s69
    %p80 = scmp.eq.s32.totalorder %s13, 0
    %p81 = por %p79, %p80
    %p82 = scmp.ne.s32.totalorder %s68, %s69
    %p83 = scmp.eq.s32.totalorder %s14, 1
    %p84 = por %p82, %p83
    %p86 = scmp.ne.s32.totalorder %s69, %s85
    %p87 = scmp.eq.s32.totalorder %s14, 0
    %p88 = por %p86, %p87
    %p89 = scmp.le.s32.totalorder 1, %s8
    %p90 = scmp.lt.s32.totalorder %s8, 3
    %p91 = pnand %p89, %p90
    %p92 = pneg %p91
    // Predicated region
    $region9: #{bottleneck_ir_sam_forward.7} parent=5 // pred_check
      _
    $region10: #{bottleneck_ir_sam_forward.7} parent=5 // pred_check_branch
      %94 = sbr.rel (%p91) target = $region12
    $region11: #{bottleneck_ir_sam_forward.7} parent=5 // pred_region
      %s95 = ssub.s32 %s8, 1
      // Predicated region
      $region13: #{bottleneck_ir_sam_forward.7} parent=11 // pred_check
        %p96 = pneg %p55
      $region14: #{bottleneck_ir_sam_forward.7} parent=11 // pred_check_branch
        %98 = sbr.rel (%p96) target = $region16
      $region15: #{bottleneck_ir_sam_forward.7} parent=11 // pred_region
        _
      $region16: #{bottleneck_ir_sam_forward.7} parent=11 // pred_fallthru
        _
    $region12: #{bottleneck_ir_sam_forward.7} parent=5 // pred_fallthru
      _
    %p99 = scmp.lt.s32.totalorder %s8, 2
    // Predicated region
    $region17: #{bottleneck_ir_sam_forward.7} parent=5 // pred_check
      %p100 = pneg %p99
    $region18: #{bottleneck_ir_sam_forward.7} parent=5 // pred_check_branch
      %102 = sbr.rel (%p100) target = $region20
    $region19: #{bottleneck_ir_sam_forward.7} parent=5 // pred_region
      // Predicated region
      $region21: #{bottleneck_ir_sam_forward.7} parent=19 // pred_check
        %p103 = pneg %p28
      $region22: #{bottleneck_ir_sam_forward.7} parent=19 // pred_check_branch
        %105 = sbr.rel (%p103) target = $region24
      $region23: #{bottleneck_ir_sam_forward.7} parent=19 // pred_region
        %p106 = scmp.lt.s32.totalorder %s8, 1
        %s107 = scalar_select %p106, %s8, 1
        %s108 = smul.addr %s107, 54
        %s109 = smul.addr %s108, 8
        %s110 = scalar_lea.vmem %s0, %s109
      $region24: #{bottleneck_ir_sam_forward.7} parent=19 // pred_fallthru
        _
    $region20: #{bottleneck_ir_sam_forward.7} parent=5 // pred_fallthru
      _
    %p111 = scmp.le.s32.totalorder 1, %s8
    %p112 = scmp.lt.s32.totalorder %s8, 3
    %p113 = pnand %p111, %p112
    %p114 = pneg %p113
    // Predicated region
    $region25: #{bottleneck_ir_sam_forward.7} parent=5 // pred_check
      _
    $region26: #{bottleneck_ir_sam_forward.7} parent=5 // pred_check_branch
      %116 = sbr.rel (%p113) target = $region28
    $region27: #{bottleneck_ir_sam_forward.7} parent=5 // pred_region
      %s117 = ssub.s32 %s8, 1
      %p118 = scmp.lt.s32.totalorder %s13, 1
      %s119 = scalar_select %p118, %s13, 1
      %s120 = smul.addr %s119, 54
      %s121 = smul.addr %s120, 8
      %s122 = scalar_lea.vmem %s0, %s121
      %p123 = pneg %p34
      %p124 = pneg %p31
      %p125 = pneg %p55
      %p126 = pneg %p52
      %p127 = pneg %p81
      %p128 = pneg %p78
      %p129 = scmp.lt.s32.totalorder %s13, 1
      %s130 = scalar_select %p129, %s13, 1
      %s131 = smul.addr %s130, 32
      %s132 = smul.addr %s131, 8
      %s133 = scalar_lea.vmem %s2, %s132
      %p134 = scmp.lt.s32.totalorder %s13, 1
      %s135 = scalar_select %p134, %s13, 1
      %s136 = smul.addr %s135, 54
      %s137 = smul.addr %s136, 8
      %s138 = scalar_lea.vmem %s0, %s137
      %p139 = scmp.lt.s32.totalorder %s13, 1
      %s140 = scalar_select %p139, %s13, 1
      %s141 = smul.addr %s140, 32
      %s142 = smul.addr %s141, 8
      %s143 = scalar_lea.vmem %s2, %s142
      %v145 = vld [vmem:[%s138] sm:$0xff]
      %v146 = vld [vmem:[%s138 + $0x8] sm:$0xff]
      %v147 = vld [vmem:[%s138 + $0x18] sm:$0xff]
      %v148 = vld [vmem:[%s138 + $0x20] sm:$0xff]
      %v149 = vld [vmem:[%s138 + $0x30] sm:$0xff]
      %v150 = vld [vmem:[%s138 + $0x38] sm:$0xff]
      %v151 = vld [vmem:[%s138 + $0x48] sm:$0xff]
      %v152 = vld [vmem:[%s138 + $0x50] sm:$0xff]
      %v153 = vld [vmem:[%s138 + $0x60] sm:$0xff]
      %v154 = vld [vmem:[%s138 + $0x68] sm:$0xff]
      %v155 = vld [vmem:[%s138 + $0x78] sm:$0xff]
      %v156 = vld [vmem:[%s138 + $0x80] sm:$0xff]
      %v157 = vld [vmem:[%s138 + $0x90] sm:$0xff]
      %v158 = vld [vmem:[%s138 + $0x98] sm:$0xff]
      %v159 = vld [vmem:[%s138 + $0xa8] sm:$0xff]
      %v160 = vld [vmem:[%s138 + $0xb0] sm:$0xff]
      %v161 = vld [vmem:[%s138 + $0xc0] sm:$0xff]
      %v162 = vld [vmem:[%s138 + $0xc8] sm:$0xff]
      %v163 = vld [vmem:[%s138 + $0xd8] sm:$0xff]
      %v164 = vld [vmem:[%s138 + $0xe0] sm:$0xff]
      %v165 = vld [vmem:[%s138 + $0xf0] sm:$0xff]
      %v166 = vld [vmem:[%s138 + $0xf8] sm:$0xff]
      %v167 = vld [vmem:[%s138 + $0x108] sm:$0xff]
      %v168 = vld [vmem:[%s138 + $0x110] sm:$0xff]
      %v169 = vld [vmem:[%s138 + $0x120] sm:$0xff]
      %v170 = vld [vmem:[%s138 + $0x128] sm:$0xff]
      %v171 = vld [vmem:[%s138 + $0x138] sm:$0xff]
      %v172 = vld [vmem:[%s138 + $0x140] sm:$0xff]
      %v173 = vld [vmem:[%s138 + $0x150] sm:$0xff]
      %v174 = vld [vmem:[%s138 + $0x158] sm:$0xff]
      %v175 = vld [vmem:[%s138 + $0x168] sm:$0xff]
      %v176 = vld [vmem:[%s138 + $0x170] sm:$0xff]
      %v177 = vpack.c.bf16 %v146, %v145
      %v178 = vpack.c.bf16 %v148, %v147
      %v179 = vpack.c.bf16 %v150, %v149
      %v180 = vpack.c.bf16 %v152, %v151
      %v181 = vpack.c.bf16 %v154, %v153
      %v182 = vpack.c.bf16 %v156, %v155
      %v183 = vpack.c.bf16 %v158, %v157
      %v184 = vpack.c.bf16 %v160, %v159
      %v185 = vpack.c.bf16 %v162, %v161
      %v186 = vpack.c.bf16 %v164, %v163
      %v187 = vpack.c.bf16 %v166, %v165
      %v188 = vpack.c.bf16 %v168, %v167
      %v189 = vpack.c.bf16 %v170, %v169
      %v190 = vpack.c.bf16 %v172, %v171
      %v191 = vpack.c.bf16 %v174, %v173
      %v192 = vpack.c.bf16 %v176, %v175
      %v193 = vld [vmem:[%s1] sm:$0xf]
      %v194 = vld [vmem:[%s1 + $0x4] sm:$0xf]
      %v195 = vld [vmem:[%s1 + $0x8] sm:$0xf]
      %v196 = vld [vmem:[%s1 + $0xc] sm:$0xf]
      %v197 = vld [vmem:[%s138 + $0x1] sm:$0xff]
      %v198 = vld [vmem:[%s138 + $0x9] sm:$0xff]
      %v199 = vld [vmem:[%s138 + $0x19] sm:$0xff]
      %v200 = vld [vmem:[%s138 + $0x21] sm:$0xff]
      %v201 = vld [vmem:[%s138 + $0x31] sm:$0xff]
      %v202 = vld [vmem:[%s138 + $0x39] sm:$0xff]
      %v203 = vld [vmem:[%s138 + $0x49] sm:$0xff]
      %v204 = vld [vmem:[%s138 + $0x51] sm:$0xff]
      %v205 = vld [vmem:[%s138 + $0x61] sm:$0xff]
      %v206 = vld [vmem:[%s138 + $0x69] sm:$0xff]
      %v207 = vld [vmem:[%s138 + $0x79] sm:$0xff]
      %v208 = vld [vmem:[%s138 + $0x81] sm:$0xff]
      %v209 = vld [vmem:[%s138 + $0x91] sm:$0xff]
      %v210 = vld [vmem:[%s138 + $0x99] sm:$0xff]
      %v211 = vld [vmem:[%s138 + $0xa9] sm:$0xff]
      %v212 = vld [vmem:[%s138 + $0xb1] sm:$0xff]
      %v213 = vld [vmem:[%s138 + $0xc1] sm:$0xff]
      %v214 = vld [vmem:[%s138 + $0xc9] sm:$0xff]
      %v215 = vld [vmem:[%s138 + $0xd9] sm:$0xff]
      %v216 = vld [vmem:[%s138 + $0xe1] sm:$0xff]
      %v217 = vld [vmem:[%s138 + $0xf1] sm:$0xff]
      %v218 = vld [vmem:[%s138 + $0xf9] sm:$0xff]
      %v219 = vld [vmem:[%s138 + $0x109] sm:$0xff]
      %v220 = vld [vmem:[%s138 + $0x111] sm:$0xff]
      %v221 = vld [vmem:[%s138 + $0x121] sm:$0xff]
      %v222 = vld [vmem:[%s138 + $0x129] sm:$0xff]
      %v223 = vld [vmem:[%s138 + $0x139] sm:$0xff]
      %v224 = vld [vmem:[%s138 + $0x141] sm:$0xff]
      %v225 = vld [vmem:[%s138 + $0x151] sm:$0xff]
      %v226 = vld [vmem:[%s138 + $0x159] sm:$0xff]
      %v227 = vld [vmem:[%s138 + $0x169] sm:$0xff]
      %v228 = vld [vmem:[%s138 + $0x171] sm:$0xff]
      %v229 = vpack.c.bf16 %v198, %v197
      %v230 = vpack.c.bf16 %v200, %v199
      %v231 = vpack.c.bf16 %v202, %v201
      %v232 = vpack.c.bf16 %v204, %v203
      %v233 = vpack.c.bf16 %v206, %v205
      %v234 = vpack.c.bf16 %v208, %v207
      %v235 = vpack.c.bf16 %v210, %v209
      %v236 = vpack.c.bf16 %v212, %v211
      %v237 = vpack.c.bf16 %v214, %v213
      %v238 = vpack.c.bf16 %v216, %v215
      %v239 = vpack.c.bf16 %v218, %v217
      %v240 = vpack.c.bf16 %v220, %v219
      %v241 = vpack.c.bf16 %v222, %v221
      %v242 = vpack.c.bf16 %v224, %v223
      %v243 = vpack.c.bf16 %v226, %v225
      %v244 = vpack.c.bf16 %v228, %v227
      %v245 = vld [vmem:[%s1 + $0x10] sm:$0xf]
      %v246 = vld [vmem:[%s1 + $0x14] sm:$0xf]
      %v247 = vld [vmem:[%s1 + $0x18] sm:$0xf]
      %v248 = vld [vmem:[%s1 + $0x1c] sm:$0xf]
      %v253 = vunpack.c.l.b16 %v245
      %v254 = vunpack.c.l.b16 %v246
      %v255 = vunpack.c.l.b16 %v247
      %v256 = vunpack.c.l.b16 %v248
      %v257 = vpack.c.b16 %v254, %v253
      %v258 = vpack.c.b16 %v256, %v255
      %vm261 = vcmask 261120
      %v263 = vsel %vm261, %v229, 0
      %v266 = vsel %vm261, %v230, 0
      %v269 = vsel %vm261, %v231, 0
      %v272 = vsel %vm261, %v232, 0
      %v275 = vsel %vm261, %v233, 0
      %v278 = vsel %vm261, %v234, 0
      %v281 = vsel %vm261, %v235, 0
      %v284 = vsel %vm261, %v236, 0
      %v287 = vsel %vm261, %v237, 0
      %v290 = vsel %vm261, %v238, 0
      %v293 = vsel %vm261, %v239, 0
      %v296 = vsel %vm261, %v240, 0
      %v299 = vsel %vm261, %v241, 0
      %v302 = vsel %vm261, %v242, 0
      %v305 = vsel %vm261, %v243, 0
      %v308 = vsel %vm261, %v244, 0
      %310 = vmatprep.subr.bf16.mxu0 0
      %311 = vmatpush1.bf16.msra.mxu0 0
      %312 = vmatprep.subr.bf16.mxu0 0
      %313 = vmatpush1.bf16.msra.mxu0 0
      %314 = vmatprep.subr.bf16.mxu0 0
      %315 = vmatpush1.bf16.msra.mxu0 0
      %316 = vmatprep.subr.bf16.mxu0 0
      %317 = vmatpush1.bf16.msra.mxu0 0
      %318 = vmatprep.subr.bf16.mxu0 0
      %319 = vmatpush1.bf16.msra.mxu0 0
      %320 = vmatprep.subr.bf16.mxu0 0
      %321 = vmatpush1.bf16.msra.mxu0 0
      %322 = vmatprep.subr.bf16.mxu0 0
      %323 = vmatpush1.bf16.msra.mxu0 %v258
      %324 = vmatprep.subr.bf16.mxu0 0
      %325 = vmatpush1.bf16.msra.mxu0 %v257
      %326 = vmatprep.subr.bf16.mxu0 0
      %327 = vmatpush2.bf16.msra.mxu0 0
      %328 = vmatprep.subr.bf16.mxu0 0
      %329 = vmatpush2.bf16.msra.mxu0 0
      %330 = vmatprep.subr.bf16.mxu0 0
      %331 = vmatpush2.bf16.msra.mxu0 0
      %332 = vmatprep.subr.bf16.mxu0 0
      %333 = vmatpush2.bf16.msra.mxu0 0
      %334 = vmatprep.subr.bf16.mxu0 0
      %335 = vmatpush2.bf16.msra.mxu0 0
      %336 = vmatprep.subr.bf16.mxu0 0
      %337 = vmatpush2.bf16.msra.mxu0 0
      %338 = vmatprep.subr.bf16.mxu0 0
      %339 = vmatpush2.bf16.msra.mxu0 0
      %340 = vmatprep.subr.bf16.mxu0 0
      %341 = vmatpush2.bf16.msra.mxu0 0
      %342 = vmatprep.mubr.bf16.mxu0 0
      %343 = vmatmul.mubr.bf16.gmra.mxu0 %v263
      %v344 = vpop.f32.mrf.mxu0
      %v345 = vadd.f32 0.0, %v344
      %v346 = vpop.f32.mrf.mxu0
      %v347 = vpop.f32.mrf.mxu0
      %v348 = vadd.f32 0.0, %v347
      %v349 = vpop.f32.mrf.mxu0
      %350 = vmatprep.mubr.bf16.mxu0 0
      %351 = vmatmul.mubr.bf16.gmra.mxu0 %v266
      %v352 = vpop.f32.mrf.mxu0
      %v353 = vadd.f32 0.0, %v352
      %v354 = vpop.f32.mrf.mxu0
      %v355 = vpop.f32.mrf.mxu0
      %v356 = vadd.f32 0.0, %v355
      %v357 = vpop.f32.mrf.mxu0
      %358 = vmatprep.mubr.bf16.mxu0 0
      %359 = vmatmul.mubr.bf16.gmra.mxu0 %v269
      %v360 = vpop.f32.mrf.mxu0
      %v361 = vadd.f32 0.0, %v360
      %v362 = vpop.f32.mrf.mxu0
      %v363 = vpop.f32.mrf.mxu0
      %v364 = vadd.f32 0.0, %v363
      %v365 = vpop.f32.mrf.mxu0
      %366 = vmatprep.mubr.bf16.mxu0 0
      %367 = vmatmul.mubr.bf16.gmra.mxu0 %v272
      %v368 = vpop.f32.mrf.mxu0
      %v369 = vadd.f32 0.0, %v368
      %v370 = vpop.f32.mrf.mxu0
      %v371 = vpop.f32.mrf.mxu0
      %v372 = vadd.f32 0.0, %v371
      %v373 = vpop.f32.mrf.mxu0
      %374 = vmatprep.mubr.bf16.mxu0 0
      %375 = vmatmul.mubr.bf16.gmra.mxu0 %v275
      %v376 = vpop.f32.mrf.mxu0
      %v377 = vadd.f32 0.0, %v376
      %v378 = vpop.f32.mrf.mxu0
      %v379 = vpop.f32.mrf.mxu0
      %v380 = vadd.f32 0.0, %v379
      %v381 = vpop.f32.mrf.mxu0
      %382 = vmatprep.mubr.bf16.mxu0 0
      %383 = vmatmul.mubr.bf16.gmra.mxu0 %v278
      %v384 = vpop.f32.mrf.mxu0
      %v385 = vadd.f32 0.0, %v384
      %v386 = vpop.f32.mrf.mxu0
      %v387 = vpop.f32.mrf.mxu0
      %v388 = vadd.f32 0.0, %v387
      %v389 = vpop.f32.mrf.mxu0
      %390 = vmatprep.mubr.bf16.mxu0 0
      %391 = vmatmul.mubr.bf16.gmra.mxu0 %v281
      %v392 = vpop.f32.mrf.mxu0
      %v393 = vadd.f32 0.0, %v392
      %v394 = vpop.f32.mrf.mxu0
      %v395 = vpop.f32.mrf.mxu0
      %v396 = vadd.f32 0.0, %v395
      %v397 = vpop.f32.mrf.mxu0
      %398 = vmatprep.mubr.bf16.mxu0 0
      %399 = vmatmul.mubr.bf16.gmra.mxu0 %v284
      %v400 = vpop.f32.mrf.mxu0
      %v401 = vadd.f32 0.0, %v400
      %v402 = vpop.f32.mrf.mxu0
      %v403 = vpop.f32.mrf.mxu0
      %v404 = vadd.f32 0.0, %v403
      %v405 = vpop.f32.mrf.mxu0
      %406 = vmatprep.mubr.bf16.mxu0 0
      %407 = vmatmul.mubr.bf16.gmra.mxu0 %v287
      %v408 = vpop.f32.mrf.mxu0
      %v409 = vadd.f32 0.0, %v408
      %v410 = vpop.f32.mrf.mxu0
      %v411 = vpop.f32.mrf.mxu0
      %v412 = vadd.f32 0.0, %v411
      %v413 = vpop.f32.mrf.mxu0
      %414 = vmatprep.mubr.bf16.mxu0 0
      %415 = vmatmul.mubr.bf16.gmra.mxu0 %v290
      %v416 = vpop.f32.mrf.mxu0
      %v417 = vadd.f32 0.0, %v416
      %v418 = vpop.f32.mrf.mxu0
      %v419 = vpop.f32.mrf.mxu0
      %v420 = vadd.f32 0.0, %v419
      %v421 = vpop.f32.mrf.mxu0
      %422 = vmatprep.mubr.bf16.mxu0 0
      %423 = vmatmul.mubr.bf16.gmra.mxu0 %v293
      %v424 = vpop.f32.mrf.mxu0
      %v425 = vadd.f32 0.0, %v424
      %v426 = vpop.f32.mrf.mxu0
      %v427 = vpop.f32.mrf.mxu0
      %v428 = vadd.f32 0.0, %v427
      %v429 = vpop.f32.mrf.mxu0
      %430 = vmatprep.mubr.bf16.mxu0 0
      %431 = vmatmul.mubr.bf16.gmra.mxu0 %v296
      %v432 = vpop.f32.mrf.mxu0
      %v433 = vadd.f32 0.0, %v432
      %v434 = vpop.f32.mrf.mxu0
      %v435 = vpop.f32.mrf.mxu0
      %v436 = vadd.f32 0.0, %v435
      %v437 = vpop.f32.mrf.mxu0
      %438 = vmatprep.mubr.bf16.mxu0 0
      %439 = vmatmul.mubr.bf16.gmra.mxu0 %v299
      %v440 = vpop.f32.mrf.mxu0
      %v441 = vadd.f32 0.0, %v440
      %v442 = vpop.f32.mrf.mxu0
      %v443 = vpop.f32.mrf.mxu0
      %v444 = vadd.f32 0.0, %v443
      %v445 = vpop.f32.mrf.mxu0
      %446 = vmatprep.mubr.bf16.mxu0 0
      %447 = vmatmul.mubr.bf16.gmra.mxu0 %v302
      %v448 = vpop.f32.mrf.mxu0
      %v449 = vadd.f32 0.0, %v448
      %v450 = vpop.f32.mrf.mxu0
      %v451 = vpop.f32.mrf.mxu0
      %v452 = vadd.f32 0.0, %v451
      %v453 = vpop.f32.mrf.mxu0
      %454 = vmatprep.mubr.bf16.mxu0 0
      %455 = vmatmul.mubr.bf16.gmra.mxu0 %v305
      %v456 = vpop.f32.mrf.mxu0
      %v457 = vadd.f32 0.0, %v456
      %v458 = vpop.f32.mrf.mxu0
      %v459 = vpop.f32.mrf.mxu0
      %v460 = vadd.f32 0.0, %v459
      %v461 = vpop.f32.mrf.mxu0
      %462 = vmatprep.mubr.bf16.mxu0 0
      %463 = vmatmul.mubr.bf16.gmra.mxu0 %v308
      %v464 = vpop.f32.mrf.mxu0
      %v465 = vadd.f32 0.0, %v464
      %v466 = vpop.f32.mrf.mxu0
      %v467 = vpop.f32.mrf.mxu0
      %v468 = vadd.f32 0.0, %v467
      %v469 = vpop.f32.mrf.mxu0
      %470 = vdwg.mxu0
      %v475 = vunpack.c.l.b16 %v193
      %v476 = vunpack.c.l.b16 %v194
      %v477 = vunpack.c.l.b16 %v195
      %v478 = vunpack.c.l.b16 %v196
      %v479 = vpack.c.b16 %v476, %v475
      %v480 = vpack.c.b16 %v478, %v477
      %v484 = vsel %vm261, %v177, 0
      %v487 = vsel %vm261, %v178, 0
      %v490 = vsel %vm261, %v179, 0
      %v493 = vsel %vm261, %v180, 0
      %v496 = vsel %vm261, %v181, 0
      %v499 = vsel %vm261, %v182, 0
      %v502 = vsel %vm261, %v183, 0
      %v505 = vsel %vm261, %v184, 0
      %v508 = vsel %vm261, %v185, 0
      %v511 = vsel %vm261, %v186, 0
      %v514 = vsel %vm261, %v187, 0
      %v517 = vsel %vm261, %v188, 0
      %v520 = vsel %vm261, %v189, 0
      %v523 = vsel %vm261, %v190, 0
      %v526 = vsel %vm261, %v191, 0
      %v529 = vsel %vm261, %v192, 0
      %531 = vmatprep.subr.bf16.mxu0 0
      %532 = vmatpush1.bf16.msra.mxu0 0
      %533 = vmatprep.subr.bf16.mxu0 0
      %534 = vmatpush1.bf16.msra.mxu0 0
      %535 = vmatprep.subr.bf16.mxu0 0
      %536 = vmatpush1.bf16.msra.mxu0 0
      %537 = vmatprep.subr.bf16.mxu0 0
      %538 = vmatpush1.bf16.msra.mxu0 0
      %539 = vmatprep.subr.bf16.mxu0 0
      %540 = vmatpush1.bf16.msra.mxu0 0
      %541 = vmatprep.subr.bf16.mxu0 0
      %542 = vmatpush1.bf16.msra.mxu0 0
      %543 = vmatprep.subr.bf16.mxu0 0
      %544 = vmatpush1.bf16.msra.mxu0 %v480
      %545 = vmatprep.subr.bf16.mxu0 0
      %546 = vmatpush1.bf16.msra.mxu0 %v479
      %547 = vmatprep.subr.bf16.mxu0 0
      %548 = vmatpush2.bf16.msra.mxu0 0
      %549 = vmatprep.subr.bf16.mxu0 0
      %550 = vmatpush2.bf16.msra.mxu0 0
      %551 = vmatprep.subr.bf16.mxu0 0
      %552 = vmatpush2.bf16.msra.mxu0 0
      %553 = vmatprep.subr.bf16.mxu0 0
      %554 = vmatpush2.bf16.msra.mxu0 0
      %555 = vmatprep.subr.bf16.mxu0 0
      %556 = vmatpush2.bf16.msra.mxu0 0
      %557 = vmatprep.subr.bf16.mxu0 0
      %558 = vmatpush2.bf16.msra.mxu0 0
      %559 = vmatprep.subr.bf16.mxu0 0
      %560 = vmatpush2.bf16.msra.mxu0 0
      %561 = vmatprep.subr.bf16.mxu0 0
      %562 = vmatpush2.bf16.msra.mxu0 0
      %563 = vmatprep.mubr.bf16.mxu0 0
      %564 = vmatmul.mubr.bf16.gmra.mxu0 %v484
      %v565 = vpop.f32.mrf.mxu0
      %v566 = vadd.f32 %v345, %v565
      %v567 = vpop.f32.mrf.mxu0
      %v568 = vpop.f32.mrf.mxu0
      %v569 = vadd.f32 %v348, %v568
      %v570 = vpop.f32.mrf.mxu0
      %571 = vmatprep.mubr.bf16.mxu0 0
      %572 = vmatmul.mubr.bf16.gmra.mxu0 %v487
      %v573 = vpop.f32.mrf.mxu0
      %v574 = vadd.f32 %v353, %v573
      %v575 = vpop.f32.mrf.mxu0
      %v576 = vpop.f32.mrf.mxu0
      %v577 = vadd.f32 %v356, %v576
      %v578 = vpop.f32.mrf.mxu0
      %579 = vmatprep.mubr.bf16.mxu0 0
      %580 = vmatmul.mubr.bf16.gmra.mxu0 %v490
      %v581 = vpop.f32.mrf.mxu0
      %v582 = vadd.f32 %v361, %v581
      %v583 = vpop.f32.mrf.mxu0
      %v584 = vpop.f32.mrf.mxu0
      %v585 = vadd.f32 %v364, %v584
      %v586 = vpop.f32.mrf.mxu0
      %587 = vmatprep.mubr.bf16.mxu0 0
      %588 = vmatmul.mubr.bf16.gmra.mxu0 %v493
      %v589 = vpop.f32.mrf.mxu0
      %v590 = vadd.f32 %v369, %v589
      %v591 = vpop.f32.mrf.mxu0
      %v592 = vpop.f32.mrf.mxu0
      %v593 = vadd.f32 %v372, %v592
      %v594 = vpop.f32.mrf.mxu0
      %595 = vmatprep.mubr.bf16.mxu0 0
      %596 = vmatmul.mubr.bf16.gmra.mxu0 %v496
      %v597 = vpop.f32.mrf.mxu0
      %v598 = vadd.f32 %v377, %v597
      %v599 = vpop.f32.mrf.mxu0
      %v600 = vpop.f32.mrf.mxu0
      %v601 = vadd.f32 %v380, %v600
      %v602 = vpop.f32.mrf.mxu0
      %603 = vmatprep.mubr.bf16.mxu0 0
      %604 = vmatmul.mubr.bf16.gmra.mxu0 %v499
      %v605 = vpop.f32.mrf.mxu0
      %v606 = vadd.f32 %v385, %v605
      %v607 = vpop.f32.mrf.mxu0
      %v608 = vpop.f32.mrf.mxu0
      %v609 = vadd.f32 %v388, %v608
      %v610 = vpop.f32.mrf.mxu0
      %611 = vmatprep.mubr.bf16.mxu0 0
      %612 = vmatmul.mubr.bf16.gmra.mxu0 %v502
      %v613 = vpop.f32.mrf.mxu0
      %v614 = vadd.f32 %v393, %v613
      %v615 = vpop.f32.mrf.mxu0
      %v616 = vpop.f32.mrf.mxu0
      %v617 = vadd.f32 %v396, %v616
      %v618 = vpop.f32.mrf.mxu0
      %619 = vmatprep.mubr.bf16.mxu0 0
      %620 = vmatmul.mubr.bf16.gmra.mxu0 %v505
      %v621 = vpop.f32.mrf.mxu0
      %v622 = vadd.f32 %v401, %v621
      %v623 = vpop.f32.mrf.mxu0
      %v624 = vpop.f32.mrf.mxu0
      %v625 = vadd.f32 %v404, %v624
      %v626 = vpop.f32.mrf.mxu0
      %627 = vmatprep.mubr.bf16.mxu0 0
      %628 = vmatmul.mubr.bf16.gmra.mxu0 %v508
      %v629 = vpop.f32.mrf.mxu0
      %v630 = vadd.f32 %v409, %v629
      %v631 = vpop.f32.mrf.mxu0
      %v632 = vpop.f32.mrf.mxu0
      %v633 = vadd.f32 %v412, %v632
      %v634 = vpop.f32.mrf.mxu0
      %635 = vmatprep.mubr.bf16.mxu0 0
      %636 = vmatmul.mubr.bf16.gmra.mxu0 %v511
      %v637 = vpop.f32.mrf.mxu0
      %v638 = vadd.f32 %v417, %v637
      %v639 = vpop.f32.mrf.mxu0
      %v640 = vpop.f32.mrf.mxu0
      %v641 = vadd.f32 %v420, %v640
      %v642 = vpop.f32.mrf.mxu0
      %643 = vmatprep.mubr.bf16.mxu0 0
      %644 = vmatmul.mubr.bf16.gmra.mxu0 %v514
      %v645 = vpop.f32.mrf.mxu0
      %v646 = vadd.f32 %v425, %v645
      %v647 = vpop.f32.mrf.mxu0
      %v648 = vpop.f32.mrf.mxu0
      %v649 = vadd.f32 %v428, %v648
      %v650 = vpop.f32.mrf.mxu0
      %651 = vmatprep.mubr.bf16.mxu0 0
      %652 = vmatmul.mubr.bf16.gmra.mxu0 %v517
      %v653 = vpop.f32.mrf.mxu0
      %v654 = vadd.f32 %v433, %v653
      %v655 = vpop.f32.mrf.mxu0
      %v656 = vpop.f32.mrf.mxu0
      %v657 = vadd.f32 %v436, %v656
      %v658 = vpop.f32.mrf.mxu0
      %659 = vmatprep.mubr.bf16.mxu0 0
      %660 = vmatmul.mubr.bf16.gmra.mxu0 %v520
      %v661 = vpop.f32.mrf.mxu0
      %v662 = vadd.f32 %v441, %v661
      %v663 = vpop.f32.mrf.mxu0
      %v664 = vpop.f32.mrf.mxu0
      %v665 = vadd.f32 %v444, %v664
      %v666 = vpop.f32.mrf.mxu0
      %667 = vmatprep.mubr.bf16.mxu0 0
      %668 = vmatmul.mubr.bf16.gmra.mxu0 %v523
      %v669 = vpop.f32.mrf.mxu0
      %v670 = vadd.f32 %v449, %v669
      %v671 = vpop.f32.mrf.mxu0
      %v672 = vpop.f32.mrf.mxu0
      %v673 = vadd.f32 %v452, %v672
      %v674 = vpop.f32.mrf.mxu0
      %675 = vmatprep.mubr.bf16.mxu0 0
      %676 = vmatmul.mubr.bf16.gmra.mxu0 %v526
      %v677 = vpop.f32.mrf.mxu0
      %v678 = vadd.f32 %v457, %v677
      %v679 = vpop.f32.mrf.mxu0
      %v680 = vpop.f32.mrf.mxu0
      %v681 = vadd.f32 %v460, %v680
      %v682 = vpop.f32.mrf.mxu0
      %683 = vmatprep.mubr.bf16.mxu0 0
      %684 = vmatmul.mubr.bf16.gmra.mxu0 %v529
      %v685 = vpop.f32.mrf.mxu0
      %v686 = vadd.f32 %v465, %v685
      %v687 = vpop.f32.mrf.mxu0
      %v688 = vpop.f32.mrf.mxu0
      %v689 = vadd.f32 %v468, %v688
      %v690 = vpop.f32.mrf.mxu0
      %691 = vdwg.mxu0
      %v692 = vld [vmem:[%s138 + $0x2] sm:$0xff]
      %v693 = vld [vmem:[%s138 + $0xa] sm:$0xff]
      %v694 = vld [vmem:[%s138 + $0x1a] sm:$0xff]
      %v695 = vld [vmem:[%s138 + $0x22] sm:$0xff]
      %v696 = vld [vmem:[%s138 + $0x32] sm:$0xff]
      %v697 = vld [vmem:[%s138 + $0x3a] sm:$0xff]
      %v698 = vld [vmem:[%s138 + $0x4a] sm:$0xff]
      %v699 = vld [vmem:[%s138 + $0x52] sm:$0xff]
      %v700 = vld [vmem:[%s138 + $0x62] sm:$0xff]
      %v701 = vld [vmem:[%s138 + $0x6a] sm:$0xff]
      %v702 = vld [vmem:[%s138 + $0x7a] sm:$0xff]
      %v703 = vld [vmem:[%s138 + $0x82] sm:$0xff]
      %v704 = vld [vmem:[%s138 + $0x92] sm:$0xff]
      %v705 = vld [vmem:[%s138 + $0x9a] sm:$0xff]
      %v706 = vld [vmem:[%s138 + $0xaa] sm:$0xff]
      %v707 = vld [vmem:[%s138 + $0xb2] sm:$0xff]
      %v708 = vld [vmem:[%s138 + $0xc2] sm:$0xff]
      %v709 = vld [vmem:[%s138 + $0xca] sm:$0xff]
      %v710 = vld [vmem:[%s138 + $0xda] sm:$0xff]
      %v711 = vld [vmem:[%s138 + $0xe2] sm:$0xff]
      %v712 = vld [vmem:[%s138 + $0xf2] sm:$0xff]
      %v713 = vld [vmem:[%s138 + $0xfa] sm:$0xff]
      %v714 = vld [vmem:[%s138 + $0x10a] sm:$0xff]
      %v715 = vld [vmem:[%s138 + $0x112] sm:$0xff]
      %v716 = vld [vmem:[%s138 + $0x122] sm:$0xff]
      %v717 = vld [vmem:[%s138 + $0x12a] sm:$0xff]
      %v718 = vld [vmem:[%s138 + $0x13a] sm:$0xff]
      %v719 = vld [vmem:[%s138 + $0x142] sm:$0xff]
      %v720 = vld [vmem:[%s138 + $0x152] sm:$0xff]
      %v721 = vld [vmem:[%s138 + $0x15a] sm:$0xff]
      %v722 = vld [vmem:[%s138 + $0x16a] sm:$0xff]
      %v723 = vld [vmem:[%s138 + $0x172] sm:$0xff]
      %v724 = vpack.c.bf16 %v693, %v692
      %v725 = vpack.c.bf16 %v695, %v694
      %v726 = vpack.c.bf16 %v697, %v696
      %v727 = vpack.c.bf16 %v699, %v698
      %v728 = vpack.c.bf16 %v701, %v700
      %v729 = vpack.c.bf16 %v703, %v702
      %v730 = vpack.c.bf16 %v705, %v704
      %v731 = vpack.c.bf16 %v707, %v706
      %v732 = vpack.c.bf16 %v709, %v708
      %v733 = vpack.c.bf16 %v711, %v710
      %v734 = vpack.c.bf16 %v713, %v712
      %v735 = vpack.c.bf16 %v715, %v714
      %v736 = vpack.c.bf16 %v717, %v716
      %v737 = vpack.c.bf16 %v719, %v718
      %v738 = vpack.c.bf16 %v721, %v720
      %v739 = vpack.c.bf16 %v723, %v722
      %v740 = vld [vmem:[%s1 + $0x20] sm:$0xf]
      %v741 = vld [vmem:[%s1 + $0x24] sm:$0xf]
      %v742 = vld [vmem:[%s1 + $0x28] sm:$0xf]
      %v743 = vld [vmem:[%s1 + $0x2c] sm:$0xf]
      %v748 = vunpack.c.l.b16 %v740
      %v749 = vunpack.c.l.b16 %v741
      %v750 = vunpack.c.l.b16 %v742
      %v751 = vunpack.c.l.b16 %v743
      %v752 = vpack.c.b16 %v749, %v748
      %v753 = vpack.c.b16 %v751, %v750
      %v757 = vsel %vm261, %v724, 0
      %v760 = vsel %vm261, %v725, 0
      %v763 = vsel %vm261, %v726, 0
      %v766 = vsel %vm261, %v727, 0
      %v769 = vsel %vm261, %v728, 0
      %v772 = vsel %vm261, %v729, 0
      %v775 = vsel %vm261, %v730, 0
      %v778 = vsel %vm261, %v731, 0
      %v781 = vsel %vm261, %v732, 0
      %v784 = vsel %vm261, %v733, 0
      %v787 = vsel %vm261, %v734, 0
      %v790 = vsel %vm261, %v735, 0
      %v793 = vsel %vm261, %v736, 0
      %v796 = vsel %vm261, %v737, 0
      %v799 = vsel %vm261, %v738, 0
      %v802 = vsel %vm261, %v739, 0
      %804 = vmatprep.subr.bf16.mxu0 0
      %805 = vmatpush1.bf16.msra.mxu0 0
      %806 = vmatprep.subr.bf16.mxu0 0
      %807 = vmatpush1.bf16.msra.mxu0 0
      %808 = vmatprep.subr.bf16.mxu0 0
      %809 = vmatpush1.bf16.msra.mxu0 0
      %810 = vmatprep.subr.bf16.mxu0 0
      %811 = vmatpush1.bf16.msra.mxu0 0
      %812 = vmatprep.subr.bf16.mxu0 0
      %813 = vmatpush1.bf16.msra.mxu0 0
      %814 = vmatprep.subr.bf16.mxu0 0
      %815 = vmatpush1.bf16.msra.mxu0 0
      %816 = vmatprep.subr.bf16.mxu0 0
      %817 = vmatpush1.bf16.msra.mxu0 %v753
      %818 = vmatprep.subr.bf16.mxu0 0
      %819 = vmatpush1.bf16.msra.mxu0 %v752
      %820 = vmatprep.subr.bf16.mxu0 0
      %821 = vmatpush2.bf16.msra.mxu0 0
      %822 = vmatprep.subr.bf16.mxu0 0
      %823 = vmatpush2.bf16.msra.mxu0 0
      %824 = vmatprep.subr.bf16.mxu0 0
      %825 = vmatpush2.bf16.msra.mxu0 0
      %826 = vmatprep.subr.bf16.mxu0 0
      %827 = vmatpush2.bf16.msra.mxu0 0
      %828 = vmatprep.subr.bf16.mxu0 0
      %829 = vmatpush2.bf16.msra.mxu0 0
      %830 = vmatprep.subr.bf16.mxu0 0
      %831 = vmatpush2.bf16.msra.mxu0 0
      %832 = vmatprep.subr.bf16.mxu0 0
      %833 = vmatpush2.bf16.msra.mxu0 0
      %834 = vmatprep.subr.bf16.mxu0 0
      %835 = vmatpush2.bf16.msra.mxu0 0
      %836 = vmatprep.mubr.bf16.mxu0 0
      %837 = vmatmul.mubr.bf16.gmra.mxu0 %v757
      %v838 = vpop.f32.mrf.mxu0
      %v839 = vadd.f32 0.0, %v838
      %v840 = vpop.f32.mrf.mxu0
      %v841 = vpop.f32.mrf.mxu0
      %v842 = vadd.f32 0.0, %v841
      %v843 = vpop.f32.mrf.mxu0
      %844 = vmatprep.mubr.bf16.mxu0 0
      %845 = vmatmul.mubr.bf16.gmra.mxu0 %v760
      %v846 = vpop.f32.mrf.mxu0
      %v847 = vadd.f32 0.0, %v846
      %v848 = vpop.f32.mrf.mxu0
      %v849 = vpop.f32.mrf.mxu0
      %v850 = vadd.f32 0.0, %v849
      %v851 = vpop.f32.mrf.mxu0
      %852 = vmatprep.mubr.bf16.mxu0 0
      %853 = vmatmul.mubr.bf16.gmra.mxu0 %v763
      %v854 = vpop.f32.mrf.mxu0
      %v855 = vadd.f32 0.0, %v854
      %v856 = vpop.f32.mrf.mxu0
      %v857 = vpop.f32.mrf.mxu0
      %v858 = vadd.f32 0.0, %v857
      %v859 = vpop.f32.mrf.mxu0
      %860 = vmatprep.mubr.bf16.mxu0 0
      %861 = vmatmul.mubr.bf16.gmra.mxu0 %v766
      %v862 = vpop.f32.mrf.mxu0
      %v863 = vadd.f32 0.0, %v862
      %v864 = vpop.f32.mrf.mxu0
      %v865 = vpop.f32.mrf.mxu0
      %v866 = vadd.f32 0.0, %v865
      %v867 = vpop.f32.mrf.mxu0
      %868 = vmatprep.mubr.bf16.mxu0 0
      %869 = vmatmul.mubr.bf16.gmra.mxu0 %v769
      %v870 = vpop.f32.mrf.mxu0
      %v871 = vadd.f32 0.0, %v870
      %v872 = vpop.f32.mrf.mxu0
      %v873 = vpop.f32.mrf.mxu0
      %v874 = vadd.f32 0.0, %v873
      %v875 = vpop.f32.mrf.mxu0
      %876 = vmatprep.mubr.bf16.mxu0 0
      %877 = vmatmul.mubr.bf16.gmra.mxu0 %v772
      %v878 = vpop.f32.mrf.mxu0
      %v879 = vadd.f32 0.0, %v878
      %v880 = vpop.f32.mrf.mxu0
      %v881 = vpop.f32.mrf.mxu0
      %v882 = vadd.f32 0.0, %v881
      %v883 = vpop.f32.mrf.mxu0
      %884 = vmatprep.mubr.bf16.mxu0 0
      %885 = vmatmul.mubr.bf16.gmra.mxu0 %v775
      %v886 = vpop.f32.mrf.mxu0
      %v887 = vadd.f32 0.0, %v886
      %v888 = vpop.f32.mrf.mxu0
      %v889 = vpop.f32.mrf.mxu0
      %v890 = vadd.f32 0.0, %v889
      %v891 = vpop.f32.mrf.mxu0
      %892 = vmatprep.mubr.bf16.mxu0 0
      %893 = vmatmul.mubr.bf16.gmra.mxu0 %v778
      %v894 = vpop.f32.mrf.mxu0
      %v895 = vadd.f32 0.0, %v894
      %v896 = vpop.f32.mrf.mxu0
      %v897 = vpop.f32.mrf.mxu0
      %v898 = vadd.f32 0.0, %v897
      %v899 = vpop.f32.mrf.mxu0
      %900 = vmatprep.mubr.bf16.mxu0 0
      %901 = vmatmul.mubr.bf16.gmra.mxu0 %v781
      %v902 = vpop.f32.mrf.mxu0
      %v903 = vadd.f32 0.0, %v902
      %v904 = vpop.f32.mrf.mxu0
      %v905 = vpop.f32.mrf.mxu0
      %v906 = vadd.f32 0.0, %v905
      %v907 = vpop.f32.mrf.mxu0
      %908 = vmatprep.mubr.bf16.mxu0 0
      %909 = vmatmul.mubr.bf16.gmra.mxu0 %v784
      %v910 = vpop.f32.mrf.mxu0
      %v911 = vadd.f32 0.0, %v910
      %v912 = vpop.f32.mrf.mxu0
      %v913 = vpop.f32.mrf.mxu0
      %v914 = vadd.f32 0.0, %v913
      %v915 = vpop.f32.mrf.mxu0
      %916 = vmatprep.mubr.bf16.mxu0 0
      %917 = vmatmul.mubr.bf16.gmra.mxu0 %v787
      %v918 = vpop.f32.mrf.mxu0
      %v919 = vadd.f32 0.0, %v918
      %v920 = vpop.f32.mrf.mxu0
      %v921 = vpop.f32.mrf.mxu0
      %v922 = vadd.f32 0.0, %v921
      %v923 = vpop.f32.mrf.mxu0
      %924 = vmatprep.mubr.bf16.mxu0 0
      %925 = vmatmul.mubr.bf16.gmra.mxu0 %v790
      %v926 = vpop.f32.mrf.mxu0
      %v927 = vadd.f32 0.0, %v926
      %v928 = vpop.f32.mrf.mxu0
      %v929 = vpop.f32.mrf.mxu0
      %v930 = vadd.f32 0.0, %v929
      %v931 = vpop.f32.mrf.mxu0
      %932 = vmatprep.mubr.bf16.mxu0 0
      %933 = vmatmul.mubr.bf16.gmra.mxu0 %v793
      %v934 = vpop.f32.mrf.mxu0
      %v935 = vadd.f32 0.0, %v934
      %v936 = vpop.f32.mrf.mxu0
      %v937 = vpop.f32.mrf.mxu0
      %v938 = vadd.f32 0.0, %v937
      %v939 = vpop.f32.mrf.mxu0
      %940 = vmatprep.mubr.bf16.mxu0 0
      %941 = vmatmul.mubr.bf16.gmra.mxu0 %v796
      %v942 = vpop.f32.mrf.mxu0
      %v943 = vadd.f32 0.0, %v942
      %v944 = vpop.f32.mrf.mxu0
      %v945 = vpop.f32.mrf.mxu0
      %v946 = vadd.f32 0.0, %v945
      %v947 = vpop.f32.mrf.mxu0
      %948 = vmatprep.mubr.bf16.mxu0 0
      %949 = vmatmul.mubr.bf16.gmra.mxu0 %v799
      %v950 = vpop.f32.mrf.mxu0
      %v951 = vadd.f32 0.0, %v950
      %v952 = vpop.f32.mrf.mxu0
      %v953 = vpop.f32.mrf.mxu0
      %v954 = vadd.f32 0.0, %v953
      %v955 = vpop.f32.mrf.mxu0
      %956 = vmatprep.mubr.bf16.mxu0 0
      %957 = vmatmul.mubr.bf16.gmra.mxu0 %v802
      %v958 = vpop.f32.mrf.mxu0
      %v959 = vadd.f32 0.0, %v958
      %v960 = vpop.f32.mrf.mxu0
      %v961 = vpop.f32.mrf.mxu0
      %v962 = vadd.f32 0.0, %v961
      %v963 = vpop.f32.mrf.mxu0
      %964 = vdwg.mxu0
      %v965 = vadd.f32 %v566, %v839
      %v966 = vadd.f32 %v569, %v842
      %v967 = vadd.f32 %v574, %v847
      %v968 = vadd.f32 %v577, %v850
      %v969 = vadd.f32 %v582, %v855
      %v970 = vadd.f32 %v585, %v858
      %v971 = vadd.f32 %v590, %v863
      %v972 = vadd.f32 %v593, %v866
      %v973 = vadd.f32 %v598, %v871
      %v974 = vadd.f32 %v601, %v874
      %v975 = vadd.f32 %v606, %v879
      %v976 = vadd.f32 %v609, %v882
      %v977 = vadd.f32 %v614, %v887
      %v978 = vadd.f32 %v617, %v890
      %v979 = vadd.f32 %v622, %v895
      %v980 = vadd.f32 %v625, %v898
      %v981 = vadd.f32 %v630, %v903
      %v982 = vadd.f32 %v633, %v906
      %v983 = vadd.f32 %v638, %v911
      %v984 = vadd.f32 %v641, %v914
      %v985 = vadd.f32 %v646, %v919
      %v986 = vadd.f32 %v649, %v922
      %v987 = vadd.f32 %v654, %v927
      %v988 = vadd.f32 %v657, %v930
      %v989 = vadd.f32 %v662, %v935
      %v990 = vadd.f32 %v665, %v938
      %v991 = vadd.f32 %v670, %v943
      %v992 = vadd.f32 %v673, %v946
      %v993 = vadd.f32 %v678, %v951
      %v994 = vadd.f32 %v681, %v954
      %v995 = vadd.f32 %v686, %v959
      %v996 = vadd.f32 %v689, %v962
      %s997 = scalar_lea.vmem %s138, 24
      %v998 = vld [vmem:[%s997] sm:$0xff]
      %v999 = vld [vmem:[%s997 + $0x8] sm:$0xff]
      %v1000 = vld [vmem:[%s997 + $0x18] sm:$0xff]
      %v1001 = vld [vmem:[%s997 + $0x20] sm:$0xff]
      %v1002 = vld [vmem:[%s997 + $0x30] sm:$0xff]
      %v1003 = vld [vmem:[%s997 + $0x38] sm:$0xff]
      %v1004 = vld [vmem:[%s997 + $0x48] sm:$0xff]
      %v1005 = vld [vmem:[%s997 + $0x50] sm:$0xff]
      %v1006 = vld [vmem:[%s997 + $0x60] sm:$0xff]
      %v1007 = vld [vmem:[%s997 + $0x68] sm:$0xff]
      %v1008 = vld [vmem:[%s997 + $0x78] sm:$0xff]
      %v1009 = vld [vmem:[%s997 + $0x80] sm:$0xff]
      %v1010 = vld [vmem:[%s997 + $0x90] sm:$0xff]
      %v1011 = vld [vmem:[%s997 + $0x98] sm:$0xff]
      %v1012 = vld [vmem:[%s997 + $0xa8] sm:$0xff]
      %v1013 = vld [vmem:[%s997 + $0xb0] sm:$0xff]
      %v1014 = vld [vmem:[%s997 + $0xc0] sm:$0xff]
      %v1015 = vld [vmem:[%s997 + $0xc8] sm:$0xff]
      %v1016 = vld [vmem:[%s997 + $0xd8] sm:$0xff]
      %v1017 = vld [vmem:[%s997 + $0xe0] sm:$0xff]
      %v1018 = vld [vmem:[%s997 + $0xf0] sm:$0xff]
      %v1019 = vld [vmem:[%s997 + $0xf8] sm:$0xff]
      %v1020 = vld [vmem:[%s997 + $0x108] sm:$0xff]
      %v1021 = vld [vmem:[%s997 + $0x110] sm:$0xff]
      %v1022 = vld [vmem:[%s997 + $0x120] sm:$0xff]
      %v1023 = vld [vmem:[%s997 + $0x128] sm:$0xff]
      %v1024 = vld [vmem:[%s997 + $0x138] sm:$0xff]
      %v1025 = vld [vmem:[%s997 + $0x140] sm:$0xff]
      %v1026 = vld [vmem:[%s997 + $0x150] sm:$0xff]
      %v1027 = vld [vmem:[%s997 + $0x158] sm:$0xff]
      %v1028 = vld [vmem:[%s997 + $0x168] sm:$0xff]
      %v1029 = vld [vmem:[%s997 + $0x170] sm:$0xff]
      %v1030 = vpack.c.bf16 %v999, %v998
      %v1031 = vpack.c.bf16 %v1001, %v1000
      %v1032 = vpack.c.bf16 %v1003, %v1002
      %v1033 = vpack.c.bf16 %v1005, %v1004
      %v1034 = vpack.c.bf16 %v1007, %v1006
      %v1035 = vpack.c.bf16 %v1009, %v1008
      %v1036 = vpack.c.bf16 %v1011, %v1010
      %v1037 = vpack.c.bf16 %v1013, %v1012
      %v1038 = vpack.c.bf16 %v1015, %v1014
      %v1039 = vpack.c.bf16 %v1017, %v1016
      %v1040 = vpack.c.bf16 %v1019, %v1018
      %v1041 = vpack.c.bf16 %v1021, %v1020
      %v1042 = vpack.c.bf16 %v1023, %v1022
      %v1043 = vpack.c.bf16 %v1025, %v1024
      %v1044 = vpack.c.bf16 %v1027, %v1026
      %v1045 = vpack.c.bf16 %v1029, %v1028
      %v1046 = vld [vmem:[%s1 + $0x30] sm:$0xf]
      %v1047 = vld [vmem:[%s1 + $0x34] sm:$0xf]
      %v1048 = vld [vmem:[%s1 + $0x38] sm:$0xf]
      %v1049 = vld [vmem:[%s1 + $0x3c] sm:$0xf]
      %v1054 = vunpack.c.l.b16 %v1046
      %v1055 = vunpack.c.l.b16 %v1047
      %v1056 = vunpack.c.l.b16 %v1048
      %v1057 = vunpack.c.l.b16 %v1049
      %v1058 = vpack.c.b16 %v1055, %v1054
      %v1059 = vpack.c.b16 %v1057, %v1056
      %v1063 = vsel %vm261, %v1030, 0
      %v1066 = vsel %vm261, %v1031, 0
      %v1069 = vsel %vm261, %v1032, 0
      %v1072 = vsel %vm261, %v1033, 0
      %v1075 = vsel %vm261, %v1034, 0
      %v1078 = vsel %vm261, %v1035, 0
      %v1081 = vsel %vm261, %v1036, 0
      %v1084 = vsel %vm261, %v1037, 0
      %v1087 = vsel %vm261, %v1038, 0
      %v1090 = vsel %vm261, %v1039, 0
      %v1093 = vsel %vm261, %v1040, 0
      %v1096 = vsel %vm261, %v1041, 0
      %v1099 = vsel %vm261, %v1042, 0
      %v1102 = vsel %vm261, %v1043, 0
      %v1105 = vsel %vm261, %v1044, 0
      %v1108 = vsel %vm261, %v1045, 0
      %1110 = vmatprep.subr.bf16.mxu0 0
      %1111 = vmatpush1.bf16.msra.mxu0 0
      %1112 = vmatprep.subr.bf16.mxu0 0
      %1113 = vmatpush1.bf16.msra.mxu0 0
      %1114 = vmatprep.subr.bf16.mxu0 0
      %1115 = vmatpush1.bf16.msra.mxu0 0
      %1116 = vmatprep.subr.bf16.mxu0 0
      %1117 = vmatpush1.bf16.msra.mxu0 0
      %1118 = vmatprep.subr.bf16.mxu0 0
      %1119 = vmatpush1.bf16.msra.mxu0 0
      %1120 = vmatprep.subr.bf16.mxu0 0
      %1121 = vmatpush1.bf16.msra.mxu0 0
      %1122 = vmatprep.subr.bf16.mxu0 0
      %1123 = vmatpush1.bf16.msra.mxu0 %v1059
      %1124 = vmatprep.subr.bf16.mxu0 0
      %1125 = vmatpush1.bf16.msra.mxu0 %v1058
      %1126 = vmatprep.subr.bf16.mxu0 0
      %1127 = vmatpush2.bf16.msra.mxu0 0
      %1128 = vmatprep.subr.bf16.mxu0 0
      %1129 = vmatpush2.bf16.msra.mxu0 0
      %1130 = vmatprep.subr.bf16.mxu0 0
      %1131 = vmatpush2.bf16.msra.mxu0 0
      %1132 = vmatprep.subr.bf16.mxu0 0
      %1133 = vmatpush2.bf16.msra.mxu0 0
      %1134 = vmatprep.subr.bf16.mxu0 0
      %1135 = vmatpush2.bf16.msra.mxu0 0
      %1136 = vmatprep.subr.bf16.mxu0 0
      %1137 = vmatpush2.bf16.msra.mxu0 0
      %1138 = vmatprep.subr.bf16.mxu0 0
      %1139 = vmatpush2.bf16.msra.mxu0 0
      %1140 = vmatprep.subr.bf16.mxu0 0
      %1141 = vmatpush2.bf16.msra.mxu0 0
      %1142 = vmatprep.mubr.bf16.mxu0 0
      %1143 = vmatmul.mubr.bf16.gmra.mxu0 %v1063
      %v1144 = vpop.f32.mrf.mxu0
      %v1145 = vadd.f32 0.0, %v1144
      %v1146 = vpop.f32.mrf.mxu0
      %v1147 = vpop.f32.mrf.mxu0
      %v1148 = vadd.f32 0.0, %v1147
      %v1149 = vpop.f32.mrf.mxu0
      %1150 = vmatprep.mubr.bf16.mxu0 0
      %1151 = vmatmul.mubr.bf16.gmra.mxu0 %v1066
      %v1152 = vpop.f32.mrf.mxu0
      %v1153 = vadd.f32 0.0, %v1152
      %v1154 = vpop.f32.mrf.mxu0
      %v1155 = vpop.f32.mrf.mxu0
      %v1156 = vadd.f32 0.0, %v1155
      %v1157 = vpop.f32.mrf.mxu0
      %1158 = vmatprep.mubr.bf16.mxu0 0
      %1159 = vmatmul.mubr.bf16.gmra.mxu0 %v1069
      %v1160 = vpop.f32.mrf.mxu0
      %v1161 = vadd.f32 0.0, %v1160
      %v1162 = vpop.f32.mrf.mxu0
      %v1163 = vpop.f32.mrf.mxu0
      %v1164 = vadd.f32 0.0, %v1163
      %v1165 = vpop.f32.mrf.mxu0
      %1166 = vmatprep.mubr.bf16.mxu0 0
      %1167 = vmatmul.mubr.bf16.gmra.mxu0 %v1072
      %v1168 = vpop.f32.mrf.mxu0
      %v1169 = vadd.f32 0.0, %v1168
      %v1170 = vpop.f32.mrf.mxu0
      %v1171 = vpop.f32.mrf.mxu0
      %v1172 = vadd.f32 0.0, %v1171
      %v1173 = vpop.f32.mrf.mxu0
      %1174 = vmatprep.mubr.bf16.mxu0 0
      %1175 = vmatmul.mubr.bf16.gmra.mxu0 %v1075
      %v1176 = vpop.f32.mrf.mxu0
      %v1177 = vadd.f32 0.0, %v1176
      %v1178 = vpop.f32.mrf.mxu0
      %v1179 = vpop.f32.mrf.mxu0
      %v1180 = vadd.f32 0.0, %v1179
      %v1181 = vpop.f32.mrf.mxu0
      %1182 = vmatprep.mubr.bf16.mxu0 0
      %1183 = vmatmul.mubr.bf16.gmra.mxu0 %v1078
      %v1184 = vpop.f32.mrf.mxu0
      %v1185 = vadd.f32 0.0, %v1184
      %v1186 = vpop.f32.mrf.mxu0
      %v1187 = vpop.f32.mrf.mxu0
      %v1188 = vadd.f32 0.0, %v1187
      %v1189 = vpop.f32.mrf.mxu0
      %1190 = vmatprep.mubr.bf16.mxu0 0
      %1191 = vmatmul.mubr.bf16.gmra.mxu0 %v1081
      %v1192 = vpop.f32.mrf.mxu0
      %v1193 = vadd.f32 0.0, %v1192
      %v1194 = vpop.f32.mrf.mxu0
      %v1195 = vpop.f32.mrf.mxu0
      %v1196 = vadd.f32 0.0, %v1195
      %v1197 = vpop.f32.mrf.mxu0
      %1198 = vmatprep.mubr.bf16.mxu0 0
      %1199 = vmatmul.mubr.bf16.gmra.mxu0 %v1084
      %v1200 = vpop.f32.mrf.mxu0
      %v1201 = vadd.f32 0.0, %v1200
      %v1202 = vpop.f32.mrf.mxu0
      %v1203 = vpop.f32.mrf.mxu0
      %v1204 = vadd.f32 0.0, %v1203
      %v1205 = vpop.f32.mrf.mxu0
      %1206 = vmatprep.mubr.bf16.mxu0 0
      %1207 = vmatmul.mubr.bf16.gmra.mxu0 %v1087
      %v1208 = vpop.f32.mrf.mxu0
      %v1209 = vadd.f32 0.0, %v1208
      %v1210 = vpop.f32.mrf.mxu0
      %v1211 = vpop.f32.mrf.mxu0
      %v1212 = vadd.f32 0.0, %v1211
      %v1213 = vpop.f32.mrf.mxu0
      %1214 = vmatprep.mubr.bf16.mxu0 0
      %1215 = vmatmul.mubr.bf16.gmra.mxu0 %v1090
      %v1216 = vpop.f32.mrf.mxu0
      %v1217 = vadd.f32 0.0, %v1216
      %v1218 = vpop.f32.mrf.mxu0
      %v1219 = vpop.f32.mrf.mxu0
      %v1220 = vadd.f32 0.0, %v1219
      %v1221 = vpop.f32.mrf.mxu0
      %1222 = vmatprep.mubr.bf16.mxu0 0
      %1223 = vmatmul.mubr.bf16.gmra.mxu0 %v1093
      %v1224 = vpop.f32.mrf.mxu0
      %v1225 = vadd.f32 0.0, %v1224
      %v1226 = vpop.f32.mrf.mxu0
      %v1227 = vpop.f32.mrf.mxu0
      %v1228 = vadd.f32 0.0, %v1227
      %v1229 = vpop.f32.mrf.mxu0
      %1230 = vmatprep.mubr.bf16.mxu0 0
      %1231 = vmatmul.mubr.bf16.gmra.mxu0 %v1096
      %v1232 = vpop.f32.mrf.mxu0
      %v1233 = vadd.f32 0.0, %v1232
      %v1234 = vpop.f32.mrf.mxu0
      %v1235 = vpop.f32.mrf.mxu0
      %v1236 = vadd.f32 0.0, %v1235
      %v1237 = vpop.f32.mrf.mxu0
      %1238 = vmatprep.mubr.bf16.mxu0 0
      %1239 = vmatmul.mubr.bf16.gmra.mxu0 %v1099
      %v1240 = vpop.f32.mrf.mxu0
      %v1241 = vadd.f32 0.0, %v1240
      %v1242 = vpop.f32.mrf.mxu0
      %v1243 = vpop.f32.mrf.mxu0
      %v1244 = vadd.f32 0.0, %v1243
      %v1245 = vpop.f32.mrf.mxu0
      %1246 = vmatprep.mubr.bf16.mxu0 0
      %1247 = vmatmul.mubr.bf16.gmra.mxu0 %v1102
      %v1248 = vpop.f32.mrf.mxu0
      %v1249 = vadd.f32 0.0, %v1248
      %v1250 = vpop.f32.mrf.mxu0
      %v1251 = vpop.f32.mrf.mxu0
      %v1252 = vadd.f32 0.0, %v1251
      %v1253 = vpop.f32.mrf.mxu0
      %1254 = vmatprep.mubr.bf16.mxu0 0
      %1255 = vmatmul.mubr.bf16.gmra.mxu0 %v1105
      %v1256 = vpop.f32.mrf.mxu0
      %v1257 = vadd.f32 0.0, %v1256
      %v1258 = vpop.f32.mrf.mxu0
      %v1259 = vpop.f32.mrf.mxu0
      %v1260 = vadd.f32 0.0, %v1259
      %v1261 = vpop.f32.mrf.mxu0
      %1262 = vmatprep.mubr.bf16.mxu0 0
      %1263 = vmatmul.mubr.bf16.gmra.mxu0 %v1108
      %v1264 = vpop.f32.mrf.mxu0
      %v1265 = vadd.f32 0.0, %v1264
      %v1266 = vpop.f32.mrf.mxu0
      %v1267 = vpop.f32.mrf.mxu0
      %v1268 = vadd.f32 0.0, %v1267
      %v1269 = vpop.f32.mrf.mxu0
      %1270 = vdwg.mxu0
      %v1271 = vadd.f32 %v965, %v1145
      %v1272 = vadd.f32 %v966, %v1148
      %v1273 = vadd.f32 %v967, %v1153
      %v1274 = vadd.f32 %v968, %v1156
      %v1275 = vadd.f32 %v969, %v1161
      %v1276 = vadd.f32 %v970, %v1164
      %v1277 = vadd.f32 %v971, %v1169
      %v1278 = vadd.f32 %v972, %v1172
      %v1279 = vadd.f32 %v973, %v1177
      %v1280 = vadd.f32 %v974, %v1180
      %v1281 = vadd.f32 %v975, %v1185
      %v1282 = vadd.f32 %v976, %v1188
      %v1283 = vadd.f32 %v977, %v1193
      %v1284 = vadd.f32 %v978, %v1196
      %v1285 = vadd.f32 %v979, %v1201
      %v1286 = vadd.f32 %v980, %v1204
      %v1287 = vadd.f32 %v981, %v1209
      %v1288 = vadd.f32 %v982, %v1212
      %v1289 = vadd.f32 %v983, %v1217
      %v1290 = vadd.f32 %v984, %v1220
      %v1291 = vadd.f32 %v985, %v1225
      %v1292 = vadd.f32 %v986, %v1228
      %v1293 = vadd.f32 %v987, %v1233
      %v1294 = vadd.f32 %v988, %v1236
      %v1295 = vadd.f32 %v989, %v1241
      %v1296 = vadd.f32 %v990, %v1244
      %v1297 = vadd.f32 %v991, %v1249
      %v1298 = vadd.f32 %v992, %v1252
      %v1299 = vadd.f32 %v993, %v1257
      %v1300 = vadd.f32 %v994, %v1260
      %v1301 = vadd.f32 %v995, %v1265
      %v1302 = vadd.f32 %v996, %v1268
      %v1303 = vld [vmem:[%s997 + $0x1] sm:$0xff]
      %v1304 = vld [vmem:[%s997 + $0x9] sm:$0xff]
      %v1305 = vld [vmem:[%s997 + $0x19] sm:$0xff]
      %v1306 = vld [vmem:[%s997 + $0x21] sm:$0xff]
      %v1307 = vld [vmem:[%s997 + $0x31] sm:$0xff]
      %v1308 = vld [vmem:[%s997 + $0x39] sm:$0xff]
      %v1309 = vld [vmem:[%s997 + $0x49] sm:$0xff]
      %v1310 = vld [vmem:[%s997 + $0x51] sm:$0xff]
      %v1311 = vld [vmem:[%s997 + $0x61] sm:$0xff]
      %v1312 = vld [vmem:[%s997 + $0x69] sm:$0xff]
      %v1313 = vld [vmem:[%s997 + $0x79] sm:$0xff]
      %v1314 = vld [vmem:[%s997 + $0x81] sm:$0xff]
      %v1315 = vld [vmem:[%s997 + $0x91] sm:$0xff]
      %v1316 = vld [vmem:[%s997 + $0x99] sm:$0xff]
      %v1317 = vld [vmem:[%s997 + $0xa9] sm:$0xff]
      %v1318 = vld [vmem:[%s997 + $0xb1] sm:$0xff]
      %v1319 = vld [vmem:[%s997 + $0xc1] sm:$0xff]
      %v1320 = vld [vmem:[%s997 + $0xc9] sm:$0xff]
      %v1321 = vld [vmem:[%s997 + $0xd9] sm:$0xff]
      %v1322 = vld [vmem:[%s997 + $0xe1] sm:$0xff]
      %v1323 = vld [vmem:[%s997 + $0xf1] sm:$0xff]
      %v1324 = vld [vmem:[%s997 + $0xf9] sm:$0xff]
      %v1325 = vld [vmem:[%s997 + $0x109] sm:$0xff]
      %v1326 = vld [vmem:[%s997 + $0x111] sm:$0xff]
      %v1327 = vld [vmem:[%s997 + $0x121] sm:$0xff]
      %v1328 = vld [vmem:[%s997 + $0x129] sm:$0xff]
      %v1329 = vld [vmem:[%s997 + $0x139] sm:$0xff]
      %v1330 = vld [vmem:[%s997 + $0x141] sm:$0xff]
      %v1331 = vld [vmem:[%s997 + $0x151] sm:$0xff]
      %v1332 = vld [vmem:[%s997 + $0x159] sm:$0xff]
      %v1333 = vld [vmem:[%s997 + $0x169] sm:$0xff]
      %v1334 = vld [vmem:[%s997 + $0x171] sm:$0xff]
      %v1335 = vpack.c.bf16 %v1304, %v1303
      %v1336 = vpack.c.bf16 %v1306, %v1305
      %v1337 = vpack.c.bf16 %v1308, %v1307
      %v1338 = vpack.c.bf16 %v1310, %v1309
      %v1339 = vpack.c.bf16 %v1312, %v1311
      %v1340 = vpack.c.bf16 %v1314, %v1313
      %v1341 = vpack.c.bf16 %v1316, %v1315
      %v1342 = vpack.c.bf16 %v1318, %v1317
      %v1343 = vpack.c.bf16 %v1320, %v1319
      %v1344 = vpack.c.bf16 %v1322, %v1321
      %v1345 = vpack.c.bf16 %v1324, %v1323
      %v1346 = vpack.c.bf16 %v1326, %v1325
      %v1347 = vpack.c.bf16 %v1328, %v1327
      %v1348 = vpack.c.bf16 %v1330, %v1329
      %v1349 = vpack.c.bf16 %v1332, %v1331
      %v1350 = vpack.c.bf16 %v1334, %v1333
      %v1351 = vld [vmem:[%s1 + $0x40] sm:$0xf]
      %v1352 = vld [vmem:[%s1 + $0x44] sm:$0xf]
      %v1353 = vld [vmem:[%s1 + $0x48] sm:$0xf]
      %v1354 = vld [vmem:[%s1 + $0x4c] sm:$0xf]
      %v1359 = vunpack.c.l.b16 %v1351
      %v1360 = vunpack.c.l.b16 %v1352
      %v1361 = vunpack.c.l.b16 %v1353
      %v1362 = vunpack.c.l.b16 %v1354
      %v1363 = vpack.c.b16 %v1360, %v1359
      %v1364 = vpack.c.b16 %v1362, %v1361
      %v1368 = vsel %vm261, %v1335, 0
      %v1371 = vsel %vm261, %v1336, 0
      %v1374 = vsel %vm261, %v1337, 0
      %v1377 = vsel %vm261, %v1338, 0
      %v1380 = vsel %vm261, %v1339, 0
      %v1383 = vsel %vm261, %v1340, 0
      %v1386 = vsel %vm261, %v1341, 0
      %v1389 = vsel %vm261, %v1342, 0
      %v1392 = vsel %vm261, %v1343, 0
      %v1395 = vsel %vm261, %v1344, 0
      %v1398 = vsel %vm261, %v1345, 0
      %v1401 = vsel %vm261, %v1346, 0
      %v1404 = vsel %vm261, %v1347, 0
      %v1407 = vsel %vm261, %v1348, 0
      %v1410 = vsel %vm261, %v1349, 0
      %v1413 = vsel %vm261, %v1350, 0
      %1415 = vmatprep.subr.bf16.mxu0 0
      %1416 = vmatpush1.bf16.msra.mxu0 0
      %1417 = vmatprep.subr.bf16.mxu0 0
      %1418 = vmatpush1.bf16.msra.mxu0 0
      %1419 = vmatprep.subr.bf16.mxu0 0
      %1420 = vmatpush1.bf16.msra.mxu0 0
      %1421 = vmatprep.subr.bf16.mxu0 0
      %1422 = vmatpush1.bf16.msra.mxu0 0
      %1423 = vmatprep.subr.bf16.mxu0 0
      %1424 = vmatpush1.bf16.msra.mxu0 0
      %1425 = vmatprep.subr.bf16.mxu0 0
      %1426 = vmatpush1.bf16.msra.mxu0 0
      %1427 = vmatprep.subr.bf16.mxu0 0
      %1428 = vmatpush1.bf16.msra.mxu0 %v1364
      %1429 = vmatprep.subr.bf16.mxu0 0
      %1430 = vmatpush1.bf16.msra.mxu0 %v1363
      %1431 = vmatprep.subr.bf16.mxu0 0
      %1432 = vmatpush2.bf16.msra.mxu0 0
      %1433 = vmatprep.subr.bf16.mxu0 0
      %1434 = vmatpush2.bf16.msra.mxu0 0
      %1435 = vmatprep.subr.bf16.mxu0 0
      %1436 = vmatpush2.bf16.msra.mxu0 0
      %1437 = vmatprep.subr.bf16.mxu0 0
      %1438 = vmatpush2.bf16.msra.mxu0 0
      %1439 = vmatprep.subr.bf16.mxu0 0
      %1440 = vmatpush2.bf16.msra.mxu0 0
      %1441 = vmatprep.subr.bf16.mxu0 0
      %1442 = vmatpush2.bf16.msra.mxu0 0
      %1443 = vmatprep.subr.bf16.mxu0 0
      %1444 = vmatpush2.bf16.msra.mxu0 0
      %1445 = vmatprep.subr.bf16.mxu0 0
      %1446 = vmatpush2.bf16.msra.mxu0 0
      %1447 = vmatprep.mubr.bf16.mxu0 0
      %1448 = vmatmul.mubr.bf16.gmra.mxu0 %v1368
      %v1449 = vpop.f32.mrf.mxu0
      %v1450 = vadd.f32 0.0, %v1449
      %v1451 = vpop.f32.mrf.mxu0
      %v1452 = vpop.f32.mrf.mxu0
      %v1453 = vadd.f32 0.0, %v1452
      %v1454 = vpop.f32.mrf.mxu0
      %1455 = vmatprep.mubr.bf16.mxu0 0
      %1456 = vmatmul.mubr.bf16.gmra.mxu0 %v1371
      %v1457 = vpop.f32.mrf.mxu0
      %v1458 = vadd.f32 0.0, %v1457
      %v1459 = vpop.f32.mrf.mxu0
      %v1460 = vpop.f32.mrf.mxu0
      %v1461 = vadd.f32 0.0, %v1460
      %v1462 = vpop.f32.mrf.mxu0
      %1463 = vmatprep.mubr.bf16.mxu0 0
      %1464 = vmatmul.mubr.bf16.gmra.mxu0 %v1374
      %v1465 = vpop.f32.mrf.mxu0
      %v1466 = vadd.f32 0.0, %v1465
      %v1467 = vpop.f32.mrf.mxu0
      %v1468 = vpop.f32.mrf.mxu0
      %v1469 = vadd.f32 0.0, %v1468
      %v1470 = vpop.f32.mrf.mxu0
      %1471 = vmatprep.mubr.bf16.mxu0 0
      %1472 = vmatmul.mubr.bf16.gmra.mxu0 %v1377
      %v1473 = vpop.f32.mrf.mxu0
      %v1474 = vadd.f32 0.0, %v1473
      %v1475 = vpop.f32.mrf.mxu0
      %v1476 = vpop.f32.mrf.mxu0
      %v1477 = vadd.f32 0.0, %v1476
      %v1478 = vpop.f32.mrf.mxu0
      %1479 = vmatprep.mubr.bf16.mxu0 0
      %1480 = vmatmul.mubr.bf16.gmra.mxu0 %v1380
      %v1481 = vpop.f32.mrf.mxu0
      %v1482 = vadd.f32 0.0, %v1481
      %v1483 = vpop.f32.mrf.mxu0
      %v1484 = vpop.f32.mrf.mxu0
      %v1485 = vadd.f32 0.0, %v1484
      %v1486 = vpop.f32.mrf.mxu0
      %1487 = vmatprep.mubr.bf16.mxu0 0
      %1488 = vmatmul.mubr.bf16.gmra.mxu0 %v1383
      %v1489 = vpop.f32.mrf.mxu0
      %v1490 = vadd.f32 0.0, %v1489
      %v1491 = vpop.f32.mrf.mxu0
      %v1492 = vpop.f32.mrf.mxu0
      %v1493 = vadd.f32 0.0, %v1492
      %v1494 = vpop.f32.mrf.mxu0
      %1495 = vmatprep.mubr.bf16.mxu0 0
      %1496 = vmatmul.mubr.bf16.gmra.mxu0 %v1386
      %v1497 = vpop.f32.mrf.mxu0
      %v1498 = vadd.f32 0.0, %v1497
      %v1499 = vpop.f32.mrf.mxu0
      %v1500 = vpop.f32.mrf.mxu0
      %v1501 = vadd.f32 0.0, %v1500
      %v1502 = vpop.f32.mrf.mxu0
      %1503 = vmatprep.mubr.bf16.mxu0 0
      %1504 = vmatmul.mubr.bf16.gmra.mxu0 %v1389
      %v1505 = vpop.f32.mrf.mxu0
      %v1506 = vadd.f32 0.0, %v1505
      %v1507 = vpop.f32.mrf.mxu0
      %v1508 = vpop.f32.mrf.mxu0
      %v1509 = vadd.f32 0.0, %v1508
      %v1510 = vpop.f32.mrf.mxu0
      %1511 = vmatprep.mubr.bf16.mxu0 0
      %1512 = vmatmul.mubr.bf16.gmra.mxu0 %v1392
      %v1513 = vpop.f32.mrf.mxu0
      %v1514 = vadd.f32 0.0, %v1513
      %v1515 = vpop.f32.mrf.mxu0
      %v1516 = vpop.f32.mrf.mxu0
      %v1517 = vadd.f32 0.0, %v1516
      %v1518 = vpop.f32.mrf.mxu0
      %1519 = vmatprep.mubr.bf16.mxu0 0
      %1520 = vmatmul.mubr.bf16.gmra.mxu0 %v1395
      %v1521 = vpop.f32.mrf.mxu0
      %v1522 = vadd.f32 0.0, %v1521
      %v1523 = vpop.f32.mrf.mxu0
      %v1524 = vpop.f32.mrf.mxu0
      %v1525 = vadd.f32 0.0, %v1524
      %v1526 = vpop.f32.mrf.mxu0
      %1527 = vmatprep.mubr.bf16.mxu0 0
      %1528 = vmatmul.mubr.bf16.gmra.mxu0 %v1398
      %v1529 = vpop.f32.mrf.mxu0
      %v1530 = vadd.f32 0.0, %v1529
      %v1531 = vpop.f32.mrf.mxu0
      %v1532 = vpop.f32.mrf.mxu0
      %v1533 = vadd.f32 0.0, %v1532
      %v1534 = vpop.f32.mrf.mxu0
      %1535 = vmatprep.mubr.bf16.mxu0 0
      %1536 = vmatmul.mubr.bf16.gmra.mxu0 %v1401
      %v1537 = vpop.f32.mrf.mxu0
      %v1538 = vadd.f32 0.0, %v1537
      %v1539 = vpop.f32.mrf.mxu0
      %v1540 = vpop.f32.mrf.mxu0
      %v1541 = vadd.f32 0.0, %v1540
      %v1542 = vpop.f32.mrf.mxu0
      %1543 = vmatprep.mubr.bf16.mxu0 0
      %1544 = vmatmul.mubr.bf16.gmra.mxu0 %v1404
      %v1545 = vpop.f32.mrf.mxu0
      %v1546 = vadd.f32 0.0, %v1545
      %v1547 = vpop.f32.mrf.mxu0
      %v1548 = vpop.f32.mrf.mxu0
      %v1549 = vadd.f32 0.0, %v1548
      %v1550 = vpop.f32.mrf.mxu0
      %1551 = vmatprep.mubr.bf16.mxu0 0
      %1552 = vmatmul.mubr.bf16.gmra.mxu0 %v1407
      %v1553 = vpop.f32.mrf.mxu0
      %v1554 = vadd.f32 0.0, %v1553
      %v1555 = vpop.f32.mrf.mxu0
      %v1556 = vpop.f32.mrf.mxu0
      %v1557 = vadd.f32 0.0, %v1556
      %v1558 = vpop.f32.mrf.mxu0
      %1559 = vmatprep.mubr.bf16.mxu0 0
      %1560 = vmatmul.mubr.bf16.gmra.mxu0 %v1410
      %v1561 = vpop.f32.mrf.mxu0
      %v1562 = vadd.f32 0.0, %v1561
      %v1563 = vpop.f32.mrf.mxu0
      %v1564 = vpop.f32.mrf.mxu0
      %v1565 = vadd.f32 0.0, %v1564
      %v1566 = vpop.f32.mrf.mxu0
      %1567 = vmatprep.mubr.bf16.mxu0 0
      %1568 = vmatmul.mubr.bf16.gmra.mxu0 %v1413
      %v1569 = vpop.f32.mrf.mxu0
      %v1570 = vadd.f32 0.0, %v1569
      %v1571 = vpop.f32.mrf.mxu0
      %v1572 = vpop.f32.mrf.mxu0
      %v1573 = vadd.f32 0.0, %v1572
      %v1574 = vpop.f32.mrf.mxu0
      %1575 = vdwg.mxu0
      %v1576 = vadd.f32 %v1271, %v1450
      %v1577 = vadd.f32 %v1272, %v1453
      %v1578 = vadd.f32 %v1273, %v1458
      %v1579 = vadd.f32 %v1274, %v1461
      %v1580 = vadd.f32 %v1275, %v1466
      %v1581 = vadd.f32 %v1276, %v1469
      %v1582 = vadd.f32 %v1277, %v1474
      %v1583 = vadd.f32 %v1278, %v1477
      %v1584 = vadd.f32 %v1279, %v1482
      %v1585 = vadd.f32 %v1280, %v1485
      %v1586 = vadd.f32 %v1281, %v1490
      %v1587 = vadd.f32 %v1282, %v1493
      %v1588 = vadd.f32 %v1283, %v1498
      %v1589 = vadd.f32 %v1284, %v1501
      %v1590 = vadd.f32 %v1285, %v1506
      %v1591 = vadd.f32 %v1286, %v1509
      %v1592 = vadd.f32 %v1287, %v1514
      %v1593 = vadd.f32 %v1288, %v1517
      %v1594 = vadd.f32 %v1289, %v1522
      %v1595 = vadd.f32 %v1290, %v1525
      %v1596 = vadd.f32 %v1291, %v1530
      %v1597 = vadd.f32 %v1292, %v1533
      %v1598 = vadd.f32 %v1293, %v1538
      %v1599 = vadd.f32 %v1294, %v1541
      %v1600 = vadd.f32 %v1295, %v1546
      %v1601 = vadd.f32 %v1296, %v1549
      %v1602 = vadd.f32 %v1297, %v1554
      %v1603 = vadd.f32 %v1298, %v1557
      %v1604 = vadd.f32 %v1299, %v1562
      %v1605 = vadd.f32 %v1300, %v1565
      %v1606 = vadd.f32 %v1301, %v1570
      %v1607 = vadd.f32 %v1302, %v1573
      %v1608 = vld [vmem:[%s997 + $0x2] sm:$0xff]
      %v1609 = vld [vmem:[%s997 + $0xa] sm:$0xff]
      %v1610 = vld [vmem:[%s997 + $0x1a] sm:$0xff]
      %v1611 = vld [vmem:[%s997 + $0x22] sm:$0xff]
      %v1612 = vld [vmem:[%s997 + $0x32] sm:$0xff]
      %v1613 = vld [vmem:[%s997 + $0x3a] sm:$0xff]
      %v1614 = vld [vmem:[%s997 + $0x4a] sm:$0xff]
      %v1615 = vld [vmem:[%s997 + $0x52] sm:$0xff]
      %v1616 = vld [vmem:[%s997 + $0x62] sm:$0xff]
      %v1617 = vld [vmem:[%s997 + $0x6a] sm:$0xff]
      %v1618 = vld [vmem:[%s997 + $0x7a] sm:$0xff]
      %v1619 = vld [vmem:[%s997 + $0x82] sm:$0xff]
      %v1620 = vld [vmem:[%s997 + $0x92] sm:$0xff]
      %v1621 = vld [vmem:[%s997 + $0x9a] sm:$0xff]
      %v1622 = vld [vmem:[%s997 + $0xaa] sm:$0xff]
      %v1623 = vld [vmem:[%s997 + $0xb2] sm:$0xff]
      %v1624 = vld [vmem:[%s997 + $0xc2] sm:$0xff]
      %v1625 = vld [vmem:[%s997 + $0xca] sm:$0xff]
      %v1626 = vld [vmem:[%s997 + $0xda] sm:$0xff]
      %v1627 = vld [vmem:[%s997 + $0xe2] sm:$0xff]
      %v1628 = vld [vmem:[%s997 + $0xf2] sm:$0xff]
      %v1629 = vld [vmem:[%s997 + $0xfa] sm:$0xff]
      %v1630 = vld [vmem:[%s997 + $0x10a] sm:$0xff]
      %v1631 = vld [vmem:[%s997 + $0x112] sm:$0xff]
      %v1632 = vld [vmem:[%s997 + $0x122] sm:$0xff]
      %v1633 = vld [vmem:[%s997 + $0x12a] sm:$0xff]
      %v1634 = vld [vmem:[%s997 + $0x13a] sm:$0xff]
      %v1635 = vld [vmem:[%s997 + $0x142] sm:$0xff]
      %v1636 = vld [vmem:[%s997 + $0x152] sm:$0xff]
      %v1637 = vld [vmem:[%s997 + $0x15a] sm:$0xff]
      %v1638 = vld [vmem:[%s997 + $0x16a] sm:$0xff]
      %v1639 = vld [vmem:[%s997 + $0x172] sm:$0xff]
      %v1640 = vpack.c.bf16 %v1609, %v1608
      %v1641 = vpack.c.bf16 %v1611, %v1610
      %v1642 = vpack.c.bf16 %v1613, %v1612
      %v1643 = vpack.c.bf16 %v1615, %v1614
      %v1644 = vpack.c.bf16 %v1617, %v1616
      %v1645 = vpack.c.bf16 %v1619, %v1618
      %v1646 = vpack.c.bf16 %v1621, %v1620
      %v1647 = vpack.c.bf16 %v1623, %v1622
      %v1648 = vpack.c.bf16 %v1625, %v1624
      %v1649 = vpack.c.bf16 %v1627, %v1626
      %v1650 = vpack.c.bf16 %v1629, %v1628
      %v1651 = vpack.c.bf16 %v1631, %v1630
      %v1652 = vpack.c.bf16 %v1633, %v1632
      %v1653 = vpack.c.bf16 %v1635, %v1634
      %v1654 = vpack.c.bf16 %v1637, %v1636
      %v1655 = vpack.c.bf16 %v1639, %v1638
      %v1656 = vld [vmem:[%s1 + $0x50] sm:$0xf]
      %v1657 = vld [vmem:[%s1 + $0x54] sm:$0xf]
      %v1658 = vld [vmem:[%s1 + $0x58] sm:$0xf]
      %v1659 = vld [vmem:[%s1 + $0x5c] sm:$0xf]
      %v1664 = vunpack.c.l.b16 %v1656
      %v1665 = vunpack.c.l.b16 %v1657
      %v1666 = vunpack.c.l.b16 %v1658
      %v1667 = vunpack.c.l.b16 %v1659
      %v1668 = vpack.c.b16 %v1665, %v1664
      %v1669 = vpack.c.b16 %v1667, %v1666
      %v1673 = vsel %vm261, %v1640, 0
      %v1676 = vsel %vm261, %v1641, 0
      %v1679 = vsel %vm261, %v1642, 0
      %v1682 = vsel %vm261, %v1643, 0
      %v1685 = vsel %vm261, %v1644, 0
      %v1688 = vsel %vm261, %v1645, 0
      %v1691 = vsel %vm261, %v1646, 0
      %v1694 = vsel %vm261, %v1647, 0
      %v1697 = vsel %vm261, %v1648, 0
      %v1700 = vsel %vm261, %v1649, 0
      %v1703 = vsel %vm261, %v1650, 0
      %v1706 = vsel %vm261, %v1651, 0
      %v1709 = vsel %vm261, %v1652, 0
      %v1712 = vsel %vm261, %v1653, 0
      %v1715 = vsel %vm261, %v1654, 0
      %v1718 = vsel %vm261, %v1655, 0
      %1720 = vmatprep.subr.bf16.mxu0 0
      %1721 = vmatpush1.bf16.msra.mxu0 0
      %1722 = vmatprep.subr.bf16.mxu0 0
      %1723 = vmatpush1.bf16.msra.mxu0 0
      %1724 = vmatprep.subr.bf16.mxu0 0
      %1725 = vmatpush1.bf16.msra.mxu0 0
      %1726 = vmatprep.subr.bf16.mxu0 0
      %1727 = vmatpush1.bf16.msra.mxu0 0
      %1728 = vmatprep.subr.bf16.mxu0 0
      %1729 = vmatpush1.bf16.msra.mxu0 0
      %1730 = vmatprep.subr.bf16.mxu0 0
      %1731 = vmatpush1.bf16.msra.mxu0 0
      %1732 = vmatprep.subr.bf16.mxu0 0
      %1733 = vmatpush1.bf16.msra.mxu0 %v1669
      %1734 = vmatprep.subr.bf16.mxu0 0
      %1735 = vmatpush1.bf16.msra.mxu0 %v1668
      %1736 = vmatprep.subr.bf16.mxu0 0
      %1737 = vmatpush2.bf16.msra.mxu0 0
      %1738 = vmatprep.subr.bf16.mxu0 0
      %1739 = vmatpush2.bf16.msra.mxu0 0
      %1740 = vmatprep.subr.bf16.mxu0 0
      %1741 = vmatpush2.bf16.msra.mxu0 0
      %1742 = vmatprep.subr.bf16.mxu0 0
      %1743 = vmatpush2.bf16.msra.mxu0 0
      %1744 = vmatprep.subr.bf16.mxu0 0
      %1745 = vmatpush2.bf16.msra.mxu0 0
      %1746 = vmatprep.subr.bf16.mxu0 0
      %1747 = vmatpush2.bf16.msra.mxu0 0
      %1748 = vmatprep.subr.bf16.mxu0 0
      %1749 = vmatpush2.bf16.msra.mxu0 0
      %1750 = vmatprep.subr.bf16.mxu0 0
      %1751 = vmatpush2.bf16.msra.mxu0 0
      %1752 = vmatprep.mubr.bf16.mxu0 0
      %1753 = vmatmul.mubr.bf16.gmra.mxu0 %v1673
      %v1754 = vpop.f32.mrf.mxu0
      %v1755 = vadd.f32 0.0, %v1754
      %v1756 = vpop.f32.mrf.mxu0
      %v1757 = vpop.f32.mrf.mxu0
      %v1758 = vadd.f32 0.0, %v1757
      %v1759 = vpop.f32.mrf.mxu0
      %1760 = vmatprep.mubr.bf16.mxu0 0
      %1761 = vmatmul.mubr.bf16.gmra.mxu0 %v1676
      %v1762 = vpop.f32.mrf.mxu0
      %v1763 = vadd.f32 0.0, %v1762
      %v1764 = vpop.f32.mrf.mxu0
      %v1765 = vpop.f32.mrf.mxu0
      %v1766 = vadd.f32 0.0, %v1765
      %v1767 = vpop.f32.mrf.mxu0
      %1768 = vmatprep.mubr.bf16.mxu0 0
      %1769 = vmatmul.mubr.bf16.gmra.mxu0 %v1679
      %v1770 = vpop.f32.mrf.mxu0
      %v1771 = vadd.f32 0.0, %v1770
      %v1772 = vpop.f32.mrf.mxu0
      %v1773 = vpop.f32.mrf.mxu0
      %v1774 = vadd.f32 0.0, %v1773
      %v1775 = vpop.f32.mrf.mxu0
      %1776 = vmatprep.mubr.bf16.mxu0 0
      %1777 = vmatmul.mubr.bf16.gmra.mxu0 %v1682
      %v1778 = vpop.f32.mrf.mxu0
      %v1779 = vadd.f32 0.0, %v1778
      %v1780 = vpop.f32.mrf.mxu0
      %v1781 = vpop.f32.mrf.mxu0
      %v1782 = vadd.f32 0.0, %v1781
      %v1783 = vpop.f32.mrf.mxu0
      %1784 = vmatprep.mubr.bf16.mxu0 0
      %1785 = vmatmul.mubr.bf16.gmra.mxu0 %v1685
      %v1786 = vpop.f32.mrf.mxu0
      %v1787 = vadd.f32 0.0, %v1786
      %v1788 = vpop.f32.mrf.mxu0
      %v1789 = vpop.f32.mrf.mxu0
      %v1790 = vadd.f32 0.0, %v1789
      %v1791 = vpop.f32.mrf.mxu0
      %1792 = vmatprep.mubr.bf16.mxu0 0
      %1793 = vmatmul.mubr.bf16.gmra.mxu0 %v1688
      %v1794 = vpop.f32.mrf.mxu0
      %v1795 = vadd.f32 0.0, %v1794
      %v1796 = vpop.f32.mrf.mxu0
      %v1797 = vpop.f32.mrf.mxu0
      %v1798 = vadd.f32 0.0, %v1797
      %v1799 = vpop.f32.mrf.mxu0
      %1800 = vmatprep.mubr.bf16.mxu0 0
      %1801 = vmatmul.mubr.bf16.gmra.mxu0 %v1691
      %v1802 = vpop.f32.mrf.mxu0
      %v1803 = vadd.f32 0.0, %v1802
      %v1804 = vpop.f32.mrf.mxu0
      %v1805 = vpop.f32.mrf.mxu0
      %v1806 = vadd.f32 0.0, %v1805
      %v1807 = vpop.f32.mrf.mxu0
      %1808 = vmatprep.mubr.bf16.mxu0 0
      %1809 = vmatmul.mubr.bf16.gmra.mxu0 %v1694
      %v1810 = vpop.f32.mrf.mxu0
      %v1811 = vadd.f32 0.0, %v1810
      %v1812 = vpop.f32.mrf.mxu0
      %v1813 = vpop.f32.mrf.mxu0
      %v1814 = vadd.f32 0.0, %v1813
      %v1815 = vpop.f32.mrf.mxu0
      %1816 = vmatprep.mubr.bf16.mxu0 0
      %1817 = vmatmul.mubr.bf16.gmra.mxu0 %v1697
      %v1818 = vpop.f32.mrf.mxu0
      %v1819 = vadd.f32 0.0, %v1818
      %v1820 = vpop.f32.mrf.mxu0
      %v1821 = vpop.f32.mrf.mxu0
      %v1822 = vadd.f32 0.0, %v1821
      %v1823 = vpop.f32.mrf.mxu0
      %1824 = vmatprep.mubr.bf16.mxu0 0
      %1825 = vmatmul.mubr.bf16.gmra.mxu0 %v1700
      %v1826 = vpop.f32.mrf.mxu0
      %v1827 = vadd.f32 0.0, %v1826
      %v1828 = vpop.f32.mrf.mxu0
      %v1829 = vpop.f32.mrf.mxu0
      %v1830 = vadd.f32 0.0, %v1829
      %v1831 = vpop.f32.mrf.mxu0
      %1832 = vmatprep.mubr.bf16.mxu0 0
      %1833 = vmatmul.mubr.bf16.gmra.mxu0 %v1703
      %v1834 = vpop.f32.mrf.mxu0
      %v1835 = vadd.f32 0.0, %v1834
      %v1836 = vpop.f32.mrf.mxu0
      %v1837 = vpop.f32.mrf.mxu0
      %v1838 = vadd.f32 0.0, %v1837
      %v1839 = vpop.f32.mrf.mxu0
      %1840 = vmatprep.mubr.bf16.mxu0 0
      %1841 = vmatmul.mubr.bf16.gmra.mxu0 %v1706
      %v1842 = vpop.f32.mrf.mxu0
      %v1843 = vadd.f32 0.0, %v1842
      %v1844 = vpop.f32.mrf.mxu0
      %v1845 = vpop.f32.mrf.mxu0
      %v1846 = vadd.f32 0.0, %v1845
      %v1847 = vpop.f32.mrf.mxu0
      %1848 = vmatprep.mubr.bf16.mxu0 0
      %1849 = vmatmul.mubr.bf16.gmra.mxu0 %v1709
      %v1850 = vpop.f32.mrf.mxu0
      %v1851 = vadd.f32 0.0, %v1850
      %v1852 = vpop.f32.mrf.mxu0
      %v1853 = vpop.f32.mrf.mxu0
      %v1854 = vadd.f32 0.0, %v1853
      %v1855 = vpop.f32.mrf.mxu0
      %1856 = vmatprep.mubr.bf16.mxu0 0
      %1857 = vmatmul.mubr.bf16.gmra.mxu0 %v1712
      %v1858 = vpop.f32.mrf.mxu0
      %v1859 = vadd.f32 0.0, %v1858
      %v1860 = vpop.f32.mrf.mxu0
      %v1861 = vpop.f32.mrf.mxu0
      %v1862 = vadd.f32 0.0, %v1861
      %v1863 = vpop.f32.mrf.mxu0
      %1864 = vmatprep.mubr.bf16.mxu0 0
      %1865 = vmatmul.mubr.bf16.gmra.mxu0 %v1715
      %v1866 = vpop.f32.mrf.mxu0
      %v1867 = vadd.f32 0.0, %v1866
      %v1868 = vpop.f32.mrf.mxu0
      %v1869 = vpop.f32.mrf.mxu0
      %v1870 = vadd.f32 0.0, %v1869
      %v1871 = vpop.f32.mrf.mxu0
      %1872 = vmatprep.mubr.bf16.mxu0 0
      %1873 = vmatmul.mubr.bf16.gmra.mxu0 %v1718
      %v1874 = vpop.f32.mrf.mxu0
      %v1875 = vadd.f32 0.0, %v1874
      %v1876 = vpop.f32.mrf.mxu0
      %v1877 = vpop.f32.mrf.mxu0
      %v1878 = vadd.f32 0.0, %v1877
      %v1879 = vpop.f32.mrf.mxu0
      %1880 = vdwg.mxu0
      %v1881 = vadd.f32 %v1576, %v1755
      %v1882 = vadd.f32 %v1577, %v1758
      %v1883 = vadd.f32 %v1578, %v1763
      %v1884 = vadd.f32 %v1579, %v1766
      %v1885 = vadd.f32 %v1580, %v1771
      %v1886 = vadd.f32 %v1581, %v1774
      %v1887 = vadd.f32 %v1582, %v1779
      %v1888 = vadd.f32 %v1583, %v1782
      %v1889 = vadd.f32 %v1584, %v1787
      %v1890 = vadd.f32 %v1585, %v1790
      %v1891 = vadd.f32 %v1586, %v1795
      %v1892 = vadd.f32 %v1587, %v1798
      %v1893 = vadd.f32 %v1588, %v1803
      %v1894 = vadd.f32 %v1589, %v1806
      %v1895 = vadd.f32 %v1590, %v1811
      %v1896 = vadd.f32 %v1591, %v1814
      %v1897 = vadd.f32 %v1592, %v1819
      %v1898 = vadd.f32 %v1593, %v1822
      %v1899 = vadd.f32 %v1594, %v1827
      %v1900 = vadd.f32 %v1595, %v1830
      %v1901 = vadd.f32 %v1596, %v1835
      %v1902 = vadd.f32 %v1597, %v1838
      %v1903 = vadd.f32 %v1598, %v1843
      %v1904 = vadd.f32 %v1599, %v1846
      %v1905 = vadd.f32 %v1600, %v1851
      %v1906 = vadd.f32 %v1601, %v1854
      %v1907 = vadd.f32 %v1602, %v1859
      %v1908 = vadd.f32 %v1603, %v1862
      %v1909 = vadd.f32 %v1604, %v1867
      %v1910 = vadd.f32 %v1605, %v1870
      %v1911 = vadd.f32 %v1606, %v1875
      %v1912 = vadd.f32 %v1607, %v1878
      %s1913 = scalar_lea.vmem %s138, 48
      %v1914 = vld [vmem:[%s1913] sm:$0xff]
      %v1915 = vld [vmem:[%s1913 + $0x8] sm:$0xff]
      %v1916 = vld [vmem:[%s1913 + $0x18] sm:$0xff]
      %v1917 = vld [vmem:[%s1913 + $0x20] sm:$0xff]
      %v1918 = vld [vmem:[%s1913 + $0x30] sm:$0xff]
      %v1919 = vld [vmem:[%s1913 + $0x38] sm:$0xff]
      %v1920 = vld [vmem:[%s1913 + $0x48] sm:$0xff]
      %v1921 = vld [vmem:[%s1913 + $0x50] sm:$0xff]
      %v1922 = vld [vmem:[%s1913 + $0x60] sm:$0xff]
      %v1923 = vld [vmem:[%s1913 + $0x68] sm:$0xff]
      %v1924 = vld [vmem:[%s1913 + $0x78] sm:$0xff]
      %v1925 = vld [vmem:[%s1913 + $0x80] sm:$0xff]
      %v1926 = vld [vmem:[%s1913 + $0x90] sm:$0xff]
      %v1927 = vld [vmem:[%s1913 + $0x98] sm:$0xff]
      %v1928 = vld [vmem:[%s1913 + $0xa8] sm:$0xff]
      %v1929 = vld [vmem:[%s1913 + $0xb0] sm:$0xff]
      %v1930 = vld [vmem:[%s1913 + $0xc0] sm:$0xff]
      %v1931 = vld [vmem:[%s1913 + $0xc8] sm:$0xff]
      %v1932 = vld [vmem:[%s1913 + $0xd8] sm:$0xff]
      %v1933 = vld [vmem:[%s1913 + $0xe0] sm:$0xff]
      %v1934 = vld [vmem:[%s1913 + $0xf0] sm:$0xff]
      %v1935 = vld [vmem:[%s1913 + $0xf8] sm:$0xff]
      %v1936 = vld [vmem:[%s1913 + $0x108] sm:$0xff]
      %v1937 = vld [vmem:[%s1913 + $0x110] sm:$0xff]
      %v1938 = vld [vmem:[%s1913 + $0x120] sm:$0xff]
      %v1939 = vld [vmem:[%s1913 + $0x128] sm:$0xff]
      %v1940 = vld [vmem:[%s1913 + $0x138] sm:$0xff]
      %v1941 = vld [vmem:[%s1913 + $0x140] sm:$0xff]
      %v1942 = vld [vmem:[%s1913 + $0x150] sm:$0xff]
      %v1943 = vld [vmem:[%s1913 + $0x158] sm:$0xff]
      %v1944 = vld [vmem:[%s1913 + $0x168] sm:$0xff]
      %v1945 = vld [vmem:[%s1913 + $0x170] sm:$0xff]
      %v1946 = vpack.c.bf16 %v1915, %v1914
      %v1947 = vpack.c.bf16 %v1917, %v1916
      %v1948 = vpack.c.bf16 %v1919, %v1918
      %v1949 = vpack.c.bf16 %v1921, %v1920
      %v1950 = vpack.c.bf16 %v1923, %v1922
      %v1951 = vpack.c.bf16 %v1925, %v1924
      %v1952 = vpack.c.bf16 %v1927, %v1926
      %v1953 = vpack.c.bf16 %v1929, %v1928
      %v1954 = vpack.c.bf16 %v1931, %v1930
      %v1955 = vpack.c.bf16 %v1933, %v1932
      %v1956 = vpack.c.bf16 %v1935, %v1934
      %v1957 = vpack.c.bf16 %v1937, %v1936
      %v1958 = vpack.c.bf16 %v1939, %v1938
      %v1959 = vpack.c.bf16 %v1941, %v1940
      %v1960 = vpack.c.bf16 %v1943, %v1942
      %v1961 = vpack.c.bf16 %v1945, %v1944
      %v1962 = vld [vmem:[%s1 + $0x60] sm:$0xf]
      %v1963 = vld [vmem:[%s1 + $0x64] sm:$0xf]
      %v1964 = vld [vmem:[%s1 + $0x68] sm:$0xf]
      %v1965 = vld [vmem:[%s1 + $0x6c] sm:$0xf]
      %v1970 = vunpack.c.l.b16 %v1962
      %v1971 = vunpack.c.l.b16 %v1963
      %v1972 = vunpack.c.l.b16 %v1964
      %v1973 = vunpack.c.l.b16 %v1965
      %v1974 = vpack.c.b16 %v1971, %v1970
      %v1975 = vpack.c.b16 %v1973, %v1972
      %v1979 = vsel %vm261, %v1946, 0
      %v1982 = vsel %vm261, %v1947, 0
      %v1985 = vsel %vm261, %v1948, 0
      %v1988 = vsel %vm261, %v1949, 0
      %v1991 = vsel %vm261, %v1950, 0
      %v1994 = vsel %vm261, %v1951, 0
      %v1997 = vsel %vm261, %v1952, 0
      %v2000 = vsel %vm261, %v1953, 0
      %v2003 = vsel %vm261, %v1954, 0
      %v2006 = vsel %vm261, %v1955, 0
      %v2009 = vsel %vm261, %v1956, 0
      %v2012 = vsel %vm261, %v1957, 0
      %v2015 = vsel %vm261, %v1958, 0
      %v2018 = vsel %vm261, %v1959, 0
      %v2021 = vsel %vm261, %v1960, 0
      %v2024 = vsel %vm261, %v1961, 0
      %2026 = vmatprep.subr.bf16.mxu0 0
      %2027 = vmatpush1.bf16.msra.mxu0 0
      %2028 = vmatprep.subr.bf16.mxu0 0
      %2029 = vmatpush1.bf16.msra.mxu0 0
      %2030 = vmatprep.subr.bf16.mxu0 0
      %2031 = vmatpush1.bf16.msra.mxu0 0
      %2032 = vmatprep.subr.bf16.mxu0 0
      %2033 = vmatpush1.bf16.msra.mxu0 0
      %2034 = vmatprep.subr.bf16.mxu0 0
      %2035 = vmatpush1.bf16.msra.mxu0 0
      %2036 = vmatprep.subr.bf16.mxu0 0
      %2037 = vmatpush1.bf16.msra.mxu0 0
      %2038 = vmatprep.subr.bf16.mxu0 0
      %2039 = vmatpush1.bf16.msra.mxu0 %v1975
      %2040 = vmatprep.subr.bf16.mxu0 0
      %2041 = vmatpush1.bf16.msra.mxu0 %v1974
      %2042 = vmatprep.subr.bf16.mxu0 0
      %2043 = vmatpush2.bf16.msra.mxu0 0
      %2044 = vmatprep.subr.bf16.mxu0 0
      %2045 = vmatpush2.bf16.msra.mxu0 0
      %2046 = vmatprep.subr.bf16.mxu0 0
      %2047 = vmatpush2.bf16.msra.mxu0 0
      %2048 = vmatprep.subr.bf16.mxu0 0
      %2049 = vmatpush2.bf16.msra.mxu0 0
      %2050 = vmatprep.subr.bf16.mxu0 0
      %2051 = vmatpush2.bf16.msra.mxu0 0
      %2052 = vmatprep.subr.bf16.mxu0 0
      %2053 = vmatpush2.bf16.msra.mxu0 0
      %2054 = vmatprep.subr.bf16.mxu0 0
      %2055 = vmatpush2.bf16.msra.mxu0 0
      %2056 = vmatprep.subr.bf16.mxu0 0
      %2057 = vmatpush2.bf16.msra.mxu0 0
      %2058 = vmatprep.mubr.bf16.mxu0 0
      %2059 = vmatmul.mubr.bf16.gmra.mxu0 %v1979
      %v2060 = vpop.f32.mrf.mxu0
      %v2061 = vadd.f32 0.0, %v2060
      %v2062 = vpop.f32.mrf.mxu0
      %v2063 = vpop.f32.mrf.mxu0
      %v2064 = vadd.f32 0.0, %v2063
      %v2065 = vpop.f32.mrf.mxu0
      %2066 = vmatprep.mubr.bf16.mxu0 0
      %2067 = vmatmul.mubr.bf16.gmra.mxu0 %v1982
      %v2068 = vpop.f32.mrf.mxu0
      %v2069 = vadd.f32 0.0, %v2068
      %v2070 = vpop.f32.mrf.mxu0
      %v2071 = vpop.f32.mrf.mxu0
      %v2072 = vadd.f32 0.0, %v2071
      %v2073 = vpop.f32.mrf.mxu0
      %2074 = vmatprep.mubr.bf16.mxu0 0
      %2075 = vmatmul.mubr.bf16.gmra.mxu0 %v1985
      %v2076 = vpop.f32.mrf.mxu0
      %v2077 = vadd.f32 0.0, %v2076
      %v2078 = vpop.f32.mrf.mxu0
      %v2079 = vpop.f32.mrf.mxu0
      %v2080 = vadd.f32 0.0, %v2079
      %v2081 = vpop.f32.mrf.mxu0
      %2082 = vmatprep.mubr.bf16.mxu0 0
      %2083 = vmatmul.mubr.bf16.gmra.mxu0 %v1988
      %v2084 = vpop.f32.mrf.mxu0
      %v2085 = vadd.f32 0.0, %v2084
      %v2086 = vpop.f32.mrf.mxu0
      %v2087 = vpop.f32.mrf.mxu0
      %v2088 = vadd.f32 0.0, %v2087
      %v2089 = vpop.f32.mrf.mxu0
      %2090 = vmatprep.mubr.bf16.mxu0 0
      %2091 = vmatmul.mubr.bf16.gmra.mxu0 %v1991
      %v2092 = vpop.f32.mrf.mxu0
      %v2093 = vadd.f32 0.0, %v2092
      %v2094 = vpop.f32.mrf.mxu0
      %v2095 = vpop.f32.mrf.mxu0
      %v2096 = vadd.f32 0.0, %v2095
      %v2097 = vpop.f32.mrf.mxu0
      %2098 = vmatprep.mubr.bf16.mxu0 0
      %2099 = vmatmul.mubr.bf16.gmra.mxu0 %v1994
      %v2100 = vpop.f32.mrf.mxu0
      %v2101 = vadd.f32 0.0, %v2100
      %v2102 = vpop.f32.mrf.mxu0
      %v2103 = vpop.f32.mrf.mxu0
      %v2104 = vadd.f32 0.0, %v2103
      %v2105 = vpop.f32.mrf.mxu0
      %2106 = vmatprep.mubr.bf16.mxu0 0
      %2107 = vmatmul.mubr.bf16.gmra.mxu0 %v1997
      %v2108 = vpop.f32.mrf.mxu0
      %v2109 = vadd.f32 0.0, %v2108
      %v2110 = vpop.f32.mrf.mxu0
      %v2111 = vpop.f32.mrf.mxu0
      %v2112 = vadd.f32 0.0, %v2111
      %v2113 = vpop.f32.mrf.mxu0
      %2114 = vmatprep.mubr.bf16.mxu0 0
      %2115 = vmatmul.mubr.bf16.gmra.mxu0 %v2000
      %v2116 = vpop.f32.mrf.mxu0
      %v2117 = vadd.f32 0.0, %v2116
      %v2118 = vpop.f32.mrf.mxu0
      %v2119 = vpop.f32.mrf.mxu0
      %v2120 = vadd.f32 0.0, %v2119
      %v2121 = vpop.f32.mrf.mxu0
      %2122 = vmatprep.mubr.bf16.mxu0 0
      %2123 = vmatmul.mubr.bf16.gmra.mxu0 %v2003
      %v2124 = vpop.f32.mrf.mxu0
      %v2125 = vadd.f32 0.0, %v2124
      %v2126 = vpop.f32.mrf.mxu0
      %v2127 = vpop.f32.mrf.mxu0
      %v2128 = vadd.f32 0.0, %v2127
      %v2129 = vpop.f32.mrf.mxu0
      %2130 = vmatprep.mubr.bf16.mxu0 0
      %2131 = vmatmul.mubr.bf16.gmra.mxu0 %v2006
      %v2132 = vpop.f32.mrf.mxu0
      %v2133 = vadd.f32 0.0, %v2132
      %v2134 = vpop.f32.mrf.mxu0
      %v2135 = vpop.f32.mrf.mxu0
      %v2136 = vadd.f32 0.0, %v2135
      %v2137 = vpop.f32.mrf.mxu0
      %2138 = vmatprep.mubr.bf16.mxu0 0
      %2139 = vmatmul.mubr.bf16.gmra.mxu0 %v2009
      %v2140 = vpop.f32.mrf.mxu0
      %v2141 = vadd.f32 0.0, %v2140
      %v2142 = vpop.f32.mrf.mxu0
      %v2143 = vpop.f32.mrf.mxu0
      %v2144 = vadd.f32 0.0, %v2143
      %v2145 = vpop.f32.mrf.mxu0
      %2146 = vmatprep.mubr.bf16.mxu0 0
      %2147 = vmatmul.mubr.bf16.gmra.mxu0 %v2012
      %v2148 = vpop.f32.mrf.mxu0
      %v2149 = vadd.f32 0.0, %v2148
      %v2150 = vpop.f32.mrf.mxu0
      %v2151 = vpop.f32.mrf.mxu0
      %v2152 = vadd.f32 0.0, %v2151
      %v2153 = vpop.f32.mrf.mxu0
      %2154 = vmatprep.mubr.bf16.mxu0 0
      %2155 = vmatmul.mubr.bf16.gmra.mxu0 %v2015
      %v2156 = vpop.f32.mrf.mxu0
      %v2157 = vadd.f32 0.0, %v2156
      %v2158 = vpop.f32.mrf.mxu0
      %v2159 = vpop.f32.mrf.mxu0
      %v2160 = vadd.f32 0.0, %v2159
      %v2161 = vpop.f32.mrf.mxu0
      %2162 = vmatprep.mubr.bf16.mxu0 0
      %2163 = vmatmul.mubr.bf16.gmra.mxu0 %v2018
      %v2164 = vpop.f32.mrf.mxu0
      %v2165 = vadd.f32 0.0, %v2164
      %v2166 = vpop.f32.mrf.mxu0
      %v2167 = vpop.f32.mrf.mxu0
      %v2168 = vadd.f32 0.0, %v2167
      %v2169 = vpop.f32.mrf.mxu0
      %2170 = vmatprep.mubr.bf16.mxu0 0
      %2171 = vmatmul.mubr.bf16.gmra.mxu0 %v2021
      %v2172 = vpop.f32.mrf.mxu0
      %v2173 = vadd.f32 0.0, %v2172
      %v2174 = vpop.f32.mrf.mxu0
      %v2175 = vpop.f32.mrf.mxu0
      %v2176 = vadd.f32 0.0, %v2175
      %v2177 = vpop.f32.mrf.mxu0
      %2178 = vmatprep.mubr.bf16.mxu0 0
      %2179 = vmatmul.mubr.bf16.gmra.mxu0 %v2024
      %v2180 = vpop.f32.mrf.mxu0
      %v2181 = vadd.f32 0.0, %v2180
      %v2182 = vpop.f32.mrf.mxu0
      %v2183 = vpop.f32.mrf.mxu0
      %v2184 = vadd.f32 0.0, %v2183
      %v2185 = vpop.f32.mrf.mxu0
      %2186 = vdwg.mxu0
      %v2187 = vadd.f32 %v1881, %v2061
      %v2188 = vadd.f32 %v1882, %v2064
      %v2189 = vadd.f32 %v1883, %v2069
      %v2190 = vadd.f32 %v1884, %v2072
      %v2191 = vadd.f32 %v1885, %v2077
      %v2192 = vadd.f32 %v1886, %v2080
      %v2193 = vadd.f32 %v1887, %v2085
      %v2194 = vadd.f32 %v1888, %v2088
      %v2195 = vadd.f32 %v1889, %v2093
      %v2196 = vadd.f32 %v1890, %v2096
      %v2197 = vadd.f32 %v1891, %v2101
      %v2198 = vadd.f32 %v1892, %v2104
      %v2199 = vadd.f32 %v1893, %v2109
      %v2200 = vadd.f32 %v1894, %v2112
      %v2201 = vadd.f32 %v1895, %v2117
      %v2202 = vadd.f32 %v1896, %v2120
      %v2203 = vadd.f32 %v1897, %v2125
      %v2204 = vadd.f32 %v1898, %v2128
      %v2205 = vadd.f32 %v1899, %v2133
      %v2206 = vadd.f32 %v1900, %v2136
      %v2207 = vadd.f32 %v1901, %v2141
      %v2208 = vadd.f32 %v1902, %v2144
      %v2209 = vadd.f32 %v1903, %v2149
      %v2210 = vadd.f32 %v1904, %v2152
      %v2211 = vadd.f32 %v1905, %v2157
      %v2212 = vadd.f32 %v1906, %v2160
      %v2213 = vadd.f32 %v1907, %v2165
      %v2214 = vadd.f32 %v1908, %v2168
      %v2215 = vadd.f32 %v1909, %v2173
      %v2216 = vadd.f32 %v1910, %v2176
      %v2217 = vadd.f32 %v1911, %v2181
      %v2218 = vadd.f32 %v1912, %v2184
      %v2219 = vld [vmem:[%s1913 + $0x1] sm:$0xff]
      %v2220 = vld [vmem:[%s1913 + $0x9] sm:$0xff]
      %v2221 = vld [vmem:[%s1913 + $0x19] sm:$0xff]
      %v2222 = vld [vmem:[%s1913 + $0x21] sm:$0xff]
      %v2223 = vld [vmem:[%s1913 + $0x31] sm:$0xff]
      %v2224 = vld [vmem:[%s1913 + $0x39] sm:$0xff]
      %v2225 = vld [vmem:[%s1913 + $0x49] sm:$0xff]
      %v2226 = vld [vmem:[%s1913 + $0x51] sm:$0xff]
      %v2227 = vld [vmem:[%s1913 + $0x61] sm:$0xff]
      %v2228 = vld [vmem:[%s1913 + $0x69] sm:$0xff]
      %v2229 = vld [vmem:[%s1913 + $0x79] sm:$0xff]
      %v2230 = vld [vmem:[%s1913 + $0x81] sm:$0xff]
      %v2231 = vld [vmem:[%s1913 + $0x91] sm:$0xff]
      %v2232 = vld [vmem:[%s1913 + $0x99] sm:$0xff]
      %v2233 = vld [vmem:[%s1913 + $0xa9] sm:$0xff]
      %v2234 = vld [vmem:[%s1913 + $0xb1] sm:$0xff]
      %v2235 = vld [vmem:[%s1913 + $0xc1] sm:$0xff]
      %v2236 = vld [vmem:[%s1913 + $0xc9] sm:$0xff]
      %v2237 = vld [vmem:[%s1913 + $0xd9] sm:$0xff]
      %v2238 = vld [vmem:[%s1913 + $0xe1] sm:$0xff]
      %v2239 = vld [vmem:[%s1913 + $0xf1] sm:$0xff]
      %v2240 = vld [vmem:[%s1913 + $0xf9] sm:$0xff]
      %v2241 = vld [vmem:[%s1913 + $0x109] sm:$0xff]
      %v2242 = vld [vmem:[%s1913 + $0x111] sm:$0xff]
      %v2243 = vld [vmem:[%s1913 + $0x121] sm:$0xff]
      %v2244 = vld [vmem:[%s1913 + $0x129] sm:$0xff]
      %v2245 = vld [vmem:[%s1913 + $0x139] sm:$0xff]
      %v2246 = vld [vmem:[%s1913 + $0x141] sm:$0xff]
      %v2247 = vld [vmem:[%s1913 + $0x151] sm:$0xff]
      %v2248 = vld [vmem:[%s1913 + $0x159] sm:$0xff]
      %v2249 = vld [vmem:[%s1913 + $0x169] sm:$0xff]
      %v2250 = vld [vmem:[%s1913 + $0x171] sm:$0xff]
      %v2251 = vpack.c.bf16 %v2220, %v2219
      %v2252 = vpack.c.bf16 %v2222, %v2221
      %v2253 = vpack.c.bf16 %v2224, %v2223
      %v2254 = vpack.c.bf16 %v2226, %v2225
      %v2255 = vpack.c.bf16 %v2228, %v2227
      %v2256 = vpack.c.bf16 %v2230, %v2229
      %v2257 = vpack.c.bf16 %v2232, %v2231
      %v2258 = vpack.c.bf16 %v2234, %v2233
      %v2259 = vpack.c.bf16 %v2236, %v2235
      %v2260 = vpack.c.bf16 %v2238, %v2237
      %v2261 = vpack.c.bf16 %v2240, %v2239
      %v2262 = vpack.c.bf16 %v2242, %v2241
      %v2263 = vpack.c.bf16 %v2244, %v2243
      %v2264 = vpack.c.bf16 %v2246, %v2245
      %v2265 = vpack.c.bf16 %v2248, %v2247
      %v2266 = vpack.c.bf16 %v2250, %v2249
      %v2267 = vld [vmem:[%s1 + $0x70] sm:$0xf]
      %v2268 = vld [vmem:[%s1 + $0x74] sm:$0xf]
      %v2269 = vld [vmem:[%s1 + $0x78] sm:$0xf]
      %v2270 = vld [vmem:[%s1 + $0x7c] sm:$0xf]
      %v2275 = vunpack.c.l.b16 %v2267
      %v2276 = vunpack.c.l.b16 %v2268
      %v2277 = vunpack.c.l.b16 %v2269
      %v2278 = vunpack.c.l.b16 %v2270
      %v2279 = vpack.c.b16 %v2276, %v2275
      %v2280 = vpack.c.b16 %v2278, %v2277
      %v2284 = vsel %vm261, %v2251, 0
      %v2287 = vsel %vm261, %v2252, 0
      %v2290 = vsel %vm261, %v2253, 0
      %v2293 = vsel %vm261, %v2254, 0
      %v2296 = vsel %vm261, %v2255, 0
      %v2299 = vsel %vm261, %v2256, 0
      %v2302 = vsel %vm261, %v2257, 0
      %v2305 = vsel %vm261, %v2258, 0
      %v2308 = vsel %vm261, %v2259, 0
      %v2311 = vsel %vm261, %v2260, 0
      %v2314 = vsel %vm261, %v2261, 0
      %v2317 = vsel %vm261, %v2262, 0
      %v2320 = vsel %vm261, %v2263, 0
      %v2323 = vsel %vm261, %v2264, 0
      %v2326 = vsel %vm261, %v2265, 0
      %v2329 = vsel %vm261, %v2266, 0
      %2331 = vmatprep.subr.bf16.mxu0 0
      %2332 = vmatpush1.bf16.msra.mxu0 0
      %2333 = vmatprep.subr.bf16.mxu0 0
      %2334 = vmatpush1.bf16.msra.mxu0 0
      %2335 = vmatprep.subr.bf16.mxu0 0
      %2336 = vmatpush1.bf16.msra.mxu0 0
      %2337 = vmatprep.subr.bf16.mxu0 0
      %2338 = vmatpush1.bf16.msra.mxu0 0
      %2339 = vmatprep.subr.bf16.mxu0 0
      %2340 = vmatpush1.bf16.msra.mxu0 0
      %2341 = vmatprep.subr.bf16.mxu0 0
      %2342 = vmatpush1.bf16.msra.mxu0 0
      %2343 = vmatprep.subr.bf16.mxu0 0
      %2344 = vmatpush1.bf16.msra.mxu0 %v2280
      %2345 = vmatprep.subr.bf16.mxu0 0
      %2346 = vmatpush1.bf16.msra.mxu0 %v2279
      %2347 = vmatprep.subr.bf16.mxu0 0
      %2348 = vmatpush2.bf16.msra.mxu0 0
      %2349 = vmatprep.subr.bf16.mxu0 0
      %2350 = vmatpush2.bf16.msra.mxu0 0
      %2351 = vmatprep.subr.bf16.mxu0 0
      %2352 = vmatpush2.bf16.msra.mxu0 0
      %2353 = vmatprep.subr.bf16.mxu0 0
      %2354 = vmatpush2.bf16.msra.mxu0 0
      %2355 = vmatprep.subr.bf16.mxu0 0
      %2356 = vmatpush2.bf16.msra.mxu0 0
      %2357 = vmatprep.subr.bf16.mxu0 0
      %2358 = vmatpush2.bf16.msra.mxu0 0
      %2359 = vmatprep.subr.bf16.mxu0 0
      %2360 = vmatpush2.bf16.msra.mxu0 0
      %2361 = vmatprep.subr.bf16.mxu0 0
      %2362 = vmatpush2.bf16.msra.mxu0 0
      %2363 = vmatprep.mubr.bf16.mxu0 0
      %2364 = vmatmul.mubr.bf16.gmra.mxu0 %v2284
      %v2365 = vpop.f32.mrf.mxu0
      %v2366 = vadd.f32 0.0, %v2365
      %v2367 = vpop.f32.mrf.mxu0
      %v2368 = vpop.f32.mrf.mxu0
      %v2369 = vadd.f32 0.0, %v2368
      %v2370 = vpop.f32.mrf.mxu0
      %2371 = vmatprep.mubr.bf16.mxu0 0
      %2372 = vmatmul.mubr.bf16.gmra.mxu0 %v2287
      %v2373 = vpop.f32.mrf.mxu0
      %v2374 = vadd.f32 0.0, %v2373
      %v2375 = vpop.f32.mrf.mxu0
      %v2376 = vpop.f32.mrf.mxu0
      %v2377 = vadd.f32 0.0, %v2376
      %v2378 = vpop.f32.mrf.mxu0
      %2379 = vmatprep.mubr.bf16.mxu0 0
      %2380 = vmatmul.mubr.bf16.gmra.mxu0 %v2290
      %v2381 = vpop.f32.mrf.mxu0
      %v2382 = vadd.f32 0.0, %v2381
      %v2383 = vpop.f32.mrf.mxu0
      %v2384 = vpop.f32.mrf.mxu0
      %v2385 = vadd.f32 0.0, %v2384
      %v2386 = vpop.f32.mrf.mxu0
      %2387 = vmatprep.mubr.bf16.mxu0 0
      %2388 = vmatmul.mubr.bf16.gmra.mxu0 %v2293
      %v2389 = vpop.f32.mrf.mxu0
      %v2390 = vadd.f32 0.0, %v2389
      %v2391 = vpop.f32.mrf.mxu0
      %v2392 = vpop.f32.mrf.mxu0
      %v2393 = vadd.f32 0.0, %v2392
      %v2394 = vpop.f32.mrf.mxu0
      %2395 = vmatprep.mubr.bf16.mxu0 0
      %2396 = vmatmul.mubr.bf16.gmra.mxu0 %v2296
      %v2397 = vpop.f32.mrf.mxu0
      %v2398 = vadd.f32 0.0, %v2397
      %v2399 = vpop.f32.mrf.mxu0
      %v2400 = vpop.f32.mrf.mxu0
      %v2401 = vadd.f32 0.0, %v2400
      %v2402 = vpop.f32.mrf.mxu0
      %2403 = vmatprep.mubr.bf16.mxu0 0
      %2404 = vmatmul.mubr.bf16.gmra.mxu0 %v2299
      %v2405 = vpop.f32.mrf.mxu0
      %v2406 = vadd.f32 0.0, %v2405
      %v2407 = vpop.f32.mrf.mxu0
      %v2408 = vpop.f32.mrf.mxu0
      %v2409 = vadd.f32 0.0, %v2408
      %v2410 = vpop.f32.mrf.mxu0
      %2411 = vmatprep.mubr.bf16.mxu0 0
      %2412 = vmatmul.mubr.bf16.gmra.mxu0 %v2302
      %v2413 = vpop.f32.mrf.mxu0
      %v2414 = vadd.f32 0.0, %v2413
      %v2415 = vpop.f32.mrf.mxu0
      %v2416 = vpop.f32.mrf.mxu0
      %v2417 = vadd.f32 0.0, %v2416
      %v2418 = vpop.f32.mrf.mxu0
      %2419 = vmatprep.mubr.bf16.mxu0 0
      %2420 = vmatmul.mubr.bf16.gmra.mxu0 %v2305
      %v2421 = vpop.f32.mrf.mxu0
      %v2422 = vadd.f32 0.0, %v2421
      %v2423 = vpop.f32.mrf.mxu0
      %v2424 = vpop.f32.mrf.mxu0
      %v2425 = vadd.f32 0.0, %v2424
      %v2426 = vpop.f32.mrf.mxu0
      %2427 = vmatprep.mubr.bf16.mxu0 0
      %2428 = vmatmul.mubr.bf16.gmra.mxu0 %v2308
      %v2429 = vpop.f32.mrf.mxu0
      %v2430 = vadd.f32 0.0, %v2429
      %v2431 = vpop.f32.mrf.mxu0
      %v2432 = vpop.f32.mrf.mxu0
      %v2433 = vadd.f32 0.0, %v2432
      %v2434 = vpop.f32.mrf.mxu0
      %2435 = vmatprep.mubr.bf16.mxu0 0
      %2436 = vmatmul.mubr.bf16.gmra.mxu0 %v2311
      %v2437 = vpop.f32.mrf.mxu0
      %v2438 = vadd.f32 0.0, %v2437
      %v2439 = vpop.f32.mrf.mxu0
      %v2440 = vpop.f32.mrf.mxu0
      %v2441 = vadd.f32 0.0, %v2440
      %v2442 = vpop.f32.mrf.mxu0
      %2443 = vmatprep.mubr.bf16.mxu0 0
      %2444 = vmatmul.mubr.bf16.gmra.mxu0 %v2314
      %v2445 = vpop.f32.mrf.mxu0
      %v2446 = vadd.f32 0.0, %v2445
      %v2447 = vpop.f32.mrf.mxu0
      %v2448 = vpop.f32.mrf.mxu0
      %v2449 = vadd.f32 0.0, %v2448
      %v2450 = vpop.f32.mrf.mxu0
      %2451 = vmatprep.mubr.bf16.mxu0 0
      %2452 = vmatmul.mubr.bf16.gmra.mxu0 %v2317
      %v2453 = vpop.f32.mrf.mxu0
      %v2454 = vadd.f32 0.0, %v2453
      %v2455 = vpop.f32.mrf.mxu0
      %v2456 = vpop.f32.mrf.mxu0
      %v2457 = vadd.f32 0.0, %v2456
      %v2458 = vpop.f32.mrf.mxu0
      %2459 = vmatprep.mubr.bf16.mxu0 0
      %2460 = vmatmul.mubr.bf16.gmra.mxu0 %v2320
      %v2461 = vpop.f32.mrf.mxu0
      %v2462 = vadd.f32 0.0, %v2461
      %v2463 = vpop.f32.mrf.mxu0
      %v2464 = vpop.f32.mrf.mxu0
      %v2465 = vadd.f32 0.0, %v2464
      %v2466 = vpop.f32.mrf.mxu0
      %2467 = vmatprep.mubr.bf16.mxu0 0
      %2468 = vmatmul.mubr.bf16.gmra.mxu0 %v2323
      %v2469 = vpop.f32.mrf.mxu0
      %v2470 = vadd.f32 0.0, %v2469
      %v2471 = vpop.f32.mrf.mxu0
      %v2472 = vpop.f32.mrf.mxu0
      %v2473 = vadd.f32 0.0, %v2472
      %v2474 = vpop.f32.mrf.mxu0
      %2475 = vmatprep.mubr.bf16.mxu0 0
      %2476 = vmatmul.mubr.bf16.gmra.mxu0 %v2326
      %v2477 = vpop.f32.mrf.mxu0
      %v2478 = vadd.f32 0.0, %v2477
      %v2479 = vpop.f32.mrf.mxu0
      %v2480 = vpop.f32.mrf.mxu0
      %v2481 = vadd.f32 0.0, %v2480
      %v2482 = vpop.f32.mrf.mxu0
      %2483 = vmatprep.mubr.bf16.mxu0 0
      %2484 = vmatmul.mubr.bf16.gmra.mxu0 %v2329
      %v2485 = vpop.f32.mrf.mxu0
      %v2486 = vadd.f32 0.0, %v2485
      %v2487 = vpop.f32.mrf.mxu0
      %v2488 = vpop.f32.mrf.mxu0
      %v2489 = vadd.f32 0.0, %v2488
      %v2490 = vpop.f32.mrf.mxu0
      %2491 = vdwg.mxu0
      %v2492 = vadd.f32 %v2187, %v2366
      %v2493 = vadd.f32 %v2188, %v2369
      %v2494 = vadd.f32 %v2189, %v2374
      %v2495 = vadd.f32 %v2190, %v2377
      %v2496 = vadd.f32 %v2191, %v2382
      %v2497 = vadd.f32 %v2192, %v2385
      %v2498 = vadd.f32 %v2193, %v2390
      %v2499 = vadd.f32 %v2194, %v2393
      %v2500 = vadd.f32 %v2195, %v2398
      %v2501 = vadd.f32 %v2196, %v2401
      %v2502 = vadd.f32 %v2197, %v2406
      %v2503 = vadd.f32 %v2198, %v2409
      %v2504 = vadd.f32 %v2199, %v2414
      %v2505 = vadd.f32 %v2200, %v2417
      %v2506 = vadd.f32 %v2201, %v2422
      %v2507 = vadd.f32 %v2202, %v2425
      %v2508 = vadd.f32 %v2203, %v2430
      %v2509 = vadd.f32 %v2204, %v2433
      %v2510 = vadd.f32 %v2205, %v2438
      %v2511 = vadd.f32 %v2206, %v2441
      %v2512 = vadd.f32 %v2207, %v2446
      %v2513 = vadd.f32 %v2208, %v2449
      %v2514 = vadd.f32 %v2209, %v2454
      %v2515 = vadd.f32 %v2210, %v2457
      %v2516 = vadd.f32 %v2211, %v2462
      %v2517 = vadd.f32 %v2212, %v2465
      %v2518 = vadd.f32 %v2213, %v2470
      %v2519 = vadd.f32 %v2214, %v2473
      %v2520 = vadd.f32 %v2215, %v2478
      %v2521 = vadd.f32 %v2216, %v2481
      %v2522 = vadd.f32 %v2217, %v2486
      %v2523 = vadd.f32 %v2218, %v2489
      %v2524 = vld [vmem:[%s1913 + $0x2] sm:$0xff]
      %v2525 = vld [vmem:[%s1913 + $0xa] sm:$0xff]
      %v2526 = vld [vmem:[%s1913 + $0x1a] sm:$0xff]
      %v2527 = vld [vmem:[%s1913 + $0x22] sm:$0xff]
      %v2528 = vld [vmem:[%s1913 + $0x32] sm:$0xff]
      %v2529 = vld [vmem:[%s1913 + $0x3a] sm:$0xff]
      %v2530 = vld [vmem:[%s1913 + $0x4a] sm:$0xff]
      %v2531 = vld [vmem:[%s1913 + $0x52] sm:$0xff]
      %v2532 = vld [vmem:[%s1913 + $0x62] sm:$0xff]
      %v2533 = vld [vmem:[%s1913 + $0x6a] sm:$0xff]
      %v2534 = vld [vmem:[%s1913 + $0x7a] sm:$0xff]
      %v2535 = vld [vmem:[%s1913 + $0x82] sm:$0xff]
      %v2536 = vld [vmem:[%s1913 + $0x92] sm:$0xff]
      %v2537 = vld [vmem:[%s1913 + $0x9a] sm:$0xff]
      %v2538 = vld [vmem:[%s1913 + $0xaa] sm:$0xff]
      %v2539 = vld [vmem:[%s1913 + $0xb2] sm:$0xff]
      %v2540 = vld [vmem:[%s1913 + $0xc2] sm:$0xff]
      %v2541 = vld [vmem:[%s1913 + $0xca] sm:$0xff]
      %v2542 = vld [vmem:[%s1913 + $0xda] sm:$0xff]
      %v2543 = vld [vmem:[%s1913 + $0xe2] sm:$0xff]
      %v2544 = vld [vmem:[%s1913 + $0xf2] sm:$0xff]
      %v2545 = vld [vmem:[%s1913 + $0xfa] sm:$0xff]
      %v2546 = vld [vmem:[%s1913 + $0x10a] sm:$0xff]
      %v2547 = vld [vmem:[%s1913 + $0x112] sm:$0xff]
      %v2548 = vld [vmem:[%s1913 + $0x122] sm:$0xff]
      %v2549 = vld [vmem:[%s1913 + $0x12a] sm:$0xff]
      %v2550 = vld [vmem:[%s1913 + $0x13a] sm:$0xff]
      %v2551 = vld [vmem:[%s1913 + $0x142] sm:$0xff]
      %v2552 = vld [vmem:[%s1913 + $0x152] sm:$0xff]
      %v2553 = vld [vmem:[%s1913 + $0x15a] sm:$0xff]
      %v2554 = vld [vmem:[%s1913 + $0x16a] sm:$0xff]
      %v2555 = vld [vmem:[%s1913 + $0x172] sm:$0xff]
      %v2556 = vpack.c.bf16 %v2525, %v2524
      %v2557 = vpack.c.bf16 %v2527, %v2526
      %v2558 = vpack.c.bf16 %v2529, %v2528
      %v2559 = vpack.c.bf16 %v2531, %v2530
      %v2560 = vpack.c.bf16 %v2533, %v2532
      %v2561 = vpack.c.bf16 %v2535, %v2534
      %v2562 = vpack.c.bf16 %v2537, %v2536
      %v2563 = vpack.c.bf16 %v2539, %v2538
      %v2564 = vpack.c.bf16 %v2541, %v2540
      %v2565 = vpack.c.bf16 %v2543, %v2542
      %v2566 = vpack.c.bf16 %v2545, %v2544
      %v2567 = vpack.c.bf16 %v2547, %v2546
      %v2568 = vpack.c.bf16 %v2549, %v2548
      %v2569 = vpack.c.bf16 %v2551, %v2550
      %v2570 = vpack.c.bf16 %v2553, %v2552
      %v2571 = vpack.c.bf16 %v2555, %v2554
      %v2572 = vld [vmem:[%s1 + $0x80] sm:$0xf]
      %v2573 = vld [vmem:[%s1 + $0x84] sm:$0xf]
      %v2574 = vld [vmem:[%s1 + $0x88] sm:$0xf]
      %v2575 = vld [vmem:[%s1 + $0x8c] sm:$0xf]
      %v2580 = vunpack.c.l.b16 %v2572
      %v2581 = vunpack.c.l.b16 %v2573
      %v2582 = vunpack.c.l.b16 %v2574
      %v2583 = vunpack.c.l.b16 %v2575
      %v2584 = vpack.c.b16 %v2581, %v2580
      %v2585 = vpack.c.b16 %v2583, %v2582
      %v2589 = vsel %vm261, %v2556, 0
      %v2592 = vsel %vm261, %v2557, 0
      %v2595 = vsel %vm261, %v2558, 0
      %v2598 = vsel %vm261, %v2559, 0
      %v2601 = vsel %vm261, %v2560, 0
      %v2604 = vsel %vm261, %v2561, 0
      %v2607 = vsel %vm261, %v2562, 0
      %v2610 = vsel %vm261, %v2563, 0
      %v2613 = vsel %vm261, %v2564, 0
      %v2616 = vsel %vm261, %v2565, 0
      %v2619 = vsel %vm261, %v2566, 0
      %v2622 = vsel %vm261, %v2567, 0
      %v2625 = vsel %vm261, %v2568, 0
      %v2628 = vsel %vm261, %v2569, 0
      %v2631 = vsel %vm261, %v2570, 0
      %v2634 = vsel %vm261, %v2571, 0
      %2636 = vmatprep.subr.bf16.mxu0 0
      %2637 = vmatpush1.bf16.msra.mxu0 0
      %2638 = vmatprep.subr.bf16.mxu0 0
      %2639 = vmatpush1.bf16.msra.mxu0 0
      %2640 = vmatprep.subr.bf16.mxu0 0
      %2641 = vmatpush1.bf16.msra.mxu0 0
      %2642 = vmatprep.subr.bf16.mxu0 0
      %2643 = vmatpush1.bf16.msra.mxu0 0
      %2644 = vmatprep.subr.bf16.mxu0 0
      %2645 = vmatpush1.bf16.msra.mxu0 0
      %2646 = vmatprep.subr.bf16.mxu0 0
      %2647 = vmatpush1.bf16.msra.mxu0 0
      %2648 = vmatprep.subr.bf16.mxu0 0
      %2649 = vmatpush1.bf16.msra.mxu0 %v2585
      %2650 = vmatprep.subr.bf16.mxu0 0
      %2651 = vmatpush1.bf16.msra.mxu0 %v2584
      %2652 = vmatprep.subr.bf16.mxu0 0
      %2653 = vmatpush2.bf16.msra.mxu0 0
      %2654 = vmatprep.subr.bf16.mxu0 0
      %2655 = vmatpush2.bf16.msra.mxu0 0
      %2656 = vmatprep.subr.bf16.mxu0 0
      %2657 = vmatpush2.bf16.msra.mxu0 0
      %2658 = vmatprep.subr.bf16.mxu0 0
      %2659 = vmatpush2.bf16.msra.mxu0 0
      %2660 = vmatprep.subr.bf16.mxu0 0
      %2661 = vmatpush2.bf16.msra.mxu0 0
      %2662 = vmatprep.subr.bf16.mxu0 0
      %2663 = vmatpush2.bf16.msra.mxu0 0
      %2664 = vmatprep.subr.bf16.mxu0 0
      %2665 = vmatpush2.bf16.msra.mxu0 0
      %2666 = vmatprep.subr.bf16.mxu0 0
      %2667 = vmatpush2.bf16.msra.mxu0 0
      %2668 = vmatprep.mubr.bf16.mxu0 0
      %2669 = vmatmul.mubr.bf16.gmra.mxu0 %v2589
      %v2670 = vpop.f32.mrf.mxu0
      %v2671 = vadd.f32 0.0, %v2670
      %v2672 = vpop.f32.mrf.mxu0
      %v2673 = vpop.f32.mrf.mxu0
      %v2674 = vadd.f32 0.0, %v2673
      %v2675 = vpop.f32.mrf.mxu0
      %2676 = vmatprep.mubr.bf16.mxu0 0
      %2677 = vmatmul.mubr.bf16.gmra.mxu0 %v2592
      %v2678 = vpop.f32.mrf.mxu0
      %v2679 = vadd.f32 0.0, %v2678
      %v2680 = vpop.f32.mrf.mxu0
      %v2681 = vpop.f32.mrf.mxu0
      %v2682 = vadd.f32 0.0, %v2681
      %v2683 = vpop.f32.mrf.mxu0
      %2684 = vmatprep.mubr.bf16.mxu0 0
      %2685 = vmatmul.mubr.bf16.gmra.mxu0 %v2595
      %v2686 = vpop.f32.mrf.mxu0
      %v2687 = vadd.f32 0.0, %v2686
      %v2688 = vpop.f32.mrf.mxu0
      %v2689 = vpop.f32.mrf.mxu0
      %v2690 = vadd.f32 0.0, %v2689
      %v2691 = vpop.f32.mrf.mxu0
      %2692 = vmatprep.mubr.bf16.mxu0 0
      %2693 = vmatmul.mubr.bf16.gmra.mxu0 %v2598
      %v2694 = vpop.f32.mrf.mxu0
      %v2695 = vadd.f32 0.0, %v2694
      %v2696 = vpop.f32.mrf.mxu0
      %v2697 = vpop.f32.mrf.mxu0
      %v2698 = vadd.f32 0.0, %v2697
      %v2699 = vpop.f32.mrf.mxu0
      %2700 = vmatprep.mubr.bf16.mxu0 0
      %2701 = vmatmul.mubr.bf16.gmra.mxu0 %v2601
      %v2702 = vpop.f32.mrf.mxu0
      %v2703 = vadd.f32 0.0, %v2702
      %v2704 = vpop.f32.mrf.mxu0
      %v2705 = vpop.f32.mrf.mxu0
      %v2706 = vadd.f32 0.0, %v2705
      %v2707 = vpop.f32.mrf.mxu0
      %2708 = vmatprep.mubr.bf16.mxu0 0
      %2709 = vmatmul.mubr.bf16.gmra.mxu0 %v2604
      %v2710 = vpop.f32.mrf.mxu0
      %v2711 = vadd.f32 0.0, %v2710
      %v2712 = vpop.f32.mrf.mxu0
      %v2713 = vpop.f32.mrf.mxu0
      %v2714 = vadd.f32 0.0, %v2713
      %v2715 = vpop.f32.mrf.mxu0
      %2716 = vmatprep.mubr.bf16.mxu0 0
      %2717 = vmatmul.mubr.bf16.gmra.mxu0 %v2607
      %v2718 = vpop.f32.mrf.mxu0
      %v2719 = vadd.f32 0.0, %v2718
      %v2720 = vpop.f32.mrf.mxu0
      %v2721 = vpop.f32.mrf.mxu0
      %v2722 = vadd.f32 0.0, %v2721
      %v2723 = vpop.f32.mrf.mxu0
      %2724 = vmatprep.mubr.bf16.mxu0 0
      %2725 = vmatmul.mubr.bf16.gmra.mxu0 %v2610
      %v2726 = vpop.f32.mrf.mxu0
      %v2727 = vadd.f32 0.0, %v2726
      %v2728 = vpop.f32.mrf.mxu0
      %v2729 = vpop.f32.mrf.mxu0
      %v2730 = vadd.f32 0.0, %v2729
      %v2731 = vpop.f32.mrf.mxu0
      %2732 = vmatprep.mubr.bf16.mxu0 0
      %2733 = vmatmul.mubr.bf16.gmra.mxu0 %v2613
      %v2734 = vpop.f32.mrf.mxu0
      %v2735 = vadd.f32 0.0, %v2734
      %v2736 = vpop.f32.mrf.mxu0
      %v2737 = vpop.f32.mrf.mxu0
      %v2738 = vadd.f32 0.0, %v2737
      %v2739 = vpop.f32.mrf.mxu0
      %2740 = vmatprep.mubr.bf16.mxu0 0
      %2741 = vmatmul.mubr.bf16.gmra.mxu0 %v2616
      %v2742 = vpop.f32.mrf.mxu0
      %v2743 = vadd.f32 0.0, %v2742
      %v2744 = vpop.f32.mrf.mxu0
      %v2745 = vpop.f32.mrf.mxu0
      %v2746 = vadd.f32 0.0, %v2745
      %v2747 = vpop.f32.mrf.mxu0
      %2748 = vmatprep.mubr.bf16.mxu0 0
      %2749 = vmatmul.mubr.bf16.gmra.mxu0 %v2619
      %v2750 = vpop.f32.mrf.mxu0
      %v2751 = vadd.f32 0.0, %v2750
      %v2752 = vpop.f32.mrf.mxu0
      %v2753 = vpop.f32.mrf.mxu0
      %v2754 = vadd.f32 0.0, %v2753
      %v2755 = vpop.f32.mrf.mxu0
      %2756 = vmatprep.mubr.bf16.mxu0 0
      %2757 = vmatmul.mubr.bf16.gmra.mxu0 %v2622
      %v2758 = vpop.f32.mrf.mxu0
      %v2759 = vadd.f32 0.0, %v2758
      %v2760 = vpop.f32.mrf.mxu0
      %v2761 = vpop.f32.mrf.mxu0
      %v2762 = vadd.f32 0.0, %v2761
      %v2763 = vpop.f32.mrf.mxu0
      %2764 = vmatprep.mubr.bf16.mxu0 0
      %2765 = vmatmul.mubr.bf16.gmra.mxu0 %v2625
      %v2766 = vpop.f32.mrf.mxu0
      %v2767 = vadd.f32 0.0, %v2766
      %v2768 = vpop.f32.mrf.mxu0
      %v2769 = vpop.f32.mrf.mxu0
      %v2770 = vadd.f32 0.0, %v2769
      %v2771 = vpop.f32.mrf.mxu0
      %2772 = vmatprep.mubr.bf16.mxu0 0
      %2773 = vmatmul.mubr.bf16.gmra.mxu0 %v2628
      %v2774 = vpop.f32.mrf.mxu0
      %v2775 = vadd.f32 0.0, %v2774
      %v2776 = vpop.f32.mrf.mxu0
      %v2777 = vpop.f32.mrf.mxu0
      %v2778 = vadd.f32 0.0, %v2777
      %v2779 = vpop.f32.mrf.mxu0
      %2780 = vmatprep.mubr.bf16.mxu0 0
      %2781 = vmatmul.mubr.bf16.gmra.mxu0 %v2631
      %v2782 = vpop.f32.mrf.mxu0
      %v2783 = vadd.f32 0.0, %v2782
      %v2784 = vpop.f32.mrf.mxu0
      %v2785 = vpop.f32.mrf.mxu0
      %v2786 = vadd.f32 0.0, %v2785
      %v2787 = vpop.f32.mrf.mxu0
      %2788 = vmatprep.mubr.bf16.mxu0 0
      %2789 = vmatmul.mubr.bf16.gmra.mxu0 %v2634
      %v2790 = vpop.f32.mrf.mxu0
      %v2791 = vadd.f32 0.0, %v2790
      %v2792 = vpop.f32.mrf.mxu0
      %v2793 = vpop.f32.mrf.mxu0
      %v2794 = vadd.f32 0.0, %v2793
      %v2795 = vpop.f32.mrf.mxu0
      %2796 = vdwg.mxu0
      %v2797 = vadd.f32 %v2492, %v2671
      %v2798 = vadd.f32 %v2493, %v2674
      %v2799 = vadd.f32 %v2494, %v2679
      %v2800 = vadd.f32 %v2495, %v2682
      %v2801 = vadd.f32 %v2496, %v2687
      %v2802 = vadd.f32 %v2497, %v2690
      %v2803 = vadd.f32 %v2498, %v2695
      %v2804 = vadd.f32 %v2499, %v2698
      %v2805 = vadd.f32 %v2500, %v2703
      %v2806 = vadd.f32 %v2501, %v2706
      %v2807 = vadd.f32 %v2502, %v2711
      %v2808 = vadd.f32 %v2503, %v2714
      %v2809 = vadd.f32 %v2504, %v2719
      %v2810 = vadd.f32 %v2505, %v2722
      %v2811 = vadd.f32 %v2506, %v2727
      %v2812 = vadd.f32 %v2507, %v2730
      %v2813 = vadd.f32 %v2508, %v2735
      %v2814 = vadd.f32 %v2509, %v2738
      %v2815 = vadd.f32 %v2510, %v2743
      %v2816 = vadd.f32 %v2511, %v2746
      %v2817 = vadd.f32 %v2512, %v2751
      %v2818 = vadd.f32 %v2513, %v2754
      %v2819 = vadd.f32 %v2514, %v2759
      %v2820 = vadd.f32 %v2515, %v2762
      %v2821 = vadd.f32 %v2516, %v2767
      %v2822 = vadd.f32 %v2517, %v2770
      %v2823 = vadd.f32 %v2518, %v2775
      %v2824 = vadd.f32 %v2519, %v2778
      %v2825 = vadd.f32 %v2520, %v2783
      %v2826 = vadd.f32 %v2521, %v2786
      %v2827 = vadd.f32 %v2522, %v2791
      %v2828 = vadd.f32 %v2523, %v2794
      %vm2829 = vcmask 523264
      %2830 = vst.msk [vmem:[%s143] sm:$0xff] %vm2829, %v2797
      %2831 = vst.msk [vmem:[%s143 + $0x8] sm:$0xff] %vm2829, %v2798
      %2832 = vst.msk [vmem:[%s143 + $0x10] sm:$0xff] %vm2829, %v2799
      %2833 = vst.msk [vmem:[%s143 + $0x18] sm:$0xff] %vm2829, %v2800
      %2834 = vst.msk [vmem:[%s143 + $0x20] sm:$0xff] %vm2829, %v2801
      %2835 = vst.msk [vmem:[%s143 + $0x28] sm:$0xff] %vm2829, %v2802
      %2836 = vst.msk [vmem:[%s143 + $0x30] sm:$0xff] %vm2829, %v2803
      %2837 = vst.msk [vmem:[%s143 + $0x38] sm:$0xff] %vm2829, %v2804
      %2838 = vst.msk [vmem:[%s143 + $0x40] sm:$0xff] %vm2829, %v2805
      %2839 = vst.msk [vmem:[%s143 + $0x48] sm:$0xff] %vm2829, %v2806
      %2840 = vst.msk [vmem:[%s143 + $0x50] sm:$0xff] %vm2829, %v2807
      %2841 = vst.msk [vmem:[%s143 + $0x58] sm:$0xff] %vm2829, %v2808
      %2842 = vst.msk [vmem:[%s143 + $0x60] sm:$0xff] %vm2829, %v2809
      %2843 = vst.msk [vmem:[%s143 + $0x68] sm:$0xff] %vm2829, %v2810
      %2844 = vst.msk [vmem:[%s143 + $0x70] sm:$0xff] %vm2829, %v2811
      %2845 = vst.msk [vmem:[%s143 + $0x78] sm:$0xff] %vm2829, %v2812
      %2846 = vst.msk [vmem:[%s143 + $0x80] sm:$0xff] %vm2829, %v2813
      %2847 = vst.msk [vmem:[%s143 + $0x88] sm:$0xff] %vm2829, %v2814
      %2848 = vst.msk [vmem:[%s143 + $0x90] sm:$0xff] %vm2829, %v2815
      %2849 = vst.msk [vmem:[%s143 + $0x98] sm:$0xff] %vm2829, %v2816
      %2850 = vst.msk [vmem:[%s143 + $0xa0] sm:$0xff] %vm2829, %v2817
      %2851 = vst.msk [vmem:[%s143 + $0xa8] sm:$0xff] %vm2829, %v2818
      %2852 = vst.msk [vmem:[%s143 + $0xb0] sm:$0xff] %vm2829, %v2819
      %2853 = vst.msk [vmem:[%s143 + $0xb8] sm:$0xff] %vm2829, %v2820
      %2854 = vst.msk [vmem:[%s143 + $0xc0] sm:$0xff] %vm2829, %v2821
      %2855 = vst.msk [vmem:[%s143 + $0xc8] sm:$0xff] %vm2829, %v2822
      %2856 = vst.msk [vmem:[%s143 + $0xd0] sm:$0xff] %vm2829, %v2823
      %2857 = vst.msk [vmem:[%s143 + $0xd8] sm:$0xff] %vm2829, %v2824
      %2858 = vst.msk [vmem:[%s143 + $0xe0] sm:$0xff] %vm2829, %v2825
      %2859 = vst.msk [vmem:[%s143 + $0xe8] sm:$0xff] %vm2829, %v2826
      %2860 = vst.msk [vmem:[%s143 + $0xf0] sm:$0xff] %vm2829, %v2827
      %2861 = vst.msk [vmem:[%s143 + $0xf8] sm:$0xff] %vm2829, %v2828
      %p2862 = scmp.lt.s32.totalorder %s13, 1
      %s2863 = scalar_select %p2862, %s13, 1
      %s2864 = smul.addr %s2863, 32
      %s2865 = smul.addr %s2864, 8
      %s2866 = scalar_lea.vmem %s2, %s2865
      // Predicated region
      $region29: #{bottleneck_ir_sam_forward.7} parent=27 // pred_check
        %p2867 = pneg %p78
      $region30: #{bottleneck_ir_sam_forward.7} parent=27 // pred_check_branch
        %2869 = sbr.rel (%p2867) target = $region32
      $region31: #{bottleneck_ir_sam_forward.7} parent=27 // pred_region
        _
      $region32: #{bottleneck_ir_sam_forward.7} parent=27 // pred_fallthru
        _
    $region28: #{bottleneck_ir_sam_forward.7} parent=5 // pred_fallthru
      _
    %p2870 = scmp.le.s32.totalorder 2, %s8
    // Predicated region
    $region33: #{bottleneck_ir_sam_forward.7} parent=5 // pred_check
      %p2871 = pneg %p2870
    $region34: #{bottleneck_ir_sam_forward.7} parent=5 // pred_check_branch
      %2873 = sbr.rel (%p2871) target = $region36
    $region35: #{bottleneck_ir_sam_forward.7} parent=5 // pred_region
      %s2874 = ssub.s32 %s8, 2
      // Predicated region
      $region37: #{bottleneck_ir_sam_forward.7} parent=35 // pred_check
        %p2875 = pneg %p84
      $region38: #{bottleneck_ir_sam_forward.7} parent=35 // pred_check_branch
        %2877 = sbr.rel (%p2875) target = $region40
      $region39: #{bottleneck_ir_sam_forward.7} parent=35 // pred_region
        %p2878 = scmp.lt.s32.totalorder %s14, 1
        %s2879 = scalar_select %p2878, %s14, 1
        %s2880 = smul.addr %s2879, 32
        %s2881 = smul.addr %s2880, 8
        %s2882 = scalar_lea.vmem %s2, %s2881
      $region40: #{bottleneck_ir_sam_forward.7} parent=35 // pred_fallthru
        _
    $region36: #{bottleneck_ir_sam_forward.7} parent=5 // pred_fallthru
      _
  $region6: #{bottleneck_ir_sam_forward.7} parent=0 // loop_footer
    %s12 = sadd.s32 1, %s8
  $region7: #{bottleneck_ir_sam_forward.7} parent=0 // loop_footer_branch
    %7 = sbr.rel target = $region3
  $region8: #{bottleneck_ir_sam_forward.7} parent=0 // loop_exit
    _

// kernel: bottleneck_ir_sam_forward.10
$region0: #{bottleneck_ir_sam_forward.10}
  #allocation0 [shape = 'u32[]', space=smem, size = 0x4, offset = 0x4, fixed_abs, tag = 'smem constant byte address 0x4 - core index']
  #allocation1 [shape = 'u32[144,128]{1,0:T(1,128)}', space=vmem, size = 0x12000, scoped, tag = 'internal scratch']
  %s0 = inlined_call_operand.vmem [shape: f32[2,8,8,32], index: 0, kind: input, shape index: {}]
  %s1 = inlined_call_operand.vmem [shape: bf16[32,64], index: 1, kind: input, shape index: {}]
  %s2 = inlined_call_operand.vmem [shape: f32[2,8,8,64], index: 2, kind: output, shape index: {}]
  %s3 = sld [smem:[#allocation0]]
  $region41: #{bottleneck_ir_sam_forward.10} parent=0
    _
  %s5 = ssub.s32 1, %s3
  %s6 = scalar_select 0, %s5, %s3
  loop: start=0, step=1, limit=4
  $region2: #{bottleneck_ir_sam_forward.10} parent=0 // loop_pre_header
    _
  $region3: #{bottleneck_ir_sam_forward.10} parent=0 // loop_header
    %s8 = sphi 0, %s12
    %p9 = scmp.ge.s32.totalorder %s8, 4
    %s18 = sphi 0, %s20
    %s21 = sphi 0, %s18
    %s22 = sphi 0, %s21
    %s38 = sphi 0, %s22
    %s42 = sphi 0, %s42
    %s44 = sphi 0, %s42
    %s45 = sphi 0, %s44
    %s59 = sphi 0, %s45
    %s65 = sphi 0, %s67
    %s68 = sphi 0, %s65
    %s69 = sphi 0, %s68
    %s85 = sphi 0, %s69
  $region4: #{bottleneck_ir_sam_forward.10} parent=0 // loop_header_branch
    %11 = sbr.rel (%p9) target = $region8
  $region5: #{bottleneck_ir_sam_forward.10} parent=0 // loop_body
    %s13 = ssub.s32 %s8, 1
    %s14 = ssub.s32 %s8, 2
    %s15 = sadd.s32 %s8, 1
    %s16 = ssub.s32 %s8, %s15
    %p17 = scmp.eq.s32.totalorder %s16, 0
    %s19 = sadd.s32 %s18, 1
    %s20 = scalar_select %p17, %s18, %s19
    %p23 = pneg %p17
    %p24 = scmp.eq.s32.totalorder %s8, 1
    %p25 = por %p23, %p24
    %p26 = scmp.ne.s32.totalorder %s18, %s21
    %p27 = scmp.eq.s32.totalorder %s8, 0
    %p28 = por %p26, %p27
    %p29 = scmp.ne.s32.totalorder %s18, %s21
    %p30 = scmp.eq.s32.totalorder %s13, 1
    %p31 = por %p29, %p30
    %p32 = scmp.ne.s32.totalorder %s21, %s22
    %p33 = scmp.eq.s32.totalorder %s13, 0
    %p34 = por %p32, %p33
    %p35 = scmp.ne.s32.totalorder %s21, %s22
    %p36 = scmp.eq.s32.totalorder %s14, 1
    %p37 = por %p35, %p36
    %p39 = scmp.ne.s32.totalorder %s22, %s38
    %p40 = scmp.eq.s32.totalorder %s14, 0
    %p41 = por %p39, %p40
    %s43 = sadd.s32 %s42, 1
    %p46 = scmp.eq.s32.totalorder %s8, 1
    %p47 = scmp.ne.s32.totalorder %s42, %s44
    %p48 = scmp.eq.s32.totalorder %s8, 0
    %p49 = por %p47, %p48
    %p50 = scmp.ne.s32.totalorder %s42, %s44
    %p51 = scmp.eq.s32.totalorder %s13, 1
    %p52 = por %p50, %p51
    %p53 = scmp.ne.s32.totalorder %s44, %s45
    %p54 = scmp.eq.s32.totalorder %s13, 0
    %p55 = por %p53, %p54
    %p56 = scmp.ne.s32.totalorder %s44, %s45
    %p57 = scmp.eq.s32.totalorder %s14, 1
    %p58 = por %p56, %p57
    %p60 = scmp.ne.s32.totalorder %s45, %s59
    %p61 = scmp.eq.s32.totalorder %s14, 0
    %p62 = por %p60, %p61
    %s63 = ssub.s32 %s8, %s15
    %p64 = scmp.eq.s32.totalorder %s63, 0
    %s66 = sadd.s32 %s65, 1
    %s67 = scalar_select %p64, %s65, %s66
    %p70 = pneg %p64
    %p71 = scmp.eq.s32.totalorder %s8, 1
    %p72 = por %p70, %p71
    %p73 = scmp.ne.s32.totalorder %s65, %s68
    %p74 = scmp.eq.s32.totalorder %s8, 0
    %p75 = por %p73, %p74
    %p76 = scmp.ne.s32.totalorder %s65, %s68
    %p77 = scmp.eq.s32.totalorder %s13, 1
    %p78 = por %p76, %p77
    %p79 = scmp.ne.s32.totalorder %s68, %s69
    %p80 = scmp.eq.s32.totalorder %s13, 0
    %p81 = por %p79, %p80
    %p82 = scmp.ne.s32.totalorder %s68, %s69
    %p83 = scmp.eq.s32.totalorder %s14, 1
    %p84 = por %p82, %p83
    %p86 = scmp.ne.s32.totalorder %s69, %s85
    %p87 = scmp.eq.s32.totalorder %s14, 0
    %p88 = por %p86, %p87
    %p89 = scmp.le.s32.totalorder 1, %s8
    %p90 = scmp.lt.s32.totalorder %s8, 3
    %p91 = pnand %p89, %p90
    %p92 = pneg %p91
    // Predicated region
    $region9: #{bottleneck_ir_sam_forward.10} parent=5 // pred_check
      _
    $region10: #{bottleneck_ir_sam_forward.10} parent=5 // pred_check_branch
      %94 = sbr.rel (%p91) target = $region12
    $region11: #{bottleneck_ir_sam_forward.10} parent=5 // pred_region
      %s95 = ssub.s32 %s8, 1
      // Predicated region
      $region13: #{bottleneck_ir_sam_forward.10} parent=11 // pred_check
        %p96 = pneg %p55
      $region14: #{bottleneck_ir_sam_forward.10} parent=11 // pred_check_branch
        %98 = sbr.rel (%p96) target = $region16
      $region15: #{bottleneck_ir_sam_forward.10} parent=11 // pred_region
        _
      $region16: #{bottleneck_ir_sam_forward.10} parent=11 // pred_fallthru
        _
    $region12: #{bottleneck_ir_sam_forward.10} parent=5 // pred_fallthru
      _
    %p99 = scmp.lt.s32.totalorder %s8, 2
    // Predicated region
    $region17: #{bottleneck_ir_sam_forward.10} parent=5 // pred_check
      %p100 = pneg %p99
    $region18: #{bottleneck_ir_sam_forward.10} parent=5 // pred_check_branch
      %102 = sbr.rel (%p100) target = $region20
    $region19: #{bottleneck_ir_sam_forward.10} parent=5 // pred_region
      // Predicated region
      $region21: #{bottleneck_ir_sam_forward.10} parent=19 // pred_check
        %p103 = pneg %p28
      $region22: #{bottleneck_ir_sam_forward.10} parent=19 // pred_check_branch
        %105 = sbr.rel (%p103) target = $region24
      $region23: #{bottleneck_ir_sam_forward.10} parent=19 // pred_region
        %p106 = scmp.lt.s32.totalorder %s8, 1
        %s107 = scalar_select %p106, %s8, 1
        %s108 = smul.addr %s107, 8
        %s109 = smul.addr %s108, 8
        %s110 = scalar_lea.vmem %s0, %s109
      $region24: #{bottleneck_ir_sam_forward.10} parent=19 // pred_fallthru
        _
    $region20: #{bottleneck_ir_sam_forward.10} parent=5 // pred_fallthru
      _
    %p111 = scmp.le.s32.totalorder 1, %s8
    %p112 = scmp.lt.s32.totalorder %s8, 3
    %p113 = pnand %p111, %p112
    %p114 = pneg %p113
    // Predicated region
    $region25: #{bottleneck_ir_sam_forward.10} parent=5 // pred_check
      _
    $region26: #{bottleneck_ir_sam_forward.10} parent=5 // pred_check_branch
      %116 = sbr.rel (%p113) target = $region28
    $region27: #{bottleneck_ir_sam_forward.10} parent=5 // pred_region
      %s117 = ssub.s32 %s8, 1
      %p118 = scmp.lt.s32.totalorder %s13, 1
      %s119 = scalar_select %p118, %s13, 1
      %s120 = smul.addr %s119, 8
      %s121 = smul.addr %s120, 8
      %s122 = scalar_lea.vmem %s0, %s121
      %p123 = pneg %p34
      %p124 = pneg %p31
      %p125 = pneg %p55
      %p126 = pneg %p52
      %p127 = pneg %p81
      %p128 = pneg %p78
      %p129 = scmp.lt.s32.totalorder %s13, 1
      %s130 = scalar_select %p129, %s13, 1
      %s131 = smul.addr %s130, 8
      %s132 = smul.addr %s131, 8
      %s133 = scalar_lea.vmem %s2, %s132
      %p134 = scmp.lt.s32.totalorder %s13, 1
      %s135 = scalar_select %p134, %s13, 1
      %s136 = smul.addr %s135, 8
      %s137 = smul.addr %s136, 8
      %s138 = scalar_lea.vmem %s0, %s137
      %p139 = scmp.lt.s32.totalorder %s13, 1
      %s140 = scalar_select %p139, %s13, 1
      %s141 = smul.addr %s140, 8
      %s142 = smul.addr %s141, 8
      %s143 = scalar_lea.vmem %s2, %s142
      %v145 = vld [vmem:[%s138] sm:$0xff]
      %v146 = vld [vmem:[%s138 + $0x8] sm:$0xff]
      %v147 = vld [vmem:[%s138 + $0x10] sm:$0xff]
      %v148 = vld [vmem:[%s138 + $0x18] sm:$0xff]
      %v149 = vld [vmem:[%s138 + $0x20] sm:$0xff]
      %v150 = vld [vmem:[%s138 + $0x28] sm:$0xff]
      %v151 = vld [vmem:[%s138 + $0x30] sm:$0xff]
      %v152 = vld [vmem:[%s138 + $0x38] sm:$0xff]
      %v153 = vpack.c.bf16 %v146, %v145
      %v154 = vpack.c.bf16 %v148, %v147
      %v155 = vpack.c.bf16 %v150, %v149
      %v156 = vpack.c.bf16 %v152, %v151
      %v157 = vld [vmem:[%s1] sm:$0xf]
      %v158 = vld [vmem:[%s1 + $0x4] sm:$0xf]
      %v159 = vld [vmem:[%s1 + $0x8] sm:$0xf]
      %v160 = vld [vmem:[%s1 + $0xc] sm:$0xf]
      %v165 = vunpack.c.l.b16 %v157
      %v166 = vunpack.c.l.b16 %v158
      %v167 = vunpack.c.l.b16 %v159
      %v168 = vunpack.c.l.b16 %v160
      %v169 = vpack.c.b16 %v166, %v165
      %v170 = vpack.c.b16 %v168, %v167
      %vm173 = vcmask 261120
      %v175 = vsel %vm173, %v153, 0
      %v178 = vsel %vm173, %v154, 0
      %v181 = vsel %vm173, %v155, 0
      %v184 = vsel %vm173, %v156, 0
      %186 = vmatprep.subr.bf16.mxu0 0
      %187 = vmatpush1.bf16.msra.mxu0 0
      %188 = vmatprep.subr.bf16.mxu0 0
      %189 = vmatpush1.bf16.msra.mxu0 0
      %190 = vmatprep.subr.bf16.mxu0 0
      %191 = vmatpush1.bf16.msra.mxu0 0
      %192 = vmatprep.subr.bf16.mxu0 0
      %193 = vmatpush1.bf16.msra.mxu0 0
      %194 = vmatprep.subr.bf16.mxu0 0
      %195 = vmatpush1.bf16.msra.mxu0 0
      %196 = vmatprep.subr.bf16.mxu0 0
      %197 = vmatpush1.bf16.msra.mxu0 0
      %198 = vmatprep.subr.bf16.mxu0 0
      %199 = vmatpush1.bf16.msra.mxu0 %v170
      %200 = vmatprep.subr.bf16.mxu0 0
      %201 = vmatpush1.bf16.msra.mxu0 %v169
      %202 = vmatprep.subr.bf16.mxu0 0
      %203 = vmatpush2.bf16.msra.mxu0 0
      %204 = vmatprep.subr.bf16.mxu0 0
      %205 = vmatpush2.bf16.msra.mxu0 0
      %206 = vmatprep.subr.bf16.mxu0 0
      %207 = vmatpush2.bf16.msra.mxu0 0
      %208 = vmatprep.subr.bf16.mxu0 0
      %209 = vmatpush2.bf16.msra.mxu0 0
      %210 = vmatprep.subr.bf16.mxu0 0
      %211 = vmatpush2.bf16.msra.mxu0 0
      %212 = vmatprep.subr.bf16.mxu0 0
      %213 = vmatpush2.bf16.msra.mxu0 0
      %214 = vmatprep.subr.bf16.mxu0 0
      %215 = vmatpush2.bf16.msra.mxu0 0
      %216 = vmatprep.subr.bf16.mxu0 0
      %217 = vmatpush2.bf16.msra.mxu0 0
      %218 = vmatprep.mubr.bf16.mxu0 0
      %219 = vmatmul.mubr.bf16.gmra.mxu0 %v175
      %v220 = vpop.f32.mrf.mxu0
      %v221 = vadd.f32 0.0, %v220
      %v222 = vpop.f32.mrf.mxu0
      %v223 = vpop.f32.mrf.mxu0
      %v224 = vadd.f32 0.0, %v223
      %v225 = vpop.f32.mrf.mxu0
      %226 = vmatprep.mubr.bf16.mxu0 0
      %227 = vmatmul.mubr.bf16.gmra.mxu0 %v178
      %v228 = vpop.f32.mrf.mxu0
      %v229 = vadd.f32 0.0, %v228
      %v230 = vpop.f32.mrf.mxu0
      %v231 = vpop.f32.mrf.mxu0
      %v232 = vadd.f32 0.0, %v231
      %v233 = vpop.f32.mrf.mxu0
      %234 = vmatprep.mubr.bf16.mxu0 0
      %235 = vmatmul.mubr.bf16.gmra.mxu0 %v181
      %v236 = vpop.f32.mrf.mxu0
      %v237 = vadd.f32 0.0, %v236
      %v238 = vpop.f32.mrf.mxu0
      %v239 = vpop.f32.mrf.mxu0
      %v240 = vadd.f32 0.0, %v239
      %v241 = vpop.f32.mrf.mxu0
      %242 = vmatprep.mubr.bf16.mxu0 0
      %243 = vmatmul.mubr.bf16.gmra.mxu0 %v184
      %v244 = vpop.f32.mrf.mxu0
      %v245 = vadd.f32 0.0, %v244
      %v246 = vpop.f32.mrf.mxu0
      %v247 = vpop.f32.mrf.mxu0
      %v248 = vadd.f32 0.0, %v247
      %v249 = vpop.f32.mrf.mxu0
      %250 = vdwg.mxu0
      %vm251 = vcmask 523264
      %252 = vst.msk [vmem:[%s143] sm:$0xff] %vm251, %v221
      %253 = vst.msk [vmem:[%s143 + $0x8] sm:$0xff] %vm251, %v224
      %254 = vst.msk [vmem:[%s143 + $0x10] sm:$0xff] %vm251, %v229
      %255 = vst.msk [vmem:[%s143 + $0x18] sm:$0xff] %vm251, %v232
      %256 = vst.msk [vmem:[%s143 + $0x20] sm:$0xff] %vm251, %v237
      %257 = vst.msk [vmem:[%s143 + $0x28] sm:$0xff] %vm251, %v240
      %258 = vst.msk [vmem:[%s143 + $0x30] sm:$0xff] %vm251, %v245
      %259 = vst.msk [vmem:[%s143 + $0x38] sm:$0xff] %vm251, %v248
      %p260 = scmp.lt.s32.totalorder %s13, 1
      %s261 = scalar_select %p260, %s13, 1
      %s262 = smul.addr %s261, 8
      %s263 = smul.addr %s262, 8
      %s264 = scalar_lea.vmem %s2, %s263
      // Predicated region
      $region29: #{bottleneck_ir_sam_forward.10} parent=27 // pred_check
        %p265 = pneg %p78
      $region30: #{bottleneck_ir_sam_forward.10} parent=27 // pred_check_branch
        %267 = sbr.rel (%p265) target = $region32
      $region31: #{bottleneck_ir_sam_forward.10} parent=27 // pred_region
        _
      $region32: #{bottleneck_ir_sam_forward.10} parent=27 // pred_fallthru
        _
    $region28: #{bottleneck_ir_sam_forward.10} parent=5 // pred_fallthru
      _
    %p268 = scmp.le.s32.totalorder 2, %s8
    // Predicated region
    $region33: #{bottleneck_ir_sam_forward.10} parent=5 // pred_check
      %p269 = pneg %p268
    $region34: #{bottleneck_ir_sam_forward.10} parent=5 // pred_check_branch
      %271 = sbr.rel (%p269) target = $region36
    $region35: #{bottleneck_ir_sam_forward.10} parent=5 // pred_region
      %s272 = ssub.s32 %s8, 2
      // Predicated region
      $region37: #{bottleneck_ir_sam_forward.10} parent=35 // pred_check
        %p273 = pneg %p84
      $region38: #{bottleneck_ir_sam_forward.10} parent=35 // pred_check_branch
        %275 = sbr.rel (%p273) target = $region40
      $region39: #{bottleneck_ir_sam_forward.10} parent=35 // pred_region
        %p276 = scmp.lt.s32.totalorder %s14, 1
        %s277 = scalar_select %p276, %s14, 1
        %s278 = smul.addr %s277, 8
        %s279 = smul.addr %s278, 8
        %s280 = scalar_lea.vmem %s2, %s279
      $region40: #{bottleneck_ir_sam_forward.10} parent=35 // pred_fallthru
        _
    $region36: #{bottleneck_ir_sam_forward.10} parent=5 // pred_fallthru
      _
  $region6: #{bottleneck_ir_sam_forward.10} parent=0 // loop_footer
    %s12 = sadd.s32 1, %s8
  $region7: #{bottleneck_ir_sam_forward.10} parent=0 // loop_footer_branch
    %7 = sbr.rel target = $region3
  $region8: #{bottleneck_ir_sam_forward.10} parent=0 // loop_exit
    _

// kernel: bottleneck_ir_sam_forward.9
$region0: #{bottleneck_ir_sam_forward.9}
  #allocation0 [shape = 'u32[]', space=smem, size = 0x4, offset = 0x4, fixed_abs, tag = 'smem constant byte address 0x4 - core index']
  #allocation1 [shape = 'u32[144,128]{1,0:T(1,128)}', space=vmem, size = 0x12000, scoped, tag = 'internal scratch']
  %s0 = inlined_call_operand.vmem [shape: f32[2,2,2,9,9,64], index: 0, kind: input, shape index: {}]
  %s1 = inlined_call_operand.vmem [shape: bf16[576,64], index: 1, kind: input, shape index: {}]
  %s2 = inlined_call_operand.vmem [shape: f32[2,8,8,64], index: 2, kind: output, shape index: {}]
  %s3 = sld [smem:[#allocation0]]
  $region41: #{bottleneck_ir_sam_forward.9} parent=0
    _
  %s5 = ssub.s32 1, %s3
  %s6 = scalar_select 0, %s5, %s3
  loop: start=0, step=1, limit=4
  $region2: #{bottleneck_ir_sam_forward.9} parent=0 // loop_pre_header
    _
  $region3: #{bottleneck_ir_sam_forward.9} parent=0 // loop_header
    %s8 = sphi 0, %s12
    %p9 = scmp.ge.s32.totalorder %s8, 4
    %s18 = sphi 0, %s20
    %s21 = sphi 0, %s18
    %s22 = sphi 0, %s21
    %s38 = sphi 0, %s22
    %s42 = sphi 0, %s42
    %s44 = sphi 0, %s42
    %s45 = sphi 0, %s44
    %s59 = sphi 0, %s45
    %s65 = sphi 0, %s67
    %s68 = sphi 0, %s65
    %s69 = sphi 0, %s68
    %s85 = sphi 0, %s69
  $region4: #{bottleneck_ir_sam_forward.9} parent=0 // loop_header_branch
    %11 = sbr.rel (%p9) target = $region8
  $region5: #{bottleneck_ir_sam_forward.9} parent=0 // loop_body
    %s13 = ssub.s32 %s8, 1
    %s14 = ssub.s32 %s8, 2
    %s15 = sadd.s32 %s8, 1
    %s16 = ssub.s32 %s8, %s15
    %p17 = scmp.eq.s32.totalorder %s16, 0
    %s19 = sadd.s32 %s18, 1
    %s20 = scalar_select %p17, %s18, %s19
    %p23 = pneg %p17
    %p24 = scmp.eq.s32.totalorder %s8, 1
    %p25 = por %p23, %p24
    %p26 = scmp.ne.s32.totalorder %s18, %s21
    %p27 = scmp.eq.s32.totalorder %s8, 0
    %p28 = por %p26, %p27
    %p29 = scmp.ne.s32.totalorder %s18, %s21
    %p30 = scmp.eq.s32.totalorder %s13, 1
    %p31 = por %p29, %p30
    %p32 = scmp.ne.s32.totalorder %s21, %s22
    %p33 = scmp.eq.s32.totalorder %s13, 0
    %p34 = por %p32, %p33
    %p35 = scmp.ne.s32.totalorder %s21, %s22
    %p36 = scmp.eq.s32.totalorder %s14, 1
    %p37 = por %p35, %p36
    %p39 = scmp.ne.s32.totalorder %s22, %s38
    %p40 = scmp.eq.s32.totalorder %s14, 0
    %p41 = por %p39, %p40
    %s43 = sadd.s32 %s42, 1
    %p46 = scmp.eq.s32.totalorder %s8, 1
    %p47 = scmp.ne.s32.totalorder %s42, %s44
    %p48 = scmp.eq.s32.totalorder %s8, 0
    %p49 = por %p47, %p48
    %p50 = scmp.ne.s32.totalorder %s42, %s44
    %p51 = scmp.eq.s32.totalorder %s13, 1
    %p52 = por %p50, %p51
    %p53 = scmp.ne.s32.totalorder %s44, %s45
    %p54 = scmp.eq.s32.totalorder %s13, 0
    %p55 = por %p53, %p54
    %p56 = scmp.ne.s32.totalorder %s44, %s45
    %p57 = scmp.eq.s32.totalorder %s14, 1
    %p58 = por %p56, %p57
    %p60 = scmp.ne.s32.totalorder %s45, %s59
    %p61 = scmp.eq.s32.totalorder %s14, 0
    %p62 = por %p60, %p61
    %s63 = ssub.s32 %s8, %s15
    %p64 = scmp.eq.s32.totalorder %s63, 0
    %s66 = sadd.s32 %s65, 1
    %s67 = scalar_select %p64, %s65, %s66
    %p70 = pneg %p64
    %p71 = scmp.eq.s32.totalorder %s8, 1
    %p72 = por %p70, %p71
    %p73 = scmp.ne.s32.totalorder %s65, %s68
    %p74 = scmp.eq.s32.totalorder %s8, 0
    %p75 = por %p73, %p74
    %p76 = scmp.ne.s32.totalorder %s65, %s68
    %p77 = scmp.eq.s32.totalorder %s13, 1
    %p78 = por %p76, %p77
    %p79 = scmp.ne.s32.totalorder %s68, %s69
    %p80 = scmp.eq.s32.totalorder %s13, 0
    %p81 = por %p79, %p80
    %p82 = scmp.ne.s32.totalorder %s68, %s69
    %p83 = scmp.eq.s32.totalorder %s14, 1
    %p84 = por %p82, %p83
    %p86 = scmp.ne.s32.totalorder %s69, %s85
    %p87 = scmp.eq.s32.totalorder %s14, 0
    %p88 = por %p86, %p87
    %p89 = scmp.le.s32.totalorder 1, %s8
    %p90 = scmp.lt.s32.totalorder %s8, 3
    %p91 = pnand %p89, %p90
    %p92 = pneg %p91
    // Predicated region
    $region9: #{bottleneck_ir_sam_forward.9} parent=5 // pred_check
      _
    $region10: #{bottleneck_ir_sam_forward.9} parent=5 // pred_check_branch
      %94 = sbr.rel (%p91) target = $region12
    $region11: #{bottleneck_ir_sam_forward.9} parent=5 // pred_region
      %s95 = ssub.s32 %s8, 1
      // Predicated region
      $region13: #{bottleneck_ir_sam_forward.9} parent=11 // pred_check
        %p96 = pneg %p55
      $region14: #{bottleneck_ir_sam_forward.9} parent=11 // pred_check_branch
        %98 = sbr.rel (%p96) target = $region16
      $region15: #{bottleneck_ir_sam_forward.9} parent=11 // pred_region
        _
      $region16: #{bottleneck_ir_sam_forward.9} parent=11 // pred_fallthru
        _
    $region12: #{bottleneck_ir_sam_forward.9} parent=5 // pred_fallthru
      _
    %p99 = scmp.lt.s32.totalorder %s8, 2
    // Predicated region
    $region17: #{bottleneck_ir_sam_forward.9} parent=5 // pred_check
      %p100 = pneg %p99
    $region18: #{bottleneck_ir_sam_forward.9} parent=5 // pred_check_branch
      %102 = sbr.rel (%p100) target = $region20
    $region19: #{bottleneck_ir_sam_forward.9} parent=5 // pred_region
      // Predicated region
      $region21: #{bottleneck_ir_sam_forward.9} parent=19 // pred_check
        %p103 = pneg %p28
      $region22: #{bottleneck_ir_sam_forward.9} parent=19 // pred_check_branch
        %105 = sbr.rel (%p103) target = $region24
      $region23: #{bottleneck_ir_sam_forward.9} parent=19 // pred_region
        %p106 = scmp.lt.s32.totalorder %s8, 1
        %s107 = scalar_select %p106, %s8, 1
        %s108 = smul.addr %s107, 72
        %s109 = smul.addr %s108, 8
        %s110 = scalar_lea.vmem %s0, %s109
      $region24: #{bottleneck_ir_sam_forward.9} parent=19 // pred_fallthru
        _
    $region20: #{bottleneck_ir_sam_forward.9} parent=5 // pred_fallthru
      _
    %p111 = scmp.le.s32.totalorder 1, %s8
    %p112 = scmp.lt.s32.totalorder %s8, 3
    %p113 = pnand %p111, %p112
    %p114 = pneg %p113
    // Predicated region
    $region25: #{bottleneck_ir_sam_forward.9} parent=5 // pred_check
      _
    $region26: #{bottleneck_ir_sam_forward.9} parent=5 // pred_check_branch
      %116 = sbr.rel (%p113) target = $region28
    $region27: #{bottleneck_ir_sam_forward.9} parent=5 // pred_region
      %s117 = ssub.s32 %s8, 1
      %p118 = scmp.lt.s32.totalorder %s13, 1
      %s119 = scalar_select %p118, %s13, 1
      %s120 = smul.addr %s119, 72
      %s121 = smul.addr %s120, 8
      %s122 = scalar_lea.vmem %s0, %s121
      %p123 = pneg %p34
      %p124 = pneg %p31
      %p125 = pneg %p55
      %p126 = pneg %p52
      %p127 = pneg %p81
      %p128 = pneg %p78
      %p129 = scmp.lt.s32.totalorder %s13, 1
      %s130 = scalar_select %p129, %s13, 1
      %s131 = smul.addr %s130, 8
      %s132 = smul.addr %s131, 8
      %s133 = scalar_lea.vmem %s2, %s132
      %p134 = scmp.lt.s32.totalorder %s13, 1
      %s135 = scalar_select %p134, %s13, 1
      %s136 = smul.addr %s135, 72
      %s137 = smul.addr %s136, 8
      %s138 = scalar_lea.vmem %s0, %s137
      %p139 = scmp.lt.s32.totalorder %s13, 1
      %s140 = scalar_select %p139, %s13, 1
      %s141 = smul.addr %s140, 8
      %s142 = smul.addr %s141, 8
      %s143 = scalar_lea.vmem %s2, %s142
      %v145 = vld [vmem:[%s138] sm:$0xff]
      %v146 = vld [vmem:[%s138 + $0x10] sm:$0xff]
      %v147 = vld [vmem:[%s138 + $0x20] sm:$0xff]
      %v148 = vld [vmem:[%s138 + $0x30] sm:$0xff]
      %v149 = vld [vmem:[%s138 + $0x40] sm:$0xff]
      %v150 = vld [vmem:[%s138 + $0x50] sm:$0xff]
      %v151 = vld [vmem:[%s138 + $0x60] sm:$0xff]
      %v152 = vld [vmem:[%s138 + $0x70] sm:$0xff]
      %v153 = vpack.c.bf16 %v146, %v145
      %v154 = vpack.c.bf16 %v148, %v147
      %v155 = vpack.c.bf16 %v150, %v149
      %v156 = vpack.c.bf16 %v152, %v151
      %v157 = vld [vmem:[%s1] sm:$0xf]
      %v158 = vld [vmem:[%s1 + $0x4] sm:$0xf]
      %v159 = vld [vmem:[%s1 + $0x8] sm:$0xf]
      %v160 = vld [vmem:[%s1 + $0xc] sm:$0xf]
      %v161 = vld [vmem:[%s1 + $0x10] sm:$0xf]
      %v162 = vld [vmem:[%s1 + $0x14] sm:$0xf]
      %v163 = vld [vmem:[%s1 + $0x18] sm:$0xf]
      %v164 = vld [vmem:[%s1 + $0x1c] sm:$0xf]
      %s165 = scalar_lea.vmem %s138, 144
      %v166 = vld [vmem:[%s165] sm:$0xff]
      %v167 = vld [vmem:[%s165 + $0x10] sm:$0xff]
      %v168 = vld [vmem:[%s165 + $0x20] sm:$0xff]
      %v169 = vld [vmem:[%s165 + $0x30] sm:$0xff]
      %v170 = vld [vmem:[%s165 + $0x40] sm:$0xff]
      %v171 = vld [vmem:[%s165 + $0x50] sm:$0xff]
      %v172 = vld [vmem:[%s165 + $0x60] sm:$0xff]
      %v173 = vld [vmem:[%s165 + $0x70] sm:$0xff]
      %v174 = vpack.c.bf16 %v167, %v166
      %v175 = vpack.c.bf16 %v169, %v168
      %v176 = vpack.c.bf16 %v171, %v170
      %v177 = vpack.c.bf16 %v173, %v172
      %v178 = vld [vmem:[%s1 + $0x20] sm:$0xf]
      %v179 = vld [vmem:[%s1 + $0x24] sm:$0xf]
      %v180 = vld [vmem:[%s1 + $0x28] sm:$0xf]
      %v181 = vld [vmem:[%s1 + $0x2c] sm:$0xf]
      %v182 = vld [vmem:[%s1 + $0x30] sm:$0xf]
      %v183 = vld [vmem:[%s1 + $0x34] sm:$0xf]
      %v184 = vld [vmem:[%s1 + $0x38] sm:$0xf]
      %v185 = vld [vmem:[%s1 + $0x3c] sm:$0xf]
      %v194 = vunpack.c.l.b16 %v178
      %v195 = vunpack.c.l.b16 %v179
      %v196 = vunpack.c.l.b16 %v180
      %v197 = vunpack.c.l.b16 %v181
      %v198 = vunpack.c.l.b16 %v182
      %v199 = vunpack.c.l.b16 %v183
      %v200 = vunpack.c.l.b16 %v184
      %v201 = vunpack.c.l.b16 %v185
      %v202 = vpack.c.b16 %v195, %v194
      %v203 = vpack.c.b16 %v197, %v196
      %v204 = vpack.c.b16 %v199, %v198
      %v205 = vpack.c.b16 %v201, %v200
      %vm210 = vcmask 523264
      %v212 = vsel %vm210, %v174, 0
      %v215 = vsel %vm210, %v175, 0
      %v218 = vsel %vm210, %v176, 0
      %v221 = vsel %vm210, %v177, 0
      %223 = vmatprep.subr.bf16.mxu0 0
      %224 = vmatpush1.bf16.msra.mxu0 0
      %225 = vmatprep.subr.bf16.mxu0 0
      %226 = vmatpush1.bf16.msra.mxu0 0
      %227 = vmatprep.subr.bf16.mxu0 0
      %228 = vmatpush1.bf16.msra.mxu0 0
      %229 = vmatprep.subr.bf16.mxu0 0
      %230 = vmatpush1.bf16.msra.mxu0 0
      %231 = vmatprep.subr.bf16.mxu0 0
      %232 = vmatpush1.bf16.msra.mxu0 %v205
      %233 = vmatprep.subr.bf16.mxu0 0
      %234 = vmatpush1.bf16.msra.mxu0 %v204
      %235 = vmatprep.subr.bf16.mxu0 0
      %236 = vmatpush1.bf16.msra.mxu0 %v203
      %237 = vmatprep.subr.bf16.mxu0 0
      %238 = vmatpush1.bf16.msra.mxu0 %v202
      %239 = vmatprep.subr.bf16.mxu0 0
      %240 = vmatpush2.bf16.msra.mxu0 0
      %241 = vmatprep.subr.bf16.mxu0 0
      %242 = vmatpush2.bf16.msra.mxu0 0
      %243 = vmatprep.subr.bf16.mxu0 0
      %244 = vmatpush2.bf16.msra.mxu0 0
      %245 = vmatprep.subr.bf16.mxu0 0
      %246 = vmatpush2.bf16.msra.mxu0 0
      %247 = vmatprep.subr.bf16.mxu0 0
      %248 = vmatpush2.bf16.msra.mxu0 0
      %249 = vmatprep.subr.bf16.mxu0 0
      %250 = vmatpush2.bf16.msra.mxu0 0
      %251 = vmatprep.subr.bf16.mxu0 0
      %252 = vmatpush2.bf16.msra.mxu0 0
      %253 = vmatprep.subr.bf16.mxu0 0
      %254 = vmatpush2.bf16.msra.mxu0 0
      %255 = vmatprep.mubr.bf16.mxu0 0
      %256 = vmatmul.mubr.bf16.gmra.mxu0 %v212
      %v257 = vpop.f32.mrf.mxu0
      %v258 = vadd.f32 0.0, %v257
      %v259 = vpop.f32.mrf.mxu0
      %v260 = vpop.f32.mrf.mxu0
      %v261 = vadd.f32 0.0, %v260
      %v262 = vpop.f32.mrf.mxu0
      %263 = vmatprep.mubr.bf16.mxu0 0
      %264 = vmatmul.mubr.bf16.gmra.mxu0 %v215
      %v265 = vpop.f32.mrf.mxu0
      %v266 = vadd.f32 0.0, %v265
      %v267 = vpop.f32.mrf.mxu0
      %v268 = vpop.f32.mrf.mxu0
      %v269 = vadd.f32 0.0, %v268
      %v270 = vpop.f32.mrf.mxu0
      %271 = vmatprep.mubr.bf16.mxu0 0
      %272 = vmatmul.mubr.bf16.gmra.mxu0 %v218
      %v273 = vpop.f32.mrf.mxu0
      %v274 = vadd.f32 0.0, %v273
      %v275 = vpop.f32.mrf.mxu0
      %v276 = vpop.f32.mrf.mxu0
      %v277 = vadd.f32 0.0, %v276
      %v278 = vpop.f32.mrf.mxu0
      %279 = vmatprep.mubr.bf16.mxu0 0
      %280 = vmatmul.mubr.bf16.gmra.mxu0 %v221
      %v281 = vpop.f32.mrf.mxu0
      %v282 = vadd.f32 0.0, %v281
      %v283 = vpop.f32.mrf.mxu0
      %v284 = vpop.f32.mrf.mxu0
      %v285 = vadd.f32 0.0, %v284
      %v286 = vpop.f32.mrf.mxu0
      %287 = vdwg.mxu0
      %v296 = vunpack.c.l.b16 %v157
      %v297 = vunpack.c.l.b16 %v158
      %v298 = vunpack.c.l.b16 %v159
      %v299 = vunpack.c.l.b16 %v160
      %v300 = vunpack.c.l.b16 %v161
      %v301 = vunpack.c.l.b16 %v162
      %v302 = vunpack.c.l.b16 %v163
      %v303 = vunpack.c.l.b16 %v164
      %v304 = vpack.c.b16 %v297, %v296
      %v305 = vpack.c.b16 %v299, %v298
      %v306 = vpack.c.b16 %v301, %v300
      %v307 = vpack.c.b16 %v303, %v302
      %v313 = vsel %vm210, %v153, 0
      %v316 = vsel %vm210, %v154, 0
      %v319 = vsel %vm210, %v155, 0
      %v322 = vsel %vm210, %v156, 0
      %324 = vmatprep.subr.bf16.mxu0 0
      %325 = vmatpush1.bf16.msra.mxu0 0
      %326 = vmatprep.subr.bf16.mxu0 0
      %327 = vmatpush1.bf16.msra.mxu0 0
      %328 = vmatprep.subr.bf16.mxu0 0
      %329 = vmatpush1.bf16.msra.mxu0 0
      %330 = vmatprep.subr.bf16.mxu0 0
      %331 = vmatpush1.bf16.msra.mxu0 0
      %332 = vmatprep.subr.bf16.mxu0 0
      %333 = vmatpush1.bf16.msra.mxu0 %v307
      %334 = vmatprep.subr.bf16.mxu0 0
      %335 = vmatpush1.bf16.msra.mxu0 %v306
      %336 = vmatprep.subr.bf16.mxu0 0
      %337 = vmatpush1.bf16.msra.mxu0 %v305
      %338 = vmatprep.subr.bf16.mxu0 0
      %339 = vmatpush1.bf16.msra.mxu0 %v304
      %340 = vmatprep.subr.bf16.mxu0 0
      %341 = vmatpush2.bf16.msra.mxu0 0
      %342 = vmatprep.subr.bf16.mxu0 0
      %343 = vmatpush2.bf16.msra.mxu0 0
      %344 = vmatprep.subr.bf16.mxu0 0
      %345 = vmatpush2.bf16.msra.mxu0 0
      %346 = vmatprep.subr.bf16.mxu0 0
      %347 = vmatpush2.bf16.msra.mxu0 0
      %348 = vmatprep.subr.bf16.mxu0 0
      %349 = vmatpush2.bf16.msra.mxu0 0
      %350 = vmatprep.subr.bf16.mxu0 0
      %351 = vmatpush2.bf16.msra.mxu0 0
      %352 = vmatprep.subr.bf16.mxu0 0
      %353 = vmatpush2.bf16.msra.mxu0 0
      %354 = vmatprep.subr.bf16.mxu0 0
      %355 = vmatpush2.bf16.msra.mxu0 0
      %356 = vmatprep.mubr.bf16.mxu0 0
      %357 = vmatmul.mubr.bf16.gmra.mxu0 %v313
      %v358 = vpop.f32.mrf.mxu0
      %v359 = vadd.f32 %v258, %v358
      %v360 = vpop.f32.mrf.mxu0
      %v361 = vpop.f32.mrf.mxu0
      %v362 = vadd.f32 %v261, %v361
      %v363 = vpop.f32.mrf.mxu0
      %364 = vmatprep.mubr.bf16.mxu0 0
      %365 = vmatmul.mubr.bf16.gmra.mxu0 %v316
      %v366 = vpop.f32.mrf.mxu0
      %v367 = vadd.f32 %v266, %v366
      %v368 = vpop.f32.mrf.mxu0
      %v369 = vpop.f32.mrf.mxu0
      %v370 = vadd.f32 %v269, %v369
      %v371 = vpop.f32.mrf.mxu0
      %372 = vmatprep.mubr.bf16.mxu0 0
      %373 = vmatmul.mubr.bf16.gmra.mxu0 %v319
      %v374 = vpop.f32.mrf.mxu0
      %v375 = vadd.f32 %v274, %v374
      %v376 = vpop.f32.mrf.mxu0
      %v377 = vpop.f32.mrf.mxu0
      %v378 = vadd.f32 %v277, %v377
      %v379 = vpop.f32.mrf.mxu0
      %380 = vmatprep.mubr.bf16.mxu0 0
      %381 = vmatmul.mubr.bf16.gmra.mxu0 %v322
      %v382 = vpop.f32.mrf.mxu0
      %v383 = vadd.f32 %v282, %v382
      %v384 = vpop.f32.mrf.mxu0
      %v385 = vpop.f32.mrf.mxu0
      %v386 = vadd.f32 %v285, %v385
      %v387 = vpop.f32.mrf.mxu0
      %388 = vdwg.mxu0
      %v389 = vld [vmem:[%s138 + $0x1] sm:$0xff]
      %v390 = vld [vmem:[%s138 + $0x11] sm:$0xff]
      %v391 = vld [vmem:[%s138 + $0x21] sm:$0xff]
      %v392 = vld [vmem:[%s138 + $0x31] sm:$0xff]
      %v393 = vld [vmem:[%s138 + $0x41] sm:$0xff]
      %v394 = vld [vmem:[%s138 + $0x51] sm:$0xff]
      %v395 = vld [vmem:[%s138 + $0x61] sm:$0xff]
      %v396 = vld [vmem:[%s138 + $0x71] sm:$0xff]
      %v397 = vpack.c.bf16 %v390, %v389
      %v398 = vpack.c.bf16 %v392, %v391
      %v399 = vpack.c.bf16 %v394, %v393
      %v400 = vpack.c.bf16 %v396, %v395
      %v401 = vld [vmem:[%s1 + $0x40] sm:$0xf]
      %v402 = vld [vmem:[%s1 + $0x44] sm:$0xf]
      %v403 = vld [vmem:[%s1 + $0x48] sm:$0xf]
      %v404 = vld [vmem:[%s1 + $0x4c] sm:$0xf]
      %v405 = vld [vmem:[%s1 + $0x50] sm:$0xf]
      %v406 = vld [vmem:[%s1 + $0x54] sm:$0xf]
      %v407 = vld [vmem:[%s1 + $0x58] sm:$0xf]
      %v408 = vld [vmem:[%s1 + $0x5c] sm:$0xf]
      %v417 = vunpack.c.l.b16 %v401
      %v418 = vunpack.c.l.b16 %v402
      %v419 = vunpack.c.l.b16 %v403
      %v420 = vunpack.c.l.b16 %v404
      %v421 = vunpack.c.l.b16 %v405
      %v422 = vunpack.c.l.b16 %v406
      %v423 = vunpack.c.l.b16 %v407
      %v424 = vunpack.c.l.b16 %v408
      %v425 = vpack.c.b16 %v418, %v417
      %v426 = vpack.c.b16 %v420, %v419
      %v427 = vpack.c.b16 %v422, %v421
      %v428 = vpack.c.b16 %v424, %v423
      %v434 = vsel %vm210, %v397, 0
      %v437 = vsel %vm210, %v398, 0
      %v440 = vsel %vm210, %v399, 0
      %v443 = vsel %vm210, %v400, 0
      %445 = vmatprep.subr.bf16.mxu0 0
      %446 = vmatpush1.bf16.msra.mxu0 0
      %447 = vmatprep.subr.bf16.mxu0 0
      %448 = vmatpush1.bf16.msra.mxu0 0
      %449 = vmatprep.subr.bf16.mxu0 0
      %450 = vmatpush1.bf16.msra.mxu0 0
      %451 = vmatprep.subr.bf16.mxu0 0
      %452 = vmatpush1.bf16.msra.mxu0 0
      %453 = vmatprep.subr.bf16.mxu0 0
      %454 = vmatpush1.bf16.msra.mxu0 %v428
      %455 = vmatprep.subr.bf16.mxu0 0
      %456 = vmatpush1.bf16.msra.mxu0 %v427
      %457 = vmatprep.subr.bf16.mxu0 0
      %458 = vmatpush1.bf16.msra.mxu0 %v426
      %459 = vmatprep.subr.bf16.mxu0 0
      %460 = vmatpush1.bf16.msra.mxu0 %v425
      %461 = vmatprep.subr.bf16.mxu0 0
      %462 = vmatpush2.bf16.msra.mxu0 0
      %463 = vmatprep.subr.bf16.mxu0 0
      %464 = vmatpush2.bf16.msra.mxu0 0
      %465 = vmatprep.subr.bf16.mxu0 0
      %466 = vmatpush2.bf16.msra.mxu0 0
      %467 = vmatprep.subr.bf16.mxu0 0
      %468 = vmatpush2.bf16.msra.mxu0 0
      %469 = vmatprep.subr.bf16.mxu0 0
      %470 = vmatpush2.bf16.msra.mxu0 0
      %471 = vmatprep.subr.bf16.mxu0 0
      %472 = vmatpush2.bf16.msra.mxu0 0
      %473 = vmatprep.subr.bf16.mxu0 0
      %474 = vmatpush2.bf16.msra.mxu0 0
      %475 = vmatprep.subr.bf16.mxu0 0
      %476 = vmatpush2.bf16.msra.mxu0 0
      %477 = vmatprep.mubr.bf16.mxu0 0
      %478 = vmatmul.mubr.bf16.gmra.mxu0 %v434
      %v479 = vpop.f32.mrf.mxu0
      %v480 = vadd.f32 0.0, %v479
      %v481 = vpop.f32.mrf.mxu0
      %v482 = vpop.f32.mrf.mxu0
      %v483 = vadd.f32 0.0, %v482
      %v484 = vpop.f32.mrf.mxu0
      %485 = vmatprep.mubr.bf16.mxu0 0
      %486 = vmatmul.mubr.bf16.gmra.mxu0 %v437
      %v487 = vpop.f32.mrf.mxu0
      %v488 = vadd.f32 0.0, %v487
      %v489 = vpop.f32.mrf.mxu0
      %v490 = vpop.f32.mrf.mxu0
      %v491 = vadd.f32 0.0, %v490
      %v492 = vpop.f32.mrf.mxu0
      %493 = vmatprep.mubr.bf16.mxu0 0
      %494 = vmatmul.mubr.bf16.gmra.mxu0 %v440
      %v495 = vpop.f32.mrf.mxu0
      %v496 = vadd.f32 0.0, %v495
      %v497 = vpop.f32.mrf.mxu0
      %v498 = vpop.f32.mrf.mxu0
      %v499 = vadd.f32 0.0, %v498
      %v500 = vpop.f32.mrf.mxu0
      %501 = vmatprep.mubr.bf16.mxu0 0
      %502 = vmatmul.mubr.bf16.gmra.mxu0 %v443
      %v503 = vpop.f32.mrf.mxu0
      %v504 = vadd.f32 0.0, %v503
      %v505 = vpop.f32.mrf.mxu0
      %v506 = vpop.f32.mrf.mxu0
      %v507 = vadd.f32 0.0, %v506
      %v508 = vpop.f32.mrf.mxu0
      %509 = vdwg.mxu0
      %v510 = vadd.f32 %v359, %v480
      %v511 = vadd.f32 %v362, %v483
      %v512 = vadd.f32 %v367, %v488
      %v513 = vadd.f32 %v370, %v491
      %v514 = vadd.f32 %v375, %v496
      %v515 = vadd.f32 %v378, %v499
      %v516 = vadd.f32 %v383, %v504
      %v517 = vadd.f32 %v386, %v507
      %s518 = scalar_lea.vmem %s138, 288
      %v519 = vld [vmem:[%s518] sm:$0xff]
      %v520 = vld [vmem:[%s518 + $0x10] sm:$0xff]
      %v521 = vld [vmem:[%s518 + $0x20] sm:$0xff]
      %v522 = vld [vmem:[%s518 + $0x30] sm:$0xff]
      %v523 = vld [vmem:[%s518 + $0x40] sm:$0xff]
      %v524 = vld [vmem:[%s518 + $0x50] sm:$0xff]
      %v525 = vld [vmem:[%s518 + $0x60] sm:$0xff]
      %v526 = vld [vmem:[%s518 + $0x70] sm:$0xff]
      %v527 = vpack.c.bf16 %v520, %v519
      %v528 = vpack.c.bf16 %v522, %v521
      %v529 = vpack.c.bf16 %v524, %v523
      %v530 = vpack.c.bf16 %v526, %v525
      %v531 = vld [vmem:[%s1 + $0x60] sm:$0xf]
      %v532 = vld [vmem:[%s1 + $0x64] sm:$0xf]
      %v533 = vld [vmem:[%s1 + $0x68] sm:$0xf]
      %v534 = vld [vmem:[%s1 + $0x6c] sm:$0xf]
      %v535 = vld [vmem:[%s1 + $0x70] sm:$0xf]
      %v536 = vld [vmem:[%s1 + $0x74] sm:$0xf]
      %v537 = vld [vmem:[%s1 + $0x78] sm:$0xf]
      %v538 = vld [vmem:[%s1 + $0x7c] sm:$0xf]
      %v547 = vunpack.c.l.b16 %v531
      %v548 = vunpack.c.l.b16 %v532
      %v549 = vunpack.c.l.b16 %v533
      %v550 = vunpack.c.l.b16 %v534
      %v551 = vunpack.c.l.b16 %v535
      %v552 = vunpack.c.l.b16 %v536
      %v553 = vunpack.c.l.b16 %v537
      %v554 = vunpack.c.l.b16 %v538
      %v555 = vpack.c.b16 %v548, %v547
      %v556 = vpack.c.b16 %v550, %v549
      %v557 = vpack.c.b16 %v552, %v551
      %v558 = vpack.c.b16 %v554, %v553
      %v564 = vsel %vm210, %v527, 0
      %v567 = vsel %vm210, %v528, 0
      %v570 = vsel %vm210, %v529, 0
      %v573 = vsel %vm210, %v530, 0
      %575 = vmatprep.subr.bf16.mxu0 0
      %576 = vmatpush1.bf16.msra.mxu0 0
      %577 = vmatprep.subr.bf16.mxu0 0
      %578 = vmatpush1.bf16.msra.mxu0 0
      %579 = vmatprep.subr.bf16.mxu0 0
      %580 = vmatpush1.bf16.msra.mxu0 0
      %581 = vmatprep.subr.bf16.mxu0 0
      %582 = vmatpush1.bf16.msra.mxu0 0
      %583 = vmatprep.subr.bf16.mxu0 0
      %584 = vmatpush1.bf16.msra.mxu0 %v558
      %585 = vmatprep.subr.bf16.mxu0 0
      %586 = vmatpush1.bf16.msra.mxu0 %v557
      %587 = vmatprep.subr.bf16.mxu0 0
      %588 = vmatpush1.bf16.msra.mxu0 %v556
      %589 = vmatprep.subr.bf16.mxu0 0
      %590 = vmatpush1.bf16.msra.mxu0 %v555
      %591 = vmatprep.subr.bf16.mxu0 0
      %592 = vmatpush2.bf16.msra.mxu0 0
      %593 = vmatprep.subr.bf16.mxu0 0
      %594 = vmatpush2.bf16.msra.mxu0 0
      %595 = vmatprep.subr.bf16.mxu0 0
      %596 = vmatpush2.bf16.msra.mxu0 0
      %597 = vmatprep.subr.bf16.mxu0 0
      %598 = vmatpush2.bf16.msra.mxu0 0
      %599 = vmatprep.subr.bf16.mxu0 0
      %600 = vmatpush2.bf16.msra.mxu0 0
      %601 = vmatprep.subr.bf16.mxu0 0
      %602 = vmatpush2.bf16.msra.mxu0 0
      %603 = vmatprep.subr.bf16.mxu0 0
      %604 = vmatpush2.bf16.msra.mxu0 0
      %605 = vmatprep.subr.bf16.mxu0 0
      %606 = vmatpush2.bf16.msra.mxu0 0
      %607 = vmatprep.mubr.bf16.mxu0 0
      %608 = vmatmul.mubr.bf16.gmra.mxu0 %v564
      %v609 = vpop.f32.mrf.mxu0
      %v610 = vadd.f32 0.0, %v609
      %v611 = vpop.f32.mrf.mxu0
      %v612 = vpop.f32.mrf.mxu0
      %v613 = vadd.f32 0.0, %v612
      %v614 = vpop.f32.mrf.mxu0
      %615 = vmatprep.mubr.bf16.mxu0 0
      %616 = vmatmul.mubr.bf16.gmra.mxu0 %v567
      %v617 = vpop.f32.mrf.mxu0
      %v618 = vadd.f32 0.0, %v617
      %v619 = vpop.f32.mrf.mxu0
      %v620 = vpop.f32.mrf.mxu0
      %v621 = vadd.f32 0.0, %v620
      %v622 = vpop.f32.mrf.mxu0
      %623 = vmatprep.mubr.bf16.mxu0 0
      %624 = vmatmul.mubr.bf16.gmra.mxu0 %v570
      %v625 = vpop.f32.mrf.mxu0
      %v626 = vadd.f32 0.0, %v625
      %v627 = vpop.f32.mrf.mxu0
      %v628 = vpop.f32.mrf.mxu0
      %v629 = vadd.f32 0.0, %v628
      %v630 = vpop.f32.mrf.mxu0
      %631 = vmatprep.mubr.bf16.mxu0 0
      %632 = vmatmul.mubr.bf16.gmra.mxu0 %v573
      %v633 = vpop.f32.mrf.mxu0
      %v634 = vadd.f32 0.0, %v633
      %v635 = vpop.f32.mrf.mxu0
      %v636 = vpop.f32.mrf.mxu0
      %v637 = vadd.f32 0.0, %v636
      %v638 = vpop.f32.mrf.mxu0
      %639 = vdwg.mxu0
      %v640 = vadd.f32 %v510, %v610
      %v641 = vadd.f32 %v511, %v613
      %v642 = vadd.f32 %v512, %v618
      %v643 = vadd.f32 %v513, %v621
      %v644 = vadd.f32 %v514, %v626
      %v645 = vadd.f32 %v515, %v629
      %v646 = vadd.f32 %v516, %v634
      %v647 = vadd.f32 %v517, %v637
      %s648 = scalar_lea.vmem %s138, 432
      %v649 = vld [vmem:[%s648] sm:$0xff]
      %v650 = vld [vmem:[%s648 + $0x10] sm:$0xff]
      %v651 = vld [vmem:[%s648 + $0x20] sm:$0xff]
      %v652 = vld [vmem:[%s648 + $0x30] sm:$0xff]
      %v653 = vld [vmem:[%s648 + $0x40] sm:$0xff]
      %v654 = vld [vmem:[%s648 + $0x50] sm:$0xff]
      %v655 = vld [vmem:[%s648 + $0x60] sm:$0xff]
      %v656 = vld [vmem:[%s648 + $0x70] sm:$0xff]
      %v657 = vpack.c.bf16 %v650, %v649
      %v658 = vpack.c.bf16 %v652, %v651
      %v659 = vpack.c.bf16 %v654, %v653
      %v660 = vpack.c.bf16 %v656, %v655
      %v661 = vld [vmem:[%s1 + $0x80] sm:$0xf]
      %v662 = vld [vmem:[%s1 + $0x84] sm:$0xf]
      %v663 = vld [vmem:[%s1 + $0x88] sm:$0xf]
      %v664 = vld [vmem:[%s1 + $0x8c] sm:$0xf]
      %v665 = vld [vmem:[%s1 + $0x90] sm:$0xf]
      %v666 = vld [vmem:[%s1 + $0x94] sm:$0xf]
      %v667 = vld [vmem:[%s1 + $0x98] sm:$0xf]
      %v668 = vld [vmem:[%s1 + $0x9c] sm:$0xf]
      %v677 = vunpack.c.l.b16 %v661
      %v678 = vunpack.c.l.b16 %v662
      %v679 = vunpack.c.l.b16 %v663
      %v680 = vunpack.c.l.b16 %v664
      %v681 = vunpack.c.l.b16 %v665
      %v682 = vunpack.c.l.b16 %v666
      %v683 = vunpack.c.l.b16 %v667
      %v684 = vunpack.c.l.b16 %v668
      %v685 = vpack.c.b16 %v678, %v677
      %v686 = vpack.c.b16 %v680, %v679
      %v687 = vpack.c.b16 %v682, %v681
      %v688 = vpack.c.b16 %v684, %v683
      %v694 = vsel %vm210, %v657, 0
      %v697 = vsel %vm210, %v658, 0
      %v700 = vsel %vm210, %v659, 0
      %v703 = vsel %vm210, %v660, 0
      %705 = vmatprep.subr.bf16.mxu0 0
      %706 = vmatpush1.bf16.msra.mxu0 0
      %707 = vmatprep.subr.bf16.mxu0 0
      %708 = vmatpush1.bf16.msra.mxu0 0
      %709 = vmatprep.subr.bf16.mxu0 0
      %710 = vmatpush1.bf16.msra.mxu0 0
      %711 = vmatprep.subr.bf16.mxu0 0
      %712 = vmatpush1.bf16.msra.mxu0 0
      %713 = vmatprep.subr.bf16.mxu0 0
      %714 = vmatpush1.bf16.msra.mxu0 %v688
      %715 = vmatprep.subr.bf16.mxu0 0
      %716 = vmatpush1.bf16.msra.mxu0 %v687
      %717 = vmatprep.subr.bf16.mxu0 0
      %718 = vmatpush1.bf16.msra.mxu0 %v686
      %719 = vmatprep.subr.bf16.mxu0 0
      %720 = vmatpush1.bf16.msra.mxu0 %v685
      %721 = vmatprep.subr.bf16.mxu0 0
      %722 = vmatpush2.bf16.msra.mxu0 0
      %723 = vmatprep.subr.bf16.mxu0 0
      %724 = vmatpush2.bf16.msra.mxu0 0
      %725 = vmatprep.subr.bf16.mxu0 0
      %726 = vmatpush2.bf16.msra.mxu0 0
      %727 = vmatprep.subr.bf16.mxu0 0
      %728 = vmatpush2.bf16.msra.mxu0 0
      %729 = vmatprep.subr.bf16.mxu0 0
      %730 = vmatpush2.bf16.msra.mxu0 0
      %731 = vmatprep.subr.bf16.mxu0 0
      %732 = vmatpush2.bf16.msra.mxu0 0
      %733 = vmatprep.subr.bf16.mxu0 0
      %734 = vmatpush2.bf16.msra.mxu0 0
      %735 = vmatprep.subr.bf16.mxu0 0
      %736 = vmatpush2.bf16.msra.mxu0 0
      %737 = vmatprep.mubr.bf16.mxu0 0
      %738 = vmatmul.mubr.bf16.gmra.mxu0 %v694
      %v739 = vpop.f32.mrf.mxu0
      %v740 = vadd.f32 0.0, %v739
      %v741 = vpop.f32.mrf.mxu0
      %v742 = vpop.f32.mrf.mxu0
      %v743 = vadd.f32 0.0, %v742
      %v744 = vpop.f32.mrf.mxu0
      %745 = vmatprep.mubr.bf16.mxu0 0
      %746 = vmatmul.mubr.bf16.gmra.mxu0 %v697
      %v747 = vpop.f32.mrf.mxu0
      %v748 = vadd.f32 0.0, %v747
      %v749 = vpop.f32.mrf.mxu0
      %v750 = vpop.f32.mrf.mxu0
      %v751 = vadd.f32 0.0, %v750
      %v752 = vpop.f32.mrf.mxu0
      %753 = vmatprep.mubr.bf16.mxu0 0
      %754 = vmatmul.mubr.bf16.gmra.mxu0 %v700
      %v755 = vpop.f32.mrf.mxu0
      %v756 = vadd.f32 0.0, %v755
      %v757 = vpop.f32.mrf.mxu0
      %v758 = vpop.f32.mrf.mxu0
      %v759 = vadd.f32 0.0, %v758
      %v760 = vpop.f32.mrf.mxu0
      %761 = vmatprep.mubr.bf16.mxu0 0
      %762 = vmatmul.mubr.bf16.gmra.mxu0 %v703
      %v763 = vpop.f32.mrf.mxu0
      %v764 = vadd.f32 0.0, %v763
      %v765 = vpop.f32.mrf.mxu0
      %v766 = vpop.f32.mrf.mxu0
      %v767 = vadd.f32 0.0, %v766
      %v768 = vpop.f32.mrf.mxu0
      %769 = vdwg.mxu0
      %v770 = vadd.f32 %v640, %v740
      %v771 = vadd.f32 %v641, %v743
      %v772 = vadd.f32 %v642, %v748
      %v773 = vadd.f32 %v643, %v751
      %v774 = vadd.f32 %v644, %v756
      %v775 = vadd.f32 %v645, %v759
      %v776 = vadd.f32 %v646, %v764
      %v777 = vadd.f32 %v647, %v767
      %v778 = vld [vmem:[%s518 + $0x1] sm:$0xff]
      %v779 = vld [vmem:[%s518 + $0x11] sm:$0xff]
      %v780 = vld [vmem:[%s518 + $0x21] sm:$0xff]
      %v781 = vld [vmem:[%s518 + $0x31] sm:$0xff]
      %v782 = vld [vmem:[%s518 + $0x41] sm:$0xff]
      %v783 = vld [vmem:[%s518 + $0x51] sm:$0xff]
      %v784 = vld [vmem:[%s518 + $0x61] sm:$0xff]
      %v785 = vld [vmem:[%s518 + $0x71] sm:$0xff]
      %v786 = vpack.c.bf16 %v779, %v778
      %v787 = vpack.c.bf16 %v781, %v780
      %v788 = vpack.c.bf16 %v783, %v782
      %v789 = vpack.c.bf16 %v785, %v784
      %v790 = vld [vmem:[%s1 + $0xa0] sm:$0xf]
      %v791 = vld [vmem:[%s1 + $0xa4] sm:$0xf]
      %v792 = vld [vmem:[%s1 + $0xa8] sm:$0xf]
      %v793 = vld [vmem:[%s1 + $0xac] sm:$0xf]
      %v794 = vld [vmem:[%s1 + $0xb0] sm:$0xf]
      %v795 = vld [vmem:[%s1 + $0xb4] sm:$0xf]
      %v796 = vld [vmem:[%s1 + $0xb8] sm:$0xf]
      %v797 = vld [vmem:[%s1 + $0xbc] sm:$0xf]
      %v806 = vunpack.c.l.b16 %v790
      %v807 = vunpack.c.l.b16 %v791
      %v808 = vunpack.c.l.b16 %v792
      %v809 = vunpack.c.l.b16 %v793
      %v810 = vunpack.c.l.b16 %v794
      %v811 = vunpack.c.l.b16 %v795
      %v812 = vunpack.c.l.b16 %v796
      %v813 = vunpack.c.l.b16 %v797
      %v814 = vpack.c.b16 %v807, %v806
      %v815 = vpack.c.b16 %v809, %v808
      %v816 = vpack.c.b16 %v811, %v810
      %v817 = vpack.c.b16 %v813, %v812
      %v823 = vsel %vm210, %v786, 0
      %v826 = vsel %vm210, %v787, 0
      %v829 = vsel %vm210, %v788, 0
      %v832 = vsel %vm210, %v789, 0
      %834 = vmatprep.subr.bf16.mxu0 0
      %835 = vmatpush1.bf16.msra.mxu0 0
      %836 = vmatprep.subr.bf16.mxu0 0
      %837 = vmatpush1.bf16.msra.mxu0 0
      %838 = vmatprep.subr.bf16.mxu0 0
      %839 = vmatpush1.bf16.msra.mxu0 0
      %840 = vmatprep.subr.bf16.mxu0 0
      %841 = vmatpush1.bf16.msra.mxu0 0
      %842 = vmatprep.subr.bf16.mxu0 0
      %843 = vmatpush1.bf16.msra.mxu0 %v817
      %844 = vmatprep.subr.bf16.mxu0 0
      %845 = vmatpush1.bf16.msra.mxu0 %v816
      %846 = vmatprep.subr.bf16.mxu0 0
      %847 = vmatpush1.bf16.msra.mxu0 %v815
      %848 = vmatprep.subr.bf16.mxu0 0
      %849 = vmatpush1.bf16.msra.mxu0 %v814
      %850 = vmatprep.subr.bf16.mxu0 0
      %851 = vmatpush2.bf16.msra.mxu0 0
      %852 = vmatprep.subr.bf16.mxu0 0
      %853 = vmatpush2.bf16.msra.mxu0 0
      %854 = vmatprep.subr.bf16.mxu0 0
      %855 = vmatpush2.bf16.msra.mxu0 0
      %856 = vmatprep.subr.bf16.mxu0 0
      %857 = vmatpush2.bf16.msra.mxu0 0
      %858 = vmatprep.subr.bf16.mxu0 0
      %859 = vmatpush2.bf16.msra.mxu0 0
      %860 = vmatprep.subr.bf16.mxu0 0
      %861 = vmatpush2.bf16.msra.mxu0 0
      %862 = vmatprep.subr.bf16.mxu0 0
      %863 = vmatpush2.bf16.msra.mxu0 0
      %864 = vmatprep.subr.bf16.mxu0 0
      %865 = vmatpush2.bf16.msra.mxu0 0
      %866 = vmatprep.mubr.bf16.mxu0 0
      %867 = vmatmul.mubr.bf16.gmra.mxu0 %v823
      %v868 = vpop.f32.mrf.mxu0
      %v869 = vadd.f32 0.0, %v868
      %v870 = vpop.f32.mrf.mxu0
      %v871 = vpop.f32.mrf.mxu0
      %v872 = vadd.f32 0.0, %v871
      %v873 = vpop.f32.mrf.mxu0
      %874 = vmatprep.mubr.bf16.mxu0 0
      %875 = vmatmul.mubr.bf16.gmra.mxu0 %v826
      %v876 = vpop.f32.mrf.mxu0
      %v877 = vadd.f32 0.0, %v876
      %v878 = vpop.f32.mrf.mxu0
      %v879 = vpop.f32.mrf.mxu0
      %v880 = vadd.f32 0.0, %v879
      %v881 = vpop.f32.mrf.mxu0
      %882 = vmatprep.mubr.bf16.mxu0 0
      %883 = vmatmul.mubr.bf16.gmra.mxu0 %v829
      %v884 = vpop.f32.mrf.mxu0
      %v885 = vadd.f32 0.0, %v884
      %v886 = vpop.f32.mrf.mxu0
      %v887 = vpop.f32.mrf.mxu0
      %v888 = vadd.f32 0.0, %v887
      %v889 = vpop.f32.mrf.mxu0
      %890 = vmatprep.mubr.bf16.mxu0 0
      %891 = vmatmul.mubr.bf16.gmra.mxu0 %v832
      %v892 = vpop.f32.mrf.mxu0
      %v893 = vadd.f32 0.0, %v892
      %v894 = vpop.f32.mrf.mxu0
      %v895 = vpop.f32.mrf.mxu0
      %v896 = vadd.f32 0.0, %v895
      %v897 = vpop.f32.mrf.mxu0
      %898 = vdwg.mxu0
      %v899 = vadd.f32 %v770, %v869
      %v900 = vadd.f32 %v771, %v872
      %v901 = vadd.f32 %v772, %v877
      %v902 = vadd.f32 %v773, %v880
      %v903 = vadd.f32 %v774, %v885
      %v904 = vadd.f32 %v775, %v888
      %v905 = vadd.f32 %v776, %v893
      %v906 = vadd.f32 %v777, %v896
      %s907 = scalar_lea.vmem %s138, 16
      %v908 = vld [vmem:[%s907] sm:$0xff]
      %v909 = vld [vmem:[%s907 + $0x10] sm:$0xff]
      %v910 = vld [vmem:[%s907 + $0x20] sm:$0xff]
      %v911 = vld [vmem:[%s907 + $0x30] sm:$0xff]
      %v912 = vld [vmem:[%s907 + $0x40] sm:$0xff]
      %v913 = vld [vmem:[%s907 + $0x50] sm:$0xff]
      %v914 = vld [vmem:[%s907 + $0x60] sm:$0xff]
      %v915 = vld [vmem:[%s907 + $0x70] sm:$0xff]
      %v916 = vpack.c.bf16 %v909, %v908
      %v917 = vpack.c.bf16 %v911, %v910
      %v918 = vpack.c.bf16 %v913, %v912
      %v919 = vpack.c.bf16 %v915, %v914
      %v920 = vld [vmem:[%s1 + $0xc0] sm:$0xf]
      %v921 = vld [vmem:[%s1 + $0xc4] sm:$0xf]
      %v922 = vld [vmem:[%s1 + $0xc8] sm:$0xf]
      %v923 = vld [vmem:[%s1 + $0xcc] sm:$0xf]
      %v924 = vld [vmem:[%s1 + $0xd0] sm:$0xf]
      %v925 = vld [vmem:[%s1 + $0xd4] sm:$0xf]
      %v926 = vld [vmem:[%s1 + $0xd8] sm:$0xf]
      %v927 = vld [vmem:[%s1 + $0xdc] sm:$0xf]
      %v936 = vunpack.c.l.b16 %v920
      %v937 = vunpack.c.l.b16 %v921
      %v938 = vunpack.c.l.b16 %v922
      %v939 = vunpack.c.l.b16 %v923
      %v940 = vunpack.c.l.b16 %v924
      %v941 = vunpack.c.l.b16 %v925
      %v942 = vunpack.c.l.b16 %v926
      %v943 = vunpack.c.l.b16 %v927
      %v944 = vpack.c.b16 %v937, %v936
      %v945 = vpack.c.b16 %v939, %v938
      %v946 = vpack.c.b16 %v941, %v940
      %v947 = vpack.c.b16 %v943, %v942
      %v953 = vsel %vm210, %v916, 0
      %v956 = vsel %vm210, %v917, 0
      %v959 = vsel %vm210, %v918, 0
      %v962 = vsel %vm210, %v919, 0
      %964 = vmatprep.subr.bf16.mxu0 0
      %965 = vmatpush1.bf16.msra.mxu0 0
      %966 = vmatprep.subr.bf16.mxu0 0
      %967 = vmatpush1.bf16.msra.mxu0 0
      %968 = vmatprep.subr.bf16.mxu0 0
      %969 = vmatpush1.bf16.msra.mxu0 0
      %970 = vmatprep.subr.bf16.mxu0 0
      %971 = vmatpush1.bf16.msra.mxu0 0
      %972 = vmatprep.subr.bf16.mxu0 0
      %973 = vmatpush1.bf16.msra.mxu0 %v947
      %974 = vmatprep.subr.bf16.mxu0 0
      %975 = vmatpush1.bf16.msra.mxu0 %v946
      %976 = vmatprep.subr.bf16.mxu0 0
      %977 = vmatpush1.bf16.msra.mxu0 %v945
      %978 = vmatprep.subr.bf16.mxu0 0
      %979 = vmatpush1.bf16.msra.mxu0 %v944
      %980 = vmatprep.subr.bf16.mxu0 0
      %981 = vmatpush2.bf16.msra.mxu0 0
      %982 = vmatprep.subr.bf16.mxu0 0
      %983 = vmatpush2.bf16.msra.mxu0 0
      %984 = vmatprep.subr.bf16.mxu0 0
      %985 = vmatpush2.bf16.msra.mxu0 0
      %986 = vmatprep.subr.bf16.mxu0 0
      %987 = vmatpush2.bf16.msra.mxu0 0
      %988 = vmatprep.subr.bf16.mxu0 0
      %989 = vmatpush2.bf16.msra.mxu0 0
      %990 = vmatprep.subr.bf16.mxu0 0
      %991 = vmatpush2.bf16.msra.mxu0 0
      %992 = vmatprep.subr.bf16.mxu0 0
      %993 = vmatpush2.bf16.msra.mxu0 0
      %994 = vmatprep.subr.bf16.mxu0 0
      %995 = vmatpush2.bf16.msra.mxu0 0
      %996 = vmatprep.mubr.bf16.mxu0 0
      %997 = vmatmul.mubr.bf16.gmra.mxu0 %v953
      %v998 = vpop.f32.mrf.mxu0
      %v999 = vadd.f32 0.0, %v998
      %v1000 = vpop.f32.mrf.mxu0
      %v1001 = vpop.f32.mrf.mxu0
      %v1002 = vadd.f32 0.0, %v1001
      %v1003 = vpop.f32.mrf.mxu0
      %1004 = vmatprep.mubr.bf16.mxu0 0
      %1005 = vmatmul.mubr.bf16.gmra.mxu0 %v956
      %v1006 = vpop.f32.mrf.mxu0
      %v1007 = vadd.f32 0.0, %v1006
      %v1008 = vpop.f32.mrf.mxu0
      %v1009 = vpop.f32.mrf.mxu0
      %v1010 = vadd.f32 0.0, %v1009
      %v1011 = vpop.f32.mrf.mxu0
      %1012 = vmatprep.mubr.bf16.mxu0 0
      %1013 = vmatmul.mubr.bf16.gmra.mxu0 %v959
      %v1014 = vpop.f32.mrf.mxu0
      %v1015 = vadd.f32 0.0, %v1014
      %v1016 = vpop.f32.mrf.mxu0
      %v1017 = vpop.f32.mrf.mxu0
      %v1018 = vadd.f32 0.0, %v1017
      %v1019 = vpop.f32.mrf.mxu0
      %1020 = vmatprep.mubr.bf16.mxu0 0
      %1021 = vmatmul.mubr.bf16.gmra.mxu0 %v962
      %v1022 = vpop.f32.mrf.mxu0
      %v1023 = vadd.f32 0.0, %v1022
      %v1024 = vpop.f32.mrf.mxu0
      %v1025 = vpop.f32.mrf.mxu0
      %v1026 = vadd.f32 0.0, %v1025
      %v1027 = vpop.f32.mrf.mxu0
      %1028 = vdwg.mxu0
      %v1029 = vadd.f32 %v899, %v999
      %v1030 = vadd.f32 %v900, %v1002
      %v1031 = vadd.f32 %v901, %v1007
      %v1032 = vadd.f32 %v902, %v1010
      %v1033 = vadd.f32 %v903, %v1015
      %v1034 = vadd.f32 %v904, %v1018
      %v1035 = vadd.f32 %v905, %v1023
      %v1036 = vadd.f32 %v906, %v1026
      %s1037 = scalar_lea.vmem %s138, 160
      %v1038 = vld [vmem:[%s1037] sm:$0xff]
      %v1039 = vld [vmem:[%s1037 + $0x10] sm:$0xff]
      %v1040 = vld [vmem:[%s1037 + $0x20] sm:$0xff]
      %v1041 = vld [vmem:[%s1037 + $0x30] sm:$0xff]
      %v1042 = vld [vmem:[%s1037 + $0x40] sm:$0xff]
      %v1043 = vld [vmem:[%s1037 + $0x50] sm:$0xff]
      %v1044 = vld [vmem:[%s1037 + $0x60] sm:$0xff]
      %v1045 = vld [vmem:[%s1037 + $0x70] sm:$0xff]
      %v1046 = vpack.c.bf16 %v1039, %v1038
      %v1047 = vpack.c.bf16 %v1041, %v1040
      %v1048 = vpack.c.bf16 %v1043, %v1042
      %v1049 = vpack.c.bf16 %v1045, %v1044
      %v1050 = vld [vmem:[%s1 + $0xe0] sm:$0xf]
      %v1051 = vld [vmem:[%s1 + $0xe4] sm:$0xf]
      %v1052 = vld [vmem:[%s1 + $0xe8] sm:$0xf]
      %v1053 = vld [vmem:[%s1 + $0xec] sm:$0xf]
      %v1054 = vld [vmem:[%s1 + $0xf0] sm:$0xf]
      %v1055 = vld [vmem:[%s1 + $0xf4] sm:$0xf]
      %v1056 = vld [vmem:[%s1 + $0xf8] sm:$0xf]
      %v1057 = vld [vmem:[%s1 + $0xfc] sm:$0xf]
      %v1066 = vunpack.c.l.b16 %v1050
      %v1067 = vunpack.c.l.b16 %v1051
      %v1068 = vunpack.c.l.b16 %v1052
      %v1069 = vunpack.c.l.b16 %v1053
      %v1070 = vunpack.c.l.b16 %v1054
      %v1071 = vunpack.c.l.b16 %v1055
      %v1072 = vunpack.c.l.b16 %v1056
      %v1073 = vunpack.c.l.b16 %v1057
      %v1074 = vpack.c.b16 %v1067, %v1066
      %v1075 = vpack.c.b16 %v1069, %v1068
      %v1076 = vpack.c.b16 %v1071, %v1070
      %v1077 = vpack.c.b16 %v1073, %v1072
      %v1083 = vsel %vm210, %v1046, 0
      %v1086 = vsel %vm210, %v1047, 0
      %v1089 = vsel %vm210, %v1048, 0
      %v1092 = vsel %vm210, %v1049, 0
      %1094 = vmatprep.subr.bf16.mxu0 0
      %1095 = vmatpush1.bf16.msra.mxu0 0
      %1096 = vmatprep.subr.bf16.mxu0 0
      %1097 = vmatpush1.bf16.msra.mxu0 0
      %1098 = vmatprep.subr.bf16.mxu0 0
      %1099 = vmatpush1.bf16.msra.mxu0 0
      %1100 = vmatprep.subr.bf16.mxu0 0
      %1101 = vmatpush1.bf16.msra.mxu0 0
      %1102 = vmatprep.subr.bf16.mxu0 0
      %1103 = vmatpush1.bf16.msra.mxu0 %v1077
      %1104 = vmatprep.subr.bf16.mxu0 0
      %1105 = vmatpush1.bf16.msra.mxu0 %v1076
      %1106 = vmatprep.subr.bf16.mxu0 0
      %1107 = vmatpush1.bf16.msra.mxu0 %v1075
      %1108 = vmatprep.subr.bf16.mxu0 0
      %1109 = vmatpush1.bf16.msra.mxu0 %v1074
      %1110 = vmatprep.subr.bf16.mxu0 0
      %1111 = vmatpush2.bf16.msra.mxu0 0
      %1112 = vmatprep.subr.bf16.mxu0 0
      %1113 = vmatpush2.bf16.msra.mxu0 0
      %1114 = vmatprep.subr.bf16.mxu0 0
      %1115 = vmatpush2.bf16.msra.mxu0 0
      %1116 = vmatprep.subr.bf16.mxu0 0
      %1117 = vmatpush2.bf16.msra.mxu0 0
      %1118 = vmatprep.subr.bf16.mxu0 0
      %1119 = vmatpush2.bf16.msra.mxu0 0
      %1120 = vmatprep.subr.bf16.mxu0 0
      %1121 = vmatpush2.bf16.msra.mxu0 0
      %1122 = vmatprep.subr.bf16.mxu0 0
      %1123 = vmatpush2.bf16.msra.mxu0 0
      %1124 = vmatprep.subr.bf16.mxu0 0
      %1125 = vmatpush2.bf16.msra.mxu0 0
      %1126 = vmatprep.mubr.bf16.mxu0 0
      %1127 = vmatmul.mubr.bf16.gmra.mxu0 %v1083
      %v1128 = vpop.f32.mrf.mxu0
      %v1129 = vadd.f32 0.0, %v1128
      %v1130 = vpop.f32.mrf.mxu0
      %v1131 = vpop.f32.mrf.mxu0
      %v1132 = vadd.f32 0.0, %v1131
      %v1133 = vpop.f32.mrf.mxu0
      %1134 = vmatprep.mubr.bf16.mxu0 0
      %1135 = vmatmul.mubr.bf16.gmra.mxu0 %v1086
      %v1136 = vpop.f32.mrf.mxu0
      %v1137 = vadd.f32 0.0, %v1136
      %v1138 = vpop.f32.mrf.mxu0
      %v1139 = vpop.f32.mrf.mxu0
      %v1140 = vadd.f32 0.0, %v1139
      %v1141 = vpop.f32.mrf.mxu0
      %1142 = vmatprep.mubr.bf16.mxu0 0
      %1143 = vmatmul.mubr.bf16.gmra.mxu0 %v1089
      %v1144 = vpop.f32.mrf.mxu0
      %v1145 = vadd.f32 0.0, %v1144
      %v1146 = vpop.f32.mrf.mxu0
      %v1147 = vpop.f32.mrf.mxu0
      %v1148 = vadd.f32 0.0, %v1147
      %v1149 = vpop.f32.mrf.mxu0
      %1150 = vmatprep.mubr.bf16.mxu0 0
      %1151 = vmatmul.mubr.bf16.gmra.mxu0 %v1092
      %v1152 = vpop.f32.mrf.mxu0
      %v1153 = vadd.f32 0.0, %v1152
      %v1154 = vpop.f32.mrf.mxu0
      %v1155 = vpop.f32.mrf.mxu0
      %v1156 = vadd.f32 0.0, %v1155
      %v1157 = vpop.f32.mrf.mxu0
      %1158 = vdwg.mxu0
      %v1159 = vadd.f32 %v1029, %v1129
      %v1160 = vadd.f32 %v1030, %v1132
      %v1161 = vadd.f32 %v1031, %v1137
      %v1162 = vadd.f32 %v1032, %v1140
      %v1163 = vadd.f32 %v1033, %v1145
      %v1164 = vadd.f32 %v1034, %v1148
      %v1165 = vadd.f32 %v1035, %v1153
      %v1166 = vadd.f32 %v1036, %v1156
      %v1167 = vld [vmem:[%s907 + $0x1] sm:$0xff]
      %v1168 = vld [vmem:[%s907 + $0x11] sm:$0xff]
      %v1169 = vld [vmem:[%s907 + $0x21] sm:$0xff]
      %v1170 = vld [vmem:[%s907 + $0x31] sm:$0xff]
      %v1171 = vld [vmem:[%s907 + $0x41] sm:$0xff]
      %v1172 = vld [vmem:[%s907 + $0x51] sm:$0xff]
      %v1173 = vld [vmem:[%s907 + $0x61] sm:$0xff]
      %v1174 = vld [vmem:[%s907 + $0x71] sm:$0xff]
      %v1175 = vpack.c.bf16 %v1168, %v1167
      %v1176 = vpack.c.bf16 %v1170, %v1169
      %v1177 = vpack.c.bf16 %v1172, %v1171
      %v1178 = vpack.c.bf16 %v1174, %v1173
      %v1179 = vld [vmem:[%s1 + $0x100] sm:$0xf]
      %v1180 = vld [vmem:[%s1 + $0x104] sm:$0xf]
      %v1181 = vld [vmem:[%s1 + $0x108] sm:$0xf]
      %v1182 = vld [vmem:[%s1 + $0x10c] sm:$0xf]
      %v1183 = vld [vmem:[%s1 + $0x110] sm:$0xf]
      %v1184 = vld [vmem:[%s1 + $0x114] sm:$0xf]
      %v1185 = vld [vmem:[%s1 + $0x118] sm:$0xf]
      %v1186 = vld [vmem:[%s1 + $0x11c] sm:$0xf]
      %v1195 = vunpack.c.l.b16 %v1179
      %v1196 = vunpack.c.l.b16 %v1180
      %v1197 = vunpack.c.l.b16 %v1181
      %v1198 = vunpack.c.l.b16 %v1182
      %v1199 = vunpack.c.l.b16 %v1183
      %v1200 = vunpack.c.l.b16 %v1184
      %v1201 = vunpack.c.l.b16 %v1185
      %v1202 = vunpack.c.l.b16 %v1186
      %v1203 = vpack.c.b16 %v1196, %v1195
      %v1204 = vpack.c.b16 %v1198, %v1197
      %v1205 = vpack.c.b16 %v1200, %v1199
      %v1206 = vpack.c.b16 %v1202, %v1201
      %v1212 = vsel %vm210, %v1175, 0
      %v1215 = vsel %vm210, %v1176, 0
      %v1218 = vsel %vm210, %v1177, 0
      %v1221 = vsel %vm210, %v1178, 0
      %1223 = vmatprep.subr.bf16.mxu0 0
      %1224 = vmatpush1.bf16.msra.mxu0 0
      %1225 = vmatprep.subr.bf16.mxu0 0
      %1226 = vmatpush1.bf16.msra.mxu0 0
      %1227 = vmatprep.subr.bf16.mxu0 0
      %1228 = vmatpush1.bf16.msra.mxu0 0
      %1229 = vmatprep.subr.bf16.mxu0 0
      %1230 = vmatpush1.bf16.msra.mxu0 0
      %1231 = vmatprep.subr.bf16.mxu0 0
      %1232 = vmatpush1.bf16.msra.mxu0 %v1206
      %1233 = vmatprep.subr.bf16.mxu0 0
      %1234 = vmatpush1.bf16.msra.mxu0 %v1205
      %1235 = vmatprep.subr.bf16.mxu0 0
      %1236 = vmatpush1.bf16.msra.mxu0 %v1204
      %1237 = vmatprep.subr.bf16.mxu0 0
      %1238 = vmatpush1.bf16.msra.mxu0 %v1203
      %1239 = vmatprep.subr.bf16.mxu0 0
      %1240 = vmatpush2.bf16.msra.mxu0 0
      %1241 = vmatprep.subr.bf16.mxu0 0
      %1242 = vmatpush2.bf16.msra.mxu0 0
      %1243 = vmatprep.subr.bf16.mxu0 0
      %1244 = vmatpush2.bf16.msra.mxu0 0
      %1245 = vmatprep.subr.bf16.mxu0 0
      %1246 = vmatpush2.bf16.msra.mxu0 0
      %1247 = vmatprep.subr.bf16.mxu0 0
      %1248 = vmatpush2.bf16.msra.mxu0 0
      %1249 = vmatprep.subr.bf16.mxu0 0
      %1250 = vmatpush2.bf16.msra.mxu0 0
      %1251 = vmatprep.subr.bf16.mxu0 0
      %1252 = vmatpush2.bf16.msra.mxu0 0
      %1253 = vmatprep.subr.bf16.mxu0 0
      %1254 = vmatpush2.bf16.msra.mxu0 0
      %1255 = vmatprep.mubr.bf16.mxu0 0
      %1256 = vmatmul.mubr.bf16.gmra.mxu0 %v1212
      %v1257 = vpop.f32.mrf.mxu0
      %v1258 = vadd.f32 0.0, %v1257
      %v1259 = vpop.f32.mrf.mxu0
      %v1260 = vpop.f32.mrf.mxu0
      %v1261 = vadd.f32 0.0, %v1260
      %v1262 = vpop.f32.mrf.mxu0
      %1263 = vmatprep.mubr.bf16.mxu0 0
      %1264 = vmatmul.mubr.bf16.gmra.mxu0 %v1215
      %v1265 = vpop.f32.mrf.mxu0
      %v1266 = vadd.f32 0.0, %v1265
      %v1267 = vpop.f32.mrf.mxu0
      %v1268 = vpop.f32.mrf.mxu0
      %v1269 = vadd.f32 0.0, %v1268
      %v1270 = vpop.f32.mrf.mxu0
      %1271 = vmatprep.mubr.bf16.mxu0 0
      %1272 = vmatmul.mubr.bf16.gmra.mxu0 %v1218
      %v1273 = vpop.f32.mrf.mxu0
      %v1274 = vadd.f32 0.0, %v1273
      %v1275 = vpop.f32.mrf.mxu0
      %v1276 = vpop.f32.mrf.mxu0
      %v1277 = vadd.f32 0.0, %v1276
      %v1278 = vpop.f32.mrf.mxu0
      %1279 = vmatprep.mubr.bf16.mxu0 0
      %1280 = vmatmul.mubr.bf16.gmra.mxu0 %v1221
      %v1281 = vpop.f32.mrf.mxu0
      %v1282 = vadd.f32 0.0, %v1281
      %v1283 = vpop.f32.mrf.mxu0
      %v1284 = vpop.f32.mrf.mxu0
      %v1285 = vadd.f32 0.0, %v1284
      %v1286 = vpop.f32.mrf.mxu0
      %1287 = vdwg.mxu0
      %v1288 = vadd.f32 %v1159, %v1258
      %v1289 = vadd.f32 %v1160, %v1261
      %v1290 = vadd.f32 %v1161, %v1266
      %v1291 = vadd.f32 %v1162, %v1269
      %v1292 = vadd.f32 %v1163, %v1274
      %v1293 = vadd.f32 %v1164, %v1277
      %v1294 = vadd.f32 %v1165, %v1282
      %v1295 = vadd.f32 %v1166, %v1285
      %1296 = vst.msk [vmem:[%s143] sm:$0xff] %vm210, %v1288
      %1297 = vst.msk [vmem:[%s143 + $0x8] sm:$0xff] %vm210, %v1289
      %1298 = vst.msk [vmem:[%s143 + $0x10] sm:$0xff] %vm210, %v1290
      %1299 = vst.msk [vmem:[%s143 + $0x18] sm:$0xff] %vm210, %v1291
      %1300 = vst.msk [vmem:[%s143 + $0x20] sm:$0xff] %vm210, %v1292
      %1301 = vst.msk [vmem:[%s143 + $0x28] sm:$0xff] %vm210, %v1293
      %1302 = vst.msk [vmem:[%s143 + $0x30] sm:$0xff] %vm210, %v1294
      %1303 = vst.msk [vmem:[%s143 + $0x38] sm:$0xff] %vm210, %v1295
      %p1304 = scmp.lt.s32.totalorder %s13, 1
      %s1305 = scalar_select %p1304, %s13, 1
      %s1306 = smul.addr %s1305, 8
      %s1307 = smul.addr %s1306, 8
      %s1308 = scalar_lea.vmem %s2, %s1307
      // Predicated region
      $region29: #{bottleneck_ir_sam_forward.9} parent=27 // pred_check
        %p1309 = pneg %p78
      $region30: #{bottleneck_ir_sam_forward.9} parent=27 // pred_check_branch
        %1311 = sbr.rel (%p1309) target = $region32
      $region31: #{bottleneck_ir_sam_forward.9} parent=27 // pred_region
        _
      $region32: #{bottleneck_ir_sam_forward.9} parent=27 // pred_fallthru
        _
    $region28: #{bottleneck_ir_sam_forward.9} parent=5 // pred_fallthru
      _
    %p1312 = scmp.le.s32.totalorder 2, %s8
    // Predicated region
    $region33: #{bottleneck_ir_sam_forward.9} parent=5 // pred_check
      %p1313 = pneg %p1312
    $region34: #{bottleneck_ir_sam_forward.9} parent=5 // pred_check_branch
      %1315 = sbr.rel (%p1313) target = $region36
    $region35: #{bottleneck_ir_sam_forward.9} parent=5 // pred_region
      %s1316 = ssub.s32 %s8, 2
      // Predicated region
      $region37: #{bottleneck_ir_sam_forward.9} parent=35 // pred_check
        %p1317 = pneg %p84
      $region38: #{bottleneck_ir_sam_forward.9} parent=35 // pred_check_branch
        %1319 = sbr.rel (%p1317) target = $region40
      $region39: #{bottleneck_ir_sam_forward.9} parent=35 // pred_region
        %p1320 = scmp.lt.s32.totalorder %s14, 1
        %s1321 = scalar_select %p1320, %s14, 1
        %s1322 = smul.addr %s1321, 8
        %s1323 = smul.addr %s1322, 8
        %s1324 = scalar_lea.vmem %s2, %s1323
      $region40: #{bottleneck_ir_sam_forward.9} parent=35 // pred_fallthru
        _
    $region36: #{bottleneck_ir_sam_forward.9} parent=5 // pred_fallthru
      _
  $region6: #{bottleneck_ir_sam_forward.9} parent=0 // loop_footer
    %s12 = sadd.s32 1, %s8
  $region7: #{bottleneck_ir_sam_forward.9} parent=0 // loop_footer_branch
    %7 = sbr.rel target = $region3
  $region8: #{bottleneck_ir_sam_forward.9} parent=0 // loop_exit
    _

// kernel: bottleneck_ir_sam_forward.11
$region0: #{bottleneck_ir_sam_forward.11}
  #allocation0 [shape = 'u32[]', space=smem, size = 0x4, offset = 0x4, fixed_abs, tag = 'smem constant byte address 0x4 - core index']
  #allocation1 [shape = 'u32[144,128]{1,0:T(1,128)}', space=vmem, size = 0x12000, scoped, tag = 'internal scratch']
  #allocation2 [shape = 'f32[2,2,10,10,1]{4,3,2,1,0:T(8,128)}', space=vmem, size = 0x50000, scoped, tag = 'scratch operand']
  %s0 = inlined_call_operand.vmem [shape: f32[2,8,8,64], index: 0, kind: input, shape index: {}]
  %s1 = inlined_call_operand.vmem [shape: f32[1,64], index: 1, kind: input, shape index: {}]
  %s2 = inlined_call_operand.vmem [shape: f32[1,64], index: 2, kind: input, shape index: {}]
  %s3 = inlined_call_operand.vmem [shape: f32[2,9], index: 3, kind: input, shape index: {}]
  %s4 = inlined_call_operand.vmem [shape: f32[2,8,8,64], index: 4, kind: input, shape index: {}]
  %s5 = inlined_call_operand.vmem [shape: f32[1,64], index: 5, kind: input, shape index: {}]
  %s6 = inlined_call_operand.vmem [shape: f32[1,64], index: 6, kind: input, shape index: {}]
  %s7 = inlined_call_operand.hbm [shape: f32[2,8,8,64], index: 7, kind: output, shape index: {}]
  %s8 = sld [smem:[#allocation0]]
  $region42: #{bottleneck_ir_sam_forward.11} parent=0
    _
  %s10 = ssub.s32 1, %s8
  %s11 = scalar_select 0, %s10, %s8
  $region1: #{bottleneck_ir_sam_forward.11} parent=0
    #allocation3 [shape = 'u8[1024]{0}', space=smem, size = 0x400, scoped, tag = 'input window, operand 3, single buffered']
    #allocation4 [shape = 's32[1]{0}', space=sflag, size = 0x4, scoped, tag = 'scoped memory for bottleneck_ir_sam_forward.11']
    #allocation5 [shape = 's32[1]{0}', space=sflag, size = 0x4, scoped, tag = 'scoped memory for bottleneck_ir_sam_forward.11']
    #allocation6 [shape = 'u8[65536]{0}', space=vmem, size = 0x10000, scoped, tag = 'output window, operand 0, single buffered']
    %12 = vsyncpa [#allocation5], 0
    %13 = vsyncpa [#allocation4], 0
    // Predicated region
    $region2: #{bottleneck_ir_sam_forward.11} parent=1 // pred_check
      _
    $region3: #{bottleneck_ir_sam_forward.11} parent=1 // pred_check_branch
      %15 = sbr.rel (0) target = $region5
    $region4: #{bottleneck_ir_sam_forward.11} parent=1 // pred_region
      _
    $region5: #{bottleneck_ir_sam_forward.11} parent=1 // pred_fallthru
      _
    // Predicated region
    $region6: #{bottleneck_ir_sam_forward.11} parent=1 // pred_check
      _
    $region7: #{bottleneck_ir_sam_forward.11} parent=1 // pred_check_branch
      %17 = sbr.rel (0) target = $region9
    $region8: #{bottleneck_ir_sam_forward.11} parent=1 // pred_region
      _
    $region9: #{bottleneck_ir_sam_forward.11} parent=1 // pred_fallthru
      _
    // Predicated region
    $region10: #{bottleneck_ir_sam_forward.11} parent=1 // pred_check
      _
    $region11: #{bottleneck_ir_sam_forward.11} parent=1 // pred_check_branch
      %19 = sbr.rel (0) target = $region13
    $region12: #{bottleneck_ir_sam_forward.11} parent=1 // pred_region
      _
    $region13: #{bottleneck_ir_sam_forward.11} parent=1 // pred_fallthru
      _
    // Predicated region
    $region14: #{bottleneck_ir_sam_forward.11} parent=1 // pred_check
      _
    $region15: #{bottleneck_ir_sam_forward.11} parent=1 // pred_check_branch
      %21 = sbr.rel (0) target = $region17
    $region16: #{bottleneck_ir_sam_forward.11} parent=1 // pred_region
      %s23 = ssub.s32 32, 32
      %24 = vsyncadd [#allocation5], %s23
      %s26 = sshll.u32 %s3, 4
      %s27 = int_to_ptr.vmem [resolvable:$true] %s26
      %29 = dma.vmem_to_smem %s27, 32, [#allocation3], [#allocation5]
    $region17: #{bottleneck_ir_sam_forward.11} parent=1 // pred_fallthru
      _
    // Predicated region
    $region18: #{bottleneck_ir_sam_forward.11} parent=1 // pred_check
      _
    $region19: #{bottleneck_ir_sam_forward.11} parent=1 // pred_check_branch
      %31 = sbr.rel (0) target = $region21
    $region20: #{bottleneck_ir_sam_forward.11} parent=1 // pred_region
      _
    $region21: #{bottleneck_ir_sam_forward.11} parent=1 // pred_fallthru
      _
    // Predicated region
    $region22: #{bottleneck_ir_sam_forward.11} parent=1 // pred_check
      _
    $region23: #{bottleneck_ir_sam_forward.11} parent=1 // pred_check_branch
      %33 = sbr.rel (0) target = $region25
    $region24: #{bottleneck_ir_sam_forward.11} parent=1 // pred_region
      _
    $region25: #{bottleneck_ir_sam_forward.11} parent=1 // pred_fallthru
      _
    // Predicated region
    $region26: #{bottleneck_ir_sam_forward.11} parent=1 // pred_check
      _
    $region27: #{bottleneck_ir_sam_forward.11} parent=1 // pred_check_branch
      %35 = sbr.rel (0) target = $region29
    $region28: #{bottleneck_ir_sam_forward.11} parent=1 // pred_region
      _
    $region29: #{bottleneck_ir_sam_forward.11} parent=1 // pred_fallthru
      _
    // Predicated region
    $region30: #{bottleneck_ir_sam_forward.11} parent=1 // pred_check
      _
    $region31: #{bottleneck_ir_sam_forward.11} parent=1 // pred_check_branch
      %37 = sbr.rel (0) target = $region33
    $region32: #{bottleneck_ir_sam_forward.11} parent=1 // pred_region
      %38 = dma.done [#allocation5], 32
    $region33: #{bottleneck_ir_sam_forward.11} parent=1 // pred_fallthru
      _
    %39 = sfence
    %v40 = vld [vmem:[%s0] sm:$0xff]
    %v41 = vld [vmem:[%s0 + $0x8] sm:$0xff]
    %v42 = vld [vmem:[%s0 + $0x10] sm:$0xff]
    %v43 = vld [vmem:[%s0 + $0x18] sm:$0xff]
    %v44 = vld [vmem:[%s0 + $0x20] sm:$0xff]
    %v45 = vld [vmem:[%s0 + $0x28] sm:$0xff]
    %v46 = vld [vmem:[%s0 + $0x30] sm:$0xff]
    %v47 = vld [vmem:[%s0 + $0x38] sm:$0xff]
    %v48 = vld [vmem:[%s0 + $0x40] sm:$0xff]
    %v49 = vld [vmem:[%s0 + $0x48] sm:$0xff]
    %v50 = vld [vmem:[%s0 + $0x50] sm:$0xff]
    %v51 = vld [vmem:[%s0 + $0x58] sm:$0xff]
    %v52 = vld [vmem:[%s0 + $0x60] sm:$0xff]
    %v53 = vld [vmem:[%s0 + $0x68] sm:$0xff]
    %v54 = vld [vmem:[%s0 + $0x70] sm:$0xff]
    %v55 = vld [vmem:[%s0 + $0x78] sm:$0xff]
    %vm56 = vcmask 523264
    %v57 = vsel %vm56, %v40, 0.0
    %v58 = vsel %vm56, %v41, 0.0
    %v59 = vadd.f32 %v57, %v58
    %v60 = vsel %vm56, %v42, 0.0
    %v61 = vadd.f32 %v59, %v60
    %v62 = vsel %vm56, %v43, 0.0
    %v63 = vadd.f32 %v61, %v62
    %v64 = vsel %vm56, %v44, 0.0
    %v65 = vadd.f32 %v63, %v64
    %v66 = vsel %vm56, %v45, 0.0
    %v67 = vadd.f32 %v65, %v66
    %v68 = vsel %vm56, %v46, 0.0
    %v69 = vadd.f32 %v67, %v68
    %v70 = vsel %vm56, %v47, 0.0
    %v71 = vadd.f32 %v69, %v70
    %v72 = vsel %vm56, %v48, 0.0
    %v73 = vadd.f32 %v71, %v72
    %v74 = vsel %vm56, %v49, 0.0
    %v75 = vadd.f32 %v73, %v74
    %v76 = vsel %vm56, %v50, 0.0
    %v77 = vadd.f32 %v75, %v76
    %v78 = vsel %vm56, %v51, 0.0
    %v79 = vadd.f32 %v77, %v78
    %v80 = vsel %vm56, %v52, 0.0
    %v81 = vadd.f32 %v79, %v80
    %v82 = vsel %vm56, %v53, 0.0
    %v83 = vadd.f32 %v81, %v82
    %v84 = vsel %vm56, %v54, 0.0
    %v85 = vadd.f32 %v83, %v84
    %v86 = vsel %vm56, %v55, 0.0
    %v87 = vadd.f32 %v85, %v86
    %v88 = vrot.slane %v87, 4
    %v89 = vadd.f32 %v87, %v88
    %v90 = vrot.slane %v89, 2
    %v91 = vadd.f32 %v89, %v90
    %v92 = vrot.slane %v91, 1
    %v93 = vadd.f32 %v91, %v92
    %v94 = vrcp.pop 128.0
    %v95 = vmul.f32 %v93, %v94
    %v96 = vsub.f32 %v40, %v95
    %v97 = vsub.f32 %v41, %v95
    %v98 = vsub.f32 %v42, %v95
    %v99 = vsub.f32 %v43, %v95
    %v100 = vsub.f32 %v44, %v95
    %v101 = vsub.f32 %v45, %v95
    %v102 = vsub.f32 %v46, %v95
    %v103 = vsub.f32 %v47, %v95
    %v104 = vsub.f32 %v48, %v95
    %v105 = vsub.f32 %v49, %v95
    %v106 = vsub.f32 %v50, %v95
    %v107 = vsub.f32 %v51, %v95
    %v108 = vsub.f32 %v52, %v95
    %v109 = vsub.f32 %v53, %v95
    %v110 = vsub.f32 %v54, %v95
    %v111 = vsub.f32 %v55, %v95
    %v112 = vmul.f32 %v96, %v96
    %v113 = vmul.f32 %v97, %v97
    %v114 = vmul.f32 %v98, %v98
    %v115 = vmul.f32 %v99, %v99
    %v116 = vmul.f32 %v100, %v100
    %v117 = vmul.f32 %v101, %v101
    %v118 = vmul.f32 %v102, %v102
    %v119 = vmul.f32 %v103, %v103
    %v120 = vmul.f32 %v104, %v104
    %v121 = vmul.f32 %v105, %v105
    %v122 = vmul.f32 %v106, %v106
    %v123 = vmul.f32 %v107, %v107
    %v124 = vmul.f32 %v108, %v108
    %v125 = vmul.f32 %v109, %v109
    %v126 = vmul.f32 %v110, %v110
    %v127 = vmul.f32 %v111, %v111
    %v128 = vsel %vm56, %v112, 0.0
    %v129 = vsel %vm56, %v113, 0.0
    %v130 = vadd.f32 %v128, %v129
    %v131 = vsel %vm56, %v114, 0.0
    %v132 = vadd.f32 %v130, %v131
    %v133 = vsel %vm56, %v115, 0.0
    %v134 = vadd.f32 %v132, %v133
    %v135 = vsel %vm56, %v116, 0.0
    %v136 = vadd.f32 %v134, %v135
    %v137 = vsel %vm56, %v117, 0.0
    %v138 = vadd.f32 %v136, %v137
    %v139 = vsel %vm56, %v118, 0.0
    %v140 = vadd.f32 %v138, %v139
    %v141 = vsel %vm56, %v119, 0.0
    %v142 = vadd.f32 %v140, %v141
    %v143 = vsel %vm56, %v120, 0.0
    %v144 = vadd.f32 %v142, %v143
    %v145 = vsel %vm56, %v121, 0.0
    %v146 = vadd.f32 %v144, %v145
    %v147 = vsel %vm56, %v122, 0.0
    %v148 = vadd.f32 %v146, %v147
    %v149 = vsel %vm56, %v123, 0.0
    %v150 = vadd.f32 %v148, %v149
    %v151 = vsel %vm56, %v124, 0.0
    %v152 = vadd.f32 %v150, %v151
    %v153 = vsel %vm56, %v125, 0.0
    %v154 = vadd.f32 %v152, %v153
    %v155 = vsel %vm56, %v126, 0.0
    %v156 = vadd.f32 %v154, %v155
    %v157 = vsel %vm56, %v127, 0.0
    %v158 = vadd.f32 %v156, %v157
    %v159 = vrot.slane %v158, 4
    %v160 = vadd.f32 %v158, %v159
    %v161 = vrot.slane %v160, 2
    %v162 = vadd.f32 %v160, %v161
    %v163 = vrot.slane %v162, 1
    %v164 = vadd.f32 %v162, %v163
    %v165 = vmul.f32 %v164, %v94
    %v166 = vld [vmem:[%s1] sm:$0x1]
    %v167 = vadd.f32 %v165, 1e-05
    %v168 = vrsqrt.pop %v167
    %v169 = vmul.f32 %v166, %v168
    %v171 = vlaneseq
    %v172 = vshrl.u32 %v171, 7
    %v173 = vsub.s32 0, %v172
    %v174 = vrot.slane %v169, %v173
    %v176 = vmul.f32 %v96, %v174
    %v177 = vmul.f32 %v97, %v174
    %v178 = vmul.f32 %v98, %v174
    %v179 = vmul.f32 %v99, %v174
    %v180 = vmul.f32 %v100, %v174
    %v181 = vmul.f32 %v101, %v174
    %v182 = vmul.f32 %v102, %v174
    %v183 = vmul.f32 %v103, %v174
    %v184 = vmul.f32 %v104, %v174
    %v185 = vmul.f32 %v105, %v174
    %v186 = vmul.f32 %v106, %v174
    %v187 = vmul.f32 %v107, %v174
    %v188 = vmul.f32 %v108, %v174
    %v189 = vmul.f32 %v109, %v174
    %v190 = vmul.f32 %v110, %v174
    %v191 = vmul.f32 %v111, %v174
    %v192 = vld [vmem:[%s2] sm:$0x1]
    %v194 = vlaneseq
    %v195 = vshrl.u32 %v194, 7
    %v196 = vsub.s32 0, %v195
    %v197 = vrot.slane %v192, %v196
    %v199 = vadd.f32 %v176, %v197
    %v200 = vadd.f32 %v177, %v197
    %v201 = vadd.f32 %v178, %v197
    %v202 = vadd.f32 %v179, %v197
    %v203 = vadd.f32 %v180, %v197
    %v204 = vadd.f32 %v181, %v197
    %v205 = vadd.f32 %v182, %v197
    %v206 = vadd.f32 %v183, %v197
    %v207 = vadd.f32 %v184, %v197
    %v208 = vadd.f32 %v185, %v197
    %v209 = vadd.f32 %v186, %v197
    %v210 = vadd.f32 %v187, %v197
    %v211 = vadd.f32 %v188, %v197
    %v212 = vadd.f32 %v189, %v197
    %v213 = vadd.f32 %v190, %v197
    %v214 = vadd.f32 %v191, %v197
    %v215 = vsel %vm56, %v199, 0.0
    %216 = vadd.xlane.f32.xlu0 %v215
    %v217 = vpop.xlane.xlu0 %216
    %v218 = vsel %vm56, %v200, 0.0
    %219 = vadd.xlane.f32.xlu0 %v218
    %v220 = vpop.xlane.xlu0 %219
    %v221 = vsel %vm56, %v201, 0.0
    %222 = vadd.xlane.f32.xlu0 %v221
    %v223 = vpop.xlane.xlu0 %222
    %v224 = vsel %vm56, %v202, 0.0
    %225 = vadd.xlane.f32.xlu0 %v224
    %v226 = vpop.xlane.xlu0 %225
    %v227 = vsel %vm56, %v203, 0.0
    %228 = vadd.xlane.f32.xlu0 %v227
    %v229 = vpop.xlane.xlu0 %228
    %v230 = vsel %vm56, %v204, 0.0
    %231 = vadd.xlane.f32.xlu0 %v230
    %v232 = vpop.xlane.xlu0 %231
    %v233 = vsel %vm56, %v205, 0.0
    %234 = vadd.xlane.f32.xlu0 %v233
    %v235 = vpop.xlane.xlu0 %234
    %v236 = vsel %vm56, %v206, 0.0
    %237 = vadd.xlane.f32.xlu0 %v236
    %v238 = vpop.xlane.xlu0 %237
    %v239 = vsel %vm56, %v207, 0.0
    %240 = vadd.xlane.f32.xlu0 %v239
    %v241 = vpop.xlane.xlu0 %240
    %v242 = vsel %vm56, %v208, 0.0
    %243 = vadd.xlane.f32.xlu0 %v242
    %v244 = vpop.xlane.xlu0 %243
    %v245 = vsel %vm56, %v209, 0.0
    %246 = vadd.xlane.f32.xlu0 %v245
    %v247 = vpop.xlane.xlu0 %246
    %v248 = vsel %vm56, %v210, 0.0
    %249 = vadd.xlane.f32.xlu0 %v248
    %v250 = vpop.xlane.xlu0 %249
    %v251 = vsel %vm56, %v211, 0.0
    %252 = vadd.xlane.f32.xlu0 %v251
    %v253 = vpop.xlane.xlu0 %252
    %v254 = vsel %vm56, %v212, 0.0
    %255 = vadd.xlane.f32.xlu0 %v254
    %v256 = vpop.xlane.xlu0 %255
    %v257 = vsel %vm56, %v213, 0.0
    %258 = vadd.xlane.f32.xlu0 %v257
    %v259 = vpop.xlane.xlu0 %258
    %v260 = vsel %vm56, %v214, 0.0
    %261 = vadd.xlane.f32.xlu0 %v260
    %v262 = vpop.xlane.xlu0 %261
    %v263 = vrcp.pop 64.0
    %v264 = vmul.f32 %v217, %v263
    %v265 = vmul.f32 %v220, %v263
    %v266 = vmul.f32 %v223, %v263
    %v267 = vmul.f32 %v226, %v263
    %v268 = vmul.f32 %v229, %v263
    %v269 = vmul.f32 %v232, %v263
    %v270 = vmul.f32 %v235, %v263
    %v271 = vmul.f32 %v238, %v263
    %v272 = vmul.f32 %v241, %v263
    %v273 = vmul.f32 %v244, %v263
    %v274 = vmul.f32 %v247, %v263
    %v275 = vmul.f32 %v250, %v263
    %v276 = vmul.f32 %v253, %v263
    %v277 = vmul.f32 %v256, %v263
    %v278 = vmul.f32 %v259, %v263
    %v279 = vmul.f32 %v262, %v263
    %v280 = vsel %vm56, %v199, -inf
    %281 = vmax.xlane.f32.xlu0 %v280
    %v282 = vpop.xlane.xlu0 %281
    %v283 = vsel %vm56, %v200, -inf
    %284 = vmax.xlane.f32.xlu0 %v283
    %v285 = vpop.xlane.xlu0 %284
    %v286 = vsel %vm56, %v201, -inf
    %287 = vmax.xlane.f32.xlu0 %v286
    %v288 = vpop.xlane.xlu0 %287
    %v289 = vsel %vm56, %v202, -inf
    %290 = vmax.xlane.f32.xlu0 %v289
    %v291 = vpop.xlane.xlu0 %290
    %v292 = vsel %vm56, %v203, -inf
    %293 = vmax.xlane.f32.xlu0 %v292
    %v294 = vpop.xlane.xlu0 %293
    %v295 = vsel %vm56, %v204, -inf
    %296 = vmax.xlane.f32.xlu0 %v295
    %v297 = vpop.xlane.xlu0 %296
    %v298 = vsel %vm56, %v205, -inf
    %299 = vmax.xlane.f32.xlu0 %v298
    %v300 = vpop.xlane.xlu0 %299
    %v301 = vsel %vm56, %v206, -inf
    %302 = vmax.xlane.f32.xlu0 %v301
    %v303 = vpop.xlane.xlu0 %302
    %v304 = vsel %vm56, %v207, -inf
    %305 = vmax.xlane.f32.xlu0 %v304
    %v306 = vpop.xlane.xlu0 %305
    %v307 = vsel %vm56, %v208, -inf
    %308 = vmax.xlane.f32.xlu0 %v307
    %v309 = vpop.xlane.xlu0 %308
    %v310 = vsel %vm56, %v209, -inf
    %311 = vmax.xlane.f32.xlu0 %v310
    %v312 = vpop.xlane.xlu0 %311
    %v313 = vsel %vm56, %v210, -inf
    %314 = vmax.xlane.f32.xlu0 %v313
    %v315 = vpop.xlane.xlu0 %314
    %v316 = vsel %vm56, %v211, -inf
    %317 = vmax.xlane.f32.xlu0 %v316
    %v318 = vpop.xlane.xlu0 %317
    %v319 = vsel %vm56, %v212, -inf
    %320 = vmax.xlane.f32.xlu0 %v319
    %v321 = vpop.xlane.xlu0 %320
    %v322 = vsel %vm56, %v213, -inf
    %323 = vmax.xlane.f32.xlu0 %v322
    %v324 = vpop.xlane.xlu0 %323
    %v325 = vsel %vm56, %v214, -inf
    %326 = vmax.xlane.f32.xlu0 %v325
    %v327 = vpop.xlane.xlu0 %326
    %vm328 = vcmask 7168
    %329 = vst.msk [vmem:[#allocation2] sm:$0xff] %vm328, 0.0
    %vm330 = vcmask 1024
    %331 = vst.msk [vmem:[#allocation2 + $0x8] sm:$0x3] %vm330, 0.0
    %332 = vst.msk [vmem:[#allocation2 + $0x10] sm:$0xff] %vm328, 0.0
    %333 = vst.msk [vmem:[#allocation2 + $0x18] sm:$0x3] %vm330, 0.0
    %334 = vst.msk [vmem:[#allocation2 + $0x20] sm:$0xff] %vm328, 0.0
    %335 = vst.msk [vmem:[#allocation2 + $0x28] sm:$0x3] %vm330, 0.0
    %336 = vst.msk [vmem:[#allocation2 + $0x30] sm:$0xff] %vm328, 0.0
    %337 = vst.msk [vmem:[#allocation2 + $0x38] sm:$0x3] %vm330, 0.0
    %338 = vst.msk [vmem:[#allocation2 + $0x40] sm:$0xff] %vm328, 0.0
    %339 = vst.msk [vmem:[#allocation2 + $0x48] sm:$0x3] %vm330, 0.0
    %340 = vst.msk [vmem:[#allocation2 + $0x50] sm:$0xff] %vm328, 0.0
    %341 = vst.msk [vmem:[#allocation2 + $0x58] sm:$0x3] %vm330, 0.0
    %342 = vst.msk [vmem:[#allocation2 + $0x60] sm:$0xff] %vm328, 0.0
    %343 = vst.msk [vmem:[#allocation2 + $0x68] sm:$0x3] %vm330, 0.0
    %344 = vst.msk [vmem:[#allocation2 + $0x70] sm:$0xff] %vm328, 0.0
    %345 = vst.msk [vmem:[#allocation2 + $0x78] sm:$0x3] %vm330, 0.0
    %346 = vst.msk [vmem:[#allocation2 + $0x80] sm:$0xff] %vm328, 0.0
    %347 = vst.msk [vmem:[#allocation2 + $0x88] sm:$0x3] %vm330, 0.0
    %348 = vst.msk [vmem:[#allocation2 + $0x90] sm:$0xff] %vm328, 0.0
    %349 = vst.msk [vmem:[#allocation2 + $0x98] sm:$0x3] %vm330, 0.0
    %350 = vst.msk [vmem:[#allocation2 + $0xa0] sm:$0xff] %vm328, 0.0
    %351 = vst.msk [vmem:[#allocation2 + $0xa8] sm:$0x3] %vm330, 0.0
    %352 = vst.msk [vmem:[#allocation2 + $0xb0] sm:$0xff] %vm328, 0.0
    %353 = vst.msk [vmem:[#allocation2 + $0xb8] sm:$0x3] %vm330, 0.0
    %354 = vst.msk [vmem:[#allocation2 + $0xc0] sm:$0xff] %vm328, 0.0
    %355 = vst.msk [vmem:[#allocation2 + $0xc8] sm:$0x3] %vm330, 0.0
    %356 = vst.msk [vmem:[#allocation2 + $0xd0] sm:$0xff] %vm328, 0.0
    %357 = vst.msk [vmem:[#allocation2 + $0xd8] sm:$0x3] %vm330, 0.0
    %358 = vst.msk [vmem:[#allocation2 + $0xe0] sm:$0xff] %vm328, 0.0
    %359 = vst.msk [vmem:[#allocation2 + $0xe8] sm:$0x3] %vm330, 0.0
    %360 = vst.msk [vmem:[#allocation2 + $0xf0] sm:$0xff] %vm328, 0.0
    %361 = vst.msk [vmem:[#allocation2 + $0xf8] sm:$0x3] %vm330, 0.0
    %362 = vst.msk [vmem:[#allocation2 + $0x100] sm:$0xff] %vm328, 0.0
    %363 = vst.msk [vmem:[#allocation2 + $0x108] sm:$0x3] %vm330, 0.0
    %364 = vst.msk [vmem:[#allocation2 + $0x110] sm:$0xff] %vm328, 0.0
    %365 = vst.msk [vmem:[#allocation2 + $0x118] sm:$0x3] %vm330, 0.0
    %366 = vst.msk [vmem:[#allocation2 + $0x120] sm:$0xff] %vm328, 0.0
    %367 = vst.msk [vmem:[#allocation2 + $0x128] sm:$0x3] %vm330, 0.0
    %368 = vst.msk [vmem:[#allocation2 + $0x130] sm:$0xff] %vm328, 0.0
    %369 = vst.msk [vmem:[#allocation2 + $0x138] sm:$0x3] %vm330, 0.0
    %370 = vst.msk [vmem:[#allocation2 + $0x140] sm:$0xff] %vm328, 0.0
    %371 = vst.msk [vmem:[#allocation2 + $0x148] sm:$0x3] %vm330, 0.0
    %372 = vst.msk [vmem:[#allocation2 + $0x150] sm:$0xff] %vm328, 0.0
    %373 = vst.msk [vmem:[#allocation2 + $0x158] sm:$0x3] %vm330, 0.0
    %374 = vst.msk [vmem:[#allocation2 + $0x160] sm:$0xff] %vm328, 0.0
    %375 = vst.msk [vmem:[#allocation2 + $0x168] sm:$0x3] %vm330, 0.0
    %376 = vst.msk [vmem:[#allocation2 + $0x170] sm:$0xff] %vm328, 0.0
    %377 = vst.msk [vmem:[#allocation2 + $0x178] sm:$0x3] %vm330, 0.0
    %378 = vst.msk [vmem:[#allocation2 + $0x180] sm:$0xff] %vm328, 0.0
    %379 = vst.msk [vmem:[#allocation2 + $0x188] sm:$0x3] %vm330, 0.0
    %380 = vst.msk [vmem:[#allocation2 + $0x190] sm:$0xff] %vm328, 0.0
    %381 = vst.msk [vmem:[#allocation2 + $0x198] sm:$0x3] %vm330, 0.0
    %382 = vst.msk [vmem:[#allocation2 + $0x1a0] sm:$0xff] %vm328, 0.0
    %383 = vst.msk [vmem:[#allocation2 + $0x1a8] sm:$0x3] %vm330, 0.0
    %384 = vst.msk [vmem:[#allocation2 + $0x1b0] sm:$0xff] %vm328, 0.0
    %385 = vst.msk [vmem:[#allocation2 + $0x1b8] sm:$0x3] %vm330, 0.0
    %386 = vst.msk [vmem:[#allocation2 + $0x1c0] sm:$0xff] %vm328, 0.0
    %387 = vst.msk [vmem:[#allocation2 + $0x1c8] sm:$0x3] %vm330, 0.0
    %388 = vst.msk [vmem:[#allocation2 + $0x1d0] sm:$0xff] %vm328, 0.0
    %389 = vst.msk [vmem:[#allocation2 + $0x1d8] sm:$0x3] %vm330, 0.0
    %390 = vst.msk [vmem:[#allocation2 + $0x1e0] sm:$0xff] %vm328, 0.0
    %391 = vst.msk [vmem:[#allocation2 + $0x1e8] sm:$0x3] %vm330, 0.0
    %392 = vst.msk [vmem:[#allocation2 + $0x1f0] sm:$0xff] %vm328, 0.0
    %393 = vst.msk [vmem:[#allocation2 + $0x1f8] sm:$0x3] %vm330, 0.0
    %394 = vst.msk [vmem:[#allocation2 + $0x200] sm:$0xff] %vm328, 0.0
    %395 = vst.msk [vmem:[#allocation2 + $0x208] sm:$0x3] %vm330, 0.0
    %396 = vst.msk [vmem:[#allocation2 + $0x210] sm:$0xff] %vm328, 0.0
    %397 = vst.msk [vmem:[#allocation2 + $0x218] sm:$0x3] %vm330, 0.0
    %398 = vst.msk [vmem:[#allocation2 + $0x220] sm:$0xff] %vm328, 0.0
    %399 = vst.msk [vmem:[#allocation2 + $0x228] sm:$0x3] %vm330, 0.0
    %400 = vst.msk [vmem:[#allocation2 + $0x230] sm:$0xff] %vm328, 0.0
    %401 = vst.msk [vmem:[#allocation2 + $0x238] sm:$0x3] %vm330, 0.0
    %402 = vst.msk [vmem:[#allocation2 + $0x240] sm:$0xff] %vm328, 0.0
    %403 = vst.msk [vmem:[#allocation2 + $0x248] sm:$0x3] %vm330, 0.0
    %404 = vst.msk [vmem:[#allocation2 + $0x250] sm:$0xff] %vm328, 0.0
    %405 = vst.msk [vmem:[#allocation2 + $0x258] sm:$0x3] %vm330, 0.0
    %406 = vst.msk [vmem:[#allocation2 + $0x260] sm:$0xff] %vm328, 0.0
    %407 = vst.msk [vmem:[#allocation2 + $0x268] sm:$0x3] %vm330, 0.0
    %408 = vst.msk [vmem:[#allocation2 + $0x270] sm:$0xff] %vm328, 0.0
    %409 = vst.msk [vmem:[#allocation2 + $0x278] sm:$0x3] %vm330, 0.0
    %s410 = scalar_lea.vmem [#allocation2], 16
    %411 = vst.msk [vmem:[%s410 + $0x1] sm:$0xff] %vm328, %v264
    %412 = vst.msk [vmem:[%s410 + $0x11] sm:$0xff] %vm328, %v265
    %413 = vst.msk [vmem:[%s410 + $0x21] sm:$0xff] %vm328, %v266
    %414 = vst.msk [vmem:[%s410 + $0x31] sm:$0xff] %vm328, %v267
    %415 = vst.msk [vmem:[%s410 + $0x41] sm:$0xff] %vm328, %v268
    %416 = vst.msk [vmem:[%s410 + $0x51] sm:$0xff] %vm328, %v269
    %417 = vst.msk [vmem:[%s410 + $0x61] sm:$0xff] %vm328, %v270
    %418 = vst.msk [vmem:[%s410 + $0x71] sm:$0xff] %vm328, %v271
    %419 = vst.msk [vmem:[%s410 + $0x141] sm:$0xff] %vm328, %v272
    %420 = vst.msk [vmem:[%s410 + $0x151] sm:$0xff] %vm328, %v273
    %421 = vst.msk [vmem:[%s410 + $0x161] sm:$0xff] %vm328, %v274
    %422 = vst.msk [vmem:[%s410 + $0x171] sm:$0xff] %vm328, %v275
    %423 = vst.msk [vmem:[%s410 + $0x181] sm:$0xff] %vm328, %v276
    %424 = vst.msk [vmem:[%s410 + $0x191] sm:$0xff] %vm328, %v277
    %425 = vst.msk [vmem:[%s410 + $0x1a1] sm:$0xff] %vm328, %v278
    %426 = vst.msk [vmem:[%s410 + $0x1b1] sm:$0xff] %vm328, %v279
    %s427 = scalar_lea.vmem [#allocation2], 176
    %428 = vst.msk [vmem:[%s427 + $0x1] sm:$0xff] %vm328, %v282
    %429 = vst.msk [vmem:[%s427 + $0x11] sm:$0xff] %vm328, %v285
    %430 = vst.msk [vmem:[%s427 + $0x21] sm:$0xff] %vm328, %v288
    %431 = vst.msk [vmem:[%s427 + $0x31] sm:$0xff] %vm328, %v291
    %432 = vst.msk [vmem:[%s427 + $0x41] sm:$0xff] %vm328, %v294
    %433 = vst.msk [vmem:[%s427 + $0x51] sm:$0xff] %vm328, %v297
    %434 = vst.msk [vmem:[%s427 + $0x61] sm:$0xff] %vm328, %v300
    %435 = vst.msk [vmem:[%s427 + $0x71] sm:$0xff] %vm328, %v303
    %436 = vst.msk [vmem:[%s427 + $0x141] sm:$0xff] %vm328, %v306
    %437 = vst.msk [vmem:[%s427 + $0x151] sm:$0xff] %vm328, %v309
    %438 = vst.msk [vmem:[%s427 + $0x161] sm:$0xff] %vm328, %v312
    %439 = vst.msk [vmem:[%s427 + $0x171] sm:$0xff] %vm328, %v315
    %440 = vst.msk [vmem:[%s427 + $0x181] sm:$0xff] %vm328, %v318
    %441 = vst.msk [vmem:[%s427 + $0x191] sm:$0xff] %vm328, %v321
    %442 = vst.msk [vmem:[%s427 + $0x1a1] sm:$0xff] %vm328, %v324
    %443 = vst.msk [vmem:[%s427 + $0x1b1] sm:$0xff] %vm328, %v327
    %s444 = sld [smem:[#allocation3]]
    %v445 = vld [vmem:[#allocation2] sm:$0xff]
    %v446 = vld [vmem:[#allocation2 + $0x10] sm:$0xff]
    %v447 = vld [vmem:[#allocation2 + $0x20] sm:$0xff]
    %v448 = vld [vmem:[#allocation2 + $0x30] sm:$0xff]
    %v449 = vld [vmem:[#allocation2 + $0x40] sm:$0xff]
    %v450 = vld [vmem:[#allocation2 + $0x50] sm:$0xff]
    %v451 = vld [vmem:[#allocation2 + $0x60] sm:$0xff]
    %v452 = vld [vmem:[#allocation2 + $0x70] sm:$0xff]
    %v453 = vld [vmem:[#allocation2 + $0x140] sm:$0xff]
    %v454 = vld [vmem:[#allocation2 + $0x150] sm:$0xff]
    %v455 = vld [vmem:[#allocation2 + $0x160] sm:$0xff]
    %v456 = vld [vmem:[#allocation2 + $0x170] sm:$0xff]
    %v457 = vld [vmem:[#allocation2 + $0x180] sm:$0xff]
    %v458 = vld [vmem:[#allocation2 + $0x190] sm:$0xff]
    %v459 = vld [vmem:[#allocation2 + $0x1a0] sm:$0xff]
    %v460 = vld [vmem:[#allocation2 + $0x1b0] sm:$0xff]
    %v461 = vstv %s444
    %v462 = vmul.f32 %v461, %v445
    %v463 = vmul.f32 %v461, %v446
    %v464 = vmul.f32 %v461, %v447
    %v465 = vmul.f32 %v461, %v448
    %v466 = vmul.f32 %v461, %v449
    %v467 = vmul.f32 %v461, %v450
    %v468 = vmul.f32 %v461, %v451
    %v469 = vmul.f32 %v461, %v452
    %v470 = vmul.f32 %v461, %v453
    %v471 = vmul.f32 %v461, %v454
    %v472 = vmul.f32 %v461, %v455
    %v473 = vmul.f32 %v461, %v456
    %v474 = vmul.f32 %v461, %v457
    %v475 = vmul.f32 %v461, %v458
    %v476 = vmul.f32 %v461, %v459
    %v477 = vmul.f32 %v461, %v460
    %v478 = vadd.f32 %v462, 0.0
    %v479 = vadd.f32 %v463, 0.0
    %v480 = vadd.f32 %v464, 0.0
    %v481 = vadd.f32 %v465, 0.0
    %v482 = vadd.f32 %v466, 0.0
    %v483 = vadd.f32 %v467, 0.0
    %v484 = vadd.f32 %v468, 0.0
    %v485 = vadd.f32 %v469, 0.0
    %v486 = vadd.f32 %v470, 0.0
    %v487 = vadd.f32 %v471, 0.0
    %v488 = vadd.f32 %v472, 0.0
    %v489 = vadd.f32 %v473, 0.0
    %v490 = vadd.f32 %v474, 0.0
    %v491 = vadd.f32 %v475, 0.0
    %v492 = vadd.f32 %v476, 0.0
    %v493 = vadd.f32 %v477, 0.0
    %s494 = sld [smem:[#allocation3 + $0x1]]
    %v495 = vld [vmem:[#allocation2 + $0x1] sm:$0xff]
    %v496 = vld [vmem:[#allocation2 + $0x11] sm:$0xff]
    %v497 = vld [vmem:[#allocation2 + $0x21] sm:$0xff]
    %v498 = vld [vmem:[#allocation2 + $0x31] sm:$0xff]
    %v499 = vld [vmem:[#allocation2 + $0x41] sm:$0xff]
    %v500 = vld [vmem:[#allocation2 + $0x51] sm:$0xff]
    %v501 = vld [vmem:[#allocation2 + $0x61] sm:$0xff]
    %v502 = vld [vmem:[#allocation2 + $0x71] sm:$0xff]
    %v503 = vld [vmem:[#allocation2 + $0x141] sm:$0xff]
    %v504 = vld [vmem:[#allocation2 + $0x151] sm:$0xff]
    %v505 = vld [vmem:[#allocation2 + $0x161] sm:$0xff]
    %v506 = vld [vmem:[#allocation2 + $0x171] sm:$0xff]
    %v507 = vld [vmem:[#allocation2 + $0x181] sm:$0xff]
    %v508 = vld [vmem:[#allocation2 + $0x191] sm:$0xff]
    %v509 = vld [vmem:[#allocation2 + $0x1a1] sm:$0xff]
    %v510 = vld [vmem:[#allocation2 + $0x1b1] sm:$0xff]
    %v511 = vstv %s494
    %v512 = vmul.f32 %v511, %v495
    %v513 = vmul.f32 %v511, %v496
    %v514 = vmul.f32 %v511, %v497
    %v515 = vmul.f32 %v511, %v498
    %v516 = vmul.f32 %v511, %v499
    %v517 = vmul.f32 %v511, %v500
    %v518 = vmul.f32 %v511, %v501
    %v519 = vmul.f32 %v511, %v502
    %v520 = vmul.f32 %v511, %v503
    %v521 = vmul.f32 %v511, %v504
    %v522 = vmul.f32 %v511, %v505
    %v523 = vmul.f32 %v511, %v506
    %v524 = vmul.f32 %v511, %v507
    %v525 = vmul.f32 %v511, %v508
    %v526 = vmul.f32 %v511, %v509
    %v527 = vmul.f32 %v511, %v510
    %v528 = vadd.f32 %v478, %v512
    %v529 = vadd.f32 %v479, %v513
    %v530 = vadd.f32 %v480, %v514
    %v531 = vadd.f32 %v481, %v515
    %v532 = vadd.f32 %v482, %v516
    %v533 = vadd.f32 %v483, %v517
    %v534 = vadd.f32 %v484, %v518
    %v535 = vadd.f32 %v485, %v519
    %v536 = vadd.f32 %v486, %v520
    %v537 = vadd.f32 %v487, %v521
    %v538 = vadd.f32 %v488, %v522
    %v539 = vadd.f32 %v489, %v523
    %v540 = vadd.f32 %v490, %v524
    %v541 = vadd.f32 %v491, %v525
    %v542 = vadd.f32 %v492, %v526
    %v543 = vadd.f32 %v493, %v527
    %s544 = sld [smem:[#allocation3 + $0x2]]
    %v545 = vld [vmem:[#allocation2 + $0x2] sm:$0xff]
    %v546 = vld [vmem:[#allocation2 + $0x12] sm:$0xff]
    %v547 = vld [vmem:[#allocation2 + $0x22] sm:$0xff]
    %v548 = vld [vmem:[#allocation2 + $0x32] sm:$0xff]
    %v549 = vld [vmem:[#allocation2 + $0x42] sm:$0xff]
    %v550 = vld [vmem:[#allocation2 + $0x52] sm:$0xff]
    %v551 = vld [vmem:[#allocation2 + $0x62] sm:$0xff]
    %v552 = vld [vmem:[#allocation2 + $0x72] sm:$0xff]
    %v553 = vld [vmem:[#allocation2 + $0x142] sm:$0xff]
    %v554 = vld [vmem:[#allocation2 + $0x152] sm:$0xff]
    %v555 = vld [vmem:[#allocation2 + $0x162] sm:$0xff]
    %v556 = vld [vmem:[#allocation2 + $0x172] sm:$0xff]
    %v557 = vld [vmem:[#allocation2 + $0x182] sm:$0xff]
    %v558 = vld [vmem:[#allocation2 + $0x192] sm:$0xff]
    %v559 = vld [vmem:[#allocation2 + $0x1a2] sm:$0xff]
    %v560 = vld [vmem:[#allocation2 + $0x1b2] sm:$0xff]
    %v561 = vstv %s544
    %v562 = vmul.f32 %v561, %v545
    %v563 = vmul.f32 %v561, %v546
    %v564 = vmul.f32 %v561, %v547
    %v565 = vmul.f32 %v561, %v548
    %v566 = vmul.f32 %v561, %v549
    %v567 = vmul.f32 %v561, %v550
    %v568 = vmul.f32 %v561, %v551
    %v569 = vmul.f32 %v561, %v552
    %v570 = vmul.f32 %v561, %v553
    %v571 = vmul.f32 %v561, %v554
    %v572 = vmul.f32 %v561, %v555
    %v573 = vmul.f32 %v561, %v556
    %v574 = vmul.f32 %v561, %v557
    %v575 = vmul.f32 %v561, %v558
    %v576 = vmul.f32 %v561, %v559
    %v577 = vmul.f32 %v561, %v560
    %v578 = vadd.f32 %v528, %v562
    %v579 = vadd.f32 %v529, %v563
    %v580 = vadd.f32 %v530, %v564
    %v581 = vadd.f32 %v531, %v565
    %v582 = vadd.f32 %v532, %v566
    %v583 = vadd.f32 %v533, %v567
    %v584 = vadd.f32 %v534, %v568
    %v585 = vadd.f32 %v535, %v569
    %v586 = vadd.f32 %v536, %v570
    %v587 = vadd.f32 %v537, %v571
    %v588 = vadd.f32 %v538, %v572
    %v589 = vadd.f32 %v539, %v573
    %v590 = vadd.f32 %v540, %v574
    %v591 = vadd.f32 %v541, %v575
    %v592 = vadd.f32 %v542, %v576
    %v593 = vadd.f32 %v543, %v577
    %s594 = sld [smem:[#allocation3 + $0x3]]
    %v595 = vld [vmem:[%s410] sm:$0xff]
    %v596 = vld [vmem:[%s410 + $0x10] sm:$0xff]
    %v597 = vld [vmem:[%s410 + $0x20] sm:$0xff]
    %v598 = vld [vmem:[%s410 + $0x30] sm:$0xff]
    %v599 = vld [vmem:[%s410 + $0x40] sm:$0xff]
    %v600 = vld [vmem:[%s410 + $0x50] sm:$0xff]
    %v601 = vld [vmem:[%s410 + $0x60] sm:$0xff]
    %v602 = vld [vmem:[%s410 + $0x70] sm:$0xff]
    %v603 = vld [vmem:[%s410 + $0x140] sm:$0xff]
    %v604 = vld [vmem:[%s410 + $0x150] sm:$0xff]
    %v605 = vld [vmem:[%s410 + $0x160] sm:$0xff]
    %v606 = vld [vmem:[%s410 + $0x170] sm:$0xff]
    %v607 = vld [vmem:[%s410 + $0x180] sm:$0xff]
    %v608 = vld [vmem:[%s410 + $0x190] sm:$0xff]
    %v609 = vld [vmem:[%s410 + $0x1a0] sm:$0xff]
    %v610 = vld [vmem:[%s410 + $0x1b0] sm:$0xff]
    %v611 = vstv %s594
    %v612 = vmul.f32 %v611, %v595
    %v613 = vmul.f32 %v611, %v596
    %v614 = vmul.f32 %v611, %v597
    %v615 = vmul.f32 %v611, %v598
    %v616 = vmul.f32 %v611, %v599
    %v617 = vmul.f32 %v611, %v600
    %v618 = vmul.f32 %v611, %v601
    %v619 = vmul.f32 %v611, %v602
    %v620 = vmul.f32 %v611, %v603
    %v621 = vmul.f32 %v611, %v604
    %v622 = vmul.f32 %v611, %v605
    %v623 = vmul.f32 %v611, %v606
    %v624 = vmul.f32 %v611, %v607
    %v625 = vmul.f32 %v611, %v608
    %v626 = vmul.f32 %v611, %v609
    %v627 = vmul.f32 %v611, %v610
    %v628 = vadd.f32 %v578, %v612
    %v629 = vadd.f32 %v579, %v613
    %v630 = vadd.f32 %v580, %v614
    %v631 = vadd.f32 %v581, %v615
    %v632 = vadd.f32 %v582, %v616
    %v633 = vadd.f32 %v583, %v617
    %v634 = vadd.f32 %v584, %v618
    %v635 = vadd.f32 %v585, %v619
    %v636 = vadd.f32 %v586, %v620
    %v637 = vadd.f32 %v587, %v621
    %v638 = vadd.f32 %v588, %v622
    %v639 = vadd.f32 %v589, %v623
    %v640 = vadd.f32 %v590, %v624
    %v641 = vadd.f32 %v591, %v625
    %v642 = vadd.f32 %v592, %v626
    %v643 = vadd.f32 %v593, %v627
    %s644 = sld [smem:[#allocation3 + $0x4]]
    %v645 = vld [vmem:[%s410 + $0x1] sm:$0xff]
    %v646 = vld [vmem:[%s410 + $0x11] sm:$0xff]
    %v647 = vld [vmem:[%s410 + $0x21] sm:$0xff]
    %v648 = vld [vmem:[%s410 + $0x31] sm:$0xff]
    %v649 = vld [vmem:[%s410 + $0x41] sm:$0xff]
    %v650 = vld [vmem:[%s410 + $0x51] sm:$0xff]
    %v651 = vld [vmem:[%s410 + $0x61] sm:$0xff]
    %v652 = vld [vmem:[%s410 + $0x71] sm:$0xff]
    %v653 = vld [vmem:[%s410 + $0x141] sm:$0xff]
    %v654 = vld [vmem:[%s410 + $0x151] sm:$0xff]
    %v655 = vld [vmem:[%s410 + $0x161] sm:$0xff]
    %v656 = vld [vmem:[%s410 + $0x171] sm:$0xff]
    %v657 = vld [vmem:[%s410 + $0x181] sm:$0xff]
    %v658 = vld [vmem:[%s410 + $0x191] sm:$0xff]
    %v659 = vld [vmem:[%s410 + $0x1a1] sm:$0xff]
    %v660 = vld [vmem:[%s410 + $0x1b1] sm:$0xff]
    %v661 = vstv %s644
    %v662 = vmul.f32 %v661, %v645
    %v663 = vmul.f32 %v661, %v646
    %v664 = vmul.f32 %v661, %v647
    %v665 = vmul.f32 %v661, %v648
    %v666 = vmul.f32 %v661, %v649
    %v667 = vmul.f32 %v661, %v650
    %v668 = vmul.f32 %v661, %v651
    %v669 = vmul.f32 %v661, %v652
    %v670 = vmul.f32 %v661, %v653
    %v671 = vmul.f32 %v661, %v654
    %v672 = vmul.f32 %v661, %v655
    %v673 = vmul.f32 %v661, %v656
    %v674 = vmul.f32 %v661, %v657
    %v675 = vmul.f32 %v661, %v658
    %v676 = vmul.f32 %v661, %v659
    %v677 = vmul.f32 %v661, %v660
    %v678 = vadd.f32 %v628, %v662
    %v679 = vadd.f32 %v629, %v663
    %v680 = vadd.f32 %v630, %v664
    %v681 = vadd.f32 %v631, %v665
    %v682 = vadd.f32 %v632, %v666
    %v683 = vadd.f32 %v633, %v667
    %v684 = vadd.f32 %v634, %v668
    %v685 = vadd.f32 %v635, %v669
    %v686 = vadd.f32 %v636, %v670
    %v687 = vadd.f32 %v637, %v671
    %v688 = vadd.f32 %v638, %v672
    %v689 = vadd.f32 %v639, %v673
    %v690 = vadd.f32 %v640, %v674
    %v691 = vadd.f32 %v641, %v675
    %v692 = vadd.f32 %v642, %v676
    %v693 = vadd.f32 %v643, %v677
    %s694 = sld [smem:[#allocation3 + $0x5]]
    %v695 = vld [vmem:[%s410 + $0x2] sm:$0xff]
    %v696 = vld [vmem:[%s410 + $0x12] sm:$0xff]
    %v697 = vld [vmem:[%s410 + $0x22] sm:$0xff]
    %v698 = vld [vmem:[%s410 + $0x32] sm:$0xff]
    %v699 = vld [vmem:[%s410 + $0x42] sm:$0xff]
    %v700 = vld [vmem:[%s410 + $0x52] sm:$0xff]
    %v701 = vld [vmem:[%s410 + $0x62] sm:$0xff]
    %v702 = vld [vmem:[%s410 + $0x72] sm:$0xff]
    %v703 = vld [vmem:[%s410 + $0x142] sm:$0xff]
    %v704 = vld [vmem:[%s410 + $0x152] sm:$0xff]
    %v705 = vld [vmem:[%s410 + $0x162] sm:$0xff]
    %v706 = vld [vmem:[%s410 + $0x172] sm:$0xff]
    %v707 = vld [vmem:[%s410 + $0x182] sm:$0xff]
    %v708 = vld [vmem:[%s410 + $0x192] sm:$0xff]
    %v709 = vld [vmem:[%s410 + $0x1a2] sm:$0xff]
    %v710 = vld [vmem:[%s410 + $0x1b2] sm:$0xff]
    %v711 = vstv %s694
    %v712 = vmul.f32 %v711, %v695
    %v713 = vmul.f32 %v711, %v696
    %v714 = vmul.f32 %v711, %v697
    %v715 = vmul.f32 %v711, %v698
    %v716 = vmul.f32 %v711, %v699
    %v717 = vmul.f32 %v711, %v700
    %v718 = vmul.f32 %v711, %v701
    %v719 = vmul.f32 %v711, %v702
    %v720 = vmul.f32 %v711, %v703
    %v721 = vmul.f32 %v711, %v704
    %v722 = vmul.f32 %v711, %v705
    %v723 = vmul.f32 %v711, %v706
    %v724 = vmul.f32 %v711, %v707
    %v725 = vmul.f32 %v711, %v708
    %v726 = vmul.f32 %v711, %v709
    %v727 = vmul.f32 %v711, %v710
    %v728 = vadd.f32 %v678, %v712
    %v729 = vadd.f32 %v679, %v713
    %v730 = vadd.f32 %v680, %v714
    %v731 = vadd.f32 %v681, %v715
    %v732 = vadd.f32 %v682, %v716
    %v733 = vadd.f32 %v683, %v717
    %v734 = vadd.f32 %v684, %v718
    %v735 = vadd.f32 %v685, %v719
    %v736 = vadd.f32 %v686, %v720
    %v737 = vadd.f32 %v687, %v721
    %v738 = vadd.f32 %v688, %v722
    %v739 = vadd.f32 %v689, %v723
    %v740 = vadd.f32 %v690, %v724
    %v741 = vadd.f32 %v691, %v725
    %v742 = vadd.f32 %v692, %v726
    %v743 = vadd.f32 %v693, %v727
    %s744 = sld [smem:[#allocation3 + $0x6]]
    %s745 = scalar_lea.vmem [#allocation2], 32
    %v746 = vld [vmem:[%s745] sm:$0xff]
    %v747 = vld [vmem:[%s745 + $0x10] sm:$0xff]
    %v748 = vld [vmem:[%s745 + $0x20] sm:$0xff]
    %v749 = vld [vmem:[%s745 + $0x30] sm:$0xff]
    %v750 = vld [vmem:[%s745 + $0x40] sm:$0xff]
    %v751 = vld [vmem:[%s745 + $0x50] sm:$0xff]
    %v752 = vld [vmem:[%s745 + $0x60] sm:$0xff]
    %v753 = vld [vmem:[%s745 + $0x70] sm:$0xff]
    %v754 = vld [vmem:[%s745 + $0x140] sm:$0xff]
    %v755 = vld [vmem:[%s745 + $0x150] sm:$0xff]
    %v756 = vld [vmem:[%s745 + $0x160] sm:$0xff]
    %v757 = vld [vmem:[%s745 + $0x170] sm:$0xff]
    %v758 = vld [vmem:[%s745 + $0x180] sm:$0xff]
    %v759 = vld [vmem:[%s745 + $0x190] sm:$0xff]
    %v760 = vld [vmem:[%s745 + $0x1a0] sm:$0xff]
    %v761 = vld [vmem:[%s745 + $0x1b0] sm:$0xff]
    %v762 = vstv %s744
    %v763 = vmul.f32 %v762, %v746
    %v764 = vmul.f32 %v762, %v747
    %v765 = vmul.f32 %v762, %v748
    %v766 = vmul.f32 %v762, %v749
    %v767 = vmul.f32 %v762, %v750
    %v768 = vmul.f32 %v762, %v751
    %v769 = vmul.f32 %v762, %v752
    %v770 = vmul.f32 %v762, %v753
    %v771 = vmul.f32 %v762, %v754
    %v772 = vmul.f32 %v762, %v755
    %v773 = vmul.f32 %v762, %v756
    %v774 = vmul.f32 %v762, %v757
    %v775 = vmul.f32 %v762, %v758
    %v776 = vmul.f32 %v762, %v759
    %v777 = vmul.f32 %v762, %v760
    %v778 = vmul.f32 %v762, %v761
    %v779 = vadd.f32 %v728, %v763
    %v780 = vadd.f32 %v729, %v764
    %v781 = vadd.f32 %v730, %v765
    %v782 = vadd.f32 %v731, %v766
    %v783 = vadd.f32 %v732, %v767
    %v784 = vadd.f32 %v733, %v768
    %v785 = vadd.f32 %v734, %v769
    %v786 = vadd.f32 %v735, %v770
    %v787 = vadd.f32 %v736, %v771
    %v788 = vadd.f32 %v737, %v772
    %v789 = vadd.f32 %v738, %v773
    %v790 = vadd.f32 %v739, %v774
    %v791 = vadd.f32 %v740, %v775
    %v792 = vadd.f32 %v741, %v776
    %v793 = vadd.f32 %v742, %v777
    %v794 = vadd.f32 %v743, %v778
    %s795 = sld [smem:[#allocation3 + $0x7]]
    %v796 = vld [vmem:[%s745 + $0x1] sm:$0xff]
    %v797 = vld [vmem:[%s745 + $0x11] sm:$0xff]
    %v798 = vld [vmem:[%s745 + $0x21] sm:$0xff]
    %v799 = vld [vmem:[%s745 + $0x31] sm:$0xff]
    %v800 = vld [vmem:[%s745 + $0x41] sm:$0xff]
    %v801 = vld [vmem:[%s745 + $0x51] sm:$0xff]
    %v802 = vld [vmem:[%s745 + $0x61] sm:$0xff]
    %v803 = vld [vmem:[%s745 + $0x71] sm:$0xff]
    %v804 = vld [vmem:[%s745 + $0x141] sm:$0xff]
    %v805 = vld [vmem:[%s745 + $0x151] sm:$0xff]
    %v806 = vld [vmem:[%s745 + $0x161] sm:$0xff]
    %v807 = vld [vmem:[%s745 + $0x171] sm:$0xff]
    %v808 = vld [vmem:[%s745 + $0x181] sm:$0xff]
    %v809 = vld [vmem:[%s745 + $0x191] sm:$0xff]
    %v810 = vld [vmem:[%s745 + $0x1a1] sm:$0xff]
    %v811 = vld [vmem:[%s745 + $0x1b1] sm:$0xff]
    %v812 = vstv %s795
    %v813 = vmul.f32 %v812, %v796
    %v814 = vmul.f32 %v812, %v797
    %v815 = vmul.f32 %v812, %v798
    %v816 = vmul.f32 %v812, %v799
    %v817 = vmul.f32 %v812, %v800
    %v818 = vmul.f32 %v812, %v801
    %v819 = vmul.f32 %v812, %v802
    %v820 = vmul.f32 %v812, %v803
    %v821 = vmul.f32 %v812, %v804
    %v822 = vmul.f32 %v812, %v805
    %v823 = vmul.f32 %v812, %v806
    %v824 = vmul.f32 %v812, %v807
    %v825 = vmul.f32 %v812, %v808
    %v826 = vmul.f32 %v812, %v809
    %v827 = vmul.f32 %v812, %v810
    %v828 = vmul.f32 %v812, %v811
    %v829 = vadd.f32 %v779, %v813
    %v830 = vadd.f32 %v780, %v814
    %v831 = vadd.f32 %v781, %v815
    %v832 = vadd.f32 %v782, %v816
    %v833 = vadd.f32 %v783, %v817
    %v834 = vadd.f32 %v784, %v818
    %v835 = vadd.f32 %v785, %v819
    %v836 = vadd.f32 %v786, %v820
    %v837 = vadd.f32 %v787, %v821
    %v838 = vadd.f32 %v788, %v822
    %v839 = vadd.f32 %v789, %v823
    %v840 = vadd.f32 %v790, %v824
    %v841 = vadd.f32 %v791, %v825
    %v842 = vadd.f32 %v792, %v826
    %v843 = vadd.f32 %v793, %v827
    %v844 = vadd.f32 %v794, %v828
    %s845 = sld [smem:[#allocation3 + $0x8]]
    %v846 = vld [vmem:[%s745 + $0x2] sm:$0xff]
    %v847 = vld [vmem:[%s745 + $0x12] sm:$0xff]
    %v848 = vld [vmem:[%s745 + $0x22] sm:$0xff]
    %v849 = vld [vmem:[%s745 + $0x32] sm:$0xff]
    %v850 = vld [vmem:[%s745 + $0x42] sm:$0xff]
    %v851 = vld [vmem:[%s745 + $0x52] sm:$0xff]
    %v852 = vld [vmem:[%s745 + $0x62] sm:$0xff]
    %v853 = vld [vmem:[%s745 + $0x72] sm:$0xff]
    %v854 = vld [vmem:[%s745 + $0x142] sm:$0xff]
    %v855 = vld [vmem:[%s745 + $0x152] sm:$0xff]
    %v856 = vld [vmem:[%s745 + $0x162] sm:$0xff]
    %v857 = vld [vmem:[%s745 + $0x172] sm:$0xff]
    %v858 = vld [vmem:[%s745 + $0x182] sm:$0xff]
    %v859 = vld [vmem:[%s745 + $0x192] sm:$0xff]
    %v860 = vld [vmem:[%s745 + $0x1a2] sm:$0xff]
    %v861 = vld [vmem:[%s745 + $0x1b2] sm:$0xff]
    %v862 = vstv %s845
    %v863 = vmul.f32 %v862, %v846
    %v864 = vmul.f32 %v862, %v847
    %v865 = vmul.f32 %v862, %v848
    %v866 = vmul.f32 %v862, %v849
    %v867 = vmul.f32 %v862, %v850
    %v868 = vmul.f32 %v862, %v851
    %v869 = vmul.f32 %v862, %v852
    %v870 = vmul.f32 %v862, %v853
    %v871 = vmul.f32 %v862, %v854
    %v872 = vmul.f32 %v862, %v855
    %v873 = vmul.f32 %v862, %v856
    %v874 = vmul.f32 %v862, %v857
    %v875 = vmul.f32 %v862, %v858
    %v876 = vmul.f32 %v862, %v859
    %v877 = vmul.f32 %v862, %v860
    %v878 = vmul.f32 %v862, %v861
    %v879 = vadd.f32 %v829, %v863
    %v880 = vadd.f32 %v830, %v864
    %v881 = vadd.f32 %v831, %v865
    %v882 = vadd.f32 %v832, %v866
    %v883 = vadd.f32 %v833, %v867
    %v884 = vadd.f32 %v834, %v868
    %v885 = vadd.f32 %v835, %v869
    %v886 = vadd.f32 %v836, %v870
    %v887 = vadd.f32 %v837, %v871
    %v888 = vadd.f32 %v838, %v872
    %v889 = vadd.f32 %v839, %v873
    %v890 = vadd.f32 %v840, %v874
    %v891 = vadd.f32 %v841, %v875
    %v892 = vadd.f32 %v842, %v876
    %v893 = vadd.f32 %v843, %v877
    %v894 = vadd.f32 %v844, %v878
    %s895 = sld [smem:[#allocation3 + $0x80]]
    %s896 = scalar_lea.vmem [#allocation2], 160
    %v897 = vld [vmem:[%s896] sm:$0xff]
    %v898 = vld [vmem:[%s896 + $0x10] sm:$0xff]
    %v899 = vld [vmem:[%s896 + $0x20] sm:$0xff]
    %v900 = vld [vmem:[%s896 + $0x30] sm:$0xff]
    %v901 = vld [vmem:[%s896 + $0x40] sm:$0xff]
    %v902 = vld [vmem:[%s896 + $0x50] sm:$0xff]
    %v903 = vld [vmem:[%s896 + $0x60] sm:$0xff]
    %v904 = vld [vmem:[%s896 + $0x70] sm:$0xff]
    %v905 = vld [vmem:[%s896 + $0x140] sm:$0xff]
    %v906 = vld [vmem:[%s896 + $0x150] sm:$0xff]
    %v907 = vld [vmem:[%s896 + $0x160] sm:$0xff]
    %v908 = vld [vmem:[%s896 + $0x170] sm:$0xff]
    %v909 = vld [vmem:[%s896 + $0x180] sm:$0xff]
    %v910 = vld [vmem:[%s896 + $0x190] sm:$0xff]
    %v911 = vld [vmem:[%s896 + $0x1a0] sm:$0xff]
    %v912 = vld [vmem:[%s896 + $0x1b0] sm:$0xff]
    %v913 = vstv %s895
    %v914 = vmul.f32 %v913, %v897
    %v915 = vmul.f32 %v913, %v898
    %v916 = vmul.f32 %v913, %v899
    %v917 = vmul.f32 %v913, %v900
    %v918 = vmul.f32 %v913, %v901
    %v919 = vmul.f32 %v913, %v902
    %v920 = vmul.f32 %v913, %v903
    %v921 = vmul.f32 %v913, %v904
    %v922 = vmul.f32 %v913, %v905
    %v923 = vmul.f32 %v913, %v906
    %v924 = vmul.f32 %v913, %v907
    %v925 = vmul.f32 %v913, %v908
    %v926 = vmul.f32 %v913, %v909
    %v927 = vmul.f32 %v913, %v910
    %v928 = vmul.f32 %v913, %v911
    %v929 = vmul.f32 %v913, %v912
    %v930 = vadd.f32 %v879, %v914
    %v931 = vadd.f32 %v880, %v915
    %v932 = vadd.f32 %v881, %v916
    %v933 = vadd.f32 %v882, %v917
    %v934 = vadd.f32 %v883, %v918
    %v935 = vadd.f32 %v884, %v919
    %v936 = vadd.f32 %v885, %v920
    %v937 = vadd.f32 %v886, %v921
    %v938 = vadd.f32 %v887, %v922
    %v939 = vadd.f32 %v888, %v923
    %v940 = vadd.f32 %v889, %v924
    %v941 = vadd.f32 %v890, %v925
    %v942 = vadd.f32 %v891, %v926
    %v943 = vadd.f32 %v892, %v927
    %v944 = vadd.f32 %v893, %v928
    %v945 = vadd.f32 %v894, %v929
    %s946 = sld [smem:[#allocation3 + $0x81]]
    %v947 = vld [vmem:[%s896 + $0x1] sm:$0xff]
    %v948 = vld [vmem:[%s896 + $0x11] sm:$0xff]
    %v949 = vld [vmem:[%s896 + $0x21] sm:$0xff]
    %v950 = vld [vmem:[%s896 + $0x31] sm:$0xff]
    %v951 = vld [vmem:[%s896 + $0x41] sm:$0xff]
    %v952 = vld [vmem:[%s896 + $0x51] sm:$0xff]
    %v953 = vld [vmem:[%s896 + $0x61] sm:$0xff]
    %v954 = vld [vmem:[%s896 + $0x71] sm:$0xff]
    %v955 = vld [vmem:[%s896 + $0x141] sm:$0xff]
    %v956 = vld [vmem:[%s896 + $0x151] sm:$0xff]
    %v957 = vld [vmem:[%s896 + $0x161] sm:$0xff]
    %v958 = vld [vmem:[%s896 + $0x171] sm:$0xff]
    %v959 = vld [vmem:[%s896 + $0x181] sm:$0xff]
    %v960 = vld [vmem:[%s896 + $0x191] sm:$0xff]
    %v961 = vld [vmem:[%s896 + $0x1a1] sm:$0xff]
    %v962 = vld [vmem:[%s896 + $0x1b1] sm:$0xff]
    %v963 = vstv %s946
    %v964 = vmul.f32 %v963, %v947
    %v965 = vmul.f32 %v963, %v948
    %v966 = vmul.f32 %v963, %v949
    %v967 = vmul.f32 %v963, %v950
    %v968 = vmul.f32 %v963, %v951
    %v969 = vmul.f32 %v963, %v952
    %v970 = vmul.f32 %v963, %v953
    %v971 = vmul.f32 %v963, %v954
    %v972 = vmul.f32 %v963, %v955
    %v973 = vmul.f32 %v963, %v956
    %v974 = vmul.f32 %v963, %v957
    %v975 = vmul.f32 %v963, %v958
    %v976 = vmul.f32 %v963, %v959
    %v977 = vmul.f32 %v963, %v960
    %v978 = vmul.f32 %v963, %v961
    %v979 = vmul.f32 %v963, %v962
    %v980 = vadd.f32 %v930, %v964
    %v981 = vadd.f32 %v931, %v965
    %v982 = vadd.f32 %v932, %v966
    %v983 = vadd.f32 %v933, %v967
    %v984 = vadd.f32 %v934, %v968
    %v985 = vadd.f32 %v935, %v969
    %v986 = vadd.f32 %v936, %v970
    %v987 = vadd.f32 %v937, %v971
    %v988 = vadd.f32 %v938, %v972
    %v989 = vadd.f32 %v939, %v973
    %v990 = vadd.f32 %v940, %v974
    %v991 = vadd.f32 %v941, %v975
    %v992 = vadd.f32 %v942, %v976
    %v993 = vadd.f32 %v943, %v977
    %v994 = vadd.f32 %v944, %v978
    %v995 = vadd.f32 %v945, %v979
    %s996 = sld [smem:[#allocation3 + $0x82]]
    %v997 = vld [vmem:[%s896 + $0x2] sm:$0xff]
    %v998 = vld [vmem:[%s896 + $0x12] sm:$0xff]
    %v999 = vld [vmem:[%s896 + $0x22] sm:$0xff]
    %v1000 = vld [vmem:[%s896 + $0x32] sm:$0xff]
    %v1001 = vld [vmem:[%s896 + $0x42] sm:$0xff]
    %v1002 = vld [vmem:[%s896 + $0x52] sm:$0xff]
    %v1003 = vld [vmem:[%s896 + $0x62] sm:$0xff]
    %v1004 = vld [vmem:[%s896 + $0x72] sm:$0xff]
    %v1005 = vld [vmem:[%s896 + $0x142] sm:$0xff]
    %v1006 = vld [vmem:[%s896 + $0x152] sm:$0xff]
    %v1007 = vld [vmem:[%s896 + $0x162] sm:$0xff]
    %v1008 = vld [vmem:[%s896 + $0x172] sm:$0xff]
    %v1009 = vld [vmem:[%s896 + $0x182] sm:$0xff]
    %v1010 = vld [vmem:[%s896 + $0x192] sm:$0xff]
    %v1011 = vld [vmem:[%s896 + $0x1a2] sm:$0xff]
    %v1012 = vld [vmem:[%s896 + $0x1b2] sm:$0xff]
    %v1013 = vstv %s996
    %v1014 = vmul.f32 %v1013, %v997
    %v1015 = vmul.f32 %v1013, %v998
    %v1016 = vmul.f32 %v1013, %v999
    %v1017 = vmul.f32 %v1013, %v1000
    %v1018 = vmul.f32 %v1013, %v1001
    %v1019 = vmul.f32 %v1013, %v1002
    %v1020 = vmul.f32 %v1013, %v1003
    %v1021 = vmul.f32 %v1013, %v1004
    %v1022 = vmul.f32 %v1013, %v1005
    %v1023 = vmul.f32 %v1013, %v1006
    %v1024 = vmul.f32 %v1013, %v1007
    %v1025 = vmul.f32 %v1013, %v1008
    %v1026 = vmul.f32 %v1013, %v1009
    %v1027 = vmul.f32 %v1013, %v1010
    %v1028 = vmul.f32 %v1013, %v1011
    %v1029 = vmul.f32 %v1013, %v1012
    %v1030 = vadd.f32 %v980, %v1014
    %v1031 = vadd.f32 %v981, %v1015
    %v1032 = vadd.f32 %v982, %v1016
    %v1033 = vadd.f32 %v983, %v1017
    %v1034 = vadd.f32 %v984, %v1018
    %v1035 = vadd.f32 %v985, %v1019
    %v1036 = vadd.f32 %v986, %v1020
    %v1037 = vadd.f32 %v987, %v1021
    %v1038 = vadd.f32 %v988, %v1022
    %v1039 = vadd.f32 %v989, %v1023
    %v1040 = vadd.f32 %v990, %v1024
    %v1041 = vadd.f32 %v991, %v1025
    %v1042 = vadd.f32 %v992, %v1026
    %v1043 = vadd.f32 %v993, %v1027
    %v1044 = vadd.f32 %v994, %v1028
    %v1045 = vadd.f32 %v995, %v1029
    %s1046 = sld [smem:[#allocation3 + $0x83]]
    %v1047 = vld [vmem:[%s427] sm:$0xff]
    %v1048 = vld [vmem:[%s427 + $0x10] sm:$0xff]
    %v1049 = vld [vmem:[%s427 + $0x20] sm:$0xff]
    %v1050 = vld [vmem:[%s427 + $0x30] sm:$0xff]
    %v1051 = vld [vmem:[%s427 + $0x40] sm:$0xff]
    %v1052 = vld [vmem:[%s427 + $0x50] sm:$0xff]
    %v1053 = vld [vmem:[%s427 + $0x60] sm:$0xff]
    %v1054 = vld [vmem:[%s427 + $0x70] sm:$0xff]
    %v1055 = vld [vmem:[%s427 + $0x140] sm:$0xff]
    %v1056 = vld [vmem:[%s427 + $0x150] sm:$0xff]
    %v1057 = vld [vmem:[%s427 + $0x160] sm:$0xff]
    %v1058 = vld [vmem:[%s427 + $0x170] sm:$0xff]
    %v1059 = vld [vmem:[%s427 + $0x180] sm:$0xff]
    %v1060 = vld [vmem:[%s427 + $0x190] sm:$0xff]
    %v1061 = vld [vmem:[%s427 + $0x1a0] sm:$0xff]
    %v1062 = vld [vmem:[%s427 + $0x1b0] sm:$0xff]
    %v1063 = vstv %s1046
    %v1064 = vmul.f32 %v1063, %v1047
    %v1065 = vmul.f32 %v1063, %v1048
    %v1066 = vmul.f32 %v1063, %v1049
    %v1067 = vmul.f32 %v1063, %v1050
    %v1068 = vmul.f32 %v1063, %v1051
    %v1069 = vmul.f32 %v1063, %v1052
    %v1070 = vmul.f32 %v1063, %v1053
    %v1071 = vmul.f32 %v1063, %v1054
    %v1072 = vmul.f32 %v1063, %v1055
    %v1073 = vmul.f32 %v1063, %v1056
    %v1074 = vmul.f32 %v1063, %v1057
    %v1075 = vmul.f32 %v1063, %v1058
    %v1076 = vmul.f32 %v1063, %v1059
    %v1077 = vmul.f32 %v1063, %v1060
    %v1078 = vmul.f32 %v1063, %v1061
    %v1079 = vmul.f32 %v1063, %v1062
    %v1080 = vadd.f32 %v1030, %v1064
    %v1081 = vadd.f32 %v1031, %v1065
    %v1082 = vadd.f32 %v1032, %v1066
    %v1083 = vadd.f32 %v1033, %v1067
    %v1084 = vadd.f32 %v1034, %v1068
    %v1085 = vadd.f32 %v1035, %v1069
    %v1086 = vadd.f32 %v1036, %v1070
    %v1087 = vadd.f32 %v1037, %v1071
    %v1088 = vadd.f32 %v1038, %v1072
    %v1089 = vadd.f32 %v1039, %v1073
    %v1090 = vadd.f32 %v1040, %v1074
    %v1091 = vadd.f32 %v1041, %v1075
    %v1092 = vadd.f32 %v1042, %v1076
    %v1093 = vadd.f32 %v1043, %v1077
    %v1094 = vadd.f32 %v1044, %v1078
    %v1095 = vadd.f32 %v1045, %v1079
    %s1096 = sld [smem:[#allocation3 + $0x84]]
    %v1097 = vld [vmem:[%s427 + $0x1] sm:$0xff]
    %v1098 = vld [vmem:[%s427 + $0x11] sm:$0xff]
    %v1099 = vld [vmem:[%s427 + $0x21] sm:$0xff]
    %v1100 = vld [vmem:[%s427 + $0x31] sm:$0xff]
    %v1101 = vld [vmem:[%s427 + $0x41] sm:$0xff]
    %v1102 = vld [vmem:[%s427 + $0x51] sm:$0xff]
    %v1103 = vld [vmem:[%s427 + $0x61] sm:$0xff]
    %v1104 = vld [vmem:[%s427 + $0x71] sm:$0xff]
    %v1105 = vld [vmem:[%s427 + $0x141] sm:$0xff]
    %v1106 = vld [vmem:[%s427 + $0x151] sm:$0xff]
    %v1107 = vld [vmem:[%s427 + $0x161] sm:$0xff]
    %v1108 = vld [vmem:[%s427 + $0x171] sm:$0xff]
    %v1109 = vld [vmem:[%s427 + $0x181] sm:$0xff]
    %v1110 = vld [vmem:[%s427 + $0x191] sm:$0xff]
    %v1111 = vld [vmem:[%s427 + $0x1a1] sm:$0xff]
    %v1112 = vld [vmem:[%s427 + $0x1b1] sm:$0xff]
    %v1113 = vstv %s1096
    %v1114 = vmul.f32 %v1113, %v1097
    %v1115 = vmul.f32 %v1113, %v1098
    %v1116 = vmul.f32 %v1113, %v1099
    %v1117 = vmul.f32 %v1113, %v1100
    %v1118 = vmul.f32 %v1113, %v1101
    %v1119 = vmul.f32 %v1113, %v1102
    %v1120 = vmul.f32 %v1113, %v1103
    %v1121 = vmul.f32 %v1113, %v1104
    %v1122 = vmul.f32 %v1113, %v1105
    %v1123 = vmul.f32 %v1113, %v1106
    %v1124 = vmul.f32 %v1113, %v1107
    %v1125 = vmul.f32 %v1113, %v1108
    %v1126 = vmul.f32 %v1113, %v1109
    %v1127 = vmul.f32 %v1113, %v1110
    %v1128 = vmul.f32 %v1113, %v1111
    %v1129 = vmul.f32 %v1113, %v1112
    %v1130 = vadd.f32 %v1080, %v1114
    %v1131 = vadd.f32 %v1081, %v1115
    %v1132 = vadd.f32 %v1082, %v1116
    %v1133 = vadd.f32 %v1083, %v1117
    %v1134 = vadd.f32 %v1084, %v1118
    %v1135 = vadd.f32 %v1085, %v1119
    %v1136 = vadd.f32 %v1086, %v1120
    %v1137 = vadd.f32 %v1087, %v1121
    %v1138 = vadd.f32 %v1088, %v1122
    %v1139 = vadd.f32 %v1089, %v1123
    %v1140 = vadd.f32 %v1090, %v1124
    %v1141 = vadd.f32 %v1091, %v1125
    %v1142 = vadd.f32 %v1092, %v1126
    %v1143 = vadd.f32 %v1093, %v1127
    %v1144 = vadd.f32 %v1094, %v1128
    %v1145 = vadd.f32 %v1095, %v1129
    %s1146 = sld [smem:[#allocation3 + $0x85]]
    %v1147 = vld [vmem:[%s427 + $0x2] sm:$0xff]
    %v1148 = vld [vmem:[%s427 + $0x12] sm:$0xff]
    %v1149 = vld [vmem:[%s427 + $0x22] sm:$0xff]
    %v1150 = vld [vmem:[%s427 + $0x32] sm:$0xff]
    %v1151 = vld [vmem:[%s427 + $0x42] sm:$0xff]
    %v1152 = vld [vmem:[%s427 + $0x52] sm:$0xff]
    %v1153 = vld [vmem:[%s427 + $0x62] sm:$0xff]
    %v1154 = vld [vmem:[%s427 + $0x72] sm:$0xff]
    %v1155 = vld [vmem:[%s427 + $0x142] sm:$0xff]
    %v1156 = vld [vmem:[%s427 + $0x152] sm:$0xff]
    %v1157 = vld [vmem:[%s427 + $0x162] sm:$0xff]
    %v1158 = vld [vmem:[%s427 + $0x172] sm:$0xff]
    %v1159 = vld [vmem:[%s427 + $0x182] sm:$0xff]
    %v1160 = vld [vmem:[%s427 + $0x192] sm:$0xff]
    %v1161 = vld [vmem:[%s427 + $0x1a2] sm:$0xff]
    %v1162 = vld [vmem:[%s427 + $0x1b2] sm:$0xff]
    %v1163 = vstv %s1146
    %v1164 = vmul.f32 %v1163, %v1147
    %v1165 = vmul.f32 %v1163, %v1148
    %v1166 = vmul.f32 %v1163, %v1149
    %v1167 = vmul.f32 %v1163, %v1150
    %v1168 = vmul.f32 %v1163, %v1151
    %v1169 = vmul.f32 %v1163, %v1152
    %v1170 = vmul.f32 %v1163, %v1153
    %v1171 = vmul.f32 %v1163, %v1154
    %v1172 = vmul.f32 %v1163, %v1155
    %v1173 = vmul.f32 %v1163, %v1156
    %v1174 = vmul.f32 %v1163, %v1157
    %v1175 = vmul.f32 %v1163, %v1158
    %v1176 = vmul.f32 %v1163, %v1159
    %v1177 = vmul.f32 %v1163, %v1160
    %v1178 = vmul.f32 %v1163, %v1161
    %v1179 = vmul.f32 %v1163, %v1162
    %v1180 = vadd.f32 %v1130, %v1164
    %v1181 = vadd.f32 %v1131, %v1165
    %v1182 = vadd.f32 %v1132, %v1166
    %v1183 = vadd.f32 %v1133, %v1167
    %v1184 = vadd.f32 %v1134, %v1168
    %v1185 = vadd.f32 %v1135, %v1169
    %v1186 = vadd.f32 %v1136, %v1170
    %v1187 = vadd.f32 %v1137, %v1171
    %v1188 = vadd.f32 %v1138, %v1172
    %v1189 = vadd.f32 %v1139, %v1173
    %v1190 = vadd.f32 %v1140, %v1174
    %v1191 = vadd.f32 %v1141, %v1175
    %v1192 = vadd.f32 %v1142, %v1176
    %v1193 = vadd.f32 %v1143, %v1177
    %v1194 = vadd.f32 %v1144, %v1178
    %v1195 = vadd.f32 %v1145, %v1179
    %s1196 = sld [smem:[#allocation3 + $0x86]]
    %s1197 = scalar_lea.vmem [#allocation2], 192
    %v1198 = vld [vmem:[%s1197] sm:$0xff]
    %v1199 = vld [vmem:[%s1197 + $0x10] sm:$0xff]
    %v1200 = vld [vmem:[%s1197 + $0x20] sm:$0xff]
    %v1201 = vld [vmem:[%s1197 + $0x30] sm:$0xff]
    %v1202 = vld [vmem:[%s1197 + $0x40] sm:$0xff]
    %v1203 = vld [vmem:[%s1197 + $0x50] sm:$0xff]
    %v1204 = vld [vmem:[%s1197 + $0x60] sm:$0xff]
    %v1205 = vld [vmem:[%s1197 + $0x70] sm:$0xff]
    %v1206 = vld [vmem:[%s1197 + $0x140] sm:$0xff]
    %v1207 = vld [vmem:[%s1197 + $0x150] sm:$0xff]
    %v1208 = vld [vmem:[%s1197 + $0x160] sm:$0xff]
    %v1209 = vld [vmem:[%s1197 + $0x170] sm:$0xff]
    %v1210 = vld [vmem:[%s1197 + $0x180] sm:$0xff]
    %v1211 = vld [vmem:[%s1197 + $0x190] sm:$0xff]
    %v1212 = vld [vmem:[%s1197 + $0x1a0] sm:$0xff]
    %v1213 = vld [vmem:[%s1197 + $0x1b0] sm:$0xff]
    %v1214 = vstv %s1196
    %v1215 = vmul.f32 %v1214, %v1198
    %v1216 = vmul.f32 %v1214, %v1199
    %v1217 = vmul.f32 %v1214, %v1200
    %v1218 = vmul.f32 %v1214, %v1201
    %v1219 = vmul.f32 %v1214, %v1202
    %v1220 = vmul.f32 %v1214, %v1203
    %v1221 = vmul.f32 %v1214, %v1204
    %v1222 = vmul.f32 %v1214, %v1205
    %v1223 = vmul.f32 %v1214, %v1206
    %v1224 = vmul.f32 %v1214, %v1207
    %v1225 = vmul.f32 %v1214, %v1208
    %v1226 = vmul.f32 %v1214, %v1209
    %v1227 = vmul.f32 %v1214, %v1210
    %v1228 = vmul.f32 %v1214, %v1211
    %v1229 = vmul.f32 %v1214, %v1212
    %v1230 = vmul.f32 %v1214, %v1213
    %v1231 = vadd.f32 %v1180, %v1215
    %v1232 = vadd.f32 %v1181, %v1216
    %v1233 = vadd.f32 %v1182, %v1217
    %v1234 = vadd.f32 %v1183, %v1218
    %v1235 = vadd.f32 %v1184, %v1219
    %v1236 = vadd.f32 %v1185, %v1220
    %v1237 = vadd.f32 %v1186, %v1221
    %v1238 = vadd.f32 %v1187, %v1222
    %v1239 = vadd.f32 %v1188, %v1223
    %v1240 = vadd.f32 %v1189, %v1224
    %v1241 = vadd.f32 %v1190, %v1225
    %v1242 = vadd.f32 %v1191, %v1226
    %v1243 = vadd.f32 %v1192, %v1227
    %v1244 = vadd.f32 %v1193, %v1228
    %v1245 = vadd.f32 %v1194, %v1229
    %v1246 = vadd.f32 %v1195, %v1230
    %s1247 = sld [smem:[#allocation3 + $0x87]]
    %v1248 = vld [vmem:[%s1197 + $0x1] sm:$0xff]
    %v1249 = vld [vmem:[%s1197 + $0x11] sm:$0xff]
    %v1250 = vld [vmem:[%s1197 + $0x21] sm:$0xff]
    %v1251 = vld [vmem:[%s1197 + $0x31] sm:$0xff]
    %v1252 = vld [vmem:[%s1197 + $0x41] sm:$0xff]
    %v1253 = vld [vmem:[%s1197 + $0x51] sm:$0xff]
    %v1254 = vld [vmem:[%s1197 + $0x61] sm:$0xff]
    %v1255 = vld [vmem:[%s1197 + $0x71] sm:$0xff]
    %v1256 = vld [vmem:[%s1197 + $0x141] sm:$0xff]
    %v1257 = vld [vmem:[%s1197 + $0x151] sm:$0xff]
    %v1258 = vld [vmem:[%s1197 + $0x161] sm:$0xff]
    %v1259 = vld [vmem:[%s1197 + $0x171] sm:$0xff]
    %v1260 = vld [vmem:[%s1197 + $0x181] sm:$0xff]
    %v1261 = vld [vmem:[%s1197 + $0x191] sm:$0xff]
    %v1262 = vld [vmem:[%s1197 + $0x1a1] sm:$0xff]
    %v1263 = vld [vmem:[%s1197 + $0x1b1] sm:$0xff]
    %v1264 = vstv %s1247
    %v1265 = vmul.f32 %v1264, %v1248
    %v1266 = vmul.f32 %v1264, %v1249
    %v1267 = vmul.f32 %v1264, %v1250
    %v1268 = vmul.f32 %v1264, %v1251
    %v1269 = vmul.f32 %v1264, %v1252
    %v1270 = vmul.f32 %v1264, %v1253
    %v1271 = vmul.f32 %v1264, %v1254
    %v1272 = vmul.f32 %v1264, %v1255
    %v1273 = vmul.f32 %v1264, %v1256
    %v1274 = vmul.f32 %v1264, %v1257
    %v1275 = vmul.f32 %v1264, %v1258
    %v1276 = vmul.f32 %v1264, %v1259
    %v1277 = vmul.f32 %v1264, %v1260
    %v1278 = vmul.f32 %v1264, %v1261
    %v1279 = vmul.f32 %v1264, %v1262
    %v1280 = vmul.f32 %v1264, %v1263
    %v1281 = vadd.f32 %v1231, %v1265
    %v1282 = vadd.f32 %v1232, %v1266
    %v1283 = vadd.f32 %v1233, %v1267
    %v1284 = vadd.f32 %v1234, %v1268
    %v1285 = vadd.f32 %v1235, %v1269
    %v1286 = vadd.f32 %v1236, %v1270
    %v1287 = vadd.f32 %v1237, %v1271
    %v1288 = vadd.f32 %v1238, %v1272
    %v1289 = vadd.f32 %v1239, %v1273
    %v1290 = vadd.f32 %v1240, %v1274
    %v1291 = vadd.f32 %v1241, %v1275
    %v1292 = vadd.f32 %v1242, %v1276
    %v1293 = vadd.f32 %v1243, %v1277
    %v1294 = vadd.f32 %v1244, %v1278
    %v1295 = vadd.f32 %v1245, %v1279
    %v1296 = vadd.f32 %v1246, %v1280
    %s1297 = sld [smem:[#allocation3 + $0x88]]
    %v1298 = vld [vmem:[%s1197 + $0x2] sm:$0xff]
    %v1299 = vld [vmem:[%s1197 + $0x12] sm:$0xff]
    %v1300 = vld [vmem:[%s1197 + $0x22] sm:$0xff]
    %v1301 = vld [vmem:[%s1197 + $0x32] sm:$0xff]
    %v1302 = vld [vmem:[%s1197 + $0x42] sm:$0xff]
    %v1303 = vld [vmem:[%s1197 + $0x52] sm:$0xff]
    %v1304 = vld [vmem:[%s1197 + $0x62] sm:$0xff]
    %v1305 = vld [vmem:[%s1197 + $0x72] sm:$0xff]
    %v1306 = vld [vmem:[%s1197 + $0x142] sm:$0xff]
    %v1307 = vld [vmem:[%s1197 + $0x152] sm:$0xff]
    %v1308 = vld [vmem:[%s1197 + $0x162] sm:$0xff]
    %v1309 = vld [vmem:[%s1197 + $0x172] sm:$0xff]
    %v1310 = vld [vmem:[%s1197 + $0x182] sm:$0xff]
    %v1311 = vld [vmem:[%s1197 + $0x192] sm:$0xff]
    %v1312 = vld [vmem:[%s1197 + $0x1a2] sm:$0xff]
    %v1313 = vld [vmem:[%s1197 + $0x1b2] sm:$0xff]
    %v1314 = vstv %s1297
    %v1315 = vmul.f32 %v1314, %v1298
    %v1316 = vmul.f32 %v1314, %v1299
    %v1317 = vmul.f32 %v1314, %v1300
    %v1318 = vmul.f32 %v1314, %v1301
    %v1319 = vmul.f32 %v1314, %v1302
    %v1320 = vmul.f32 %v1314, %v1303
    %v1321 = vmul.f32 %v1314, %v1304
    %v1322 = vmul.f32 %v1314, %v1305
    %v1323 = vmul.f32 %v1314, %v1306
    %v1324 = vmul.f32 %v1314, %v1307
    %v1325 = vmul.f32 %v1314, %v1308
    %v1326 = vmul.f32 %v1314, %v1309
    %v1327 = vmul.f32 %v1314, %v1310
    %v1328 = vmul.f32 %v1314, %v1311
    %v1329 = vmul.f32 %v1314, %v1312
    %v1330 = vmul.f32 %v1314, %v1313
    %v1331 = vadd.f32 %v1281, %v1315
    %v1332 = vadd.f32 %v1282, %v1316
    %v1333 = vadd.f32 %v1283, %v1317
    %v1334 = vadd.f32 %v1284, %v1318
    %v1335 = vadd.f32 %v1285, %v1319
    %v1336 = vadd.f32 %v1286, %v1320
    %v1337 = vadd.f32 %v1287, %v1321
    %v1338 = vadd.f32 %v1288, %v1322
    %v1339 = vadd.f32 %v1289, %v1323
    %v1340 = vadd.f32 %v1290, %v1324
    %v1341 = vadd.f32 %v1291, %v1325
    %v1342 = vadd.f32 %v1292, %v1326
    %v1343 = vadd.f32 %v1293, %v1327
    %v1344 = vadd.f32 %v1294, %v1328
    %v1345 = vadd.f32 %v1295, %v1329
    %v1346 = vadd.f32 %v1296, %v1330
    %v1347 = vxor.u32 %v1331, 2147483648
    %v1348 = vxor.u32 %v1332, 2147483648
    %v1349 = vxor.u32 %v1333, 2147483648
    %v1350 = vxor.u32 %v1334, 2147483648
    %v1351 = vxor.u32 %v1335, 2147483648
    %v1352 = vxor.u32 %v1336, 2147483648
    %v1353 = vxor.u32 %v1337, 2147483648
    %v1354 = vxor.u32 %v1338, 2147483648
    %v1355 = vxor.u32 %v1339, 2147483648
    %v1356 = vxor.u32 %v1340, 2147483648
    %v1357 = vxor.u32 %v1341, 2147483648
    %v1358 = vxor.u32 %v1342, 2147483648
    %v1359 = vxor.u32 %v1343, 2147483648
    %v1360 = vxor.u32 %v1344, 2147483648
    %v1361 = vxor.u32 %v1345, 2147483648
    %v1362 = vxor.u32 %v1346, 2147483648
    %v1363 = vmul.f32 %v1347, 1.442695
    %v1364 = vpow.pop %v1363
    %v1365 = vmul.f32 %v1348, 1.442695
    %v1366 = vpow.pop %v1365
    %v1367 = vmul.f32 %v1349, 1.442695
    %v1368 = vpow.pop %v1367
    %v1369 = vmul.f32 %v1350, 1.442695
    %v1370 = vpow.pop %v1369
    %v1371 = vmul.f32 %v1351, 1.442695
    %v1372 = vpow.pop %v1371
    %v1373 = vmul.f32 %v1352, 1.442695
    %v1374 = vpow.pop %v1373
    %v1375 = vmul.f32 %v1353, 1.442695
    %v1376 = vpow.pop %v1375
    %v1377 = vmul.f32 %v1354, 1.442695
    %v1378 = vpow.pop %v1377
    %v1379 = vmul.f32 %v1355, 1.442695
    %v1380 = vpow.pop %v1379
    %v1381 = vmul.f32 %v1356, 1.442695
    %v1382 = vpow.pop %v1381
    %v1383 = vmul.f32 %v1357, 1.442695
    %v1384 = vpow.pop %v1383
    %v1385 = vmul.f32 %v1358, 1.442695
    %v1386 = vpow.pop %v1385
    %v1387 = vmul.f32 %v1359, 1.442695
    %v1388 = vpow.pop %v1387
    %v1389 = vmul.f32 %v1360, 1.442695
    %v1390 = vpow.pop %v1389
    %v1391 = vmul.f32 %v1361, 1.442695
    %v1392 = vpow.pop %v1391
    %v1393 = vmul.f32 %v1362, 1.442695
    %v1394 = vpow.pop %v1393
    %v1395 = vadd.f32 %v1364, 1.0
    %v1396 = vadd.f32 %v1366, 1.0
    %v1397 = vadd.f32 %v1368, 1.0
    %v1398 = vadd.f32 %v1370, 1.0
    %v1399 = vadd.f32 %v1372, 1.0
    %v1400 = vadd.f32 %v1374, 1.0
    %v1401 = vadd.f32 %v1376, 1.0
    %v1402 = vadd.f32 %v1378, 1.0
    %v1403 = vadd.f32 %v1380, 1.0
    %v1404 = vadd.f32 %v1382, 1.0
    %v1405 = vadd.f32 %v1384, 1.0
    %v1406 = vadd.f32 %v1386, 1.0
    %v1407 = vadd.f32 %v1388, 1.0
    %v1408 = vadd.f32 %v1390, 1.0
    %v1409 = vadd.f32 %v1392, 1.0
    %v1410 = vadd.f32 %v1394, 1.0
    %v1411 = vrcp.pop %v1395
    %v1412 = vmul.f32 1.0, %v1411
    %v1413 = vrcp.pop %v1396
    %v1414 = vmul.f32 1.0, %v1413
    %v1415 = vrcp.pop %v1397
    %v1416 = vmul.f32 1.0, %v1415
    %v1417 = vrcp.pop %v1398
    %v1418 = vmul.f32 1.0, %v1417
    %v1419 = vrcp.pop %v1399
    %v1420 = vmul.f32 1.0, %v1419
    %v1421 = vrcp.pop %v1400
    %v1422 = vmul.f32 1.0, %v1421
    %v1423 = vrcp.pop %v1401
    %v1424 = vmul.f32 1.0, %v1423
    %v1425 = vrcp.pop %v1402
    %v1426 = vmul.f32 1.0, %v1425
    %v1427 = vrcp.pop %v1403
    %v1428 = vmul.f32 1.0, %v1427
    %v1429 = vrcp.pop %v1404
    %v1430 = vmul.f32 1.0, %v1429
    %v1431 = vrcp.pop %v1405
    %v1432 = vmul.f32 1.0, %v1431
    %v1433 = vrcp.pop %v1406
    %v1434 = vmul.f32 1.0, %v1433
    %v1435 = vrcp.pop %v1407
    %v1436 = vmul.f32 1.0, %v1435
    %v1437 = vrcp.pop %v1408
    %v1438 = vmul.f32 1.0, %v1437
    %v1439 = vrcp.pop %v1409
    %v1440 = vmul.f32 1.0, %v1439
    %v1441 = vrcp.pop %v1410
    %v1442 = vmul.f32 1.0, %v1441
    %1444 = vset.pattern.permute.xlu0 0
    %1445 = vperm.xlu0 %1444, %v1412
    %v1446 = vpop.permute.xlu0 %1445
    %1449 = vset.pattern.permute.xlu0 0
    %1450 = vperm.xlu0 %1449, %v1414
    %v1451 = vpop.permute.xlu0 %1450
    %1454 = vset.pattern.permute.xlu0 0
    %1455 = vperm.xlu0 %1454, %v1416
    %v1456 = vpop.permute.xlu0 %1455
    %1459 = vset.pattern.permute.xlu0 0
    %1460 = vperm.xlu0 %1459, %v1418
    %v1461 = vpop.permute.xlu0 %1460
    %1464 = vset.pattern.permute.xlu0 0
    %1465 = vperm.xlu0 %1464, %v1420
    %v1466 = vpop.permute.xlu0 %1465
    %1469 = vset.pattern.permute.xlu0 0
    %1470 = vperm.xlu0 %1469, %v1422
    %v1471 = vpop.permute.xlu0 %1470
    %1474 = vset.pattern.permute.xlu0 0
    %1475 = vperm.xlu0 %1474, %v1424
    %v1476 = vpop.permute.xlu0 %1475
    %1479 = vset.pattern.permute.xlu0 0
    %1480 = vperm.xlu0 %1479, %v1426
    %v1481 = vpop.permute.xlu0 %1480
    %1484 = vset.pattern.permute.xlu0 0
    %1485 = vperm.xlu0 %1484, %v1428
    %v1486 = vpop.permute.xlu0 %1485
    %1489 = vset.pattern.permute.xlu0 0
    %1490 = vperm.xlu0 %1489, %v1430
    %v1491 = vpop.permute.xlu0 %1490
    %1494 = vset.pattern.permute.xlu0 0
    %1495 = vperm.xlu0 %1494, %v1432
    %v1496 = vpop.permute.xlu0 %1495
    %1499 = vset.pattern.permute.xlu0 0
    %1500 = vperm.xlu0 %1499, %v1434
    %v1501 = vpop.permute.xlu0 %1500
    %1504 = vset.pattern.permute.xlu0 0
    %1505 = vperm.xlu0 %1504, %v1436
    %v1506 = vpop.permute.xlu0 %1505
    %1509 = vset.pattern.permute.xlu0 0
    %1510 = vperm.xlu0 %1509, %v1438
    %v1511 = vpop.permute.xlu0 %1510
    %1514 = vset.pattern.permute.xlu0 0
    %1515 = vperm.xlu0 %1514, %v1440
    %v1516 = vpop.permute.xlu0 %1515
    %1519 = vset.pattern.permute.xlu0 0
    %1520 = vperm.xlu0 %1519, %v1442
    %v1521 = vpop.permute.xlu0 %1520
    %v1523 = vmul.f32 %v199, %v1446
    %v1524 = vmul.f32 %v200, %v1451
    %v1525 = vmul.f32 %v201, %v1456
    %v1526 = vmul.f32 %v202, %v1461
    %v1527 = vmul.f32 %v203, %v1466
    %v1528 = vmul.f32 %v204, %v1471
    %v1529 = vmul.f32 %v205, %v1476
    %v1530 = vmul.f32 %v206, %v1481
    %v1531 = vmul.f32 %v207, %v1486
    %v1532 = vmul.f32 %v208, %v1491
    %v1533 = vmul.f32 %v209, %v1496
    %v1534 = vmul.f32 %v210, %v1501
    %v1535 = vmul.f32 %v211, %v1506
    %v1536 = vmul.f32 %v212, %v1511
    %v1537 = vmul.f32 %v213, %v1516
    %v1538 = vmul.f32 %v214, %v1521
    %v1539 = vld [vmem:[%s4] sm:$0xff]
    %v1540 = vld [vmem:[%s4 + $0x8] sm:$0xff]
    %v1541 = vld [vmem:[%s4 + $0x10] sm:$0xff]
    %v1542 = vld [vmem:[%s4 + $0x18] sm:$0xff]
    %v1543 = vld [vmem:[%s4 + $0x20] sm:$0xff]
    %v1544 = vld [vmem:[%s4 + $0x28] sm:$0xff]
    %v1545 = vld [vmem:[%s4 + $0x30] sm:$0xff]
    %v1546 = vld [vmem:[%s4 + $0x38] sm:$0xff]
    %v1547 = vld [vmem:[%s4 + $0x40] sm:$0xff]
    %v1548 = vld [vmem:[%s4 + $0x48] sm:$0xff]
    %v1549 = vld [vmem:[%s4 + $0x50] sm:$0xff]
    %v1550 = vld [vmem:[%s4 + $0x58] sm:$0xff]
    %v1551 = vld [vmem:[%s4 + $0x60] sm:$0xff]
    %v1552 = vld [vmem:[%s4 + $0x68] sm:$0xff]
    %v1553 = vld [vmem:[%s4 + $0x70] sm:$0xff]
    %v1554 = vld [vmem:[%s4 + $0x78] sm:$0xff]
    %v1555 = vsel %vm56, %v1539, 0.0
    %v1556 = vsel %vm56, %v1540, 0.0
    %v1557 = vadd.f32 %v1555, %v1556
    %v1558 = vsel %vm56, %v1541, 0.0
    %v1559 = vadd.f32 %v1557, %v1558
    %v1560 = vsel %vm56, %v1542, 0.0
    %v1561 = vadd.f32 %v1559, %v1560
    %v1562 = vsel %vm56, %v1543, 0.0
    %v1563 = vadd.f32 %v1561, %v1562
    %v1564 = vsel %vm56, %v1544, 0.0
    %v1565 = vadd.f32 %v1563, %v1564
    %v1566 = vsel %vm56, %v1545, 0.0
    %v1567 = vadd.f32 %v1565, %v1566
    %v1568 = vsel %vm56, %v1546, 0.0
    %v1569 = vadd.f32 %v1567, %v1568
    %v1570 = vsel %vm56, %v1547, 0.0
    %v1571 = vadd.f32 %v1569, %v1570
    %v1572 = vsel %vm56, %v1548, 0.0
    %v1573 = vadd.f32 %v1571, %v1572
    %v1574 = vsel %vm56, %v1549, 0.0
    %v1575 = vadd.f32 %v1573, %v1574
    %v1576 = vsel %vm56, %v1550, 0.0
    %v1577 = vadd.f32 %v1575, %v1576
    %v1578 = vsel %vm56, %v1551, 0.0
    %v1579 = vadd.f32 %v1577, %v1578
    %v1580 = vsel %vm56, %v1552, 0.0
    %v1581 = vadd.f32 %v1579, %v1580
    %v1582 = vsel %vm56, %v1553, 0.0
    %v1583 = vadd.f32 %v1581, %v1582
    %v1584 = vsel %vm56, %v1554, 0.0
    %v1585 = vadd.f32 %v1583, %v1584
    %v1586 = vrot.slane %v1585, 4
    %v1587 = vadd.f32 %v1585, %v1586
    %v1588 = vrot.slane %v1587, 2
    %v1589 = vadd.f32 %v1587, %v1588
    %v1590 = vrot.slane %v1589, 1
    %v1591 = vadd.f32 %v1589, %v1590
    %v1592 = vmul.f32 %v1591, %v94
    %v1593 = vsub.f32 %v1539, %v1592
    %v1594 = vsub.f32 %v1540, %v1592
    %v1595 = vsub.f32 %v1541, %v1592
    %v1596 = vsub.f32 %v1542, %v1592
    %v1597 = vsub.f32 %v1543, %v1592
    %v1598 = vsub.f32 %v1544, %v1592
    %v1599 = vsub.f32 %v1545, %v1592
    %v1600 = vsub.f32 %v1546, %v1592
    %v1601 = vsub.f32 %v1547, %v1592
    %v1602 = vsub.f32 %v1548, %v1592
    %v1603 = vsub.f32 %v1549, %v1592
    %v1604 = vsub.f32 %v1550, %v1592
    %v1605 = vsub.f32 %v1551, %v1592
    %v1606 = vsub.f32 %v1552, %v1592
    %v1607 = vsub.f32 %v1553, %v1592
    %v1608 = vsub.f32 %v1554, %v1592
    %v1609 = vmul.f32 %v1593, %v1593
    %v1610 = vmul.f32 %v1594, %v1594
    %v1611 = vmul.f32 %v1595, %v1595
    %v1612 = vmul.f32 %v1596, %v1596
    %v1613 = vmul.f32 %v1597, %v1597
    %v1614 = vmul.f32 %v1598, %v1598
    %v1615 = vmul.f32 %v1599, %v1599
    %v1616 = vmul.f32 %v1600, %v1600
    %v1617 = vmul.f32 %v1601, %v1601
    %v1618 = vmul.f32 %v1602, %v1602
    %v1619 = vmul.f32 %v1603, %v1603
    %v1620 = vmul.f32 %v1604, %v1604
    %v1621 = vmul.f32 %v1605, %v1605
    %v1622 = vmul.f32 %v1606, %v1606
    %v1623 = vmul.f32 %v1607, %v1607
    %v1624 = vmul.f32 %v1608, %v1608
    %v1625 = vsel %vm56, %v1609, 0.0
    %v1626 = vsel %vm56, %v1610, 0.0
    %v1627 = vadd.f32 %v1625, %v1626
    %v1628 = vsel %vm56, %v1611, 0.0
    %v1629 = vadd.f32 %v1627, %v1628
    %v1630 = vsel %vm56, %v1612, 0.0
    %v1631 = vadd.f32 %v1629, %v1630
    %v1632 = vsel %vm56, %v1613, 0.0
    %v1633 = vadd.f32 %v1631, %v1632
    %v1634 = vsel %vm56, %v1614, 0.0
    %v1635 = vadd.f32 %v1633, %v1634
    %v1636 = vsel %vm56, %v1615, 0.0
    %v1637 = vadd.f32 %v1635, %v1636
    %v1638 = vsel %vm56, %v1616, 0.0
    %v1639 = vadd.f32 %v1637, %v1638
    %v1640 = vsel %vm56, %v1617, 0.0
    %v1641 = vadd.f32 %v1639, %v1640
    %v1642 = vsel %vm56, %v1618, 0.0
    %v1643 = vadd.f32 %v1641, %v1642
    %v1644 = vsel %vm56, %v1619, 0.0
    %v1645 = vadd.f32 %v1643, %v1644
    %v1646 = vsel %vm56, %v1620, 0.0
    %v1647 = vadd.f32 %v1645, %v1646
    %v1648 = vsel %vm56, %v1621, 0.0
    %v1649 = vadd.f32 %v1647, %v1648
    %v1650 = vsel %vm56, %v1622, 0.0
    %v1651 = vadd.f32 %v1649, %v1650
    %v1652 = vsel %vm56, %v1623, 0.0
    %v1653 = vadd.f32 %v1651, %v1652
    %v1654 = vsel %vm56, %v1624, 0.0
    %v1655 = vadd.f32 %v1653, %v1654
    %v1656 = vrot.slane %v1655, 4
    %v1657 = vadd.f32 %v1655, %v1656
    %v1658 = vrot.slane %v1657, 2
    %v1659 = vadd.f32 %v1657, %v1658
    %v1660 = vrot.slane %v1659, 1
    %v1661 = vadd.f32 %v1659, %v1660
    %v1662 = vmul.f32 %v1661, %v94
    %v1663 = vld [vmem:[%s5] sm:$0x1]
    %v1664 = vadd.f32 %v1662, 1e-05
    %v1665 = vrsqrt.pop %v1664
    %v1666 = vmul.f32 %v1663, %v1665
    %v1668 = vlaneseq
    %v1669 = vshrl.u32 %v1668, 7
    %v1670 = vsub.s32 0, %v1669
    %v1671 = vrot.slane %v1666, %v1670
    %v1673 = vmul.f32 %v1593, %v1671
    %v1674 = vmul.f32 %v1594, %v1671
    %v1675 = vmul.f32 %v1595, %v1671
    %v1676 = vmul.f32 %v1596, %v1671
    %v1677 = vmul.f32 %v1597, %v1671
    %v1678 = vmul.f32 %v1598, %v1671
    %v1679 = vmul.f32 %v1599, %v1671
    %v1680 = vmul.f32 %v1600, %v1671
    %v1681 = vmul.f32 %v1601, %v1671
    %v1682 = vmul.f32 %v1602, %v1671
    %v1683 = vmul.f32 %v1603, %v1671
    %v1684 = vmul.f32 %v1604, %v1671
    %v1685 = vmul.f32 %v1605, %v1671
    %v1686 = vmul.f32 %v1606, %v1671
    %v1687 = vmul.f32 %v1607, %v1671
    %v1688 = vmul.f32 %v1608, %v1671
    %v1689 = vld [vmem:[%s6] sm:$0x1]
    %v1691 = vlaneseq
    %v1692 = vshrl.u32 %v1691, 7
    %v1693 = vsub.s32 0, %v1692
    %v1694 = vrot.slane %v1689, %v1693
    %v1696 = vadd.f32 %v1673, %v1694
    %v1697 = vadd.f32 %v1674, %v1694
    %v1698 = vadd.f32 %v1675, %v1694
    %v1699 = vadd.f32 %v1676, %v1694
    %v1700 = vadd.f32 %v1677, %v1694
    %v1701 = vadd.f32 %v1678, %v1694
    %v1702 = vadd.f32 %v1679, %v1694
    %v1703 = vadd.f32 %v1680, %v1694
    %v1704 = vadd.f32 %v1681, %v1694
    %v1705 = vadd.f32 %v1682, %v1694
    %v1706 = vadd.f32 %v1683, %v1694
    %v1707 = vadd.f32 %v1684, %v1694
    %v1708 = vadd.f32 %v1685, %v1694
    %v1709 = vadd.f32 %v1686, %v1694
    %v1710 = vadd.f32 %v1687, %v1694
    %v1711 = vadd.f32 %v1688, %v1694
    %v1712 = vadd.f32 %v1696, %v1523
    %v1713 = vadd.f32 %v1697, %v1524
    %v1714 = vadd.f32 %v1698, %v1525
    %v1715 = vadd.f32 %v1699, %v1526
    %v1716 = vadd.f32 %v1700, %v1527
    %v1717 = vadd.f32 %v1701, %v1528
    %v1718 = vadd.f32 %v1702, %v1529
    %v1719 = vadd.f32 %v1703, %v1530
    %v1720 = vadd.f32 %v1704, %v1531
    %v1721 = vadd.f32 %v1705, %v1532
    %v1722 = vadd.f32 %v1706, %v1533
    %v1723 = vadd.f32 %v1707, %v1534
    %v1724 = vadd.f32 %v1708, %v1535
    %v1725 = vadd.f32 %v1709, %v1536
    %v1726 = vadd.f32 %v1710, %v1537
    %v1727 = vadd.f32 %v1711, %v1538
    %1728 = vst.msk [vmem:[#allocation6] sm:$0xff] %vm56, %v1712
    %1729 = vst.msk [vmem:[#allocation6 + $0x8] sm:$0xff] %vm56, %v1713
    %1730 = vst.msk [vmem:[#allocation6 + $0x10] sm:$0xff] %vm56, %v1714
    %1731 = vst.msk [vmem:[#allocation6 + $0x18] sm:$0xff] %vm56, %v1715
    %1732 = vst.msk [vmem:[#allocation6 + $0x20] sm:$0xff] %vm56, %v1716
    %1733 = vst.msk [vmem:[#allocation6 + $0x28] sm:$0xff] %vm56, %v1717
    %1734 = vst.msk [vmem:[#allocation6 + $0x30] sm:$0xff] %vm56, %v1718
    %1735 = vst.msk [vmem:[#allocation6 + $0x38] sm:$0xff] %vm56, %v1719
    %1736 = vst.msk [vmem:[#allocation6 + $0x40] sm:$0xff] %vm56, %v1720
    %1737 = vst.msk [vmem:[#allocation6 + $0x48] sm:$0xff] %vm56, %v1721
    %1738 = vst.msk [vmem:[#allocation6 + $0x50] sm:$0xff] %vm56, %v1722
    %1739 = vst.msk [vmem:[#allocation6 + $0x58] sm:$0xff] %vm56, %v1723
    %1740 = vst.msk [vmem:[#allocation6 + $0x60] sm:$0xff] %vm56, %v1724
    %1741 = vst.msk [vmem:[#allocation6 + $0x68] sm:$0xff] %vm56, %v1725
    %1742 = vst.msk [vmem:[#allocation6 + $0x70] sm:$0xff] %vm56, %v1726
    %1743 = vst.msk [vmem:[#allocation6 + $0x78] sm:$0xff] %vm56, %v1727
    // Predicated region
    $region34: #{bottleneck_ir_sam_forward.11} parent=1 // pred_check
      _
    $region35: #{bottleneck_ir_sam_forward.11} parent=1 // pred_check_branch
      %1745 = sbr.rel (0) target = $region37
    $region36: #{bottleneck_ir_sam_forward.11} parent=1 // pred_region
      %s1747 = ssub.s32 2048, 2048
      %1748 = vsyncadd [#allocation4], %s1747
      %s1749 = sshll.u32 [#allocation6], 4
      %s1750 = int_to_ptr.vmem [resolvable:$true] %s1749
      %1755 = dma.vmem_to_hbm [thread:$0]  %s1750, 2048, %s7, [#allocation4], 128, 128, 8
    $region37: #{bottleneck_ir_sam_forward.11} parent=1 // pred_fallthru
      _
    // Predicated region
    $region38: #{bottleneck_ir_sam_forward.11} parent=1 // pred_check
      _
    $region39: #{bottleneck_ir_sam_forward.11} parent=1 // pred_check_branch
      %1757 = sbr.rel (0) target = $region41
    $region40: #{bottleneck_ir_sam_forward.11} parent=1 // pred_region
      %1758 = dma.done [#allocation4], 2048
    $region41: #{bottleneck_ir_sam_forward.11} parent=1 // pred_fallthru
      _
    %1759 = vsyncpa [#allocation4], 1
    %1760 = vsyncpa [#allocation5], 1

</llo_original>
